<compile_context>
chip_gen: v7x
topology: tpu7x:2x2x1
jax: 0.10.0
libtpu: 0.0.40
codegen_flags: <defaults>
</compile_context>

<pallas_src>
import functools

import jax
import jax.numpy as jnp
from jax.experimental import pallas as pl
from jax.experimental.pallas import tpu as pltpu

EPS = 1e-5


# ----------------------------------------------------------------------------
# Fused Pallas kernel: y = act( BN( x @ w + bias ) )
# ----------------------------------------------------------------------------
def _group_stat(stat_col, groups):
    """(1, N) per-column stat -> per-channel stat averaged over `groups` equal
    lane blocks and replicated back (phase-packed transposed-conv BN)."""
    n = stat_col.shape[1]
    c = n // groups
    acc = stat_col[:, 0:c]
    for g in range(1, groups):
        acc = acc + stat_col[:, g * c:(g + 1) * c]
    acc = acc * (1.0 / groups)
    return jnp.concatenate([acc] * groups, axis=1)


def _fused_kernel(x_ref, w_ref, p_ref, o_ref, *, bn_groups, act):
    # bf16 x bf16 matmul, f32 accumulation on the MXU.
    y = jnp.dot(x_ref[...], w_ref[...], preferred_element_type=jnp.float32)
    y = y + p_ref[0:1, :]                               # bias
    if bn_groups:                                       # batch-norm, batch stats
        mean = jnp.mean(y, axis=0, keepdims=True)
        if bn_groups > 1:
            mean = _group_stat(mean, bn_groups)
        d = y - mean
        var = jnp.mean(d * d, axis=0, keepdims=True)    # biased variance
        if bn_groups > 1:
            var = _group_stat(var, bn_groups)
        y = d * jax.lax.rsqrt(var + EPS)
        y = y * p_ref[1:2, :] + p_ref[2:3, :]           # gamma, beta
    if act == "relu":
        y = jnp.maximum(y, 0.0)
    elif act == "sigmoid":
        y = jax.nn.sigmoid(y)
    o_ref[...] = y.astype(o_ref.dtype)


def _pick_col_tile(N, max_tile=1024):
    """Largest multiple-of-128 divisor of N (<= max_tile) giving >= 2 column
    tiles (lane-dense stores + >= 2 parallel steps); else the full width."""
    best = None
    t = 128
    while t <= min(N // 2, max_tile):
        if N % t == 0:
            best = t
        t += 128
    return best if best is not None else N


def _pick_row_tile(M, max_tile=512):
    """Largest multiple-of-8 divisor of M (<= max_tile) giving >= 2 row tiles;
    else the full height.  Used only for BN-free layers."""
    best = None
    t = 8
    while t <= min(M // 2, max_tile):
        if M % t == 0:
            best = t
        t += 8
    return best if best is not None else M


def fused_matmul_bn_act(x, w, params, *, bn_groups, act, tm=None, tn=None):
    """(M, K) @ (K, N) + bias, optional batch-norm, activation.

    `params` = (3, N) [bias; gamma; beta].  `bn_groups`: 0 = no BN,
    1 = per-column BN (BatchNorm1d over rows), > 1 = stats averaged across
    `bn_groups` equal column blocks (BatchNorm2d for the phase-packed layout).
    """
    M, K = x.shape
    Kw, N = w.shape
    assert K == Kw and params.shape == (3, N)
    tm = M if tm is None else tm
    tn = N if tn is None else tn
    assert M % tm == 0 and N % tn == 0
    if bn_groups:
        assert tm == M, "BN statistics need the full row extent in one block"
    if bn_groups > 1:
        assert tn == N, "grouped BN needs all phase columns in one block"

    kernel = functools.partial(_fused_kernel, bn_groups=bn_groups, act=act)
    return pl.pallas_call(
        kernel,
        out_shape=jax.ShapeDtypeStruct((M, N), jnp.float32),
        grid=(M // tm, N // tn),
        in_specs=[
            pl.BlockSpec((tm, K), lambda i, j: (i, 0)),   # activations (bf16)
            pl.BlockSpec((K, tn), lambda i, j: (0, j)),   # weights (bf16)
            pl.BlockSpec((3, tn), lambda i, j: (0, j)),   # [bias; gamma; beta]
        ],
        out_specs=pl.BlockSpec((tm, tn), lambda i, j: (i, j)),
        compiler_params=pltpu.CompilerParams(
            dimension_semantics=("parallel", "parallel"),
            vmem_limit_bytes=32 * 1024 * 1024,   # safe on v5e/v6e/v7x
        ),
    )(x.astype(jnp.bfloat16), w.astype(jnp.bfloat16), params.astype(jnp.float32))


def linear_bn_act(x, w, b, gamma, beta, *, act):
    params = jnp.stack([b, gamma, beta]).astype(jnp.float32)
    return fused_matmul_bn_act(x, w, params, bn_groups=1, act=act,
                               tn=_pick_col_tile(w.shape[1]))


# ----------------------------------------------------------------------------
# ConvTranspose2d(k=4, s=2, p=1) via sub-pixel decomposition + fused matmul
# ----------------------------------------------------------------------------
def conv_transpose_bn_act(x_nhwc, w_pt, bias, gamma, beta, *, use_bn, act,
                          lane_pad=None):
    """ConvTranspose2d(Cin, Cout, 4, stride=2, padding=1) + BN2d? + activation.

    Each output phase (oh%2, ow%2) is a 2x2 convolution of the 1-padded input;
    all four phases share one 3x3 im2col window, so the layer is a single
    (B*H*W, 9*Cin) @ (9*Cin, 4*Cout) matmul followed by a pixel shuffle.
    Output is NHWC (B, 2H, 2W, Cout).
    """
    B, H, W, Cin = x_nhwc.shape
    Cin_w, Cout, K, _ = w_pt.shape
    assert Cin_w == Cin and K == 4

    # Shared 3x3 im2col window on the 1-padded input, built directly in NHWC
    # (no zero-dilation, no transpose of the expanded tensor).
    xp = jnp.pad(x_nhwc.astype(jnp.float32), ((0, 0), (1, 1), (1, 1), (0, 0)))
    cols = [xp[:, r:r + H, c:c + W, :] for r in range(3) for c in range(3)]
    patches = jnp.concatenate(cols, axis=-1).reshape(B * H * W, 9 * Cin)

    # Packed weight: column block (p, q) holds phase (oh%2, ow%2)'s 2x2
    # sub-kernel scattered into its taps of the shared 3x3 window.
    blocks = []
    for p in (0, 1):
        for q in (0, 1):
            wp = jnp.zeros((3, 3, Cin, Cout), jnp.float32)
            for rr in (0, 1):
                for cc in (0, 1):
                    r, c = p + rr, q + cc
                    kh, kw = 3 - p - 2 * rr, 3 - q - 2 * cc
                    wp = wp.at[r, c].set(w_pt[:, :, kh, kw].astype(jnp.float32))
            blocks.append(wp.reshape(9 * Cin, Cout))
    wmat = jnp.concatenate(blocks, axis=1)              # (9*Cin, 4*Cout)

    n_native = 4 * Cout
    b_t = jnp.tile(bias.astype(jnp.float32), 4)
    if use_bn:
        g_t = jnp.tile(gamma.astype(jnp.float32), 4)
        be_t = jnp.tile(beta.astype(jnp.float32), 4)
    else:
        g_t = jnp.ones((n_native,), jnp.float32)
        be_t = jnp.zeros((n_native,), jnp.float32)
    params = jnp.stack([b_t, g_t, be_t])                # (3, 4*Cout)

    if lane_pad is not None and lane_pad > n_native:
        # Lane-dense output: pad narrow channel counts up to a full 128-lane
        # tile so the kernel issues unmasked stores; sliced away below.
        wmat = jnp.pad(wmat, ((0, 0), (0, lane_pad - n_native)))
        params = jnp.pad(params, ((0, 0), (0, lane_pad - n_native)))

    tm = None if use_bn else _pick_row_tile(B * H * W)   # BN needs all rows
    y = fused_matmul_bn_act(patches, wmat, params,
                            bn_groups=4 if use_bn else 0, act=act, tm=tm)
    y = y[:, :n_native]

    # Pixel shuffle: (B*H*W, [p,q,co]) -> (B, 2H, 2W, Cout) NHWC.
    y = y.reshape(B, H, W, 2, 2, Cout).transpose(0, 1, 3, 2, 4, 5)
    return y.reshape(B, 2 * H, 2 * W, Cout)


# ----------------------------------------------------------------------------
# Generator parameters + forward (mirrors the PyTorch module)
# ----------------------------------------------------------------------------
def init_generator_params(latent_dim, key):
    ks = jax.random.split(key, 8)
    s = 0.05
    p = {}
    # fc1: Linear(latent_dim, 1024) + BN1d + ReLU
    p["w1"] = jax.random.normal(ks[0], (latent_dim, 1024), jnp.float32) * s
    p["b1"] = jax.random.normal(ks[1], (1024,), jnp.float32) * s
    p["g1"] = jnp.ones((1024,), jnp.float32)
    p["be1"] = jnp.zeros((1024,), jnp.float32)
    # fc2: Linear(1024, 7*7*128) + BN1d + ReLU
    p["w2"] = jax.random.normal(ks[2], (1024, 7 * 7 * 128), jnp.float32) * s
    p["b2"] = jax.random.normal(ks[3], (7 * 7 * 128,), jnp.float32) * s
    p["g2"] = jnp.ones((7 * 7 * 128,), jnp.float32)
    p["be2"] = jnp.zeros((7 * 7 * 128,), jnp.float32)
    # upconv1: ConvTranspose2d(128, 64, 4, 2, 1) + BN2d + ReLU
    p["wc1"] = jax.random.normal(ks[4], (128, 64, 4, 4), jnp.float32) * s
    p["bc1"] = jax.random.normal(ks[5], (64,), jnp.float32) * s
    p["gc1"] = jnp.ones((64,), jnp.float32)
    p["bec1"] = jnp.zeros((64,), jnp.float32)
    # upconv2: ConvTranspose2d(64, 1, 4, 2, 1) + Sigmoid
    p["wc2"] = jax.random.normal(ks[6], (64, 1, 4, 4), jnp.float32) * s
    p["bc2"] = jax.random.normal(ks[7], (1,), jnp.float32) * s
    return p


@jax.jit
def generator_forward(p, z):
    B = z.shape[0]
    # fc1 + BN1d + ReLU                        grid (1, 2)
    h = linear_bn_act(z, p["w1"], p["b1"], p["g1"], p["be1"], act="relu")
    # fc2 + BN1d + ReLU   (6272 = 7 x 896)     grid (1, 7)
    h = linear_bn_act(h, p["w2"], p["b2"], p["g2"], p["be2"], act="relu")
    # .view(B, 128, 7, 7) (NCHW) -> NHWC for the conv layers
    h = h.reshape(B, 128, 7, 7).transpose(0, 2, 3, 1)
    # upconv1 + BN2d + ReLU -> (B, 14, 14, 64) grid (1, 1), 256-lane output
    h = conv_transpose_bn_act(h, p["wc1"], p["bc1"], p["gc1"], p["bec1"],
                              use_bn=True, act="relu")
    # upconv2 + Sigmoid -> (B, 28, 28, 1)      grid (7, 1), padded to 128 lanes
    h = conv_transpose_bn_act(h, p["wc2"], p["bc2"], None, None,
                              use_bn=False, act="sigmoid", lane_pad=128)
    return h.transpose(0, 3, 1, 2)             # NHWC -> NCHW


if __name__ == "__main__":
    latent_dim = 64
    batch = 2

    key = jax.random.PRNGKey(0)
    k_z, k_p = jax.random.split(key)
    params = init_generator_params(latent_dim, k_p)
    z = jax.random.normal(k_z, (batch, latent_dim), dtype=jnp.float32)

    out = generator_forward(params, z)
    out = jax.block_until_ready(out)

    assert out.shape == (batch, 1, 28, 28), out.shape
    assert bool(jnp.all(jnp.isfinite(out)))
    assert bool(jnp.all((out >= 0.0) & (out <= 1.0)))  # sigmoid output range
    print("KERNEL_OK")
</pallas_src>

<mosaic_0001>
module attributes {stable_mosaic.version = 11 : i64} {
  func.func @_fused_kernel(%arg0: i32, %arg1: i32, %arg2: memref<2x64xbf16, #tpu.memory_space<vmem>>, %arg3: memref<64x512xbf16, #tpu.memory_space<vmem>>, %arg4: memref<3x512xf32, #tpu.memory_space<vmem>>, %arg5: memref<2x512xf32, #tpu.memory_space<vmem>>) attributes {dimension_semantics = [#tpu.dimension_semantics<parallel>, #tpu.dimension_semantics<parallel>], iteration_bounds = array<i64: 1, 2>, scalar_prefetch = 0 : i64, scratch_operands = 0 : i64, tpu.core_type = #tpu.core_type<tc>, window_params = [{transform_indices = @transform_0, window_bounds = array<i64: 2, 64>}, {transform_indices = @transform_1, window_bounds = array<i64: 64, 512>}, {transform_indices = @transform_2, window_bounds = array<i64: 3, 512>}, {transform_indices = @transform_3, window_bounds = array<i64: 2, 512>}]} {
    %c0 = arith.constant 0 : index
    %c0_0 = arith.constant 0 : index
    %0 = vector.load %arg2[%c0, %c0_0] : memref<2x64xbf16, #tpu.memory_space<vmem>>, vector<2x64xbf16>
    %c0_1 = arith.constant 0 : index
    %c0_2 = arith.constant 0 : index
    %1 = vector.load %arg3[%c0_1, %c0_2] : memref<64x512xbf16, #tpu.memory_space<vmem>>, vector<64x512xbf16>
    %cst = arith.constant dense<0.000000e+00> : vector<2x512xf32>
    %2 = tpu.matmul %0, %1, %cst {dimension_numbers = #tpu.dot_dimension_numbers<[1], [0], [0], [1], [0, 0, 1, 1], [], []>} : vector<2x64xbf16>, vector<64x512xbf16>, vector<2x512xf32> -> vector<2x512xf32>
    %c0_3 = arith.constant 0 : index
    %c0_4 = arith.constant 0 : index
    %3 = vector.load %arg4[%c0_3, %c0_4] : memref<3x512xf32, #tpu.memory_space<vmem>>, vector<1x512xf32>
    %4 = vector.broadcast %3 : vector<1x512xf32> to vector<2x512xf32>
    %5 = arith.addf %2, %4 : vector<2x512xf32>
    %cst_5 = arith.constant dense<0.000000e+00> : vector<512xf32>
    %6 = vector.multi_reduction <add>, %5, %cst_5 [0] : vector<2x512xf32> to vector<512xf32>
    %7 = vector.shape_cast %6 : vector<512xf32> to vector<1x512xf32>
    %cst_6 = arith.constant 2.000000e+00 : f32
    %8 = vector.broadcast %cst_6 : f32 to vector<1x512xf32>
    %9 = arith.divf %7, %8 : vector<1x512xf32>
    %10 = vector.broadcast %9 : vector<1x512xf32> to vector<2x512xf32>
    %11 = arith.subf %5, %10 : vector<2x512xf32>
    %12 = arith.mulf %11, %11 : vector<2x512xf32>
    %cst_7 = arith.constant dense<0.000000e+00> : vector<512xf32>
    %13 = vector.multi_reduction <add>, %12, %cst_7 [0] : vector<2x512xf32> to vector<512xf32>
    %14 = vector.shape_cast %13 : vector<512xf32> to vector<1x512xf32>
    %cst_8 = arith.constant 2.000000e+00 : f32
    %15 = vector.broadcast %cst_8 : f32 to vector<1x512xf32>
    %16 = arith.divf %14, %15 : vector<1x512xf32>
    %cst_9 = arith.constant 9.99999974E-6 : f32
    %17 = vector.broadcast %cst_9 : f32 to vector<1x512xf32>
    %18 = arith.addf %16, %17 : vector<1x512xf32>
    %19 = math.rsqrt %18 : vector<1x512xf32>
    %20 = vector.broadcast %19 : vector<1x512xf32> to vector<2x512xf32>
    %21 = arith.mulf %11, %20 : vector<2x512xf32>
    %c1 = arith.constant 1 : index
    %c0_10 = arith.constant 0 : index
    %22 = vector.load %arg4[%c1, %c0_10] : memref<3x512xf32, #tpu.memory_space<vmem>>, vector<1x512xf32>
    %23 = vector.broadcast %22 : vector<1x512xf32> to vector<2x512xf32>
    %24 = arith.mulf %21, %23 : vector<2x512xf32>
    %c2 = arith.constant 2 : index
    %c0_11 = arith.constant 0 : index
    %25 = vector.load %arg4[%c2, %c0_11] : memref<3x512xf32, #tpu.memory_space<vmem>>, vector<1x512xf32>
    %26 = vector.broadcast %25 : vector<1x512xf32> to vector<2x512xf32>
    %27 = arith.addf %24, %26 : vector<2x512xf32>
    %cst_12 = arith.constant 0.000000e+00 : f32
    %28 = vector.broadcast %cst_12 : f32 to vector<2x512xf32>
    %29 = arith.maximumf %27, %28 : vector<2x512xf32>
    %c0_13 = arith.constant 0 : index
    %c0_14 = arith.constant 0 : index
    %30 = vector.load %arg5[%c0_13, %c0_14] : memref<2x512xf32, #tpu.memory_space<vmem>>, vector<2x512xf32>
    tpu.vector_store %arg5[%c0_13, %c0_14], %29 {strides = array<i32>} : memref<2x512xf32, #tpu.memory_space<vmem>>, vector<2x512xf32>,
    return
  }
  func.func @transform_0(%arg0: i32, %arg1: i32) -> (i32, i32) {
    %c0_i32 = arith.constant 0 : i32
    %c0_i32_0 = arith.constant 0 : i32
    return %arg0, %c0_i32 : i32, i32
  }
  func.func @transform_1(%arg0: i32, %arg1: i32) -> (i32, i32) {
    %c0_i32 = arith.constant 0 : i32
    %c0_i32_0 = arith.constant 0 : i32
    return %c0_i32, %arg1 : i32, i32
  }
  func.func @transform_2(%arg0: i32, %arg1: i32) -> (i32, i32) {
    %c0_i32 = arith.constant 0 : i32
    %c0_i32_0 = arith.constant 0 : i32
    return %c0_i32, %arg1 : i32, i32
  }
  func.func @transform_3(%arg0: i32, %arg1: i32) -> (i32, i32) {
    %c0_i32 = arith.constant 0 : i32
    return %arg0, %arg1 : i32, i32
  }
}

module attributes {stable_mosaic.version = 11 : i64} {
  func.func @_fused_kernel(%arg0: i32, %arg1: i32, %arg2: memref<2x1024xbf16, #tpu.memory_space<vmem>>, %arg3: memref<1024x896xbf16, #tpu.memory_space<vmem>>, %arg4: memref<3x896xf32, #tpu.memory_space<vmem>>, %arg5: memref<2x896xf32, #tpu.memory_space<vmem>>) attributes {dimension_semantics = [#tpu.dimension_semantics<parallel>, #tpu.dimension_semantics<parallel>], iteration_bounds = array<i64: 1, 7>, scalar_prefetch = 0 : i64, scratch_operands = 0 : i64, tpu.core_type = #tpu.core_type<tc>, window_params = [{transform_indices = @transform_0, window_bounds = array<i64: 2, 1024>}, {transform_indices = @transform_1, window_bounds = array<i64: 1024, 896>}, {transform_indices = @transform_2, window_bounds = array<i64: 3, 896>}, {transform_indices = @transform_3, window_bounds = array<i64: 2, 896>}]} {
    %c0 = arith.constant 0 : index
    %c0_0 = arith.constant 0 : index
    %0 = vector.load %arg2[%c0, %c0_0] : memref<2x1024xbf16, #tpu.memory_space<vmem>>, vector<2x1024xbf16>
    %c0_1 = arith.constant 0 : index
    %c0_2 = arith.constant 0 : index
    %1 = vector.load %arg3[%c0_1, %c0_2] : memref<1024x896xbf16, #tpu.memory_space<vmem>>, vector<1024x896xbf16>
    %cst = arith.constant dense<0.000000e+00> : vector<2x896xf32>
    %2 = tpu.matmul %0, %1, %cst {dimension_numbers = #tpu.dot_dimension_numbers<[1], [0], [0], [1], [0, 0, 1, 1], [], []>} : vector<2x1024xbf16>, vector<1024x896xbf16>, vector<2x896xf32> -> vector<2x896xf32>
    %c0_3 = arith.constant 0 : index
    %c0_4 = arith.constant 0 : index
    %3 = vector.load %arg4[%c0_3, %c0_4] : memref<3x896xf32, #tpu.memory_space<vmem>>, vector<1x896xf32>
    %4 = vector.broadcast %3 : vector<1x896xf32> to vector<2x896xf32>
    %5 = arith.addf %2, %4 : vector<2x896xf32>
    %cst_5 = arith.constant dense<0.000000e+00> : vector<896xf32>
    %6 = vector.multi_reduction <add>, %5, %cst_5 [0] : vector<2x896xf32> to vector<896xf32>
    %7 = vector.shape_cast %6 : vector<896xf32> to vector<1x896xf32>
    %cst_6 = arith.constant 2.000000e+00 : f32
    %8 = vector.broadcast %cst_6 : f32 to vector<1x896xf32>
    %9 = arith.divf %7, %8 : vector<1x896xf32>
    %10 = vector.broadcast %9 : vector<1x896xf32> to vector<2x896xf32>
    %11 = arith.subf %5, %10 : vector<2x896xf32>
    %12 = arith.mulf %11, %11 : vector<2x896xf32>
    %cst_7 = arith.constant dense<0.000000e+00> : vector<896xf32>
    %13 = vector.multi_reduction <add>, %12, %cst_7 [0] : vector<2x896xf32> to vector<896xf32>
    %14 = vector.shape_cast %13 : vector<896xf32> to vector<1x896xf32>
    %cst_8 = arith.constant 2.000000e+00 : f32
    %15 = vector.broadcast %cst_8 : f32 to vector<1x896xf32>
    %16 = arith.divf %14, %15 : vector<1x896xf32>
    %cst_9 = arith.constant 9.99999974E-6 : f32
    %17 = vector.broadcast %cst_9 : f32 to vector<1x896xf32>
    %18 = arith.addf %16, %17 : vector<1x896xf32>
    %19 = math.rsqrt %18 : vector<1x896xf32>
    %20 = vector.broadcast %19 : vector<1x896xf32> to vector<2x896xf32>
    %21 = arith.mulf %11, %20 : vector<2x896xf32>
    %c1 = arith.constant 1 : index
    %c0_10 = arith.constant 0 : index
    %22 = vector.load %arg4[%c1, %c0_10] : memref<3x896xf32, #tpu.memory_space<vmem>>, vector<1x896xf32>
    %23 = vector.broadcast %22 : vector<1x896xf32> to vector<2x896xf32>
    %24 = arith.mulf %21, %23 : vector<2x896xf32>
    %c2 = arith.constant 2 : index
    %c0_11 = arith.constant 0 : index
    %25 = vector.load %arg4[%c2, %c0_11] : memref<3x896xf32, #tpu.memory_space<vmem>>, vector<1x896xf32>
    %26 = vector.broadcast %25 : vector<1x896xf32> to vector<2x896xf32>
    %27 = arith.addf %24, %26 : vector<2x896xf32>
    %cst_12 = arith.constant 0.000000e+00 : f32
    %28 = vector.broadcast %cst_12 : f32 to vector<2x896xf32>
    %29 = arith.maximumf %27, %28 : vector<2x896xf32>
    %c0_13 = arith.constant 0 : index
    %c0_14 = arith.constant 0 : index
    %30 = vector.load %arg5[%c0_13, %c0_14] : memref<2x896xf32, #tpu.memory_space<vmem>>, vector<2x896xf32>
    tpu.vector_store %arg5[%c0_13, %c0_14], %29 {strides = array<i32>} : memref<2x896xf32, #tpu.memory_space<vmem>>, vector<2x896xf32>,
    return
  }
  func.func @transform_0(%arg0: i32, %arg1: i32) -> (i32, i32) {
    %c0_i32 = arith.constant 0 : i32
    %c0_i32_0 = arith.constant 0 : i32
    return %arg0, %c0_i32 : i32, i32
  }
  func.func @transform_1(%arg0: i32, %arg1: i32) -> (i32, i32) {
    %c0_i32 = arith.constant 0 : i32
    %c0_i32_0 = arith.constant 0 : i32
    return %c0_i32, %arg1 : i32, i32
  }
  func.func @transform_2(%arg0: i32, %arg1: i32) -> (i32, i32) {
    %c0_i32 = arith.constant 0 : i32
    %c0_i32_0 = arith.constant 0 : i32
    return %c0_i32, %arg1 : i32, i32
  }
  func.func @transform_3(%arg0: i32, %arg1: i32) -> (i32, i32) {
    %c0_i32 = arith.constant 0 : i32
    return %arg0, %arg1 : i32, i32
  }
}

module attributes {stable_mosaic.version = 11 : i64} {
  func.func @_fused_kernel(%arg0: i32, %arg1: i32, %arg2: memref<98x1152xbf16, #tpu.memory_space<vmem>>, %arg3: memref<1152x256xbf16, #tpu.memory_space<vmem>>, %arg4: memref<3x256xf32, #tpu.memory_space<vmem>>, %arg5: memref<98x256xf32, #tpu.memory_space<vmem>>) attributes {dimension_semantics = [#tpu.dimension_semantics<parallel>, #tpu.dimension_semantics<parallel>], iteration_bounds = array<i64: 1, 1>, scalar_prefetch = 0 : i64, scratch_operands = 0 : i64, tpu.core_type = #tpu.core_type<tc>, window_params = [{transform_indices = @transform_0, window_bounds = array<i64: 98, 1152>}, {transform_indices = @transform_1, window_bounds = array<i64: 1152, 256>}, {transform_indices = @transform_2, window_bounds = array<i64: 3, 256>}, {transform_indices = @transform_3, window_bounds = array<i64: 98, 256>}]} {
    %c0 = arith.constant 0 : index
    %c0_0 = arith.constant 0 : index
    %0 = vector.load %arg2[%c0, %c0_0] : memref<98x1152xbf16, #tpu.memory_space<vmem>>, vector<98x1152xbf16>
    %c0_1 = arith.constant 0 : index
    %c0_2 = arith.constant 0 : index
    %1 = vector.load %arg3[%c0_1, %c0_2] : memref<1152x256xbf16, #tpu.memory_space<vmem>>, vector<1152x256xbf16>
    %cst = arith.constant dense<0.000000e+00> : vector<98x256xf32>
    %2 = tpu.matmul %0, %1, %cst {dimension_numbers = #tpu.dot_dimension_numbers<[1], [0], [0], [1], [0, 0, 1, 1], [], []>} : vector<98x1152xbf16>, vector<1152x256xbf16>, vector<98x256xf32> -> vector<98x256xf32>
    %c0_3 = arith.constant 0 : index
    %c0_4 = arith.constant 0 : index
    %3 = vector.load %arg4[%c0_3, %c0_4] : memref<3x256xf32, #tpu.memory_space<vmem>>, vector<1x256xf32>
    %4 = vector.broadcast %3 : vector<1x256xf32> to vector<98x256xf32>
    %5 = arith.addf %2, %4 : vector<98x256xf32>
    %cst_5 = arith.constant dense<0.000000e+00> : vector<256xf32>
    %6 = vector.multi_reduction <add>, %5, %cst_5 [0] : vector<98x256xf32> to vector<256xf32>
    %7 = vector.shape_cast %6 : vector<256xf32> to vector<1x256xf32>
    %cst_6 = arith.constant 9.800000e+01 : f32
    %8 = vector.broadcast %cst_6 : f32 to vector<1x256xf32>
    %9 = arith.divf %7, %8 : vector<1x256xf32>
    %10 = vector.extract_strided_slice %9 {offsets = [0, 0], sizes = [1, 64], strides = [1, 1]} : vector<1x256xf32> to vector<1x64xf32>
    %11 = vector.extract_strided_slice %9 {offsets = [0, 64], sizes = [1, 64], strides = [1, 1]} : vector<1x256xf32> to vector<1x64xf32>
    %12 = arith.addf %10, %11 : vector<1x64xf32>
    %13 = vector.extract_strided_slice %9 {offsets = [0, 128], sizes = [1, 64], strides = [1, 1]} : vector<1x256xf32> to vector<1x64xf32>
    %14 = arith.addf %12, %13 : vector<1x64xf32>
    %15 = vector.extract_strided_slice %9 {offsets = [0, 192], sizes = [1, 64], strides = [1, 1]} : vector<1x256xf32> to vector<1x64xf32>
    %16 = arith.addf %14, %15 : vector<1x64xf32>
    %cst_7 = arith.constant 2.500000e-01 : f32
    %17 = vector.broadcast %cst_7 : f32 to vector<1x64xf32>
    %18 = arith.mulf %16, %17 : vector<1x64xf32>
    %19 = tpu.concatenate %18, %18, %18, %18 in 1 : vector<1x64xf32>, vector<1x64xf32>, vector<1x64xf32>, vector<1x64xf32> -> vector<1x256xf32>
    %20 = vector.broadcast %19 : vector<1x256xf32> to vector<98x256xf32>
    %21 = arith.subf %5, %20 : vector<98x256xf32>
    %22 = arith.mulf %21, %21 : vector<98x256xf32>
    %cst_8 = arith.constant dense<0.000000e+00> : vector<256xf32>
    %23 = vector.multi_reduction <add>, %22, %cst_8 [0] : vector<98x256xf32> to vector<256xf32>
    %24 = vector.shape_cast %23 : vector<256xf32> to vector<1x256xf32>
    %cst_9 = arith.constant 9.800000e+01 : f32
    %25 = vector.broadcast %cst_9 : f32 to vector<1x256xf32>
    %26 = arith.divf %24, %25 : vector<1x256xf32>
    %27 = vector.extract_strided_slice %26 {offsets = [0, 0], sizes = [1, 64], strides = [1, 1]} : vector<1x256xf32> to vector<1x64xf32>
    %28 = vector.extract_strided_slice %26 {offsets = [0, 64], sizes = [1, 64], strides = [1, 1]} : vector<1x256xf32> to vector<1x64xf32>
    %29 = arith.addf %27, %28 : vector<1x64xf32>
    %30 = vector.extract_strided_slice %26 {offsets = [0, 128], sizes = [1, 64], strides = [1, 1]} : vector<1x256xf32> to vector<1x64xf32>
    %31 = arith.addf %29, %30 : vector<1x64xf32>
    %32 = vector.extract_strided_slice %26 {offsets = [0, 192], sizes = [1, 64], strides = [1, 1]} : vector<1x256xf32> to vector<1x64xf32>
    %33 = arith.addf %31, %32 : vector<1x64xf32>
    %cst_10 = arith.constant 2.500000e-01 : f32
    %34 = vector.broadcast %cst_10 : f32 to vector<1x64xf32>
    %35 = arith.mulf %33, %34 : vector<1x64xf32>
    %36 = tpu.concatenate %35, %35, %35, %35 in 1 : vector<1x64xf32>, vector<1x64xf32>, vector<1x64xf32>, vector<1x64xf32> -> vector<1x256xf32>
    %cst_11 = arith.constant 9.99999974E-6 : f32
    %37 = vector.broadcast %cst_11 : f32 to vector<1x256xf32>
    %38 = arith.addf %36, %37 : vector<1x256xf32>
    %39 = math.rsqrt %38 : vector<1x256xf32>
    %40 = vector.broadcast %39 : vector<1x256xf32> to vector<98x256xf32>
    %41 = arith.mulf %21, %40 : vector<98x256xf32>
    %c1 = arith.constant 1 : index
    %c0_12 = arith.constant 0 : index
    %42 = vector.load %arg4[%c1, %c0_12] : memref<3x256xf32, #tpu.memory_space<vmem>>, vector<1x256xf32>
    %43 = vector.broadcast %42 : vector<1x256xf32> to vector<98x256xf32>
    %44 = arith.mulf %41, %43 : vector<98x256xf32>
    %c2 = arith.constant 2 : index
    %c0_13 = arith.constant 0 : index
    %45 = vector.load %arg4[%c2, %c0_13] : memref<3x256xf32, #tpu.memory_space<vmem>>, vector<1x256xf32>
    %46 = vector.broadcast %45 : vector<1x256xf32> to vector<98x256xf32>
    %47 = arith.addf %44, %46 : vector<98x256xf32>
    %cst_14 = arith.constant 0.000000e+00 : f32
    %48 = vector.broadcast %cst_14 : f32 to vector<98x256xf32>
    %49 = arith.maximumf %47, %48 : vector<98x256xf32>
    %c0_15 = arith.constant 0 : index
    %c0_16 = arith.constant 0 : index
    %50 = vector.load %arg5[%c0_15, %c0_16] : memref<98x256xf32, #tpu.memory_space<vmem>>, vector<98x256xf32>
    tpu.vector_store %arg5[%c0_15, %c0_16], %49 {strides = array<i32>} : memref<98x256xf32, #tpu.memory_space<vmem>>, vector<98x256xf32>,
    return
  }
  func.func @transform_0(%arg0: i32, %arg1: i32) -> (i32, i32) {
    %c0_i32 = arith.constant 0 : i32
    %c0_i32_0 = arith.constant 0 : i32
    return %arg0, %c0_i32 : i32, i32
  }
  func.func @transform_1(%arg0: i32, %arg1: i32) -> (i32, i32) {
    %c0_i32 = arith.constant 0 : i32
    %c0_i32_0 = arith.constant 0 : i32
    return %c0_i32, %arg1 : i32, i32
  }
  func.func @transform_2(%arg0: i32, %arg1: i32) -> (i32, i32) {
    %c0_i32 = arith.constant 0 : i32
    %c0_i32_0 = arith.constant 0 : i32
    return %c0_i32, %arg1 : i32, i32
  }
  func.func @transform_3(%arg0: i32, %arg1: i32) -> (i32, i32) {
    %c0_i32 = arith.constant 0 : i32
    return %arg0, %arg1 : i32, i32
  }
}

module attributes {stable_mosaic.version = 11 : i64} {
  func.func @_fused_kernel(%arg0: i32, %arg1: i32, %arg2: memref<56x576xbf16, #tpu.memory_space<vmem>>, %arg3: memref<576x128xbf16, #tpu.memory_space<vmem>>, %arg4: memref<3x128xf32, #tpu.memory_space<vmem>>, %arg5: memref<56x128xf32, #tpu.memory_space<vmem>>) attributes {dimension_semantics = [#tpu.dimension_semantics<parallel>, #tpu.dimension_semantics<parallel>], iteration_bounds = array<i64: 7, 1>, scalar_prefetch = 0 : i64, scratch_operands = 0 : i64, tpu.core_type = #tpu.core_type<tc>, window_params = [{transform_indices = @transform_0, window_bounds = array<i64: 56, 576>}, {transform_indices = @transform_1, window_bounds = array<i64: 576, 128>}, {transform_indices = @transform_2, window_bounds = array<i64: 3, 128>}, {transform_indices = @transform_3, window_bounds = array<i64: 56, 128>}]} {
    %c0 = arith.constant 0 : index
    %c0_0 = arith.constant 0 : index
    %0 = vector.load %arg2[%c0, %c0_0] : memref<56x576xbf16, #tpu.memory_space<vmem>>, vector<56x576xbf16>
    %c0_1 = arith.constant 0 : index
    %c0_2 = arith.constant 0 : index
    %1 = vector.load %arg3[%c0_1, %c0_2] : memref<576x128xbf16, #tpu.memory_space<vmem>>, vector<576x128xbf16>
    %cst = arith.constant dense<0.000000e+00> : vector<56x128xf32>
    %2 = tpu.matmul %0, %1, %cst {dimension_numbers = #tpu.dot_dimension_numbers<[1], [0], [0], [1], [0, 0, 1, 1], [], []>} : vector<56x576xbf16>, vector<576x128xbf16>, vector<56x128xf32> -> vector<56x128xf32>
    %c0_3 = arith.constant 0 : index
    %c0_4 = arith.constant 0 : index
    %3 = vector.load %arg4[%c0_3, %c0_4] : memref<3x128xf32, #tpu.memory_space<vmem>>, vector<1x128xf32>
    %4 = vector.broadcast %3 : vector<1x128xf32> to vector<56x128xf32>
    %5 = arith.addf %2, %4 : vector<56x128xf32>
    %6 = arith.negf %5 : vector<56x128xf32>
    %7 = math.exp %6 : vector<56x128xf32>
    %cst_5 = arith.constant 1.000000e+00 : f32
    %8 = vector.broadcast %cst_5 : f32 to vector<56x128xf32>
    %9 = arith.addf %8, %7 : vector<56x128xf32>
    %10 = arith.divf %8, %9 : vector<56x128xf32>
    %c0_6 = arith.constant 0 : index
    %c0_7 = arith.constant 0 : index
    %11 = vector.load %arg5[%c0_6, %c0_7] : memref<56x128xf32, #tpu.memory_space<vmem>>, vector<56x128xf32>
    tpu.vector_store %arg5[%c0_6, %c0_7], %10 {strides = array<i32>} : memref<56x128xf32, #tpu.memory_space<vmem>>, vector<56x128xf32>,
    return
  }
  func.func @transform_0(%arg0: i32, %arg1: i32) -> (i32, i32) {
    %c0_i32 = arith.constant 0 : i32
    %c0_i32_0 = arith.constant 0 : i32
    return %arg0, %c0_i32 : i32, i32
  }
  func.func @transform_1(%arg0: i32, %arg1: i32) -> (i32, i32) {
    %c0_i32 = arith.constant 0 : i32
    %c0_i32_0 = arith.constant 0 : i32
    return %c0_i32, %arg1 : i32, i32
  }
  func.func @transform_2(%arg0: i32, %arg1: i32) -> (i32, i32) {
    %c0_i32 = arith.constant 0 : i32
    %c0_i32_0 = arith.constant 0 : i32
    return %c0_i32, %arg1 : i32, i32
  }
  func.func @transform_3(%arg0: i32, %arg1: i32) -> (i32, i32) {
    %c0_i32 = arith.constant 0 : i32
    return %arg0, %arg1 : i32, i32
  }
}

</mosaic_0001>

<llo_original>
// kernel: generator_forward.4
$region0: #{generator_forward.4}
  #allocation0 [shape = 'u32[]', space=smem, size = 0x4, offset = 0x4, fixed_abs, tag = 'smem constant byte address 0x4 - core index']
  #allocation1 [shape = 'u32[144,128]{1,0:T(1,128)}', space=vmem, size = 0x12000, scoped, tag = 'internal scratch']
  %s0 = inlined_call_operand.vmem [shape: bf16[2,64], index: 0, kind: input, shape index: {}]
  %s1 = inlined_call_operand.vmem [shape: bf16[64,1024], index: 1, kind: input, shape index: {}]
  %s2 = inlined_call_operand.vmem [shape: f32[3,1024], index: 2, kind: input, shape index: {}]
  %s3 = inlined_call_operand.vmem [shape: f32[2,1024], index: 3, kind: output, shape index: {}]
  %s4 = sld [smem:[#allocation0]]
  $region68: #{generator_forward.4} parent=0
    _
  %s6 = ssub.s32 1, %s4
  %s7 = scalar_select 0, %s6, %s4
  $region1: #{generator_forward.4} parent=0
    #allocation2 [shape = 'u8[131072]{0}', space=vmem, size = 0x20000, scoped, tag = 'input window, operand 1']
    loop: start=0, step=1, limit=4
    $region2: #{generator_forward.4} parent=1 // loop_pre_header
      _
    $region3: #{generator_forward.4} parent=1 // loop_header
      %s9 = sphi 0, %s13
      %p10 = scmp.ge.s32.totalorder %s9, 4
      %s16 = sphi 0, %s28
      %s17 = sphi 0, %s24
      %s18 = sphi 0, %s16
      %s19 = sphi 0, %s17
      %s20 = sphi 0, %s18
      %s21 = sphi 0, %s19
      %s31 = sphi 0, %s33
      %s34 = sphi 0, %s31
      %s35 = sphi 0, %s34
      %s51 = sphi 0, %s35
      %s57 = sphi 0, %s59
      %s60 = sphi 0, %s57
      %s61 = sphi 0, %s60
      %s77 = sphi 0, %s61
      %s83 = sphi 0, %s85
      %s86 = sphi 0, %s83
      %s87 = sphi 0, %s86
      %s103 = sphi 0, %s87
      %s111 = sphi 0, %s113
      %s114 = sphi 0, %s111
      %s115 = sphi 0, %s114
      %s131 = sphi 0, %s115
    $region4: #{generator_forward.4} parent=1 // loop_header_branch
      %12 = sbr.rel (%p10) target = $region8
    $region5: #{generator_forward.4} parent=1 // loop_body
      %s14 = ssub.s32 %s9, 1
      %s15 = ssub.s32 %s9, 2
      %s22 = sadd.s32 1, %s17
      %p23 = scmp.ge.s32.totalorder %s22, 2
      %s24 = scalar_select %p23, 0, %s22
      %s25 = sadd.s32 1, %s16
      %s26 = scalar_select %p23, %s25, %s16
      %p27 = scmp.ge.s32.totalorder %s26, 1
      %s28 = scalar_select %p27, 0, %s26
      %s29 = ssub.s32 %s16, %s28
      %p30 = scmp.eq.s32.totalorder %s29, 0
      %s32 = sadd.s32 %s31, 1
      %s33 = scalar_select %p30, %s31, %s32
      %p36 = pneg %p30
      %p37 = scmp.eq.s32.totalorder %s9, 1
      %p38 = por %p36, %p37
      %p39 = scmp.ne.s32.totalorder %s31, %s34
      %p40 = scmp.eq.s32.totalorder %s9, 0
      %p41 = por %p39, %p40
      %p42 = scmp.ne.s32.totalorder %s31, %s34
      %p43 = scmp.eq.s32.totalorder %s14, 1
      %p44 = por %p42, %p43
      %p45 = scmp.ne.s32.totalorder %s34, %s35
      %p46 = scmp.eq.s32.totalorder %s14, 0
      %p47 = por %p45, %p46
      %p48 = scmp.ne.s32.totalorder %s34, %s35
      %p49 = scmp.eq.s32.totalorder %s15, 1
      %p50 = por %p48, %p49
      %p52 = scmp.ne.s32.totalorder %s35, %s51
      %p53 = scmp.eq.s32.totalorder %s15, 0
      %p54 = por %p52, %p53
      %s55 = ssub.s32 %s17, %s24
      %p56 = scmp.eq.s32.totalorder %s55, 0
      %s58 = sadd.s32 %s57, 1
      %s59 = scalar_select %p56, %s57, %s58
      %p62 = pneg %p56
      %p63 = scmp.eq.s32.totalorder %s9, 1
      %p64 = por %p62, %p63
      %p65 = scmp.ne.s32.totalorder %s57, %s60
      %p66 = scmp.eq.s32.totalorder %s9, 0
      %p67 = por %p65, %p66
      %p68 = scmp.ne.s32.totalorder %s57, %s60
      %p69 = scmp.eq.s32.totalorder %s14, 1
      %p70 = por %p68, %p69
      %p71 = scmp.ne.s32.totalorder %s60, %s61
      %p72 = scmp.eq.s32.totalorder %s14, 0
      %p73 = por %p71, %p72
      %p74 = scmp.ne.s32.totalorder %s60, %s61
      %p75 = scmp.eq.s32.totalorder %s15, 1
      %p76 = por %p74, %p75
      %p78 = scmp.ne.s32.totalorder %s61, %s77
      %p79 = scmp.eq.s32.totalorder %s15, 0
      %p80 = por %p78, %p79
      %s81 = ssub.s32 %s17, %s24
      %p82 = scmp.eq.s32.totalorder %s81, 0
      %s84 = sadd.s32 %s83, 1
      %s85 = scalar_select %p82, %s83, %s84
      %p88 = pneg %p82
      %p89 = scmp.eq.s32.totalorder %s9, 1
      %p90 = por %p88, %p89
      %p91 = scmp.ne.s32.totalorder %s83, %s86
      %p92 = scmp.eq.s32.totalorder %s9, 0
      %p93 = por %p91, %p92
      %p94 = scmp.ne.s32.totalorder %s83, %s86
      %p95 = scmp.eq.s32.totalorder %s14, 1
      %p96 = por %p94, %p95
      %p97 = scmp.ne.s32.totalorder %s86, %s87
      %p98 = scmp.eq.s32.totalorder %s14, 0
      %p99 = por %p97, %p98
      %p100 = scmp.ne.s32.totalorder %s86, %s87
      %p101 = scmp.eq.s32.totalorder %s15, 1
      %p102 = por %p100, %p101
      %p104 = scmp.ne.s32.totalorder %s87, %s103
      %p105 = scmp.eq.s32.totalorder %s15, 0
      %p106 = por %p104, %p105
      %s107 = ssub.s32 %s16, %s28
      %s108 = ssub.s32 %s17, %s24
      %s109 = sor.u32 %s107, %s108
      %p110 = scmp.eq.s32.totalorder %s109, 0
      %s112 = sadd.s32 %s111, 1
      %s113 = scalar_select %p110, %s111, %s112
      %p116 = pneg %p110
      %p117 = scmp.eq.s32.totalorder %s9, 1
      %p118 = por %p116, %p117
      %p119 = scmp.ne.s32.totalorder %s111, %s114
      %p120 = scmp.eq.s32.totalorder %s9, 0
      %p121 = por %p119, %p120
      %p122 = scmp.ne.s32.totalorder %s111, %s114
      %p123 = scmp.eq.s32.totalorder %s14, 1
      %p124 = por %p122, %p123
      %p125 = scmp.ne.s32.totalorder %s114, %s115
      %p126 = scmp.eq.s32.totalorder %s14, 0
      %p127 = por %p125, %p126
      %p128 = scmp.ne.s32.totalorder %s114, %s115
      %p129 = scmp.eq.s32.totalorder %s15, 1
      %p130 = por %p128, %p129
      %p132 = scmp.ne.s32.totalorder %s115, %s131
      %p133 = scmp.eq.s32.totalorder %s15, 0
      %p134 = por %p132, %p133
      %p135 = scmp.le.s32.totalorder 1, %s9
      %p136 = scmp.lt.s32.totalorder %s9, 3
      %p137 = pnand %p135, %p136
      %p138 = pneg %p137
      // Predicated region
      $region9: #{generator_forward.4} parent=5 // pred_check
        _
      $region10: #{generator_forward.4} parent=5 // pred_check_branch
        %140 = sbr.rel (%p137) target = $region12
      $region11: #{generator_forward.4} parent=5 // pred_region
        %s141 = ssub.s32 %s9, 1
        // Predicated region
        $region13: #{generator_forward.4} parent=11 // pred_check
          %p142 = pneg %p47
        $region14: #{generator_forward.4} parent=11 // pred_check_branch
          %144 = sbr.rel (%p142) target = $region16
        $region15: #{generator_forward.4} parent=11 // pred_region
          %p145 = scmp.lt.s32.totalorder %s18, 0
          %s146 = scalar_select %p145, %s18, 0
          %s147 = scalar_lea.vmem %s0, %s146
        $region16: #{generator_forward.4} parent=11 // pred_fallthru
          _
      $region12: #{generator_forward.4} parent=5 // pred_fallthru
        _
      %p148 = scmp.lt.s32.totalorder %s9, 2
      // Predicated region
      $region17: #{generator_forward.4} parent=5 // pred_check
        %p149 = pneg %p148
      $region18: #{generator_forward.4} parent=5 // pred_check_branch
        %151 = sbr.rel (%p149) target = $region20
      $region19: #{generator_forward.4} parent=5 // pred_region
        // Predicated region
        $region21: #{generator_forward.4} parent=19 // pred_check
          %p152 = pneg %p67
        $region22: #{generator_forward.4} parent=19 // pred_check_branch
          %154 = sbr.rel (%p152) target = $region24
        $region23: #{generator_forward.4} parent=19 // pred_region
          %s155 = sand.u32 %s57, 1
          %s156 = sand.u32 %s57, 1
          %s157 = smul.addr %s156, 128
          %s158 = scalar_lea.vmem [#allocation2], %s157
          %s159 = smul.u32 4, %s17
          %s160 = smul.addr %s159, 4
          %s161 = scalar_lea.vmem %s1, %s160
          // Predicated region
          $region25: #{generator_forward.4} parent=23 // pred_check
            _
          $region26: #{generator_forward.4} parent=23 // pred_check_branch
            %163 = sbr.rel (0) target = $region28
          $region27: #{generator_forward.4} parent=23 // pred_region
            // Predicated region
            $region29: #{generator_forward.4} parent=27 // pred_check
              _
            $region30: #{generator_forward.4} parent=27 // pred_check_branch
              %165 = sbr.rel (0) target = $region32
            $region31: #{generator_forward.4} parent=27 // pred_region
              loop: start=0, step=1, limit=1
              $region33: #{generator_forward.4} parent=31 // loop_pre_header
                _
              $region34: #{generator_forward.4} parent=31 // loop_header
                %s167 = sphi 0, %s171
                %p168 = scmp.ge.s32.totalorder %s167, 1
                %s172 = sphi %s161, %s161
                %s173 = sphi %s158, %s158
              $region35: #{generator_forward.4} parent=31 // loop_header_branch
                %170 = sbr.rel (%p168) target = $region39
              $region36: #{generator_forward.4} parent=31 // loop_body
                %v174 = vld [vmem:[%s172] sm:$0xff]
                %175 = vst [vmem:[%s173] sm:$0xff] %v174
                %v176 = vld [vmem:[%s172 + $0x8] sm:$0xff]
                %177 = vst [vmem:[%s173 + $0x8] sm:$0xff] %v176
                %v178 = vld [vmem:[%s172 + $0x20] sm:$0xff]
                %179 = vst [vmem:[%s173 + $0x10] sm:$0xff] %v178
                %v180 = vld [vmem:[%s172 + $0x28] sm:$0xff]
                %181 = vst [vmem:[%s173 + $0x18] sm:$0xff] %v180
                %v182 = vld [vmem:[%s172 + $0x40] sm:$0xff]
                %183 = vst [vmem:[%s173 + $0x20] sm:$0xff] %v182
                %v184 = vld [vmem:[%s172 + $0x48] sm:$0xff]
                %185 = vst [vmem:[%s173 + $0x28] sm:$0xff] %v184
                %v186 = vld [vmem:[%s172 + $0x60] sm:$0xff]
                %187 = vst [vmem:[%s173 + $0x30] sm:$0xff] %v186
                %v188 = vld [vmem:[%s172 + $0x68] sm:$0xff]
                %189 = vst [vmem:[%s173 + $0x38] sm:$0xff] %v188
                %v190 = vld [vmem:[%s172 + $0x80] sm:$0xff]
                %191 = vst [vmem:[%s173 + $0x40] sm:$0xff] %v190
                %v192 = vld [vmem:[%s172 + $0x88] sm:$0xff]
                %193 = vst [vmem:[%s173 + $0x48] sm:$0xff] %v192
                %v194 = vld [vmem:[%s172 + $0xa0] sm:$0xff]
                %195 = vst [vmem:[%s173 + $0x50] sm:$0xff] %v194
                %v196 = vld [vmem:[%s172 + $0xa8] sm:$0xff]
                %197 = vst [vmem:[%s173 + $0x58] sm:$0xff] %v196
                %v198 = vld [vmem:[%s172 + $0xc0] sm:$0xff]
                %199 = vst [vmem:[%s173 + $0x60] sm:$0xff] %v198
                %v200 = vld [vmem:[%s172 + $0xc8] sm:$0xff]
                %201 = vst [vmem:[%s173 + $0x68] sm:$0xff] %v200
                %v202 = vld [vmem:[%s172 + $0xe0] sm:$0xff]
                %203 = vst [vmem:[%s173 + $0x70] sm:$0xff] %v202
                %v204 = vld [vmem:[%s172 + $0xe8] sm:$0xff]
                %205 = vst [vmem:[%s173 + $0x78] sm:$0xff] %v204
              $region37: #{generator_forward.4} parent=31 // loop_footer
                %s171 = sadd.s32 1, %s167
              $region38: #{generator_forward.4} parent=31 // loop_footer_branch
                %166 = sbr.rel target = $region34
              $region39: #{generator_forward.4} parent=31 // loop_exit
                _
            $region32: #{generator_forward.4} parent=27 // pred_fallthru
              _
            // Predicated region
            $region40: #{generator_forward.4} parent=27 // pred_check
              _
            $region41: #{generator_forward.4} parent=27 // pred_check_branch
              %207 = sbr.rel target = $region43
            $region42: #{generator_forward.4} parent=27 // pred_region
              _
            $region43: #{generator_forward.4} parent=27 // pred_fallthru
              _
          $region28: #{generator_forward.4} parent=23 // pred_fallthru
            _
          %208 = vnop
        $region24: #{generator_forward.4} parent=19 // pred_fallthru
          _
        // Predicated region
        $region44: #{generator_forward.4} parent=19 // pred_check
          %p209 = pneg %p93
        $region45: #{generator_forward.4} parent=19 // pred_check_branch
          %211 = sbr.rel (%p209) target = $region47
        $region46: #{generator_forward.4} parent=19 // pred_region
          %s212 = smul.u32 4, %s17
          %p213 = scmp.lt.s32.totalorder %s212, 7
          %s214 = scalar_select %p213, %s212, 7
          %s215 = smul.addr %s214, 4
          %s216 = scalar_lea.vmem %s2, %s215
          %s217 = smul.u32 4, %s17
        $region47: #{generator_forward.4} parent=19 // pred_fallthru
          _
      $region20: #{generator_forward.4} parent=5 // pred_fallthru
        _
      %p218 = scmp.le.s32.totalorder 1, %s9
      %p219 = scmp.lt.s32.totalorder %s9, 3
      %p220 = pnand %p218, %p219
      %p221 = pneg %p220
      // Predicated region
      $region48: #{generator_forward.4} parent=5 // pred_check
        _
      $region49: #{generator_forward.4} parent=5 // pred_check_branch
        %223 = sbr.rel (%p220) target = $region51
      $region50: #{generator_forward.4} parent=5 // pred_region
        %s224 = ssub.s32 %s9, 1
        %s225 = sand.u32 %s60, 1
        %s226 = sand.u32 %s60, 1
        %s227 = smul.addr %s226, 128
        %s228 = scalar_lea.vmem [#allocation2], %s227
        // Predicated region
        $region52: #{generator_forward.4} parent=50 // pred_check
          %p229 = pneg %p73
        $region53: #{generator_forward.4} parent=50 // pred_check_branch
          %231 = sbr.rel (%p229) target = $region55
        $region54: #{generator_forward.4} parent=50 // pred_region
          _
        $region55: #{generator_forward.4} parent=50 // pred_fallthru
          _
        %p232 = scmp.lt.s32.totalorder %s18, 0
        %s233 = scalar_select %p232, %s18, 0
        %s234 = scalar_lea.vmem %s0, %s233
        %p235 = pneg %p47
        %p236 = pneg %p44
        %s237 = sand.u32 %s60, 1
        %s238 = sand.u32 %s60, 1
        %s239 = smul.addr %s238, 128
        %s240 = scalar_lea.vmem [#allocation2], %s239
        %p241 = pneg %p73
        %p242 = pneg %p70
        %s243 = smul.u32 4, %s19
        %p244 = scmp.lt.s32.totalorder %s243, 7
        %s245 = scalar_select %p244, %s243, 7
        %s246 = smul.addr %s245, 4
        %s247 = scalar_lea.vmem %s2, %s246
        %p248 = pneg %p99
        %p249 = pneg %p96
        %p250 = pneg %p127
        %p251 = pneg %p124
        %s252 = smul.u32 4, %s19
        %p253 = scmp.lt.s32.totalorder %s18, 0
        %s254 = scalar_select %p253, %s18, 0
        %p255 = scmp.lt.s32.totalorder %s252, 7
        %s256 = scalar_select %p255, %s252, 7
        %s257 = smul.addr %s254, 8
        %s258 = sadd.s32 %s256, %s257
        %s259 = smul.addr %s258, 2
        %s260 = scalar_lea.vmem %s3, %s259
        %p261 = scmp.lt.s32.totalorder %s18, 0
        %s262 = scalar_select %p261, %s18, 0
        %s263 = scalar_lea.vmem %s0, %s262
        %s264 = smul.u32 4, %s19
        %s265 = smul.u32 4, %s19
        %p266 = scmp.lt.s32.totalorder %s265, 7
        %s267 = scalar_select %p266, %s265, 7
        %s268 = smul.addr %s267, 4
        %s269 = scalar_lea.vmem %s2, %s268
        %s270 = smul.u32 4, %s19
        %s271 = smul.u32 4, %s19
        %p272 = scmp.lt.s32.totalorder %s18, 0
        %s273 = scalar_select %p272, %s18, 0
        %p274 = scmp.lt.s32.totalorder %s271, 7
        %s275 = scalar_select %p274, %s271, 7
        %s276 = smul.addr %s273, 8
        %s277 = sadd.s32 %s275, %s276
        %s278 = smul.addr %s277, 2
        %s279 = scalar_lea.vmem %s3, %s278
        %s280 = smul.u32 4, %s19
        %v282 = vld [vmem:[%s263] sm:$0x1]
        %v283 = vld [vmem:[%s228] sm:$0xff]
        %v284 = vld [vmem:[%s228 + $0x8] sm:$0xff]
        %v285 = vld [vmem:[%s228 + $0x10] sm:$0xff]
        %v286 = vld [vmem:[%s228 + $0x18] sm:$0xff]
        %v287 = vld [vmem:[%s228 + $0x20] sm:$0xff]
        %v288 = vld [vmem:[%s228 + $0x28] sm:$0xff]
        %v289 = vld [vmem:[%s228 + $0x30] sm:$0xff]
        %v290 = vld [vmem:[%s228 + $0x38] sm:$0xff]
        %v291 = vld [vmem:[%s228 + $0x40] sm:$0xff]
        %v292 = vld [vmem:[%s228 + $0x48] sm:$0xff]
        %v293 = vld [vmem:[%s228 + $0x50] sm:$0xff]
        %v294 = vld [vmem:[%s228 + $0x58] sm:$0xff]
        %v295 = vld [vmem:[%s228 + $0x60] sm:$0xff]
        %v296 = vld [vmem:[%s228 + $0x68] sm:$0xff]
        %v297 = vld [vmem:[%s228 + $0x70] sm:$0xff]
        %v298 = vld [vmem:[%s228 + $0x78] sm:$0xff]
        %v299 = vld [vmem:[%s269] ss:$4 sm:$0xf]
        %v301 = vlaneseq
        %v302 = vshrl.u32 %v301, 7
        %v303 = vsub.s32 0, %v302
        %v304 = vrot.slane %v299, %v303
        %v305 = vlaneseq
        %v306 = vshrl.u32 %v305, 7
        %v307 = vsub.s32 1, %v306
        %v308 = vrot.slane %v299, %v307
        %v309 = vlaneseq
        %v310 = vshrl.u32 %v309, 7
        %v311 = vsub.s32 2, %v310
        %v312 = vrot.slane %v299, %v311
        %v313 = vlaneseq
        %v314 = vshrl.u32 %v313, 7
        %v315 = vsub.s32 3, %v314
        %v316 = vrot.slane %v299, %v315
        %v337 = vunpack.c.l.b16 %v283
        %v338 = vunpack.c.h.b16 %v283
        %v339 = vunpack.c.l.b16 %v284
        %v340 = vunpack.c.h.b16 %v284
        %v341 = vunpack.c.l.b16 %v285
        %v342 = vunpack.c.h.b16 %v285
        %v343 = vunpack.c.l.b16 %v286
        %v344 = vunpack.c.h.b16 %v286
        %v345 = vunpack.c.l.b16 %v287
        %v346 = vunpack.c.h.b16 %v287
        %v347 = vunpack.c.l.b16 %v288
        %v348 = vunpack.c.h.b16 %v288
        %v349 = vunpack.c.l.b16 %v289
        %v350 = vunpack.c.h.b16 %v289
        %v351 = vunpack.c.l.b16 %v290
        %v352 = vunpack.c.h.b16 %v290
        %v353 = vunpack.c.l.b16 %v291
        %v354 = vunpack.c.h.b16 %v291
        %v355 = vunpack.c.l.b16 %v292
        %v356 = vunpack.c.h.b16 %v292
        %v357 = vunpack.c.l.b16 %v293
        %v358 = vunpack.c.h.b16 %v293
        %v359 = vunpack.c.l.b16 %v294
        %v360 = vunpack.c.h.b16 %v294
        %v361 = vunpack.c.l.b16 %v295
        %v362 = vunpack.c.h.b16 %v295
        %v363 = vunpack.c.l.b16 %v296
        %v364 = vunpack.c.h.b16 %v296
        %v365 = vunpack.c.l.b16 %v297
        %v366 = vunpack.c.h.b16 %v297
        %v367 = vunpack.c.l.b16 %v298
        %v368 = vunpack.c.h.b16 %v298
        %v369 = vpack.c.b16 %v341, %v337
        %v370 = vpack.c.b16 %v342, %v338
        %v371 = vpack.c.b16 %v343, %v339
        %v372 = vpack.c.b16 %v344, %v340
        %v373 = vpack.c.b16 %v349, %v345
        %v374 = vpack.c.b16 %v350, %v346
        %v375 = vpack.c.b16 %v351, %v347
        %v376 = vpack.c.b16 %v352, %v348
        %v377 = vpack.c.b16 %v357, %v353
        %v378 = vpack.c.b16 %v358, %v354
        %v379 = vpack.c.b16 %v359, %v355
        %v380 = vpack.c.b16 %v360, %v356
        %v381 = vpack.c.b16 %v365, %v361
        %v382 = vpack.c.b16 %v366, %v362
        %v383 = vpack.c.b16 %v367, %v363
        %v384 = vpack.c.b16 %v368, %v364
        %vm401 = vcmask 523264
        %v403 = vsel %vm401, %v282, 0
        %405 = vmatprep.subr.bf16.mxu0 %v370
        %406 = vmatpush1.bf16.msra.mxu0 %v369
        %407 = vmatprep.subr.bf16.mxu0 %v374
        %408 = vmatpush1.bf16.msra.mxu0 %v373
        %409 = vmatprep.subr.bf16.mxu0 %v378
        %410 = vmatpush1.bf16.msra.mxu0 %v377
        %411 = vmatprep.subr.bf16.mxu0 %v382
        %412 = vmatpush1.bf16.msra.mxu0 %v381
        %413 = vmatprep.subr.bf16.mxu0 0
        %414 = vmatpush1.bf16.msra.mxu0 0
        %415 = vmatprep.subr.bf16.mxu0 0
        %416 = vmatpush1.bf16.msra.mxu0 0
        %417 = vmatprep.subr.bf16.mxu0 0
        %418 = vmatpush1.bf16.msra.mxu0 0
        %419 = vmatprep.subr.bf16.mxu0 0
        %420 = vmatpush1.bf16.msra.mxu0 0
        %421 = vmatprep.subr.bf16.mxu0 0
        %422 = vmatpush1.bf16.msra.mxu0 0
        %423 = vmatprep.subr.bf16.mxu0 0
        %424 = vmatpush1.bf16.msra.mxu0 0
        %425 = vmatprep.subr.bf16.mxu0 0
        %426 = vmatpush1.bf16.msra.mxu0 0
        %427 = vmatprep.subr.bf16.mxu0 0
        %428 = vmatpush1.bf16.msra.mxu0 0
        %429 = vmatprep.subr.bf16.mxu0 0
        %430 = vmatpush1.bf16.msra.mxu0 0
        %431 = vmatprep.subr.bf16.mxu0 0
        %432 = vmatpush1.bf16.msra.mxu0 0
        %433 = vmatprep.subr.bf16.mxu0 0
        %434 = vmatpush1.bf16.msra.mxu0 0
        %435 = vmatprep.subr.bf16.mxu0 0
        %436 = vmatpush1.bf16.msra.mxu0 0
        %437 = vmatprep.mubr.bf16.mxu0 0
        %438 = vmatmul.mubr.bf16.gmra.mrb[0].mxu0 %v403
        %v439 = vpop.f32.mrb[0].mxu0
        %v440 = vadd.f32 %v304, %v439
        %v441 = vpop.f32.mrb[0].mxu0
        %v442 = vadd.f32 %v308, %v441
        %v443 = vpop.f32.mrb[0].mxu0
        %v444 = vpop.f32.mrb[0].mxu0
        %445 = vdwg.mxu0
        %446 = vmatprep.subr.bf16.mxu0 %v372
        %447 = vmatpush1.bf16.msra.mxu0 %v371
        %448 = vmatprep.subr.bf16.mxu0 %v376
        %449 = vmatpush1.bf16.msra.mxu0 %v375
        %450 = vmatprep.subr.bf16.mxu0 %v380
        %451 = vmatpush1.bf16.msra.mxu0 %v379
        %452 = vmatprep.subr.bf16.mxu0 %v384
        %453 = vmatpush1.bf16.msra.mxu0 %v383
        %454 = vmatprep.subr.bf16.mxu0 0
        %455 = vmatpush1.bf16.msra.mxu0 0
        %456 = vmatprep.subr.bf16.mxu0 0
        %457 = vmatpush1.bf16.msra.mxu0 0
        %458 = vmatprep.subr.bf16.mxu0 0
        %459 = vmatpush1.bf16.msra.mxu0 0
        %460 = vmatprep.subr.bf16.mxu0 0
        %461 = vmatpush1.bf16.msra.mxu0 0
        %462 = vmatprep.subr.bf16.mxu0 0
        %463 = vmatpush1.bf16.msra.mxu0 0
        %464 = vmatprep.subr.bf16.mxu0 0
        %465 = vmatpush1.bf16.msra.mxu0 0
        %466 = vmatprep.subr.bf16.mxu0 0
        %467 = vmatpush1.bf16.msra.mxu0 0
        %468 = vmatprep.subr.bf16.mxu0 0
        %469 = vmatpush1.bf16.msra.mxu0 0
        %470 = vmatprep.subr.bf16.mxu0 0
        %471 = vmatpush1.bf16.msra.mxu0 0
        %472 = vmatprep.subr.bf16.mxu0 0
        %473 = vmatpush1.bf16.msra.mxu0 0
        %474 = vmatprep.subr.bf16.mxu0 0
        %475 = vmatpush1.bf16.msra.mxu0 0
        %476 = vmatprep.subr.bf16.mxu0 0
        %477 = vmatpush1.bf16.msra.mxu0 0
        %478 = vmatprep.mubr.bf16.mxu0 0
        %479 = vmatmul.mubr.bf16.gmra.mrb[0].mxu0 %v403
        %v480 = vpop.f32.mrb[0].mxu0
        %v481 = vadd.f32 %v312, %v480
        %v482 = vpop.f32.mrb[0].mxu0
        %v483 = vadd.f32 %v316, %v482
        %v484 = vpop.f32.mrb[0].mxu0
        %v485 = vpop.f32.mrb[0].mxu0
        %486 = vdwg.mxu0
        %vm487 = vcmask 1041408
        %v488 = vsel %vm487, %v440, 0.0
        %v489 = vrot.slane %v488, 4
        %v490 = vadd.f32 %v488, %v489
        %v491 = vrot.slane %v490, 2
        %v492 = vadd.f32 %v490, %v491
        %v493 = vrot.slane %v492, 1
        %v494 = vadd.f32 %v492, %v493
        %v495 = vsel %vm487, %v442, 0.0
        %v496 = vrot.slane %v495, 4
        %v497 = vadd.f32 %v495, %v496
        %v498 = vrot.slane %v497, 2
        %v499 = vadd.f32 %v497, %v498
        %v500 = vrot.slane %v499, 1
        %v501 = vadd.f32 %v499, %v500
        %v502 = vsel %vm487, %v481, 0.0
        %v503 = vrot.slane %v502, 4
        %v504 = vadd.f32 %v502, %v503
        %v505 = vrot.slane %v504, 2
        %v506 = vadd.f32 %v504, %v505
        %v507 = vrot.slane %v506, 1
        %v508 = vadd.f32 %v506, %v507
        %v509 = vsel %vm487, %v483, 0.0
        %v510 = vrot.slane %v509, 4
        %v511 = vadd.f32 %v509, %v510
        %v512 = vrot.slane %v511, 2
        %v513 = vadd.f32 %v511, %v512
        %v514 = vrot.slane %v513, 1
        %v515 = vadd.f32 %v513, %v514
        %v516 = vrcp.pop 2.0
        %v517 = vmul.f32 %v494, %v516
        %v518 = vmul.f32 %v501, %v516
        %v519 = vmul.f32 %v508, %v516
        %v520 = vmul.f32 %v515, %v516
        %v521 = vsub.f32 %v440, %v517
        %v522 = vsub.f32 %v442, %v518
        %v523 = vsub.f32 %v481, %v519
        %v524 = vsub.f32 %v483, %v520
        %v525 = vmul.f32 %v521, %v521
        %v526 = vmul.f32 %v522, %v522
        %v527 = vmul.f32 %v523, %v523
        %v528 = vmul.f32 %v524, %v524
        %v529 = vsel %vm487, %v525, 0.0
        %v530 = vrot.slane %v529, 4
        %v531 = vadd.f32 %v529, %v530
        %v532 = vrot.slane %v531, 2
        %v533 = vadd.f32 %v531, %v532
        %v534 = vrot.slane %v533, 1
        %v535 = vadd.f32 %v533, %v534
        %v536 = vsel %vm487, %v526, 0.0
        %v537 = vrot.slane %v536, 4
        %v538 = vadd.f32 %v536, %v537
        %v539 = vrot.slane %v538, 2
        %v540 = vadd.f32 %v538, %v539
        %v541 = vrot.slane %v540, 1
        %v542 = vadd.f32 %v540, %v541
        %v543 = vsel %vm487, %v527, 0.0
        %v544 = vrot.slane %v543, 4
        %v545 = vadd.f32 %v543, %v544
        %v546 = vrot.slane %v545, 2
        %v547 = vadd.f32 %v545, %v546
        %v548 = vrot.slane %v547, 1
        %v549 = vadd.f32 %v547, %v548
        %v550 = vsel %vm487, %v528, 0.0
        %v551 = vrot.slane %v550, 4
        %v552 = vadd.f32 %v550, %v551
        %v553 = vrot.slane %v552, 2
        %v554 = vadd.f32 %v552, %v553
        %v555 = vrot.slane %v554, 1
        %v556 = vadd.f32 %v554, %v555
        %v557 = vmul.f32 %v535, %v516
        %v558 = vmul.f32 %v542, %v516
        %v559 = vmul.f32 %v549, %v516
        %v560 = vmul.f32 %v556, %v516
        %v561 = vadd.f32 %v557, 1e-05
        %v562 = vadd.f32 %v558, 1e-05
        %v563 = vadd.f32 %v559, 1e-05
        %v564 = vadd.f32 %v560, 1e-05
        %v565 = vrsqrt.pop %v561
        %v566 = vrsqrt.pop %v562
        %v567 = vrsqrt.pop %v563
        %v568 = vrsqrt.pop %v564
        %v569 = vmul.f32 %v521, %v565
        %v570 = vmul.f32 %v522, %v566
        %v571 = vmul.f32 %v523, %v567
        %v572 = vmul.f32 %v524, %v568
        %s573 = scalar_lea.vmem %s269, 1
        %v574 = vld [vmem:[%s573] ss:$4 sm:$0xf]
        %v576 = vlaneseq
        %v577 = vshrl.u32 %v576, 7
        %v578 = vsub.s32 0, %v577
        %v579 = vrot.slane %v574, %v578
        %v580 = vlaneseq
        %v581 = vshrl.u32 %v580, 7
        %v582 = vsub.s32 1, %v581
        %v583 = vrot.slane %v574, %v582
        %v584 = vlaneseq
        %v585 = vshrl.u32 %v584, 7
        %v586 = vsub.s32 2, %v585
        %v587 = vrot.slane %v574, %v586
        %v588 = vlaneseq
        %v589 = vshrl.u32 %v588, 7
        %v590 = vsub.s32 3, %v589
        %v591 = vrot.slane %v574, %v590
        %v596 = vmul.f32 %v569, %v579
        %v597 = vmul.f32 %v570, %v583
        %v598 = vmul.f32 %v571, %v587
        %v599 = vmul.f32 %v572, %v591
        %s600 = scalar_lea.vmem %s269, 2
        %v601 = vld [vmem:[%s600] ss:$4 sm:$0xf]
        %v603 = vlaneseq
        %v604 = vshrl.u32 %v603, 7
        %v605 = vsub.s32 0, %v604
        %v606 = vrot.slane %v601, %v605
        %v607 = vlaneseq
        %v608 = vshrl.u32 %v607, 7
        %v609 = vsub.s32 1, %v608
        %v610 = vrot.slane %v601, %v609
        %v611 = vlaneseq
        %v612 = vshrl.u32 %v611, 7
        %v613 = vsub.s32 2, %v612
        %v614 = vrot.slane %v601, %v613
        %v615 = vlaneseq
        %v616 = vshrl.u32 %v615, 7
        %v617 = vsub.s32 3, %v616
        %v618 = vrot.slane %v601, %v617
        %v623 = vadd.f32 %v596, %v606
        %v624 = vadd.f32 %v597, %v610
        %v625 = vadd.f32 %v598, %v614
        %v626 = vadd.f32 %v599, %v618
        %v627 = vmax.f32 %v623, 0.0
        %v628 = vmax.f32 %v624, 0.0
        %v629 = vmax.f32 %v625, 0.0
        %v630 = vmax.f32 %v626, 0.0
        %v635 = vcombine.low %v627, %v628
        %v636 = vcombine.low %v629, %v630
        %v638 = vunpack.c.l.s4 1983009808
        %v639 = vunpack.c.0.s8 %v638
        %v640 = vlaneseq
        %v641 = vshrl.u32 %v640, 7
        %v642 = vsub.s32 %v639, %v641
        %v643 = vrot.slane %v635, %v642
        %v645 = vunpack.c.l.s4 1983009808
        %v646 = vunpack.c.0.s8 %v645
        %v647 = vlaneseq
        %v648 = vshrl.u32 %v647, 7
        %v649 = vsub.s32 %v646, %v648
        %v650 = vrot.slane %v636, %v649
        %v651 = vcombine.low %v643, %v650
        %653 = vst [vmem:[%s279] sm:$0xff] %v651
        %s654 = smul.u32 4, %s19
        %p655 = scmp.lt.s32.totalorder %s18, 0
        %s656 = scalar_select %p655, %s18, 0
        %p657 = scmp.lt.s32.totalorder %s654, 7
        %s658 = scalar_select %p657, %s654, 7
        %s659 = smul.addr %s656, 8
        %s660 = sadd.s32 %s658, %s659
        %s661 = smul.addr %s660, 2
        %s662 = scalar_lea.vmem %s3, %s661
        // Predicated region
        $region56: #{generator_forward.4} parent=50 // pred_check
          %p663 = pneg %p124
        $region57: #{generator_forward.4} parent=50 // pred_check_branch
          %665 = sbr.rel (%p663) target = $region59
        $region58: #{generator_forward.4} parent=50 // pred_region
          %s666 = smul.u32 4, %s19
        $region59: #{generator_forward.4} parent=50 // pred_fallthru
          _
      $region51: #{generator_forward.4} parent=5 // pred_fallthru
        _
      %p667 = scmp.le.s32.totalorder 2, %s9
      // Predicated region
      $region60: #{generator_forward.4} parent=5 // pred_check
        %p668 = pneg %p667
      $region61: #{generator_forward.4} parent=5 // pred_check_branch
        %670 = sbr.rel (%p668) target = $region63
      $region62: #{generator_forward.4} parent=5 // pred_region
        %s671 = ssub.s32 %s9, 2
        // Predicated region
        $region64: #{generator_forward.4} parent=62 // pred_check
          %p672 = pneg %p130
        $region65: #{generator_forward.4} parent=62 // pred_check_branch
          %674 = sbr.rel (%p672) target = $region67
        $region66: #{generator_forward.4} parent=62 // pred_region
          %s675 = smul.u32 4, %s21
          %p676 = scmp.lt.s32.totalorder %s20, 0
          %s677 = scalar_select %p676, %s20, 0
          %p678 = scmp.lt.s32.totalorder %s675, 7
          %s679 = scalar_select %p678, %s675, 7
          %s680 = smul.addr %s677, 8
          %s681 = sadd.s32 %s679, %s680
          %s682 = smul.addr %s681, 2
          %s683 = scalar_lea.vmem %s3, %s682
        $region67: #{generator_forward.4} parent=62 // pred_fallthru
          _
      $region63: #{generator_forward.4} parent=5 // pred_fallthru
        _
    $region6: #{generator_forward.4} parent=1 // loop_footer
      %s13 = sadd.s32 1, %s9
    $region7: #{generator_forward.4} parent=1 // loop_footer_branch
      %8 = sbr.rel target = $region3
    $region8: #{generator_forward.4} parent=1 // loop_exit
      _

// kernel: generator_forward.5
$region0: #{generator_forward.5}
  #allocation0 [shape = 'u32[]', space=smem, size = 0x4, offset = 0x4, fixed_abs, tag = 'smem constant byte address 0x4 - core index']
  #allocation1 [shape = 'u32[144,128]{1,0:T(1,128)}', space=vmem, size = 0x12000, scoped, tag = 'internal scratch']
  %s0 = inlined_call_operand.vmem [shape: bf16[2,1024], index: 0, kind: input, shape index: {}]
  %s1 = inlined_call_operand.vmem [shape: bf16[1024,6272], index: 1, kind: input, shape index: {}]
  %s2 = inlined_call_operand.vmem [shape: f32[3,6272], index: 2, kind: input, shape index: {}]
  %s3 = inlined_call_operand.vmem [shape: f32[2,6272], index: 3, kind: output, shape index: {}]
  %s4 = sld [smem:[#allocation0]]
  $region71: #{generator_forward.5} parent=0
    _
  %s6 = ssub.s32 1, %s4
  %s7 = scalar_select 0, %s6, %s4
  $region1: #{generator_forward.5} parent=0
    #allocation2 [shape = 'u8[3670016]{0}', space=vmem, size = 0x380000, scoped, tag = 'input window, operand 1']
    loop: start=0, step=1, limit=9
    $region2: #{generator_forward.5} parent=1 // loop_pre_header
      _
    $region3: #{generator_forward.5} parent=1 // loop_header
      %s9 = sphi 0, %s13
      %p10 = scmp.ge.s32.totalorder %s9, 9
      %s16 = sphi 0, %s28
      %s17 = sphi 0, %s24
      %s18 = sphi 0, %s16
      %s19 = sphi 0, %s17
      %s20 = sphi 0, %s18
      %s21 = sphi 0, %s19
      %s31 = sphi 0, %s33
      %s34 = sphi 0, %s31
      %s35 = sphi 0, %s34
      %s51 = sphi 0, %s35
      %s57 = sphi 0, %s59
      %s60 = sphi 0, %s57
      %s61 = sphi 0, %s60
      %s77 = sphi 0, %s61
      %s83 = sphi 0, %s85
      %s86 = sphi 0, %s83
      %s87 = sphi 0, %s86
      %s103 = sphi 0, %s87
      %s111 = sphi 0, %s113
      %s114 = sphi 0, %s111
      %s115 = sphi 0, %s114
      %s131 = sphi 0, %s115
    $region4: #{generator_forward.5} parent=1 // loop_header_branch
      %12 = sbr.rel (%p10) target = $region8
    $region5: #{generator_forward.5} parent=1 // loop_body
      %s14 = ssub.s32 %s9, 1
      %s15 = ssub.s32 %s9, 2
      %s22 = sadd.s32 1, %s17
      %p23 = scmp.ge.s32.totalorder %s22, 7
      %s24 = scalar_select %p23, 0, %s22
      %s25 = sadd.s32 1, %s16
      %s26 = scalar_select %p23, %s25, %s16
      %p27 = scmp.ge.s32.totalorder %s26, 1
      %s28 = scalar_select %p27, 0, %s26
      %s29 = ssub.s32 %s16, %s28
      %p30 = scmp.eq.s32.totalorder %s29, 0
      %s32 = sadd.s32 %s31, 1
      %s33 = scalar_select %p30, %s31, %s32
      %p36 = pneg %p30
      %p37 = scmp.eq.s32.totalorder %s9, 6
      %p38 = por %p36, %p37
      %p39 = scmp.ne.s32.totalorder %s31, %s34
      %p40 = scmp.eq.s32.totalorder %s9, 0
      %p41 = por %p39, %p40
      %p42 = scmp.ne.s32.totalorder %s31, %s34
      %p43 = scmp.eq.s32.totalorder %s14, 6
      %p44 = por %p42, %p43
      %p45 = scmp.ne.s32.totalorder %s34, %s35
      %p46 = scmp.eq.s32.totalorder %s14, 0
      %p47 = por %p45, %p46
      %p48 = scmp.ne.s32.totalorder %s34, %s35
      %p49 = scmp.eq.s32.totalorder %s15, 6
      %p50 = por %p48, %p49
      %p52 = scmp.ne.s32.totalorder %s35, %s51
      %p53 = scmp.eq.s32.totalorder %s15, 0
      %p54 = por %p52, %p53
      %s55 = ssub.s32 %s17, %s24
      %p56 = scmp.eq.s32.totalorder %s55, 0
      %s58 = sadd.s32 %s57, 1
      %s59 = scalar_select %p56, %s57, %s58
      %p62 = pneg %p56
      %p63 = scmp.eq.s32.totalorder %s9, 6
      %p64 = por %p62, %p63
      %p65 = scmp.ne.s32.totalorder %s57, %s60
      %p66 = scmp.eq.s32.totalorder %s9, 0
      %p67 = por %p65, %p66
      %p68 = scmp.ne.s32.totalorder %s57, %s60
      %p69 = scmp.eq.s32.totalorder %s14, 6
      %p70 = por %p68, %p69
      %p71 = scmp.ne.s32.totalorder %s60, %s61
      %p72 = scmp.eq.s32.totalorder %s14, 0
      %p73 = por %p71, %p72
      %p74 = scmp.ne.s32.totalorder %s60, %s61
      %p75 = scmp.eq.s32.totalorder %s15, 6
      %p76 = por %p74, %p75
      %p78 = scmp.ne.s32.totalorder %s61, %s77
      %p79 = scmp.eq.s32.totalorder %s15, 0
      %p80 = por %p78, %p79
      %s81 = ssub.s32 %s17, %s24
      %p82 = scmp.eq.s32.totalorder %s81, 0
      %s84 = sadd.s32 %s83, 1
      %s85 = scalar_select %p82, %s83, %s84
      %p88 = pneg %p82
      %p89 = scmp.eq.s32.totalorder %s9, 6
      %p90 = por %p88, %p89
      %p91 = scmp.ne.s32.totalorder %s83, %s86
      %p92 = scmp.eq.s32.totalorder %s9, 0
      %p93 = por %p91, %p92
      %p94 = scmp.ne.s32.totalorder %s83, %s86
      %p95 = scmp.eq.s32.totalorder %s14, 6
      %p96 = por %p94, %p95
      %p97 = scmp.ne.s32.totalorder %s86, %s87
      %p98 = scmp.eq.s32.totalorder %s14, 0
      %p99 = por %p97, %p98
      %p100 = scmp.ne.s32.totalorder %s86, %s87
      %p101 = scmp.eq.s32.totalorder %s15, 6
      %p102 = por %p100, %p101
      %p104 = scmp.ne.s32.totalorder %s87, %s103
      %p105 = scmp.eq.s32.totalorder %s15, 0
      %p106 = por %p104, %p105
      %s107 = ssub.s32 %s16, %s28
      %s108 = ssub.s32 %s17, %s24
      %s109 = sor.u32 %s107, %s108
      %p110 = scmp.eq.s32.totalorder %s109, 0
      %s112 = sadd.s32 %s111, 1
      %s113 = scalar_select %p110, %s111, %s112
      %p116 = pneg %p110
      %p117 = scmp.eq.s32.totalorder %s9, 6
      %p118 = por %p116, %p117
      %p119 = scmp.ne.s32.totalorder %s111, %s114
      %p120 = scmp.eq.s32.totalorder %s9, 0
      %p121 = por %p119, %p120
      %p122 = scmp.ne.s32.totalorder %s111, %s114
      %p123 = scmp.eq.s32.totalorder %s14, 6
      %p124 = por %p122, %p123
      %p125 = scmp.ne.s32.totalorder %s114, %s115
      %p126 = scmp.eq.s32.totalorder %s14, 0
      %p127 = por %p125, %p126
      %p128 = scmp.ne.s32.totalorder %s114, %s115
      %p129 = scmp.eq.s32.totalorder %s15, 6
      %p130 = por %p128, %p129
      %p132 = scmp.ne.s32.totalorder %s115, %s131
      %p133 = scmp.eq.s32.totalorder %s15, 0
      %p134 = por %p132, %p133
      %p135 = scmp.le.s32.totalorder 1, %s9
      %p136 = scmp.lt.s32.totalorder %s9, 8
      %p137 = pnand %p135, %p136
      %p138 = pneg %p137
      // Predicated region
      $region9: #{generator_forward.5} parent=5 // pred_check
        _
      $region10: #{generator_forward.5} parent=5 // pred_check_branch
        %140 = sbr.rel (%p137) target = $region12
      $region11: #{generator_forward.5} parent=5 // pred_region
        %s141 = ssub.s32 %s9, 1
        // Predicated region
        $region13: #{generator_forward.5} parent=11 // pred_check
          %p142 = pneg %p47
        $region14: #{generator_forward.5} parent=11 // pred_check_branch
          %144 = sbr.rel (%p142) target = $region16
        $region15: #{generator_forward.5} parent=11 // pred_region
          %p145 = scmp.lt.s32.totalorder %s18, 0
          %s146 = scalar_select %p145, %s18, 0
          %s147 = smul.addr %s146, 8
          %s148 = scalar_lea.vmem %s0, %s147
        $region16: #{generator_forward.5} parent=11 // pred_fallthru
          _
      $region12: #{generator_forward.5} parent=5 // pred_fallthru
        _
      %p149 = scmp.lt.s32.totalorder %s9, 7
      // Predicated region
      $region17: #{generator_forward.5} parent=5 // pred_check
        %p150 = pneg %p149
      $region18: #{generator_forward.5} parent=5 // pred_check_branch
        %152 = sbr.rel (%p150) target = $region20
      $region19: #{generator_forward.5} parent=5 // pred_region
        // Predicated region
        $region21: #{generator_forward.5} parent=19 // pred_check
          %p153 = pneg %p67
        $region22: #{generator_forward.5} parent=19 // pred_check_branch
          %155 = sbr.rel (%p153) target = $region24
        $region23: #{generator_forward.5} parent=19 // pred_region
          %s156 = sand.u32 %s57, 1
          %s157 = sand.u32 %s57, 1
          %s158 = smul.addr %s157, 3584
          %s159 = scalar_lea.vmem [#allocation2], %s158
          %s160 = smul.u32 7, %s17
          %s161 = smul.addr %s160, 4
          %s162 = scalar_lea.vmem %s1, %s161
          // Predicated region
          $region25: #{generator_forward.5} parent=23 // pred_check
            _
          $region26: #{generator_forward.5} parent=23 // pred_check_branch
            %164 = sbr.rel (0) target = $region28
          $region27: #{generator_forward.5} parent=23 // pred_region
            // Predicated region
            $region29: #{generator_forward.5} parent=27 // pred_check
              _
            $region30: #{generator_forward.5} parent=27 // pred_check_branch
              %166 = sbr.rel (0) target = $region32
            $region31: #{generator_forward.5} parent=27 // pred_region
              %s167 = scalar_lea.vmem %s162, 24
              %s168 = scalar_lea.vmem %s159, 24 [#allocation2]
              loop: start=0, step=1, limit=1
              $region33: #{generator_forward.5} parent=31 // loop_pre_header
                _
              $region34: #{generator_forward.5} parent=31 // loop_header
                %s170 = sphi 0, %s174
                %p171 = scmp.ge.s32.totalorder %s170, 1
                %s175 = sphi %s162, %s162
                %s176 = sphi %s159, %s159
              $region35: #{generator_forward.5} parent=31 // loop_header_branch
                %173 = sbr.rel (%p171) target = $region39
              $region36: #{generator_forward.5} parent=31 // loop_body
                %v177 = vld [vmem:[%s175] sm:$0xff]
                %178 = vst [vmem:[%s176] sm:$0xff] %v177
                %v179 = vld [vmem:[%s175 + $0x8] sm:$0xff]
                %180 = vst [vmem:[%s176 + $0x8] sm:$0xff] %v179
                %v181 = vld [vmem:[%s175 + $0x10] sm:$0xff]
                %182 = vst [vmem:[%s176 + $0x10] sm:$0xff] %v181
                %v183 = vld [vmem:[%s175 + $0xc4] sm:$0xff]
                %184 = vst [vmem:[%s176 + $0x1c] sm:$0xff] %v183
                %v185 = vld [vmem:[%s175 + $0xcc] sm:$0xff]
                %186 = vst [vmem:[%s176 + $0x24] sm:$0xff] %v185
                %v187 = vld [vmem:[%s175 + $0xd4] sm:$0xff]
                %188 = vst [vmem:[%s176 + $0x2c] sm:$0xff] %v187
                %v189 = vld [vmem:[%s175 + $0x188] sm:$0xff]
                %190 = vst [vmem:[%s176 + $0x38] sm:$0xff] %v189
                %v191 = vld [vmem:[%s175 + $0x190] sm:$0xff]
                %192 = vst [vmem:[%s176 + $0x40] sm:$0xff] %v191
                %v193 = vld [vmem:[%s175 + $0x198] sm:$0xff]
                %194 = vst [vmem:[%s176 + $0x48] sm:$0xff] %v193
                %v195 = vld [vmem:[%s175 + $0x24c] sm:$0xff]
                %196 = vst [vmem:[%s176 + $0x54] sm:$0xff] %v195
                %v197 = vld [vmem:[%s175 + $0x254] sm:$0xff]
                %198 = vst [vmem:[%s176 + $0x5c] sm:$0xff] %v197
                %v199 = vld [vmem:[%s175 + $0x25c] sm:$0xff]
                %200 = vst [vmem:[%s176 + $0x64] sm:$0xff] %v199
                %v201 = vld [vmem:[%s175 + $0x310] sm:$0xff]
                %202 = vst [vmem:[%s176 + $0x70] sm:$0xff] %v201
                %v203 = vld [vmem:[%s175 + $0x318] sm:$0xff]
                %204 = vst [vmem:[%s176 + $0x78] sm:$0xff] %v203
                %v205 = vld [vmem:[%s175 + $0x320] sm:$0xff]
                %206 = vst [vmem:[%s176 + $0x80] sm:$0xff] %v205
                %v207 = vld [vmem:[%s175 + $0x3d4] sm:$0xff]
                %208 = vst [vmem:[%s176 + $0x8c] sm:$0xff] %v207
                %v209 = vld [vmem:[%s175 + $0x3dc] sm:$0xff]
                %210 = vst [vmem:[%s176 + $0x94] sm:$0xff] %v209
                %v211 = vld [vmem:[%s175 + $0x3e4] sm:$0xff]
                %212 = vst [vmem:[%s176 + $0x9c] sm:$0xff] %v211
                %v213 = vld [vmem:[%s175 + $0x498] sm:$0xff]
                %214 = vst [vmem:[%s176 + $0xa8] sm:$0xff] %v213
                %v215 = vld [vmem:[%s175 + $0x4a0] sm:$0xff]
                %216 = vst [vmem:[%s176 + $0xb0] sm:$0xff] %v215
                %v217 = vld [vmem:[%s175 + $0x4a8] sm:$0xff]
                %218 = vst [vmem:[%s176 + $0xb8] sm:$0xff] %v217
                %v219 = vld [vmem:[%s175 + $0x55c] sm:$0xff]
                %220 = vst [vmem:[%s176 + $0xc4] sm:$0xff] %v219
                %v221 = vld [vmem:[%s175 + $0x564] sm:$0xff]
                %222 = vst [vmem:[%s176 + $0xcc] sm:$0xff] %v221
                %v223 = vld [vmem:[%s175 + $0x56c] sm:$0xff]
                %224 = vst [vmem:[%s176 + $0xd4] sm:$0xff] %v223
                %v225 = vld [vmem:[%s175 + $0x620] sm:$0xff]
                %226 = vst [vmem:[%s176 + $0xe0] sm:$0xff] %v225
                %v227 = vld [vmem:[%s175 + $0x628] sm:$0xff]
                %228 = vst [vmem:[%s176 + $0xe8] sm:$0xff] %v227
                %v229 = vld [vmem:[%s175 + $0x630] sm:$0xff]
                %230 = vst [vmem:[%s176 + $0xf0] sm:$0xff] %v229
                %v231 = vld [vmem:[%s175 + $0x6e4] sm:$0xff]
                %232 = vst [vmem:[%s176 + $0xfc] sm:$0xff] %v231
                %v233 = vld [vmem:[%s175 + $0x6ec] sm:$0xff]
                %234 = vst [vmem:[%s176 + $0x104] sm:$0xff] %v233
                %v235 = vld [vmem:[%s175 + $0x6f4] sm:$0xff]
                %236 = vst [vmem:[%s176 + $0x10c] sm:$0xff] %v235
                %v237 = vld [vmem:[%s175 + $0x7a8] sm:$0xff]
                %238 = vst [vmem:[%s176 + $0x118] sm:$0xff] %v237
                %v239 = vld [vmem:[%s175 + $0x7b0] sm:$0xff]
                %240 = vst [vmem:[%s176 + $0x120] sm:$0xff] %v239
                %v241 = vld [vmem:[%s175 + $0x7b8] sm:$0xff]
                %242 = vst [vmem:[%s176 + $0x128] sm:$0xff] %v241
                %v243 = vld [vmem:[%s175 + $0x86c] sm:$0xff]
                %244 = vst [vmem:[%s176 + $0x134] sm:$0xff] %v243
                %v245 = vld [vmem:[%s175 + $0x874] sm:$0xff]
                %246 = vst [vmem:[%s176 + $0x13c] sm:$0xff] %v245
                %v247 = vld [vmem:[%s175 + $0x87c] sm:$0xff]
                %248 = vst [vmem:[%s176 + $0x144] sm:$0xff] %v247
                %v249 = vld [vmem:[%s175 + $0x930] sm:$0xff]
                %250 = vst [vmem:[%s176 + $0x150] sm:$0xff] %v249
                %v251 = vld [vmem:[%s175 + $0x938] sm:$0xff]
                %252 = vst [vmem:[%s176 + $0x158] sm:$0xff] %v251
                %v253 = vld [vmem:[%s175 + $0x940] sm:$0xff]
                %254 = vst [vmem:[%s176 + $0x160] sm:$0xff] %v253
                %v255 = vld [vmem:[%s175 + $0x9f4] sm:$0xff]
                %256 = vst [vmem:[%s176 + $0x16c] sm:$0xff] %v255
                %v257 = vld [vmem:[%s175 + $0x9fc] sm:$0xff]
                %258 = vst [vmem:[%s176 + $0x174] sm:$0xff] %v257
                %v259 = vld [vmem:[%s175 + $0xa04] sm:$0xff]
                %260 = vst [vmem:[%s176 + $0x17c] sm:$0xff] %v259
                %v261 = vld [vmem:[%s175 + $0xab8] sm:$0xff]
                %262 = vst [vmem:[%s176 + $0x188] sm:$0xff] %v261
                %v263 = vld [vmem:[%s175 + $0xac0] sm:$0xff]
                %264 = vst [vmem:[%s176 + $0x190] sm:$0xff] %v263
                %v265 = vld [vmem:[%s175 + $0xac8] sm:$0xff]
                %266 = vst [vmem:[%s176 + $0x198] sm:$0xff] %v265
                %v267 = vld [vmem:[%s175 + $0xb7c] sm:$0xff]
                %268 = vst [vmem:[%s176 + $0x1a4] sm:$0xff] %v267
                %v269 = vld [vmem:[%s175 + $0xb84] sm:$0xff]
                %270 = vst [vmem:[%s176 + $0x1ac] sm:$0xff] %v269
                %v271 = vld [vmem:[%s175 + $0xb8c] sm:$0xff]
                %272 = vst [vmem:[%s176 + $0x1b4] sm:$0xff] %v271
                %v273 = vld [vmem:[%s175 + $0xc40] sm:$0xff]
                %274 = vst [vmem:[%s176 + $0x1c0] sm:$0xff] %v273
                %v275 = vld [vmem:[%s175 + $0xc48] sm:$0xff]
                %276 = vst [vmem:[%s176 + $0x1c8] sm:$0xff] %v275
                %v277 = vld [vmem:[%s175 + $0xc50] sm:$0xff]
                %278 = vst [vmem:[%s176 + $0x1d0] sm:$0xff] %v277
                %v279 = vld [vmem:[%s175 + $0xd04] sm:$0xff]
                %280 = vst [vmem:[%s176 + $0x1dc] sm:$0xff] %v279
                %v281 = vld [vmem:[%s175 + $0xd0c] sm:$0xff]
                %282 = vst [vmem:[%s176 + $0x1e4] sm:$0xff] %v281
                %v283 = vld [vmem:[%s175 + $0xd14] sm:$0xff]
                %284 = vst [vmem:[%s176 + $0x1ec] sm:$0xff] %v283
                %v285 = vld [vmem:[%s175 + $0xdc8] sm:$0xff]
                %286 = vst [vmem:[%s176 + $0x1f8] sm:$0xff] %v285
                %v287 = vld [vmem:[%s175 + $0xdd0] sm:$0xff]
                %288 = vst [vmem:[%s176 + $0x200] sm:$0xff] %v287
                %v289 = vld [vmem:[%s175 + $0xdd8] sm:$0xff]
                %290 = vst [vmem:[%s176 + $0x208] sm:$0xff] %v289
                %v291 = vld [vmem:[%s175 + $0xe8c] sm:$0xff]
                %292 = vst [vmem:[%s176 + $0x214] sm:$0xff] %v291
                %v293 = vld [vmem:[%s175 + $0xe94] sm:$0xff]
                %294 = vst [vmem:[%s176 + $0x21c] sm:$0xff] %v293
                %v295 = vld [vmem:[%s175 + $0xe9c] sm:$0xff]
                %296 = vst [vmem:[%s176 + $0x224] sm:$0xff] %v295
                %v297 = vld [vmem:[%s175 + $0xf50] sm:$0xff]
                %298 = vst [vmem:[%s176 + $0x230] sm:$0xff] %v297
                %v299 = vld [vmem:[%s175 + $0xf58] sm:$0xff]
                %300 = vst [vmem:[%s176 + $0x238] sm:$0xff] %v299
                %v301 = vld [vmem:[%s175 + $0xf60] sm:$0xff]
                %302 = vst [vmem:[%s176 + $0x240] sm:$0xff] %v301
                %v303 = vld [vmem:[%s175 + $0x1014] sm:$0xff]
                %304 = vst [vmem:[%s176 + $0x24c] sm:$0xff] %v303
                %v305 = vld [vmem:[%s175 + $0x101c] sm:$0xff]
                %306 = vst [vmem:[%s176 + $0x254] sm:$0xff] %v305
                %v307 = vld [vmem:[%s175 + $0x1024] sm:$0xff]
                %308 = vst [vmem:[%s176 + $0x25c] sm:$0xff] %v307
                %v309 = vld [vmem:[%s175 + $0x10d8] sm:$0xff]
                %310 = vst [vmem:[%s176 + $0x268] sm:$0xff] %v309
                %v311 = vld [vmem:[%s175 + $0x10e0] sm:$0xff]
                %312 = vst [vmem:[%s176 + $0x270] sm:$0xff] %v311
                %v313 = vld [vmem:[%s175 + $0x10e8] sm:$0xff]
                %314 = vst [vmem:[%s176 + $0x278] sm:$0xff] %v313
                %v315 = vld [vmem:[%s175 + $0x119c] sm:$0xff]
                %316 = vst [vmem:[%s176 + $0x284] sm:$0xff] %v315
                %v317 = vld [vmem:[%s175 + $0x11a4] sm:$0xff]
                %318 = vst [vmem:[%s176 + $0x28c] sm:$0xff] %v317
                %v319 = vld [vmem:[%s175 + $0x11ac] sm:$0xff]
                %320 = vst [vmem:[%s176 + $0x294] sm:$0xff] %v319
                %v321 = vld [vmem:[%s175 + $0x1260] sm:$0xff]
                %322 = vst [vmem:[%s176 + $0x2a0] sm:$0xff] %v321
                %v323 = vld [vmem:[%s175 + $0x1268] sm:$0xff]
                %324 = vst [vmem:[%s176 + $0x2a8] sm:$0xff] %v323
                %v325 = vld [vmem:[%s175 + $0x1270] sm:$0xff]
                %326 = vst [vmem:[%s176 + $0x2b0] sm:$0xff] %v325
                %v327 = vld [vmem:[%s175 + $0x1324] sm:$0xff]
                %328 = vst [vmem:[%s176 + $0x2bc] sm:$0xff] %v327
                %v329 = vld [vmem:[%s175 + $0x132c] sm:$0xff]
                %330 = vst [vmem:[%s176 + $0x2c4] sm:$0xff] %v329
                %v331 = vld [vmem:[%s175 + $0x1334] sm:$0xff]
                %332 = vst [vmem:[%s176 + $0x2cc] sm:$0xff] %v331
                %v333 = vld [vmem:[%s175 + $0x13e8] sm:$0xff]
                %334 = vst [vmem:[%s176 + $0x2d8] sm:$0xff] %v333
                %v335 = vld [vmem:[%s175 + $0x13f0] sm:$0xff]
                %336 = vst [vmem:[%s176 + $0x2e0] sm:$0xff] %v335
                %v337 = vld [vmem:[%s175 + $0x13f8] sm:$0xff]
                %338 = vst [vmem:[%s176 + $0x2e8] sm:$0xff] %v337
                %v339 = vld [vmem:[%s175 + $0x14ac] sm:$0xff]
                %340 = vst [vmem:[%s176 + $0x2f4] sm:$0xff] %v339
                %v341 = vld [vmem:[%s175 + $0x14b4] sm:$0xff]
                %342 = vst [vmem:[%s176 + $0x2fc] sm:$0xff] %v341
                %v343 = vld [vmem:[%s175 + $0x14bc] sm:$0xff]
                %344 = vst [vmem:[%s176 + $0x304] sm:$0xff] %v343
                %v345 = vld [vmem:[%s175 + $0x1570] sm:$0xff]
                %346 = vst [vmem:[%s176 + $0x310] sm:$0xff] %v345
                %v347 = vld [vmem:[%s175 + $0x1578] sm:$0xff]
                %348 = vst [vmem:[%s176 + $0x318] sm:$0xff] %v347
                %v349 = vld [vmem:[%s175 + $0x1580] sm:$0xff]
                %350 = vst [vmem:[%s176 + $0x320] sm:$0xff] %v349
                %v351 = vld [vmem:[%s175 + $0x1634] sm:$0xff]
                %352 = vst [vmem:[%s176 + $0x32c] sm:$0xff] %v351
                %v353 = vld [vmem:[%s175 + $0x163c] sm:$0xff]
                %354 = vst [vmem:[%s176 + $0x334] sm:$0xff] %v353
                %v355 = vld [vmem:[%s175 + $0x1644] sm:$0xff]
                %356 = vst [vmem:[%s176 + $0x33c] sm:$0xff] %v355
                %v357 = vld [vmem:[%s175 + $0x16f8] sm:$0xff]
                %358 = vst [vmem:[%s176 + $0x348] sm:$0xff] %v357
                %v359 = vld [vmem:[%s175 + $0x1700] sm:$0xff]
                %360 = vst [vmem:[%s176 + $0x350] sm:$0xff] %v359
                %v361 = vld [vmem:[%s175 + $0x1708] sm:$0xff]
                %362 = vst [vmem:[%s176 + $0x358] sm:$0xff] %v361
                %v363 = vld [vmem:[%s175 + $0x17bc] sm:$0xff]
                %364 = vst [vmem:[%s176 + $0x364] sm:$0xff] %v363
                %v365 = vld [vmem:[%s175 + $0x17c4] sm:$0xff]
                %366 = vst [vmem:[%s176 + $0x36c] sm:$0xff] %v365
                %v367 = vld [vmem:[%s175 + $0x17cc] sm:$0xff]
                %368 = vst [vmem:[%s176 + $0x374] sm:$0xff] %v367
                %v369 = vld [vmem:[%s175 + $0x1880] sm:$0xff]
                %370 = vst [vmem:[%s176 + $0x380] sm:$0xff] %v369
                %v371 = vld [vmem:[%s175 + $0x1888] sm:$0xff]
                %372 = vst [vmem:[%s176 + $0x388] sm:$0xff] %v371
                %v373 = vld [vmem:[%s175 + $0x1890] sm:$0xff]
                %374 = vst [vmem:[%s176 + $0x390] sm:$0xff] %v373
                %v375 = vld [vmem:[%s175 + $0x1944] sm:$0xff]
                %376 = vst [vmem:[%s176 + $0x39c] sm:$0xff] %v375
                %v377 = vld [vmem:[%s175 + $0x194c] sm:$0xff]
                %378 = vst [vmem:[%s176 + $0x3a4] sm:$0xff] %v377
                %v379 = vld [vmem:[%s175 + $0x1954] sm:$0xff]
                %380 = vst [vmem:[%s176 + $0x3ac] sm:$0xff] %v379
                %v381 = vld [vmem:[%s175 + $0x1a08] sm:$0xff]
                %382 = vst [vmem:[%s176 + $0x3b8] sm:$0xff] %v381
                %v383 = vld [vmem:[%s175 + $0x1a10] sm:$0xff]
                %384 = vst [vmem:[%s176 + $0x3c0] sm:$0xff] %v383
                %v385 = vld [vmem:[%s175 + $0x1a18] sm:$0xff]
                %386 = vst [vmem:[%s176 + $0x3c8] sm:$0xff] %v385
                %v387 = vld [vmem:[%s175 + $0x1acc] sm:$0xff]
                %388 = vst [vmem:[%s176 + $0x3d4] sm:$0xff] %v387
                %v389 = vld [vmem:[%s175 + $0x1ad4] sm:$0xff]
                %390 = vst [vmem:[%s176 + $0x3dc] sm:$0xff] %v389
                %v391 = vld [vmem:[%s175 + $0x1adc] sm:$0xff]
                %392 = vst [vmem:[%s176 + $0x3e4] sm:$0xff] %v391
                %v393 = vld [vmem:[%s175 + $0x1b90] sm:$0xff]
                %394 = vst [vmem:[%s176 + $0x3f0] sm:$0xff] %v393
                %v395 = vld [vmem:[%s175 + $0x1b98] sm:$0xff]
                %396 = vst [vmem:[%s176 + $0x3f8] sm:$0xff] %v395
                %v397 = vld [vmem:[%s175 + $0x1ba0] sm:$0xff]
                %398 = vst [vmem:[%s176 + $0x400] sm:$0xff] %v397
                %v399 = vld [vmem:[%s175 + $0x1c54] sm:$0xff]
                %400 = vst [vmem:[%s176 + $0x40c] sm:$0xff] %v399
                %v401 = vld [vmem:[%s175 + $0x1c5c] sm:$0xff]
                %402 = vst [vmem:[%s176 + $0x414] sm:$0xff] %v401
                %v403 = vld [vmem:[%s175 + $0x1c64] sm:$0xff]
                %404 = vst [vmem:[%s176 + $0x41c] sm:$0xff] %v403
                %v405 = vld [vmem:[%s175 + $0x1d18] sm:$0xff]
                %406 = vst [vmem:[%s176 + $0x428] sm:$0xff] %v405
                %v407 = vld [vmem:[%s175 + $0x1d20] sm:$0xff]
                %408 = vst [vmem:[%s176 + $0x430] sm:$0xff] %v407
                %v409 = vld [vmem:[%s175 + $0x1d28] sm:$0xff]
                %410 = vst [vmem:[%s176 + $0x438] sm:$0xff] %v409
                %v411 = vld [vmem:[%s175 + $0x1ddc] sm:$0xff]
                %412 = vst [vmem:[%s176 + $0x444] sm:$0xff] %v411
                %v413 = vld [vmem:[%s175 + $0x1de4] sm:$0xff]
                %414 = vst [vmem:[%s176 + $0x44c] sm:$0xff] %v413
                %v415 = vld [vmem:[%s175 + $0x1dec] sm:$0xff]
                %416 = vst [vmem:[%s176 + $0x454] sm:$0xff] %v415
                %v417 = vld [vmem:[%s175 + $0x1ea0] sm:$0xff]
                %418 = vst [vmem:[%s176 + $0x460] sm:$0xff] %v417
                %v419 = vld [vmem:[%s175 + $0x1ea8] sm:$0xff]
                %420 = vst [vmem:[%s176 + $0x468] sm:$0xff] %v419
                %v421 = vld [vmem:[%s175 + $0x1eb0] sm:$0xff]
                %422 = vst [vmem:[%s176 + $0x470] sm:$0xff] %v421
                %v423 = vld [vmem:[%s175 + $0x1f64] sm:$0xff]
                %424 = vst [vmem:[%s176 + $0x47c] sm:$0xff] %v423
                %v425 = vld [vmem:[%s175 + $0x1f6c] sm:$0xff]
                %426 = vst [vmem:[%s176 + $0x484] sm:$0xff] %v425
                %v427 = vld [vmem:[%s175 + $0x1f74] sm:$0xff]
                %428 = vst [vmem:[%s176 + $0x48c] sm:$0xff] %v427
                %v429 = vld [vmem:[%s175 + $0x2028] sm:$0xff]
                %430 = vst [vmem:[%s176 + $0x498] sm:$0xff] %v429
                %v431 = vld [vmem:[%s175 + $0x2030] sm:$0xff]
                %432 = vst [vmem:[%s176 + $0x4a0] sm:$0xff] %v431
                %v433 = vld [vmem:[%s175 + $0x2038] sm:$0xff]
                %434 = vst [vmem:[%s176 + $0x4a8] sm:$0xff] %v433
                %v435 = vld [vmem:[%s175 + $0x20ec] sm:$0xff]
                %436 = vst [vmem:[%s176 + $0x4b4] sm:$0xff] %v435
                %v437 = vld [vmem:[%s175 + $0x20f4] sm:$0xff]
                %438 = vst [vmem:[%s176 + $0x4bc] sm:$0xff] %v437
                %v439 = vld [vmem:[%s175 + $0x20fc] sm:$0xff]
                %440 = vst [vmem:[%s176 + $0x4c4] sm:$0xff] %v439
                %v441 = vld [vmem:[%s175 + $0x21b0] sm:$0xff]
                %442 = vst [vmem:[%s176 + $0x4d0] sm:$0xff] %v441
                %v443 = vld [vmem:[%s175 + $0x21b8] sm:$0xff]
                %444 = vst [vmem:[%s176 + $0x4d8] sm:$0xff] %v443
                %v445 = vld [vmem:[%s175 + $0x21c0] sm:$0xff]
                %446 = vst [vmem:[%s176 + $0x4e0] sm:$0xff] %v445
                %v447 = vld [vmem:[%s175 + $0x2274] sm:$0xff]
                %448 = vst [vmem:[%s176 + $0x4ec] sm:$0xff] %v447
                %v449 = vld [vmem:[%s175 + $0x227c] sm:$0xff]
                %450 = vst [vmem:[%s176 + $0x4f4] sm:$0xff] %v449
                %v451 = vld [vmem:[%s175 + $0x2284] sm:$0xff]
                %452 = vst [vmem:[%s176 + $0x4fc] sm:$0xff] %v451
                %v453 = vld [vmem:[%s175 + $0x2338] sm:$0xff]
                %454 = vst [vmem:[%s176 + $0x508] sm:$0xff] %v453
                %v455 = vld [vmem:[%s175 + $0x2340] sm:$0xff]
                %456 = vst [vmem:[%s176 + $0x510] sm:$0xff] %v455
                %v457 = vld [vmem:[%s175 + $0x2348] sm:$0xff]
                %458 = vst [vmem:[%s176 + $0x518] sm:$0xff] %v457
                %v459 = vld [vmem:[%s175 + $0x23fc] sm:$0xff]
                %460 = vst [vmem:[%s176 + $0x524] sm:$0xff] %v459
                %v461 = vld [vmem:[%s175 + $0x2404] sm:$0xff]
                %462 = vst [vmem:[%s176 + $0x52c] sm:$0xff] %v461
                %v463 = vld [vmem:[%s175 + $0x240c] sm:$0xff]
                %464 = vst [vmem:[%s176 + $0x534] sm:$0xff] %v463
                %v465 = vld [vmem:[%s175 + $0x24c0] sm:$0xff]
                %466 = vst [vmem:[%s176 + $0x540] sm:$0xff] %v465
                %v467 = vld [vmem:[%s175 + $0x24c8] sm:$0xff]
                %468 = vst [vmem:[%s176 + $0x548] sm:$0xff] %v467
                %v469 = vld [vmem:[%s175 + $0x24d0] sm:$0xff]
                %470 = vst [vmem:[%s176 + $0x550] sm:$0xff] %v469
                %v471 = vld [vmem:[%s175 + $0x2584] sm:$0xff]
                %472 = vst [vmem:[%s176 + $0x55c] sm:$0xff] %v471
                %v473 = vld [vmem:[%s175 + $0x258c] sm:$0xff]
                %474 = vst [vmem:[%s176 + $0x564] sm:$0xff] %v473
                %v475 = vld [vmem:[%s175 + $0x2594] sm:$0xff]
                %476 = vst [vmem:[%s176 + $0x56c] sm:$0xff] %v475
                %v477 = vld [vmem:[%s175 + $0x2648] sm:$0xff]
                %478 = vst [vmem:[%s176 + $0x578] sm:$0xff] %v477
                %v479 = vld [vmem:[%s175 + $0x2650] sm:$0xff]
                %480 = vst [vmem:[%s176 + $0x580] sm:$0xff] %v479
                %v481 = vld [vmem:[%s175 + $0x2658] sm:$0xff]
                %482 = vst [vmem:[%s176 + $0x588] sm:$0xff] %v481
                %v483 = vld [vmem:[%s175 + $0x270c] sm:$0xff]
                %484 = vst [vmem:[%s176 + $0x594] sm:$0xff] %v483
                %v485 = vld [vmem:[%s175 + $0x2714] sm:$0xff]
                %486 = vst [vmem:[%s176 + $0x59c] sm:$0xff] %v485
                %v487 = vld [vmem:[%s175 + $0x271c] sm:$0xff]
                %488 = vst [vmem:[%s176 + $0x5a4] sm:$0xff] %v487
                %v489 = vld [vmem:[%s175 + $0x27d0] sm:$0xff]
                %490 = vst [vmem:[%s176 + $0x5b0] sm:$0xff] %v489
                %v491 = vld [vmem:[%s175 + $0x27d8] sm:$0xff]
                %492 = vst [vmem:[%s176 + $0x5b8] sm:$0xff] %v491
                %v493 = vld [vmem:[%s175 + $0x27e0] sm:$0xff]
                %494 = vst [vmem:[%s176 + $0x5c0] sm:$0xff] %v493
                %v495 = vld [vmem:[%s175 + $0x2894] sm:$0xff]
                %496 = vst [vmem:[%s176 + $0x5cc] sm:$0xff] %v495
                %v497 = vld [vmem:[%s175 + $0x289c] sm:$0xff]
                %498 = vst [vmem:[%s176 + $0x5d4] sm:$0xff] %v497
                %v499 = vld [vmem:[%s175 + $0x28a4] sm:$0xff]
                %500 = vst [vmem:[%s176 + $0x5dc] sm:$0xff] %v499
                %v501 = vld [vmem:[%s175 + $0x2958] sm:$0xff]
                %502 = vst [vmem:[%s176 + $0x5e8] sm:$0xff] %v501
                %v503 = vld [vmem:[%s175 + $0x2960] sm:$0xff]
                %504 = vst [vmem:[%s176 + $0x5f0] sm:$0xff] %v503
                %v505 = vld [vmem:[%s175 + $0x2968] sm:$0xff]
                %506 = vst [vmem:[%s176 + $0x5f8] sm:$0xff] %v505
                %v507 = vld [vmem:[%s175 + $0x2a1c] sm:$0xff]
                %508 = vst [vmem:[%s176 + $0x604] sm:$0xff] %v507
                %v509 = vld [vmem:[%s175 + $0x2a24] sm:$0xff]
                %510 = vst [vmem:[%s176 + $0x60c] sm:$0xff] %v509
                %v511 = vld [vmem:[%s175 + $0x2a2c] sm:$0xff]
                %512 = vst [vmem:[%s176 + $0x614] sm:$0xff] %v511
                %v513 = vld [vmem:[%s175 + $0x2ae0] sm:$0xff]
                %514 = vst [vmem:[%s176 + $0x620] sm:$0xff] %v513
                %v515 = vld [vmem:[%s175 + $0x2ae8] sm:$0xff]
                %516 = vst [vmem:[%s176 + $0x628] sm:$0xff] %v515
                %v517 = vld [vmem:[%s175 + $0x2af0] sm:$0xff]
                %518 = vst [vmem:[%s176 + $0x630] sm:$0xff] %v517
                %v519 = vld [vmem:[%s175 + $0x2ba4] sm:$0xff]
                %520 = vst [vmem:[%s176 + $0x63c] sm:$0xff] %v519
                %v521 = vld [vmem:[%s175 + $0x2bac] sm:$0xff]
                %522 = vst [vmem:[%s176 + $0x644] sm:$0xff] %v521
                %v523 = vld [vmem:[%s175 + $0x2bb4] sm:$0xff]
                %524 = vst [vmem:[%s176 + $0x64c] sm:$0xff] %v523
                %v525 = vld [vmem:[%s175 + $0x2c68] sm:$0xff]
                %526 = vst [vmem:[%s176 + $0x658] sm:$0xff] %v525
                %v527 = vld [vmem:[%s175 + $0x2c70] sm:$0xff]
                %528 = vst [vmem:[%s176 + $0x660] sm:$0xff] %v527
                %v529 = vld [vmem:[%s175 + $0x2c78] sm:$0xff]
                %530 = vst [vmem:[%s176 + $0x668] sm:$0xff] %v529
                %v531 = vld [vmem:[%s175 + $0x2d2c] sm:$0xff]
                %532 = vst [vmem:[%s176 + $0x674] sm:$0xff] %v531
                %v533 = vld [vmem:[%s175 + $0x2d34] sm:$0xff]
                %534 = vst [vmem:[%s176 + $0x67c] sm:$0xff] %v533
                %v535 = vld [vmem:[%s175 + $0x2d3c] sm:$0xff]
                %536 = vst [vmem:[%s176 + $0x684] sm:$0xff] %v535
                %v537 = vld [vmem:[%s175 + $0x2df0] sm:$0xff]
                %538 = vst [vmem:[%s176 + $0x690] sm:$0xff] %v537
                %v539 = vld [vmem:[%s175 + $0x2df8] sm:$0xff]
                %540 = vst [vmem:[%s176 + $0x698] sm:$0xff] %v539
                %v541 = vld [vmem:[%s175 + $0x2e00] sm:$0xff]
                %542 = vst [vmem:[%s176 + $0x6a0] sm:$0xff] %v541
                %v543 = vld [vmem:[%s175 + $0x2eb4] sm:$0xff]
                %544 = vst [vmem:[%s176 + $0x6ac] sm:$0xff] %v543
                %v545 = vld [vmem:[%s175 + $0x2ebc] sm:$0xff]
                %546 = vst [vmem:[%s176 + $0x6b4] sm:$0xff] %v545
                %v547 = vld [vmem:[%s175 + $0x2ec4] sm:$0xff]
                %548 = vst [vmem:[%s176 + $0x6bc] sm:$0xff] %v547
                %v549 = vld [vmem:[%s175 + $0x2f78] sm:$0xff]
                %550 = vst [vmem:[%s176 + $0x6c8] sm:$0xff] %v549
                %v551 = vld [vmem:[%s175 + $0x2f80] sm:$0xff]
                %552 = vst [vmem:[%s176 + $0x6d0] sm:$0xff] %v551
                %v553 = vld [vmem:[%s175 + $0x2f88] sm:$0xff]
                %554 = vst [vmem:[%s176 + $0x6d8] sm:$0xff] %v553
                %v555 = vld [vmem:[%s175 + $0x303c] sm:$0xff]
                %556 = vst [vmem:[%s176 + $0x6e4] sm:$0xff] %v555
                %v557 = vld [vmem:[%s175 + $0x3044] sm:$0xff]
                %558 = vst [vmem:[%s176 + $0x6ec] sm:$0xff] %v557
                %v559 = vld [vmem:[%s175 + $0x304c] sm:$0xff]
                %560 = vst [vmem:[%s176 + $0x6f4] sm:$0xff] %v559
                %v561 = vld [vmem:[%s175 + $0x3100] sm:$0xff]
                %562 = vst [vmem:[%s176 + $0x700] sm:$0xff] %v561
                %v563 = vld [vmem:[%s175 + $0x3108] sm:$0xff]
                %564 = vst [vmem:[%s176 + $0x708] sm:$0xff] %v563
                %v565 = vld [vmem:[%s175 + $0x3110] sm:$0xff]
                %566 = vst [vmem:[%s176 + $0x710] sm:$0xff] %v565
                %v567 = vld [vmem:[%s175 + $0x31c4] sm:$0xff]
                %568 = vst [vmem:[%s176 + $0x71c] sm:$0xff] %v567
                %v569 = vld [vmem:[%s175 + $0x31cc] sm:$0xff]
                %570 = vst [vmem:[%s176 + $0x724] sm:$0xff] %v569
                %v571 = vld [vmem:[%s175 + $0x31d4] sm:$0xff]
                %572 = vst [vmem:[%s176 + $0x72c] sm:$0xff] %v571
                %v573 = vld [vmem:[%s175 + $0x3288] sm:$0xff]
                %574 = vst [vmem:[%s176 + $0x738] sm:$0xff] %v573
                %v575 = vld [vmem:[%s175 + $0x3290] sm:$0xff]
                %576 = vst [vmem:[%s176 + $0x740] sm:$0xff] %v575
                %v577 = vld [vmem:[%s175 + $0x3298] sm:$0xff]
                %578 = vst [vmem:[%s176 + $0x748] sm:$0xff] %v577
                %v579 = vld [vmem:[%s175 + $0x334c] sm:$0xff]
                %580 = vst [vmem:[%s176 + $0x754] sm:$0xff] %v579
                %v581 = vld [vmem:[%s175 + $0x3354] sm:$0xff]
                %582 = vst [vmem:[%s176 + $0x75c] sm:$0xff] %v581
                %v583 = vld [vmem:[%s175 + $0x335c] sm:$0xff]
                %584 = vst [vmem:[%s176 + $0x764] sm:$0xff] %v583
                %v585 = vld [vmem:[%s175 + $0x3410] sm:$0xff]
                %586 = vst [vmem:[%s176 + $0x770] sm:$0xff] %v585
                %v587 = vld [vmem:[%s175 + $0x3418] sm:$0xff]
                %588 = vst [vmem:[%s176 + $0x778] sm:$0xff] %v587
                %v589 = vld [vmem:[%s175 + $0x3420] sm:$0xff]
                %590 = vst [vmem:[%s176 + $0x780] sm:$0xff] %v589
                %v591 = vld [vmem:[%s175 + $0x34d4] sm:$0xff]
                %592 = vst [vmem:[%s176 + $0x78c] sm:$0xff] %v591
                %v593 = vld [vmem:[%s175 + $0x34dc] sm:$0xff]
                %594 = vst [vmem:[%s176 + $0x794] sm:$0xff] %v593
                %v595 = vld [vmem:[%s175 + $0x34e4] sm:$0xff]
                %596 = vst [vmem:[%s176 + $0x79c] sm:$0xff] %v595
                %v597 = vld [vmem:[%s175 + $0x3598] sm:$0xff]
                %598 = vst [vmem:[%s176 + $0x7a8] sm:$0xff] %v597
                %v599 = vld [vmem:[%s175 + $0x35a0] sm:$0xff]
                %600 = vst [vmem:[%s176 + $0x7b0] sm:$0xff] %v599
                %v601 = vld [vmem:[%s175 + $0x35a8] sm:$0xff]
                %602 = vst [vmem:[%s176 + $0x7b8] sm:$0xff] %v601
                %v603 = vld [vmem:[%s175 + $0x365c] sm:$0xff]
                %604 = vst [vmem:[%s176 + $0x7c4] sm:$0xff] %v603
                %v605 = vld [vmem:[%s175 + $0x3664] sm:$0xff]
                %606 = vst [vmem:[%s176 + $0x7cc] sm:$0xff] %v605
                %v607 = vld [vmem:[%s175 + $0x366c] sm:$0xff]
                %608 = vst [vmem:[%s176 + $0x7d4] sm:$0xff] %v607
                %v609 = vld [vmem:[%s175 + $0x3720] sm:$0xff]
                %610 = vst [vmem:[%s176 + $0x7e0] sm:$0xff] %v609
                %v611 = vld [vmem:[%s175 + $0x3728] sm:$0xff]
                %612 = vst [vmem:[%s176 + $0x7e8] sm:$0xff] %v611
                %v613 = vld [vmem:[%s175 + $0x3730] sm:$0xff]
                %614 = vst [vmem:[%s176 + $0x7f0] sm:$0xff] %v613
                %v615 = vld [vmem:[%s175 + $0x37e4] sm:$0xff]
                %616 = vst [vmem:[%s176 + $0x7fc] sm:$0xff] %v615
                %v617 = vld [vmem:[%s175 + $0x37ec] sm:$0xff]
                %618 = vst [vmem:[%s176 + $0x804] sm:$0xff] %v617
                %v619 = vld [vmem:[%s175 + $0x37f4] sm:$0xff]
                %620 = vst [vmem:[%s176 + $0x80c] sm:$0xff] %v619
                %v621 = vld [vmem:[%s175 + $0x38a8] sm:$0xff]
                %622 = vst [vmem:[%s176 + $0x818] sm:$0xff] %v621
                %v623 = vld [vmem:[%s175 + $0x38b0] sm:$0xff]
                %624 = vst [vmem:[%s176 + $0x820] sm:$0xff] %v623
                %v625 = vld [vmem:[%s175 + $0x38b8] sm:$0xff]
                %626 = vst [vmem:[%s176 + $0x828] sm:$0xff] %v625
                %v627 = vld [vmem:[%s175 + $0x396c] sm:$0xff]
                %628 = vst [vmem:[%s176 + $0x834] sm:$0xff] %v627
                %v629 = vld [vmem:[%s175 + $0x3974] sm:$0xff]
                %630 = vst [vmem:[%s176 + $0x83c] sm:$0xff] %v629
                %v631 = vld [vmem:[%s175 + $0x397c] sm:$0xff]
                %632 = vst [vmem:[%s176 + $0x844] sm:$0xff] %v631
                %v633 = vld [vmem:[%s175 + $0x3a30] sm:$0xff]
                %634 = vst [vmem:[%s176 + $0x850] sm:$0xff] %v633
                %v635 = vld [vmem:[%s175 + $0x3a38] sm:$0xff]
                %636 = vst [vmem:[%s176 + $0x858] sm:$0xff] %v635
                %v637 = vld [vmem:[%s175 + $0x3a40] sm:$0xff]
                %638 = vst [vmem:[%s176 + $0x860] sm:$0xff] %v637
                %v639 = vld [vmem:[%s175 + $0x3af4] sm:$0xff]
                %640 = vst [vmem:[%s176 + $0x86c] sm:$0xff] %v639
                %v641 = vld [vmem:[%s175 + $0x3afc] sm:$0xff]
                %642 = vst [vmem:[%s176 + $0x874] sm:$0xff] %v641
                %v643 = vld [vmem:[%s175 + $0x3b04] sm:$0xff]
                %644 = vst [vmem:[%s176 + $0x87c] sm:$0xff] %v643
                %v645 = vld [vmem:[%s175 + $0x3bb8] sm:$0xff]
                %646 = vst [vmem:[%s176 + $0x888] sm:$0xff] %v645
                %v647 = vld [vmem:[%s175 + $0x3bc0] sm:$0xff]
                %648 = vst [vmem:[%s176 + $0x890] sm:$0xff] %v647
                %v649 = vld [vmem:[%s175 + $0x3bc8] sm:$0xff]
                %650 = vst [vmem:[%s176 + $0x898] sm:$0xff] %v649
                %v651 = vld [vmem:[%s175 + $0x3c7c] sm:$0xff]
                %652 = vst [vmem:[%s176 + $0x8a4] sm:$0xff] %v651
                %v653 = vld [vmem:[%s175 + $0x3c84] sm:$0xff]
                %654 = vst [vmem:[%s176 + $0x8ac] sm:$0xff] %v653
                %v655 = vld [vmem:[%s175 + $0x3c8c] sm:$0xff]
                %656 = vst [vmem:[%s176 + $0x8b4] sm:$0xff] %v655
                %v657 = vld [vmem:[%s175 + $0x3d40] sm:$0xff]
                %658 = vst [vmem:[%s176 + $0x8c0] sm:$0xff] %v657
                %v659 = vld [vmem:[%s175 + $0x3d48] sm:$0xff]
                %660 = vst [vmem:[%s176 + $0x8c8] sm:$0xff] %v659
                %v661 = vld [vmem:[%s175 + $0x3d50] sm:$0xff]
                %662 = vst [vmem:[%s176 + $0x8d0] sm:$0xff] %v661
                %v663 = vld [vmem:[%s175 + $0x3e04] sm:$0xff]
                %664 = vst [vmem:[%s176 + $0x8dc] sm:$0xff] %v663
                %v665 = vld [vmem:[%s175 + $0x3e0c] sm:$0xff]
                %666 = vst [vmem:[%s176 + $0x8e4] sm:$0xff] %v665
                %v667 = vld [vmem:[%s175 + $0x3e14] sm:$0xff]
                %668 = vst [vmem:[%s176 + $0x8ec] sm:$0xff] %v667
                %v669 = vld [vmem:[%s175 + $0x3ec8] sm:$0xff]
                %670 = vst [vmem:[%s176 + $0x8f8] sm:$0xff] %v669
                %v671 = vld [vmem:[%s175 + $0x3ed0] sm:$0xff]
                %672 = vst [vmem:[%s176 + $0x900] sm:$0xff] %v671
                %v673 = vld [vmem:[%s175 + $0x3ed8] sm:$0xff]
                %674 = vst [vmem:[%s176 + $0x908] sm:$0xff] %v673
                %v675 = vld [vmem:[%s175 + $0x3f8c] sm:$0xff]
                %676 = vst [vmem:[%s176 + $0x914] sm:$0xff] %v675
                %v677 = vld [vmem:[%s175 + $0x3f94] sm:$0xff]
                %678 = vst [vmem:[%s176 + $0x91c] sm:$0xff] %v677
                %v679 = vld [vmem:[%s175 + $0x3f9c] sm:$0xff]
                %680 = vst [vmem:[%s176 + $0x924] sm:$0xff] %v679
                %v681 = vld [vmem:[%s175 + $0x4050] sm:$0xff]
                %682 = vst [vmem:[%s176 + $0x930] sm:$0xff] %v681
                %v683 = vld [vmem:[%s175 + $0x4058] sm:$0xff]
                %684 = vst [vmem:[%s176 + $0x938] sm:$0xff] %v683
                %v685 = vld [vmem:[%s175 + $0x4060] sm:$0xff]
                %686 = vst [vmem:[%s176 + $0x940] sm:$0xff] %v685
                %v687 = vld [vmem:[%s175 + $0x4114] sm:$0xff]
                %688 = vst [vmem:[%s176 + $0x94c] sm:$0xff] %v687
                %v689 = vld [vmem:[%s175 + $0x411c] sm:$0xff]
                %690 = vst [vmem:[%s176 + $0x954] sm:$0xff] %v689
                %v691 = vld [vmem:[%s175 + $0x4124] sm:$0xff]
                %692 = vst [vmem:[%s176 + $0x95c] sm:$0xff] %v691
                %v693 = vld [vmem:[%s175 + $0x41d8] sm:$0xff]
                %694 = vst [vmem:[%s176 + $0x968] sm:$0xff] %v693
                %v695 = vld [vmem:[%s175 + $0x41e0] sm:$0xff]
                %696 = vst [vmem:[%s176 + $0x970] sm:$0xff] %v695
                %v697 = vld [vmem:[%s175 + $0x41e8] sm:$0xff]
                %698 = vst [vmem:[%s176 + $0x978] sm:$0xff] %v697
                %v699 = vld [vmem:[%s175 + $0x429c] sm:$0xff]
                %700 = vst [vmem:[%s176 + $0x984] sm:$0xff] %v699
                %v701 = vld [vmem:[%s175 + $0x42a4] sm:$0xff]
                %702 = vst [vmem:[%s176 + $0x98c] sm:$0xff] %v701
                %v703 = vld [vmem:[%s175 + $0x42ac] sm:$0xff]
                %704 = vst [vmem:[%s176 + $0x994] sm:$0xff] %v703
                %v705 = vld [vmem:[%s175 + $0x4360] sm:$0xff]
                %706 = vst [vmem:[%s176 + $0x9a0] sm:$0xff] %v705
                %v707 = vld [vmem:[%s175 + $0x4368] sm:$0xff]
                %708 = vst [vmem:[%s176 + $0x9a8] sm:$0xff] %v707
                %v709 = vld [vmem:[%s175 + $0x4370] sm:$0xff]
                %710 = vst [vmem:[%s176 + $0x9b0] sm:$0xff] %v709
                %v711 = vld [vmem:[%s175 + $0x4424] sm:$0xff]
                %712 = vst [vmem:[%s176 + $0x9bc] sm:$0xff] %v711
                %v713 = vld [vmem:[%s175 + $0x442c] sm:$0xff]
                %714 = vst [vmem:[%s176 + $0x9c4] sm:$0xff] %v713
                %v715 = vld [vmem:[%s175 + $0x4434] sm:$0xff]
                %716 = vst [vmem:[%s176 + $0x9cc] sm:$0xff] %v715
                %v717 = vld [vmem:[%s175 + $0x44e8] sm:$0xff]
                %718 = vst [vmem:[%s176 + $0x9d8] sm:$0xff] %v717
                %v719 = vld [vmem:[%s175 + $0x44f0] sm:$0xff]
                %720 = vst [vmem:[%s176 + $0x9e0] sm:$0xff] %v719
                %v721 = vld [vmem:[%s175 + $0x44f8] sm:$0xff]
                %722 = vst [vmem:[%s176 + $0x9e8] sm:$0xff] %v721
                %v723 = vld [vmem:[%s175 + $0x45ac] sm:$0xff]
                %724 = vst [vmem:[%s176 + $0x9f4] sm:$0xff] %v723
                %v725 = vld [vmem:[%s175 + $0x45b4] sm:$0xff]
                %726 = vst [vmem:[%s176 + $0x9fc] sm:$0xff] %v725
                %v727 = vld [vmem:[%s175 + $0x45bc] sm:$0xff]
                %728 = vst [vmem:[%s176 + $0xa04] sm:$0xff] %v727
                %v729 = vld [vmem:[%s175 + $0x4670] sm:$0xff]
                %730 = vst [vmem:[%s176 + $0xa10] sm:$0xff] %v729
                %v731 = vld [vmem:[%s175 + $0x4678] sm:$0xff]
                %732 = vst [vmem:[%s176 + $0xa18] sm:$0xff] %v731
                %v733 = vld [vmem:[%s175 + $0x4680] sm:$0xff]
                %734 = vst [vmem:[%s176 + $0xa20] sm:$0xff] %v733
                %v735 = vld [vmem:[%s175 + $0x4734] sm:$0xff]
                %736 = vst [vmem:[%s176 + $0xa2c] sm:$0xff] %v735
                %v737 = vld [vmem:[%s175 + $0x473c] sm:$0xff]
                %738 = vst [vmem:[%s176 + $0xa34] sm:$0xff] %v737
                %v739 = vld [vmem:[%s175 + $0x4744] sm:$0xff]
                %740 = vst [vmem:[%s176 + $0xa3c] sm:$0xff] %v739
                %v741 = vld [vmem:[%s175 + $0x47f8] sm:$0xff]
                %742 = vst [vmem:[%s176 + $0xa48] sm:$0xff] %v741
                %v743 = vld [vmem:[%s175 + $0x4800] sm:$0xff]
                %744 = vst [vmem:[%s176 + $0xa50] sm:$0xff] %v743
                %v745 = vld [vmem:[%s175 + $0x4808] sm:$0xff]
                %746 = vst [vmem:[%s176 + $0xa58] sm:$0xff] %v745
                %v747 = vld [vmem:[%s175 + $0x48bc] sm:$0xff]
                %748 = vst [vmem:[%s176 + $0xa64] sm:$0xff] %v747
                %v749 = vld [vmem:[%s175 + $0x48c4] sm:$0xff]
                %750 = vst [vmem:[%s176 + $0xa6c] sm:$0xff] %v749
                %v751 = vld [vmem:[%s175 + $0x48cc] sm:$0xff]
                %752 = vst [vmem:[%s176 + $0xa74] sm:$0xff] %v751
                %v753 = vld [vmem:[%s175 + $0x4980] sm:$0xff]
                %754 = vst [vmem:[%s176 + $0xa80] sm:$0xff] %v753
                %v755 = vld [vmem:[%s175 + $0x4988] sm:$0xff]
                %756 = vst [vmem:[%s176 + $0xa88] sm:$0xff] %v755
                %v757 = vld [vmem:[%s175 + $0x4990] sm:$0xff]
                %758 = vst [vmem:[%s176 + $0xa90] sm:$0xff] %v757
                %v759 = vld [vmem:[%s175 + $0x4a44] sm:$0xff]
                %760 = vst [vmem:[%s176 + $0xa9c] sm:$0xff] %v759
                %v761 = vld [vmem:[%s175 + $0x4a4c] sm:$0xff]
                %762 = vst [vmem:[%s176 + $0xaa4] sm:$0xff] %v761
                %v763 = vld [vmem:[%s175 + $0x4a54] sm:$0xff]
                %764 = vst [vmem:[%s176 + $0xaac] sm:$0xff] %v763
                %v765 = vld [vmem:[%s175 + $0x4b08] sm:$0xff]
                %766 = vst [vmem:[%s176 + $0xab8] sm:$0xff] %v765
                %v767 = vld [vmem:[%s175 + $0x4b10] sm:$0xff]
                %768 = vst [vmem:[%s176 + $0xac0] sm:$0xff] %v767
                %v769 = vld [vmem:[%s175 + $0x4b18] sm:$0xff]
                %770 = vst [vmem:[%s176 + $0xac8] sm:$0xff] %v769
                %v771 = vld [vmem:[%s175 + $0x4bcc] sm:$0xff]
                %772 = vst [vmem:[%s176 + $0xad4] sm:$0xff] %v771
                %v773 = vld [vmem:[%s175 + $0x4bd4] sm:$0xff]
                %774 = vst [vmem:[%s176 + $0xadc] sm:$0xff] %v773
                %v775 = vld [vmem:[%s175 + $0x4bdc] sm:$0xff]
                %776 = vst [vmem:[%s176 + $0xae4] sm:$0xff] %v775
                %v777 = vld [vmem:[%s175 + $0x4c90] sm:$0xff]
                %778 = vst [vmem:[%s176 + $0xaf0] sm:$0xff] %v777
                %v779 = vld [vmem:[%s175 + $0x4c98] sm:$0xff]
                %780 = vst [vmem:[%s176 + $0xaf8] sm:$0xff] %v779
                %v781 = vld [vmem:[%s175 + $0x4ca0] sm:$0xff]
                %782 = vst [vmem:[%s176 + $0xb00] sm:$0xff] %v781
                %v783 = vld [vmem:[%s175 + $0x4d54] sm:$0xff]
                %784 = vst [vmem:[%s176 + $0xb0c] sm:$0xff] %v783
                %v785 = vld [vmem:[%s175 + $0x4d5c] sm:$0xff]
                %786 = vst [vmem:[%s176 + $0xb14] sm:$0xff] %v785
                %v787 = vld [vmem:[%s175 + $0x4d64] sm:$0xff]
                %788 = vst [vmem:[%s176 + $0xb1c] sm:$0xff] %v787
                %v789 = vld [vmem:[%s175 + $0x4e18] sm:$0xff]
                %790 = vst [vmem:[%s176 + $0xb28] sm:$0xff] %v789
                %v791 = vld [vmem:[%s175 + $0x4e20] sm:$0xff]
                %792 = vst [vmem:[%s176 + $0xb30] sm:$0xff] %v791
                %v793 = vld [vmem:[%s175 + $0x4e28] sm:$0xff]
                %794 = vst [vmem:[%s176 + $0xb38] sm:$0xff] %v793
                %v795 = vld [vmem:[%s175 + $0x4edc] sm:$0xff]
                %796 = vst [vmem:[%s176 + $0xb44] sm:$0xff] %v795
                %v797 = vld [vmem:[%s175 + $0x4ee4] sm:$0xff]
                %798 = vst [vmem:[%s176 + $0xb4c] sm:$0xff] %v797
                %v799 = vld [vmem:[%s175 + $0x4eec] sm:$0xff]
                %800 = vst [vmem:[%s176 + $0xb54] sm:$0xff] %v799
                %v801 = vld [vmem:[%s175 + $0x4fa0] sm:$0xff]
                %802 = vst [vmem:[%s176 + $0xb60] sm:$0xff] %v801
                %v803 = vld [vmem:[%s175 + $0x4fa8] sm:$0xff]
                %804 = vst [vmem:[%s176 + $0xb68] sm:$0xff] %v803
                %v805 = vld [vmem:[%s175 + $0x4fb0] sm:$0xff]
                %806 = vst [vmem:[%s176 + $0xb70] sm:$0xff] %v805
                %v807 = vld [vmem:[%s175 + $0x5064] sm:$0xff]
                %808 = vst [vmem:[%s176 + $0xb7c] sm:$0xff] %v807
                %v809 = vld [vmem:[%s175 + $0x506c] sm:$0xff]
                %810 = vst [vmem:[%s176 + $0xb84] sm:$0xff] %v809
                %v811 = vld [vmem:[%s175 + $0x5074] sm:$0xff]
                %812 = vst [vmem:[%s176 + $0xb8c] sm:$0xff] %v811
                %v813 = vld [vmem:[%s175 + $0x5128] sm:$0xff]
                %814 = vst [vmem:[%s176 + $0xb98] sm:$0xff] %v813
                %v815 = vld [vmem:[%s175 + $0x5130] sm:$0xff]
                %816 = vst [vmem:[%s176 + $0xba0] sm:$0xff] %v815
                %v817 = vld [vmem:[%s175 + $0x5138] sm:$0xff]
                %818 = vst [vmem:[%s176 + $0xba8] sm:$0xff] %v817
                %v819 = vld [vmem:[%s175 + $0x51ec] sm:$0xff]
                %820 = vst [vmem:[%s176 + $0xbb4] sm:$0xff] %v819
                %v821 = vld [vmem:[%s175 + $0x51f4] sm:$0xff]
                %822 = vst [vmem:[%s176 + $0xbbc] sm:$0xff] %v821
                %v823 = vld [vmem:[%s175 + $0x51fc] sm:$0xff]
                %824 = vst [vmem:[%s176 + $0xbc4] sm:$0xff] %v823
                %v825 = vld [vmem:[%s175 + $0x52b0] sm:$0xff]
                %826 = vst [vmem:[%s176 + $0xbd0] sm:$0xff] %v825
                %v827 = vld [vmem:[%s175 + $0x52b8] sm:$0xff]
                %828 = vst [vmem:[%s176 + $0xbd8] sm:$0xff] %v827
                %v829 = vld [vmem:[%s175 + $0x52c0] sm:$0xff]
                %830 = vst [vmem:[%s176 + $0xbe0] sm:$0xff] %v829
                %v831 = vld [vmem:[%s175 + $0x5374] sm:$0xff]
                %832 = vst [vmem:[%s176 + $0xbec] sm:$0xff] %v831
                %v833 = vld [vmem:[%s175 + $0x537c] sm:$0xff]
                %834 = vst [vmem:[%s176 + $0xbf4] sm:$0xff] %v833
                %v835 = vld [vmem:[%s175 + $0x5384] sm:$0xff]
                %836 = vst [vmem:[%s176 + $0xbfc] sm:$0xff] %v835
                %v837 = vld [vmem:[%s175 + $0x5438] sm:$0xff]
                %838 = vst [vmem:[%s176 + $0xc08] sm:$0xff] %v837
                %v839 = vld [vmem:[%s175 + $0x5440] sm:$0xff]
                %840 = vst [vmem:[%s176 + $0xc10] sm:$0xff] %v839
                %v841 = vld [vmem:[%s175 + $0x5448] sm:$0xff]
                %842 = vst [vmem:[%s176 + $0xc18] sm:$0xff] %v841
                %v843 = vld [vmem:[%s175 + $0x54fc] sm:$0xff]
                %844 = vst [vmem:[%s176 + $0xc24] sm:$0xff] %v843
                %v845 = vld [vmem:[%s175 + $0x5504] sm:$0xff]
                %846 = vst [vmem:[%s176 + $0xc2c] sm:$0xff] %v845
                %v847 = vld [vmem:[%s175 + $0x550c] sm:$0xff]
                %848 = vst [vmem:[%s176 + $0xc34] sm:$0xff] %v847
                %v849 = vld [vmem:[%s175 + $0x55c0] sm:$0xff]
                %850 = vst [vmem:[%s176 + $0xc40] sm:$0xff] %v849
                %v851 = vld [vmem:[%s175 + $0x55c8] sm:$0xff]
                %852 = vst [vmem:[%s176 + $0xc48] sm:$0xff] %v851
                %v853 = vld [vmem:[%s175 + $0x55d0] sm:$0xff]
                %854 = vst [vmem:[%s176 + $0xc50] sm:$0xff] %v853
                %v855 = vld [vmem:[%s175 + $0x5684] sm:$0xff]
                %856 = vst [vmem:[%s176 + $0xc5c] sm:$0xff] %v855
                %v857 = vld [vmem:[%s175 + $0x568c] sm:$0xff]
                %858 = vst [vmem:[%s176 + $0xc64] sm:$0xff] %v857
                %v859 = vld [vmem:[%s175 + $0x5694] sm:$0xff]
                %860 = vst [vmem:[%s176 + $0xc6c] sm:$0xff] %v859
                %v861 = vld [vmem:[%s175 + $0x5748] sm:$0xff]
                %862 = vst [vmem:[%s176 + $0xc78] sm:$0xff] %v861
                %v863 = vld [vmem:[%s175 + $0x5750] sm:$0xff]
                %864 = vst [vmem:[%s176 + $0xc80] sm:$0xff] %v863
                %v865 = vld [vmem:[%s175 + $0x5758] sm:$0xff]
                %866 = vst [vmem:[%s176 + $0xc88] sm:$0xff] %v865
                %v867 = vld [vmem:[%s175 + $0x580c] sm:$0xff]
                %868 = vst [vmem:[%s176 + $0xc94] sm:$0xff] %v867
                %v869 = vld [vmem:[%s175 + $0x5814] sm:$0xff]
                %870 = vst [vmem:[%s176 + $0xc9c] sm:$0xff] %v869
                %v871 = vld [vmem:[%s175 + $0x581c] sm:$0xff]
                %872 = vst [vmem:[%s176 + $0xca4] sm:$0xff] %v871
                %v873 = vld [vmem:[%s175 + $0x58d0] sm:$0xff]
                %874 = vst [vmem:[%s176 + $0xcb0] sm:$0xff] %v873
                %v875 = vld [vmem:[%s175 + $0x58d8] sm:$0xff]
                %876 = vst [vmem:[%s176 + $0xcb8] sm:$0xff] %v875
                %v877 = vld [vmem:[%s175 + $0x58e0] sm:$0xff]
                %878 = vst [vmem:[%s176 + $0xcc0] sm:$0xff] %v877
                %v879 = vld [vmem:[%s175 + $0x5994] sm:$0xff]
                %880 = vst [vmem:[%s176 + $0xccc] sm:$0xff] %v879
                %v881 = vld [vmem:[%s175 + $0x599c] sm:$0xff]
                %882 = vst [vmem:[%s176 + $0xcd4] sm:$0xff] %v881
                %v883 = vld [vmem:[%s175 + $0x59a4] sm:$0xff]
                %884 = vst [vmem:[%s176 + $0xcdc] sm:$0xff] %v883
                %v885 = vld [vmem:[%s175 + $0x5a58] sm:$0xff]
                %886 = vst [vmem:[%s176 + $0xce8] sm:$0xff] %v885
                %v887 = vld [vmem:[%s175 + $0x5a60] sm:$0xff]
                %888 = vst [vmem:[%s176 + $0xcf0] sm:$0xff] %v887
                %v889 = vld [vmem:[%s175 + $0x5a68] sm:$0xff]
                %890 = vst [vmem:[%s176 + $0xcf8] sm:$0xff] %v889
                %v891 = vld [vmem:[%s175 + $0x5b1c] sm:$0xff]
                %892 = vst [vmem:[%s176 + $0xd04] sm:$0xff] %v891
                %v893 = vld [vmem:[%s175 + $0x5b24] sm:$0xff]
                %894 = vst [vmem:[%s176 + $0xd0c] sm:$0xff] %v893
                %v895 = vld [vmem:[%s175 + $0x5b2c] sm:$0xff]
                %896 = vst [vmem:[%s176 + $0xd14] sm:$0xff] %v895
                %v897 = vld [vmem:[%s175 + $0x5be0] sm:$0xff]
                %898 = vst [vmem:[%s176 + $0xd20] sm:$0xff] %v897
                %v899 = vld [vmem:[%s175 + $0x5be8] sm:$0xff]
                %900 = vst [vmem:[%s176 + $0xd28] sm:$0xff] %v899
                %v901 = vld [vmem:[%s175 + $0x5bf0] sm:$0xff]
                %902 = vst [vmem:[%s176 + $0xd30] sm:$0xff] %v901
                %v903 = vld [vmem:[%s175 + $0x5ca4] sm:$0xff]
                %904 = vst [vmem:[%s176 + $0xd3c] sm:$0xff] %v903
                %v905 = vld [vmem:[%s175 + $0x5cac] sm:$0xff]
                %906 = vst [vmem:[%s176 + $0xd44] sm:$0xff] %v905
                %v907 = vld [vmem:[%s175 + $0x5cb4] sm:$0xff]
                %908 = vst [vmem:[%s176 + $0xd4c] sm:$0xff] %v907
                %v909 = vld [vmem:[%s175 + $0x5d68] sm:$0xff]
                %910 = vst [vmem:[%s176 + $0xd58] sm:$0xff] %v909
                %v911 = vld [vmem:[%s175 + $0x5d70] sm:$0xff]
                %912 = vst [vmem:[%s176 + $0xd60] sm:$0xff] %v911
                %v913 = vld [vmem:[%s175 + $0x5d78] sm:$0xff]
                %914 = vst [vmem:[%s176 + $0xd68] sm:$0xff] %v913
                %v915 = vld [vmem:[%s175 + $0x5e2c] sm:$0xff]
                %916 = vst [vmem:[%s176 + $0xd74] sm:$0xff] %v915
                %v917 = vld [vmem:[%s175 + $0x5e34] sm:$0xff]
                %918 = vst [vmem:[%s176 + $0xd7c] sm:$0xff] %v917
                %v919 = vld [vmem:[%s175 + $0x5e3c] sm:$0xff]
                %920 = vst [vmem:[%s176 + $0xd84] sm:$0xff] %v919
                %v921 = vld [vmem:[%s175 + $0x5ef0] sm:$0xff]
                %922 = vst [vmem:[%s176 + $0xd90] sm:$0xff] %v921
                %v923 = vld [vmem:[%s175 + $0x5ef8] sm:$0xff]
                %924 = vst [vmem:[%s176 + $0xd98] sm:$0xff] %v923
                %v925 = vld [vmem:[%s175 + $0x5f00] sm:$0xff]
                %926 = vst [vmem:[%s176 + $0xda0] sm:$0xff] %v925
                %v927 = vld [vmem:[%s175 + $0x5fb4] sm:$0xff]
                %928 = vst [vmem:[%s176 + $0xdac] sm:$0xff] %v927
                %v929 = vld [vmem:[%s175 + $0x5fbc] sm:$0xff]
                %930 = vst [vmem:[%s176 + $0xdb4] sm:$0xff] %v929
                %v931 = vld [vmem:[%s175 + $0x5fc4] sm:$0xff]
                %932 = vst [vmem:[%s176 + $0xdbc] sm:$0xff] %v931
                %v933 = vld [vmem:[%s175 + $0x6078] sm:$0xff]
                %934 = vst [vmem:[%s176 + $0xdc8] sm:$0xff] %v933
                %v935 = vld [vmem:[%s175 + $0x6080] sm:$0xff]
                %936 = vst [vmem:[%s176 + $0xdd0] sm:$0xff] %v935
                %v937 = vld [vmem:[%s175 + $0x6088] sm:$0xff]
                %938 = vst [vmem:[%s176 + $0xdd8] sm:$0xff] %v937
                %v939 = vld [vmem:[%s175 + $0x613c] sm:$0xff]
                %940 = vst [vmem:[%s176 + $0xde4] sm:$0xff] %v939
                %v941 = vld [vmem:[%s175 + $0x6144] sm:$0xff]
                %942 = vst [vmem:[%s176 + $0xdec] sm:$0xff] %v941
                %v943 = vld [vmem:[%s175 + $0x614c] sm:$0xff]
                %944 = vst [vmem:[%s176 + $0xdf4] sm:$0xff] %v943
              $region37: #{generator_forward.5} parent=31 // loop_footer
                %s174 = sadd.s32 1, %s170
              $region38: #{generator_forward.5} parent=31 // loop_footer_branch
                %169 = sbr.rel target = $region34
              $region39: #{generator_forward.5} parent=31 // loop_exit
                _
              loop: start=0, step=1, limit=1
              $region40: #{generator_forward.5} parent=31 // loop_pre_header
                _
              $region41: #{generator_forward.5} parent=31 // loop_header
                %s947 = sphi 0, %s951
                %p948 = scmp.ge.s32.totalorder %s947, 1
                %s952 = sphi %s167, %s167
                %s953 = sphi %s168, %s168
              $region42: #{generator_forward.5} parent=31 // loop_header_branch
                %950 = sbr.rel (%p948) target = $region46
              $region43: #{generator_forward.5} parent=31 // loop_body
                %v954 = vld [vmem:[%s952] sm:$0xf]
                %955 = vst [vmem:[%s953] sm:$0xf] %v954
                %v956 = vld [vmem:[%s952 + $0xc4] sm:$0xf]
                %957 = vst [vmem:[%s953 + $0x1c] sm:$0xf] %v956
                %v958 = vld [vmem:[%s952 + $0x188] sm:$0xf]
                %959 = vst [vmem:[%s953 + $0x38] sm:$0xf] %v958
                %v960 = vld [vmem:[%s952 + $0x24c] sm:$0xf]
                %961 = vst [vmem:[%s953 + $0x54] sm:$0xf] %v960
                %v962 = vld [vmem:[%s952 + $0x310] sm:$0xf]
                %963 = vst [vmem:[%s953 + $0x70] sm:$0xf] %v962
                %v964 = vld [vmem:[%s952 + $0x3d4] sm:$0xf]
                %965 = vst [vmem:[%s953 + $0x8c] sm:$0xf] %v964
                %v966 = vld [vmem:[%s952 + $0x498] sm:$0xf]
                %967 = vst [vmem:[%s953 + $0xa8] sm:$0xf] %v966
                %v968 = vld [vmem:[%s952 + $0x55c] sm:$0xf]
                %969 = vst [vmem:[%s953 + $0xc4] sm:$0xf] %v968
                %v970 = vld [vmem:[%s952 + $0x620] sm:$0xf]
                %971 = vst [vmem:[%s953 + $0xe0] sm:$0xf] %v970
                %v972 = vld [vmem:[%s952 + $0x6e4] sm:$0xf]
                %973 = vst [vmem:[%s953 + $0xfc] sm:$0xf] %v972
                %v974 = vld [vmem:[%s952 + $0x7a8] sm:$0xf]
                %975 = vst [vmem:[%s953 + $0x118] sm:$0xf] %v974
                %v976 = vld [vmem:[%s952 + $0x86c] sm:$0xf]
                %977 = vst [vmem:[%s953 + $0x134] sm:$0xf] %v976
                %v978 = vld [vmem:[%s952 + $0x930] sm:$0xf]
                %979 = vst [vmem:[%s953 + $0x150] sm:$0xf] %v978
                %v980 = vld [vmem:[%s952 + $0x9f4] sm:$0xf]
                %981 = vst [vmem:[%s953 + $0x16c] sm:$0xf] %v980
                %v982 = vld [vmem:[%s952 + $0xab8] sm:$0xf]
                %983 = vst [vmem:[%s953 + $0x188] sm:$0xf] %v982
                %v984 = vld [vmem:[%s952 + $0xb7c] sm:$0xf]
                %985 = vst [vmem:[%s953 + $0x1a4] sm:$0xf] %v984
                %v986 = vld [vmem:[%s952 + $0xc40] sm:$0xf]
                %987 = vst [vmem:[%s953 + $0x1c0] sm:$0xf] %v986
                %v988 = vld [vmem:[%s952 + $0xd04] sm:$0xf]
                %989 = vst [vmem:[%s953 + $0x1dc] sm:$0xf] %v988
                %v990 = vld [vmem:[%s952 + $0xdc8] sm:$0xf]
                %991 = vst [vmem:[%s953 + $0x1f8] sm:$0xf] %v990
                %v992 = vld [vmem:[%s952 + $0xe8c] sm:$0xf]
                %993 = vst [vmem:[%s953 + $0x214] sm:$0xf] %v992
                %v994 = vld [vmem:[%s952 + $0xf50] sm:$0xf]
                %995 = vst [vmem:[%s953 + $0x230] sm:$0xf] %v994
                %v996 = vld [vmem:[%s952 + $0x1014] sm:$0xf]
                %997 = vst [vmem:[%s953 + $0x24c] sm:$0xf] %v996
                %v998 = vld [vmem:[%s952 + $0x10d8] sm:$0xf]
                %999 = vst [vmem:[%s953 + $0x268] sm:$0xf] %v998
                %v1000 = vld [vmem:[%s952 + $0x119c] sm:$0xf]
                %1001 = vst [vmem:[%s953 + $0x284] sm:$0xf] %v1000
                %v1002 = vld [vmem:[%s952 + $0x1260] sm:$0xf]
                %1003 = vst [vmem:[%s953 + $0x2a0] sm:$0xf] %v1002
                %v1004 = vld [vmem:[%s952 + $0x1324] sm:$0xf]
                %1005 = vst [vmem:[%s953 + $0x2bc] sm:$0xf] %v1004
                %v1006 = vld [vmem:[%s952 + $0x13e8] sm:$0xf]
                %1007 = vst [vmem:[%s953 + $0x2d8] sm:$0xf] %v1006
                %v1008 = vld [vmem:[%s952 + $0x14ac] sm:$0xf]
                %1009 = vst [vmem:[%s953 + $0x2f4] sm:$0xf] %v1008
                %v1010 = vld [vmem:[%s952 + $0x1570] sm:$0xf]
                %1011 = vst [vmem:[%s953 + $0x310] sm:$0xf] %v1010
                %v1012 = vld [vmem:[%s952 + $0x1634] sm:$0xf]
                %1013 = vst [vmem:[%s953 + $0x32c] sm:$0xf] %v1012
                %v1014 = vld [vmem:[%s952 + $0x16f8] sm:$0xf]
                %1015 = vst [vmem:[%s953 + $0x348] sm:$0xf] %v1014
                %v1016 = vld [vmem:[%s952 + $0x17bc] sm:$0xf]
                %1017 = vst [vmem:[%s953 + $0x364] sm:$0xf] %v1016
                %v1018 = vld [vmem:[%s952 + $0x1880] sm:$0xf]
                %1019 = vst [vmem:[%s953 + $0x380] sm:$0xf] %v1018
                %v1020 = vld [vmem:[%s952 + $0x1944] sm:$0xf]
                %1021 = vst [vmem:[%s953 + $0x39c] sm:$0xf] %v1020
                %v1022 = vld [vmem:[%s952 + $0x1a08] sm:$0xf]
                %1023 = vst [vmem:[%s953 + $0x3b8] sm:$0xf] %v1022
                %v1024 = vld [vmem:[%s952 + $0x1acc] sm:$0xf]
                %1025 = vst [vmem:[%s953 + $0x3d4] sm:$0xf] %v1024
                %v1026 = vld [vmem:[%s952 + $0x1b90] sm:$0xf]
                %1027 = vst [vmem:[%s953 + $0x3f0] sm:$0xf] %v1026
                %v1028 = vld [vmem:[%s952 + $0x1c54] sm:$0xf]
                %1029 = vst [vmem:[%s953 + $0x40c] sm:$0xf] %v1028
                %v1030 = vld [vmem:[%s952 + $0x1d18] sm:$0xf]
                %1031 = vst [vmem:[%s953 + $0x428] sm:$0xf] %v1030
                %v1032 = vld [vmem:[%s952 + $0x1ddc] sm:$0xf]
                %1033 = vst [vmem:[%s953 + $0x444] sm:$0xf] %v1032
                %v1034 = vld [vmem:[%s952 + $0x1ea0] sm:$0xf]
                %1035 = vst [vmem:[%s953 + $0x460] sm:$0xf] %v1034
                %v1036 = vld [vmem:[%s952 + $0x1f64] sm:$0xf]
                %1037 = vst [vmem:[%s953 + $0x47c] sm:$0xf] %v1036
                %v1038 = vld [vmem:[%s952 + $0x2028] sm:$0xf]
                %1039 = vst [vmem:[%s953 + $0x498] sm:$0xf] %v1038
                %v1040 = vld [vmem:[%s952 + $0x20ec] sm:$0xf]
                %1041 = vst [vmem:[%s953 + $0x4b4] sm:$0xf] %v1040
                %v1042 = vld [vmem:[%s952 + $0x21b0] sm:$0xf]
                %1043 = vst [vmem:[%s953 + $0x4d0] sm:$0xf] %v1042
                %v1044 = vld [vmem:[%s952 + $0x2274] sm:$0xf]
                %1045 = vst [vmem:[%s953 + $0x4ec] sm:$0xf] %v1044
                %v1046 = vld [vmem:[%s952 + $0x2338] sm:$0xf]
                %1047 = vst [vmem:[%s953 + $0x508] sm:$0xf] %v1046
                %v1048 = vld [vmem:[%s952 + $0x23fc] sm:$0xf]
                %1049 = vst [vmem:[%s953 + $0x524] sm:$0xf] %v1048
                %v1050 = vld [vmem:[%s952 + $0x24c0] sm:$0xf]
                %1051 = vst [vmem:[%s953 + $0x540] sm:$0xf] %v1050
                %v1052 = vld [vmem:[%s952 + $0x2584] sm:$0xf]
                %1053 = vst [vmem:[%s953 + $0x55c] sm:$0xf] %v1052
                %v1054 = vld [vmem:[%s952 + $0x2648] sm:$0xf]
                %1055 = vst [vmem:[%s953 + $0x578] sm:$0xf] %v1054
                %v1056 = vld [vmem:[%s952 + $0x270c] sm:$0xf]
                %1057 = vst [vmem:[%s953 + $0x594] sm:$0xf] %v1056
                %v1058 = vld [vmem:[%s952 + $0x27d0] sm:$0xf]
                %1059 = vst [vmem:[%s953 + $0x5b0] sm:$0xf] %v1058
                %v1060 = vld [vmem:[%s952 + $0x2894] sm:$0xf]
                %1061 = vst [vmem:[%s953 + $0x5cc] sm:$0xf] %v1060
                %v1062 = vld [vmem:[%s952 + $0x2958] sm:$0xf]
                %1063 = vst [vmem:[%s953 + $0x5e8] sm:$0xf] %v1062
                %v1064 = vld [vmem:[%s952 + $0x2a1c] sm:$0xf]
                %1065 = vst [vmem:[%s953 + $0x604] sm:$0xf] %v1064
                %v1066 = vld [vmem:[%s952 + $0x2ae0] sm:$0xf]
                %1067 = vst [vmem:[%s953 + $0x620] sm:$0xf] %v1066
                %v1068 = vld [vmem:[%s952 + $0x2ba4] sm:$0xf]
                %1069 = vst [vmem:[%s953 + $0x63c] sm:$0xf] %v1068
                %v1070 = vld [vmem:[%s952 + $0x2c68] sm:$0xf]
                %1071 = vst [vmem:[%s953 + $0x658] sm:$0xf] %v1070
                %v1072 = vld [vmem:[%s952 + $0x2d2c] sm:$0xf]
                %1073 = vst [vmem:[%s953 + $0x674] sm:$0xf] %v1072
                %v1074 = vld [vmem:[%s952 + $0x2df0] sm:$0xf]
                %1075 = vst [vmem:[%s953 + $0x690] sm:$0xf] %v1074
                %v1076 = vld [vmem:[%s952 + $0x2eb4] sm:$0xf]
                %1077 = vst [vmem:[%s953 + $0x6ac] sm:$0xf] %v1076
                %v1078 = vld [vmem:[%s952 + $0x2f78] sm:$0xf]
                %1079 = vst [vmem:[%s953 + $0x6c8] sm:$0xf] %v1078
                %v1080 = vld [vmem:[%s952 + $0x303c] sm:$0xf]
                %1081 = vst [vmem:[%s953 + $0x6e4] sm:$0xf] %v1080
                %v1082 = vld [vmem:[%s952 + $0x3100] sm:$0xf]
                %1083 = vst [vmem:[%s953 + $0x700] sm:$0xf] %v1082
                %v1084 = vld [vmem:[%s952 + $0x31c4] sm:$0xf]
                %1085 = vst [vmem:[%s953 + $0x71c] sm:$0xf] %v1084
                %v1086 = vld [vmem:[%s952 + $0x3288] sm:$0xf]
                %1087 = vst [vmem:[%s953 + $0x738] sm:$0xf] %v1086
                %v1088 = vld [vmem:[%s952 + $0x334c] sm:$0xf]
                %1089 = vst [vmem:[%s953 + $0x754] sm:$0xf] %v1088
                %v1090 = vld [vmem:[%s952 + $0x3410] sm:$0xf]
                %1091 = vst [vmem:[%s953 + $0x770] sm:$0xf] %v1090
                %v1092 = vld [vmem:[%s952 + $0x34d4] sm:$0xf]
                %1093 = vst [vmem:[%s953 + $0x78c] sm:$0xf] %v1092
                %v1094 = vld [vmem:[%s952 + $0x3598] sm:$0xf]
                %1095 = vst [vmem:[%s953 + $0x7a8] sm:$0xf] %v1094
                %v1096 = vld [vmem:[%s952 + $0x365c] sm:$0xf]
                %1097 = vst [vmem:[%s953 + $0x7c4] sm:$0xf] %v1096
                %v1098 = vld [vmem:[%s952 + $0x3720] sm:$0xf]
                %1099 = vst [vmem:[%s953 + $0x7e0] sm:$0xf] %v1098
                %v1100 = vld [vmem:[%s952 + $0x37e4] sm:$0xf]
                %1101 = vst [vmem:[%s953 + $0x7fc] sm:$0xf] %v1100
                %v1102 = vld [vmem:[%s952 + $0x38a8] sm:$0xf]
                %1103 = vst [vmem:[%s953 + $0x818] sm:$0xf] %v1102
                %v1104 = vld [vmem:[%s952 + $0x396c] sm:$0xf]
                %1105 = vst [vmem:[%s953 + $0x834] sm:$0xf] %v1104
                %v1106 = vld [vmem:[%s952 + $0x3a30] sm:$0xf]
                %1107 = vst [vmem:[%s953 + $0x850] sm:$0xf] %v1106
                %v1108 = vld [vmem:[%s952 + $0x3af4] sm:$0xf]
                %1109 = vst [vmem:[%s953 + $0x86c] sm:$0xf] %v1108
                %v1110 = vld [vmem:[%s952 + $0x3bb8] sm:$0xf]
                %1111 = vst [vmem:[%s953 + $0x888] sm:$0xf] %v1110
                %v1112 = vld [vmem:[%s952 + $0x3c7c] sm:$0xf]
                %1113 = vst [vmem:[%s953 + $0x8a4] sm:$0xf] %v1112
                %v1114 = vld [vmem:[%s952 + $0x3d40] sm:$0xf]
                %1115 = vst [vmem:[%s953 + $0x8c0] sm:$0xf] %v1114
                %v1116 = vld [vmem:[%s952 + $0x3e04] sm:$0xf]
                %1117 = vst [vmem:[%s953 + $0x8dc] sm:$0xf] %v1116
                %v1118 = vld [vmem:[%s952 + $0x3ec8] sm:$0xf]
                %1119 = vst [vmem:[%s953 + $0x8f8] sm:$0xf] %v1118
                %v1120 = vld [vmem:[%s952 + $0x3f8c] sm:$0xf]
                %1121 = vst [vmem:[%s953 + $0x914] sm:$0xf] %v1120
                %v1122 = vld [vmem:[%s952 + $0x4050] sm:$0xf]
                %1123 = vst [vmem:[%s953 + $0x930] sm:$0xf] %v1122
                %v1124 = vld [vmem:[%s952 + $0x4114] sm:$0xf]
                %1125 = vst [vmem:[%s953 + $0x94c] sm:$0xf] %v1124
                %v1126 = vld [vmem:[%s952 + $0x41d8] sm:$0xf]
                %1127 = vst [vmem:[%s953 + $0x968] sm:$0xf] %v1126
                %v1128 = vld [vmem:[%s952 + $0x429c] sm:$0xf]
                %1129 = vst [vmem:[%s953 + $0x984] sm:$0xf] %v1128
                %v1130 = vld [vmem:[%s952 + $0x4360] sm:$0xf]
                %1131 = vst [vmem:[%s953 + $0x9a0] sm:$0xf] %v1130
                %v1132 = vld [vmem:[%s952 + $0x4424] sm:$0xf]
                %1133 = vst [vmem:[%s953 + $0x9bc] sm:$0xf] %v1132
                %v1134 = vld [vmem:[%s952 + $0x44e8] sm:$0xf]
                %1135 = vst [vmem:[%s953 + $0x9d8] sm:$0xf] %v1134
                %v1136 = vld [vmem:[%s952 + $0x45ac] sm:$0xf]
                %1137 = vst [vmem:[%s953 + $0x9f4] sm:$0xf] %v1136
                %v1138 = vld [vmem:[%s952 + $0x4670] sm:$0xf]
                %1139 = vst [vmem:[%s953 + $0xa10] sm:$0xf] %v1138
                %v1140 = vld [vmem:[%s952 + $0x4734] sm:$0xf]
                %1141 = vst [vmem:[%s953 + $0xa2c] sm:$0xf] %v1140
                %v1142 = vld [vmem:[%s952 + $0x47f8] sm:$0xf]
                %1143 = vst [vmem:[%s953 + $0xa48] sm:$0xf] %v1142
                %v1144 = vld [vmem:[%s952 + $0x48bc] sm:$0xf]
                %1145 = vst [vmem:[%s953 + $0xa64] sm:$0xf] %v1144
                %v1146 = vld [vmem:[%s952 + $0x4980] sm:$0xf]
                %1147 = vst [vmem:[%s953 + $0xa80] sm:$0xf] %v1146
                %v1148 = vld [vmem:[%s952 + $0x4a44] sm:$0xf]
                %1149 = vst [vmem:[%s953 + $0xa9c] sm:$0xf] %v1148
                %v1150 = vld [vmem:[%s952 + $0x4b08] sm:$0xf]
                %1151 = vst [vmem:[%s953 + $0xab8] sm:$0xf] %v1150
                %v1152 = vld [vmem:[%s952 + $0x4bcc] sm:$0xf]
                %1153 = vst [vmem:[%s953 + $0xad4] sm:$0xf] %v1152
                %v1154 = vld [vmem:[%s952 + $0x4c90] sm:$0xf]
                %1155 = vst [vmem:[%s953 + $0xaf0] sm:$0xf] %v1154
                %v1156 = vld [vmem:[%s952 + $0x4d54] sm:$0xf]
                %1157 = vst [vmem:[%s953 + $0xb0c] sm:$0xf] %v1156
                %v1158 = vld [vmem:[%s952 + $0x4e18] sm:$0xf]
                %1159 = vst [vmem:[%s953 + $0xb28] sm:$0xf] %v1158
                %v1160 = vld [vmem:[%s952 + $0x4edc] sm:$0xf]
                %1161 = vst [vmem:[%s953 + $0xb44] sm:$0xf] %v1160
                %v1162 = vld [vmem:[%s952 + $0x4fa0] sm:$0xf]
                %1163 = vst [vmem:[%s953 + $0xb60] sm:$0xf] %v1162
                %v1164 = vld [vmem:[%s952 + $0x5064] sm:$0xf]
                %1165 = vst [vmem:[%s953 + $0xb7c] sm:$0xf] %v1164
                %v1166 = vld [vmem:[%s952 + $0x5128] sm:$0xf]
                %1167 = vst [vmem:[%s953 + $0xb98] sm:$0xf] %v1166
                %v1168 = vld [vmem:[%s952 + $0x51ec] sm:$0xf]
                %1169 = vst [vmem:[%s953 + $0xbb4] sm:$0xf] %v1168
                %v1170 = vld [vmem:[%s952 + $0x52b0] sm:$0xf]
                %1171 = vst [vmem:[%s953 + $0xbd0] sm:$0xf] %v1170
                %v1172 = vld [vmem:[%s952 + $0x5374] sm:$0xf]
                %1173 = vst [vmem:[%s953 + $0xbec] sm:$0xf] %v1172
                %v1174 = vld [vmem:[%s952 + $0x5438] sm:$0xf]
                %1175 = vst [vmem:[%s953 + $0xc08] sm:$0xf] %v1174
                %v1176 = vld [vmem:[%s952 + $0x54fc] sm:$0xf]
                %1177 = vst [vmem:[%s953 + $0xc24] sm:$0xf] %v1176
                %v1178 = vld [vmem:[%s952 + $0x55c0] sm:$0xf]
                %1179 = vst [vmem:[%s953 + $0xc40] sm:$0xf] %v1178
                %v1180 = vld [vmem:[%s952 + $0x5684] sm:$0xf]
                %1181 = vst [vmem:[%s953 + $0xc5c] sm:$0xf] %v1180
                %v1182 = vld [vmem:[%s952 + $0x5748] sm:$0xf]
                %1183 = vst [vmem:[%s953 + $0xc78] sm:$0xf] %v1182
                %v1184 = vld [vmem:[%s952 + $0x580c] sm:$0xf]
                %1185 = vst [vmem:[%s953 + $0xc94] sm:$0xf] %v1184
                %v1186 = vld [vmem:[%s952 + $0x58d0] sm:$0xf]
                %1187 = vst [vmem:[%s953 + $0xcb0] sm:$0xf] %v1186
                %v1188 = vld [vmem:[%s952 + $0x5994] sm:$0xf]
                %1189 = vst [vmem:[%s953 + $0xccc] sm:$0xf] %v1188
                %v1190 = vld [vmem:[%s952 + $0x5a58] sm:$0xf]
                %1191 = vst [vmem:[%s953 + $0xce8] sm:$0xf] %v1190
                %v1192 = vld [vmem:[%s952 + $0x5b1c] sm:$0xf]
                %1193 = vst [vmem:[%s953 + $0xd04] sm:$0xf] %v1192
                %v1194 = vld [vmem:[%s952 + $0x5be0] sm:$0xf]
                %1195 = vst [vmem:[%s953 + $0xd20] sm:$0xf] %v1194
                %v1196 = vld [vmem:[%s952 + $0x5ca4] sm:$0xf]
                %1197 = vst [vmem:[%s953 + $0xd3c] sm:$0xf] %v1196
                %v1198 = vld [vmem:[%s952 + $0x5d68] sm:$0xf]
                %1199 = vst [vmem:[%s953 + $0xd58] sm:$0xf] %v1198
                %v1200 = vld [vmem:[%s952 + $0x5e2c] sm:$0xf]
                %1201 = vst [vmem:[%s953 + $0xd74] sm:$0xf] %v1200
                %v1202 = vld [vmem:[%s952 + $0x5ef0] sm:$0xf]
                %1203 = vst [vmem:[%s953 + $0xd90] sm:$0xf] %v1202
                %v1204 = vld [vmem:[%s952 + $0x5fb4] sm:$0xf]
                %1205 = vst [vmem:[%s953 + $0xdac] sm:$0xf] %v1204
                %v1206 = vld [vmem:[%s952 + $0x6078] sm:$0xf]
                %1207 = vst [vmem:[%s953 + $0xdc8] sm:$0xf] %v1206
                %v1208 = vld [vmem:[%s952 + $0x613c] sm:$0xf]
                %1209 = vst [vmem:[%s953 + $0xde4] sm:$0xf] %v1208
              $region44: #{generator_forward.5} parent=31 // loop_footer
                %s951 = sadd.s32 1, %s947
              $region45: #{generator_forward.5} parent=31 // loop_footer_branch
                %946 = sbr.rel target = $region41
              $region46: #{generator_forward.5} parent=31 // loop_exit
                _
            $region32: #{generator_forward.5} parent=27 // pred_fallthru
              _
          $region28: #{generator_forward.5} parent=23 // pred_fallthru
            _
          %1210 = vnop
        $region24: #{generator_forward.5} parent=19 // pred_fallthru
          _
        // Predicated region
        $region47: #{generator_forward.5} parent=19 // pred_check
          %p1211 = pneg %p93
        $region48: #{generator_forward.5} parent=19 // pred_check_branch
          %1213 = sbr.rel (%p1211) target = $region50
        $region49: #{generator_forward.5} parent=19 // pred_region
          %s1214 = smul.u32 7, %s17
          %p1215 = scmp.lt.s32.totalorder %s1214, 48
          %s1216 = scalar_select %p1215, %s1214, 48
          %s1217 = smul.addr %s1216, 4
          %s1218 = scalar_lea.vmem %s2, %s1217
          %s1219 = smul.u32 7, %s17
        $region50: #{generator_forward.5} parent=19 // pred_fallthru
          _
      $region20: #{generator_forward.5} parent=5 // pred_fallthru
        _
      %p1220 = scmp.le.s32.totalorder 1, %s9
      %p1221 = scmp.lt.s32.totalorder %s9, 8
      %p1222 = pnand %p1220, %p1221
      %p1223 = pneg %p1222
      // Predicated region
      $region51: #{generator_forward.5} parent=5 // pred_check
        _
      $region52: #{generator_forward.5} parent=5 // pred_check_branch
        %1225 = sbr.rel (%p1222) target = $region54
      $region53: #{generator_forward.5} parent=5 // pred_region
        %s1226 = ssub.s32 %s9, 1
        %s1227 = sand.u32 %s60, 1
        %s1228 = sand.u32 %s60, 1
        %s1229 = smul.addr %s1228, 3584
        %s1230 = scalar_lea.vmem [#allocation2], %s1229
        // Predicated region
        $region55: #{generator_forward.5} parent=53 // pred_check
          %p1231 = pneg %p73
        $region56: #{generator_forward.5} parent=53 // pred_check_branch
          %1233 = sbr.rel (%p1231) target = $region58
        $region57: #{generator_forward.5} parent=53 // pred_region
          _
        $region58: #{generator_forward.5} parent=53 // pred_fallthru
          _
        %p1234 = scmp.lt.s32.totalorder %s18, 0
        %s1235 = scalar_select %p1234, %s18, 0
        %s1236 = smul.addr %s1235, 8
        %s1237 = scalar_lea.vmem %s0, %s1236
        %p1238 = pneg %p47
        %p1239 = pneg %p44
        %s1240 = sand.u32 %s60, 1
        %s1241 = sand.u32 %s60, 1
        %s1242 = smul.addr %s1241, 3584
        %s1243 = scalar_lea.vmem [#allocation2], %s1242
        %p1244 = pneg %p73
        %p1245 = pneg %p70
        %s1246 = smul.u32 7, %s19
        %p1247 = scmp.lt.s32.totalorder %s1246, 48
        %s1248 = scalar_select %p1247, %s1246, 48
        %s1249 = smul.addr %s1248, 4
        %s1250 = scalar_lea.vmem %s2, %s1249
        %p1251 = pneg %p99
        %p1252 = pneg %p96
        %p1253 = pneg %p127
        %p1254 = pneg %p124
        %s1255 = smul.u32 7, %s19
        %p1256 = scmp.lt.s32.totalorder %s18, 0
        %s1257 = scalar_select %p1256, %s18, 0
        %p1258 = scmp.lt.s32.totalorder %s1255, 48
        %s1259 = scalar_select %p1258, %s1255, 48
        %s1260 = smul.addr %s1257, 49
        %s1261 = sadd.s32 %s1259, %s1260
        %s1262 = smul.addr %s1261, 2
        %s1263 = scalar_lea.vmem %s3, %s1262
        %p1264 = scmp.lt.s32.totalorder %s18, 0
        %s1265 = scalar_select %p1264, %s18, 0
        %s1266 = smul.addr %s1265, 8
        %s1267 = scalar_lea.vmem %s0, %s1266
        %s1268 = smul.u32 7, %s19
        %s1269 = smul.u32 7, %s19
        %p1270 = scmp.lt.s32.totalorder %s1269, 48
        %s1271 = scalar_select %p1270, %s1269, 48
        %s1272 = smul.addr %s1271, 4
        %s1273 = scalar_lea.vmem %s2, %s1272
        %s1274 = smul.u32 7, %s19
        %s1275 = smul.u32 7, %s19
        %p1276 = scmp.lt.s32.totalorder %s18, 0
        %s1277 = scalar_select %p1276, %s18, 0
        %p1278 = scmp.lt.s32.totalorder %s1275, 48
        %s1279 = scalar_select %p1278, %s1275, 48
        %s1280 = smul.addr %s1277, 49
        %s1281 = sadd.s32 %s1279, %s1280
        %s1282 = smul.addr %s1281, 2
        %s1283 = scalar_lea.vmem %s3, %s1282
        %s1284 = smul.u32 7, %s19
        %v1286 = vld [vmem:[%s1267] sm:$0xff]
        %v1287 = vld [vmem:[%s1230] sm:$0xff]
        %v1288 = vld [vmem:[%s1230 + $0x8] sm:$0xff]
        %v1289 = vld [vmem:[%s1230 + $0x10] sm:$0xff]
        %v1290 = vld [vmem:[%s1230 + $0x18] sm:$0xf]
        %v1291 = vld [vmem:[%s1230 + $0x1c] sm:$0xff]
        %v1292 = vld [vmem:[%s1230 + $0x24] sm:$0xff]
        %v1293 = vld [vmem:[%s1230 + $0x2c] sm:$0xff]
        %v1294 = vld [vmem:[%s1230 + $0x34] sm:$0xf]
        %v1295 = vld [vmem:[%s1230 + $0x38] sm:$0xff]
        %v1296 = vld [vmem:[%s1230 + $0x40] sm:$0xff]
        %v1297 = vld [vmem:[%s1230 + $0x48] sm:$0xff]
        %v1298 = vld [vmem:[%s1230 + $0x50] sm:$0xf]
        %v1299 = vld [vmem:[%s1230 + $0x54] sm:$0xff]
        %v1300 = vld [vmem:[%s1230 + $0x5c] sm:$0xff]
        %v1301 = vld [vmem:[%s1230 + $0x64] sm:$0xff]
        %v1302 = vld [vmem:[%s1230 + $0x6c] sm:$0xf]
        %v1303 = vld [vmem:[%s1230 + $0x70] sm:$0xff]
        %v1304 = vld [vmem:[%s1230 + $0x78] sm:$0xff]
        %v1305 = vld [vmem:[%s1230 + $0x80] sm:$0xff]
        %v1306 = vld [vmem:[%s1230 + $0x88] sm:$0xf]
        %v1307 = vld [vmem:[%s1230 + $0x8c] sm:$0xff]
        %v1308 = vld [vmem:[%s1230 + $0x94] sm:$0xff]
        %v1309 = vld [vmem:[%s1230 + $0x9c] sm:$0xff]
        %v1310 = vld [vmem:[%s1230 + $0xa4] sm:$0xf]
        %v1311 = vld [vmem:[%s1230 + $0xa8] sm:$0xff]
        %v1312 = vld [vmem:[%s1230 + $0xb0] sm:$0xff]
        %v1313 = vld [vmem:[%s1230 + $0xb8] sm:$0xff]
        %v1314 = vld [vmem:[%s1230 + $0xc0] sm:$0xf]
        %v1315 = vld [vmem:[%s1230 + $0xc4] sm:$0xff]
        %v1316 = vld [vmem:[%s1230 + $0xcc] sm:$0xff]
        %v1317 = vld [vmem:[%s1230 + $0xd4] sm:$0xff]
        %v1318 = vld [vmem:[%s1230 + $0xdc] sm:$0xf]
        %v1319 = vld [vmem:[%s1230 + $0xe0] sm:$0xff]
        %v1320 = vld [vmem:[%s1230 + $0xe8] sm:$0xff]
        %v1321 = vld [vmem:[%s1230 + $0xf0] sm:$0xff]
        %v1322 = vld [vmem:[%s1230 + $0xf8] sm:$0xf]
        %v1323 = vld [vmem:[%s1230 + $0xfc] sm:$0xff]
        %v1324 = vld [vmem:[%s1230 + $0x104] sm:$0xff]
        %v1325 = vld [vmem:[%s1230 + $0x10c] sm:$0xff]
        %v1326 = vld [vmem:[%s1230 + $0x114] sm:$0xf]
        %v1327 = vld [vmem:[%s1230 + $0x118] sm:$0xff]
        %v1328 = vld [vmem:[%s1230 + $0x120] sm:$0xff]
        %v1329 = vld [vmem:[%s1230 + $0x128] sm:$0xff]
        %v1330 = vld [vmem:[%s1230 + $0x130] sm:$0xf]
        %v1331 = vld [vmem:[%s1230 + $0x134] sm:$0xff]
        %v1332 = vld [vmem:[%s1230 + $0x13c] sm:$0xff]
        %v1333 = vld [vmem:[%s1230 + $0x144] sm:$0xff]
        %v1334 = vld [vmem:[%s1230 + $0x14c] sm:$0xf]
        %v1335 = vld [vmem:[%s1230 + $0x150] sm:$0xff]
        %v1336 = vld [vmem:[%s1230 + $0x158] sm:$0xff]
        %v1337 = vld [vmem:[%s1230 + $0x160] sm:$0xff]
        %v1338 = vld [vmem:[%s1230 + $0x168] sm:$0xf]
        %v1339 = vld [vmem:[%s1230 + $0x16c] sm:$0xff]
        %v1340 = vld [vmem:[%s1230 + $0x174] sm:$0xff]
        %v1341 = vld [vmem:[%s1230 + $0x17c] sm:$0xff]
        %v1342 = vld [vmem:[%s1230 + $0x184] sm:$0xf]
        %v1343 = vld [vmem:[%s1230 + $0x188] sm:$0xff]
        %v1344 = vld [vmem:[%s1230 + $0x190] sm:$0xff]
        %v1345 = vld [vmem:[%s1230 + $0x198] sm:$0xff]
        %v1346 = vld [vmem:[%s1230 + $0x1a0] sm:$0xf]
        %v1347 = vld [vmem:[%s1230 + $0x1a4] sm:$0xff]
        %v1348 = vld [vmem:[%s1230 + $0x1ac] sm:$0xff]
        %v1349 = vld [vmem:[%s1230 + $0x1b4] sm:$0xff]
        %v1350 = vld [vmem:[%s1230 + $0x1bc] sm:$0xf]
        %v1351 = vld [vmem:[%s1230 + $0x1c0] sm:$0xff]
        %v1352 = vld [vmem:[%s1230 + $0x1c8] sm:$0xff]
        %v1353 = vld [vmem:[%s1230 + $0x1d0] sm:$0xff]
        %v1354 = vld [vmem:[%s1230 + $0x1d8] sm:$0xf]
        %v1355 = vld [vmem:[%s1230 + $0x1dc] sm:$0xff]
        %v1356 = vld [vmem:[%s1230 + $0x1e4] sm:$0xff]
        %v1357 = vld [vmem:[%s1230 + $0x1ec] sm:$0xff]
        %v1358 = vld [vmem:[%s1230 + $0x1f4] sm:$0xf]
        %v1359 = vld [vmem:[%s1230 + $0x1f8] sm:$0xff]
        %v1360 = vld [vmem:[%s1230 + $0x200] sm:$0xff]
        %v1361 = vld [vmem:[%s1230 + $0x208] sm:$0xff]
        %v1362 = vld [vmem:[%s1230 + $0x210] sm:$0xf]
        %v1363 = vld [vmem:[%s1230 + $0x214] sm:$0xff]
        %v1364 = vld [vmem:[%s1230 + $0x21c] sm:$0xff]
        %v1365 = vld [vmem:[%s1230 + $0x224] sm:$0xff]
        %v1366 = vld [vmem:[%s1230 + $0x22c] sm:$0xf]
        %v1367 = vld [vmem:[%s1230 + $0x230] sm:$0xff]
        %v1368 = vld [vmem:[%s1230 + $0x238] sm:$0xff]
        %v1369 = vld [vmem:[%s1230 + $0x240] sm:$0xff]
        %v1370 = vld [vmem:[%s1230 + $0x248] sm:$0xf]
        %v1371 = vld [vmem:[%s1230 + $0x24c] sm:$0xff]
        %v1372 = vld [vmem:[%s1230 + $0x254] sm:$0xff]
        %v1373 = vld [vmem:[%s1230 + $0x25c] sm:$0xff]
        %v1374 = vld [vmem:[%s1230 + $0x264] sm:$0xf]
        %v1375 = vld [vmem:[%s1230 + $0x268] sm:$0xff]
        %v1376 = vld [vmem:[%s1230 + $0x270] sm:$0xff]
        %v1377 = vld [vmem:[%s1230 + $0x278] sm:$0xff]
        %v1378 = vld [vmem:[%s1230 + $0x280] sm:$0xf]
        %v1379 = vld [vmem:[%s1230 + $0x284] sm:$0xff]
        %v1380 = vld [vmem:[%s1230 + $0x28c] sm:$0xff]
        %v1381 = vld [vmem:[%s1230 + $0x294] sm:$0xff]
        %v1382 = vld [vmem:[%s1230 + $0x29c] sm:$0xf]
        %v1383 = vld [vmem:[%s1230 + $0x2a0] sm:$0xff]
        %v1384 = vld [vmem:[%s1230 + $0x2a8] sm:$0xff]
        %v1385 = vld [vmem:[%s1230 + $0x2b0] sm:$0xff]
        %v1386 = vld [vmem:[%s1230 + $0x2b8] sm:$0xf]
        %v1387 = vld [vmem:[%s1230 + $0x2bc] sm:$0xff]
        %v1388 = vld [vmem:[%s1230 + $0x2c4] sm:$0xff]
        %v1389 = vld [vmem:[%s1230 + $0x2cc] sm:$0xff]
        %v1390 = vld [vmem:[%s1230 + $0x2d4] sm:$0xf]
        %v1391 = vld [vmem:[%s1230 + $0x2d8] sm:$0xff]
        %v1392 = vld [vmem:[%s1230 + $0x2e0] sm:$0xff]
        %v1393 = vld [vmem:[%s1230 + $0x2e8] sm:$0xff]
        %v1394 = vld [vmem:[%s1230 + $0x2f0] sm:$0xf]
        %v1395 = vld [vmem:[%s1230 + $0x2f4] sm:$0xff]
        %v1396 = vld [vmem:[%s1230 + $0x2fc] sm:$0xff]
        %v1397 = vld [vmem:[%s1230 + $0x304] sm:$0xff]
        %v1398 = vld [vmem:[%s1230 + $0x30c] sm:$0xf]
        %v1399 = vld [vmem:[%s1230 + $0x310] sm:$0xff]
        %v1400 = vld [vmem:[%s1230 + $0x318] sm:$0xff]
        %v1401 = vld [vmem:[%s1230 + $0x320] sm:$0xff]
        %v1402 = vld [vmem:[%s1230 + $0x328] sm:$0xf]
        %v1403 = vld [vmem:[%s1230 + $0x32c] sm:$0xff]
        %v1404 = vld [vmem:[%s1230 + $0x334] sm:$0xff]
        %v1405 = vld [vmem:[%s1230 + $0x33c] sm:$0xff]
        %v1406 = vld [vmem:[%s1230 + $0x344] sm:$0xf]
        %v1407 = vld [vmem:[%s1230 + $0x348] sm:$0xff]
        %v1408 = vld [vmem:[%s1230 + $0x350] sm:$0xff]
        %v1409 = vld [vmem:[%s1230 + $0x358] sm:$0xff]
        %v1410 = vld [vmem:[%s1230 + $0x360] sm:$0xf]
        %v1411 = vld [vmem:[%s1230 + $0x364] sm:$0xff]
        %v1412 = vld [vmem:[%s1230 + $0x36c] sm:$0xff]
        %v1413 = vld [vmem:[%s1230 + $0x374] sm:$0xff]
        %v1414 = vld [vmem:[%s1230 + $0x37c] sm:$0xf]
        %v1415 = vld [vmem:[%s1230 + $0x380] sm:$0xff]
        %v1416 = vld [vmem:[%s1230 + $0x388] sm:$0xff]
        %v1417 = vld [vmem:[%s1230 + $0x390] sm:$0xff]
        %v1418 = vld [vmem:[%s1230 + $0x398] sm:$0xf]
        %v1419 = vld [vmem:[%s1230 + $0x39c] sm:$0xff]
        %v1420 = vld [vmem:[%s1230 + $0x3a4] sm:$0xff]
        %v1421 = vld [vmem:[%s1230 + $0x3ac] sm:$0xff]
        %v1422 = vld [vmem:[%s1230 + $0x3b4] sm:$0xf]
        %v1423 = vld [vmem:[%s1230 + $0x3b8] sm:$0xff]
        %v1424 = vld [vmem:[%s1230 + $0x3c0] sm:$0xff]
        %v1425 = vld [vmem:[%s1230 + $0x3c8] sm:$0xff]
        %v1426 = vld [vmem:[%s1230 + $0x3d0] sm:$0xf]
        %v1427 = vld [vmem:[%s1230 + $0x3d4] sm:$0xff]
        %v1428 = vld [vmem:[%s1230 + $0x3dc] sm:$0xff]
        %v1429 = vld [vmem:[%s1230 + $0x3e4] sm:$0xff]
        %v1430 = vld [vmem:[%s1230 + $0x3ec] sm:$0xf]
        %v1431 = vld [vmem:[%s1230 + $0x3f0] sm:$0xff]
        %v1432 = vld [vmem:[%s1230 + $0x3f8] sm:$0xff]
        %v1433 = vld [vmem:[%s1230 + $0x400] sm:$0xff]
        %v1434 = vld [vmem:[%s1230 + $0x408] sm:$0xf]
        %v1435 = vld [vmem:[%s1230 + $0x40c] sm:$0xff]
        %v1436 = vld [vmem:[%s1230 + $0x414] sm:$0xff]
        %v1437 = vld [vmem:[%s1230 + $0x41c] sm:$0xff]
        %v1438 = vld [vmem:[%s1230 + $0x424] sm:$0xf]
        %v1439 = vld [vmem:[%s1230 + $0x428] sm:$0xff]
        %v1440 = vld [vmem:[%s1230 + $0x430] sm:$0xff]
        %v1441 = vld [vmem:[%s1230 + $0x438] sm:$0xff]
        %v1442 = vld [vmem:[%s1230 + $0x440] sm:$0xf]
        %v1443 = vld [vmem:[%s1230 + $0x444] sm:$0xff]
        %v1444 = vld [vmem:[%s1230 + $0x44c] sm:$0xff]
        %v1445 = vld [vmem:[%s1230 + $0x454] sm:$0xff]
        %v1446 = vld [vmem:[%s1230 + $0x45c] sm:$0xf]
        %v1447 = vld [vmem:[%s1230 + $0x460] sm:$0xff]
        %v1448 = vld [vmem:[%s1230 + $0x468] sm:$0xff]
        %v1449 = vld [vmem:[%s1230 + $0x470] sm:$0xff]
        %v1450 = vld [vmem:[%s1230 + $0x478] sm:$0xf]
        %v1451 = vld [vmem:[%s1230 + $0x47c] sm:$0xff]
        %v1452 = vld [vmem:[%s1230 + $0x484] sm:$0xff]
        %v1453 = vld [vmem:[%s1230 + $0x48c] sm:$0xff]
        %v1454 = vld [vmem:[%s1230 + $0x494] sm:$0xf]
        %v1455 = vld [vmem:[%s1230 + $0x498] sm:$0xff]
        %v1456 = vld [vmem:[%s1230 + $0x4a0] sm:$0xff]
        %v1457 = vld [vmem:[%s1230 + $0x4a8] sm:$0xff]
        %v1458 = vld [vmem:[%s1230 + $0x4b0] sm:$0xf]
        %v1459 = vld [vmem:[%s1230 + $0x4b4] sm:$0xff]
        %v1460 = vld [vmem:[%s1230 + $0x4bc] sm:$0xff]
        %v1461 = vld [vmem:[%s1230 + $0x4c4] sm:$0xff]
        %v1462 = vld [vmem:[%s1230 + $0x4cc] sm:$0xf]
        %v1463 = vld [vmem:[%s1230 + $0x4d0] sm:$0xff]
        %v1464 = vld [vmem:[%s1230 + $0x4d8] sm:$0xff]
        %v1465 = vld [vmem:[%s1230 + $0x4e0] sm:$0xff]
        %v1466 = vld [vmem:[%s1230 + $0x4e8] sm:$0xf]
        %v1467 = vld [vmem:[%s1230 + $0x4ec] sm:$0xff]
        %v1468 = vld [vmem:[%s1230 + $0x4f4] sm:$0xff]
        %v1469 = vld [vmem:[%s1230 + $0x4fc] sm:$0xff]
        %v1470 = vld [vmem:[%s1230 + $0x504] sm:$0xf]
        %v1471 = vld [vmem:[%s1230 + $0x508] sm:$0xff]
        %v1472 = vld [vmem:[%s1230 + $0x510] sm:$0xff]
        %v1473 = vld [vmem:[%s1230 + $0x518] sm:$0xff]
        %v1474 = vld [vmem:[%s1230 + $0x520] sm:$0xf]
        %v1475 = vld [vmem:[%s1230 + $0x524] sm:$0xff]
        %v1476 = vld [vmem:[%s1230 + $0x52c] sm:$0xff]
        %v1477 = vld [vmem:[%s1230 + $0x534] sm:$0xff]
        %v1478 = vld [vmem:[%s1230 + $0x53c] sm:$0xf]
        %v1479 = vld [vmem:[%s1230 + $0x540] sm:$0xff]
        %v1480 = vld [vmem:[%s1230 + $0x548] sm:$0xff]
        %v1481 = vld [vmem:[%s1230 + $0x550] sm:$0xff]
        %v1482 = vld [vmem:[%s1230 + $0x558] sm:$0xf]
        %v1483 = vld [vmem:[%s1230 + $0x55c] sm:$0xff]
        %v1484 = vld [vmem:[%s1230 + $0x564] sm:$0xff]
        %v1485 = vld [vmem:[%s1230 + $0x56c] sm:$0xff]
        %v1486 = vld [vmem:[%s1230 + $0x574] sm:$0xf]
        %v1487 = vld [vmem:[%s1230 + $0x578] sm:$0xff]
        %v1488 = vld [vmem:[%s1230 + $0x580] sm:$0xff]
        %v1489 = vld [vmem:[%s1230 + $0x588] sm:$0xff]
        %v1490 = vld [vmem:[%s1230 + $0x590] sm:$0xf]
        %v1491 = vld [vmem:[%s1230 + $0x594] sm:$0xff]
        %v1492 = vld [vmem:[%s1230 + $0x59c] sm:$0xff]
        %v1493 = vld [vmem:[%s1230 + $0x5a4] sm:$0xff]
        %v1494 = vld [vmem:[%s1230 + $0x5ac] sm:$0xf]
        %v1495 = vld [vmem:[%s1230 + $0x5b0] sm:$0xff]
        %v1496 = vld [vmem:[%s1230 + $0x5b8] sm:$0xff]
        %v1497 = vld [vmem:[%s1230 + $0x5c0] sm:$0xff]
        %v1498 = vld [vmem:[%s1230 + $0x5c8] sm:$0xf]
        %v1499 = vld [vmem:[%s1230 + $0x5cc] sm:$0xff]
        %v1500 = vld [vmem:[%s1230 + $0x5d4] sm:$0xff]
        %v1501 = vld [vmem:[%s1230 + $0x5dc] sm:$0xff]
        %v1502 = vld [vmem:[%s1230 + $0x5e4] sm:$0xf]
        %v1503 = vld [vmem:[%s1230 + $0x5e8] sm:$0xff]
        %v1504 = vld [vmem:[%s1230 + $0x5f0] sm:$0xff]
        %v1505 = vld [vmem:[%s1230 + $0x5f8] sm:$0xff]
        %v1506 = vld [vmem:[%s1230 + $0x600] sm:$0xf]
        %v1507 = vld [vmem:[%s1230 + $0x604] sm:$0xff]
        %v1508 = vld [vmem:[%s1230 + $0x60c] sm:$0xff]
        %v1509 = vld [vmem:[%s1230 + $0x614] sm:$0xff]
        %v1510 = vld [vmem:[%s1230 + $0x61c] sm:$0xf]
        %v1511 = vld [vmem:[%s1230 + $0x620] sm:$0xff]
        %v1512 = vld [vmem:[%s1230 + $0x628] sm:$0xff]
        %v1513 = vld [vmem:[%s1230 + $0x630] sm:$0xff]
        %v1514 = vld [vmem:[%s1230 + $0x638] sm:$0xf]
        %v1515 = vld [vmem:[%s1230 + $0x63c] sm:$0xff]
        %v1516 = vld [vmem:[%s1230 + $0x644] sm:$0xff]
        %v1517 = vld [vmem:[%s1230 + $0x64c] sm:$0xff]
        %v1518 = vld [vmem:[%s1230 + $0x654] sm:$0xf]
        %v1519 = vld [vmem:[%s1230 + $0x658] sm:$0xff]
        %v1520 = vld [vmem:[%s1230 + $0x660] sm:$0xff]
        %v1521 = vld [vmem:[%s1230 + $0x668] sm:$0xff]
        %v1522 = vld [vmem:[%s1230 + $0x670] sm:$0xf]
        %v1523 = vld [vmem:[%s1230 + $0x674] sm:$0xff]
        %v1524 = vld [vmem:[%s1230 + $0x67c] sm:$0xff]
        %v1525 = vld [vmem:[%s1230 + $0x684] sm:$0xff]
        %v1526 = vld [vmem:[%s1230 + $0x68c] sm:$0xf]
        %v1527 = vld [vmem:[%s1230 + $0x690] sm:$0xff]
        %v1528 = vld [vmem:[%s1230 + $0x698] sm:$0xff]
        %v1529 = vld [vmem:[%s1230 + $0x6a0] sm:$0xff]
        %v1530 = vld [vmem:[%s1230 + $0x6a8] sm:$0xf]
        %v1531 = vld [vmem:[%s1230 + $0x6ac] sm:$0xff]
        %v1532 = vld [vmem:[%s1230 + $0x6b4] sm:$0xff]
        %v1533 = vld [vmem:[%s1230 + $0x6bc] sm:$0xff]
        %v1534 = vld [vmem:[%s1230 + $0x6c4] sm:$0xf]
        %v1535 = vld [vmem:[%s1230 + $0x6c8] sm:$0xff]
        %v1536 = vld [vmem:[%s1230 + $0x6d0] sm:$0xff]
        %v1537 = vld [vmem:[%s1230 + $0x6d8] sm:$0xff]
        %v1538 = vld [vmem:[%s1230 + $0x6e0] sm:$0xf]
        %v1539 = vld [vmem:[%s1230 + $0x6e4] sm:$0xff]
        %v1540 = vld [vmem:[%s1230 + $0x6ec] sm:$0xff]
        %v1541 = vld [vmem:[%s1230 + $0x6f4] sm:$0xff]
        %v1542 = vld [vmem:[%s1230 + $0x6fc] sm:$0xf]
        %v1543 = vld [vmem:[%s1230 + $0x700] sm:$0xff]
        %v1544 = vld [vmem:[%s1230 + $0x708] sm:$0xff]
        %v1545 = vld [vmem:[%s1230 + $0x710] sm:$0xff]
        %v1546 = vld [vmem:[%s1230 + $0x718] sm:$0xf]
        %v1547 = vld [vmem:[%s1230 + $0x71c] sm:$0xff]
        %v1548 = vld [vmem:[%s1230 + $0x724] sm:$0xff]
        %v1549 = vld [vmem:[%s1230 + $0x72c] sm:$0xff]
        %v1550 = vld [vmem:[%s1230 + $0x734] sm:$0xf]
        %v1551 = vld [vmem:[%s1230 + $0x738] sm:$0xff]
        %v1552 = vld [vmem:[%s1230 + $0x740] sm:$0xff]
        %v1553 = vld [vmem:[%s1230 + $0x748] sm:$0xff]
        %v1554 = vld [vmem:[%s1230 + $0x750] sm:$0xf]
        %v1555 = vld [vmem:[%s1230 + $0x754] sm:$0xff]
        %v1556 = vld [vmem:[%s1230 + $0x75c] sm:$0xff]
        %v1557 = vld [vmem:[%s1230 + $0x764] sm:$0xff]
        %v1558 = vld [vmem:[%s1230 + $0x76c] sm:$0xf]
        %v1559 = vld [vmem:[%s1230 + $0x770] sm:$0xff]
        %v1560 = vld [vmem:[%s1230 + $0x778] sm:$0xff]
        %v1561 = vld [vmem:[%s1230 + $0x780] sm:$0xff]
        %v1562 = vld [vmem:[%s1230 + $0x788] sm:$0xf]
        %v1563 = vld [vmem:[%s1230 + $0x78c] sm:$0xff]
        %v1564 = vld [vmem:[%s1230 + $0x794] sm:$0xff]
        %v1565 = vld [vmem:[%s1230 + $0x79c] sm:$0xff]
        %v1566 = vld [vmem:[%s1230 + $0x7a4] sm:$0xf]
        %v1567 = vld [vmem:[%s1230 + $0x7a8] sm:$0xff]
        %v1568 = vld [vmem:[%s1230 + $0x7b0] sm:$0xff]
        %v1569 = vld [vmem:[%s1230 + $0x7b8] sm:$0xff]
        %v1570 = vld [vmem:[%s1230 + $0x7c0] sm:$0xf]
        %v1571 = vld [vmem:[%s1230 + $0x7c4] sm:$0xff]
        %v1572 = vld [vmem:[%s1230 + $0x7cc] sm:$0xff]
        %v1573 = vld [vmem:[%s1230 + $0x7d4] sm:$0xff]
        %v1574 = vld [vmem:[%s1230 + $0x7dc] sm:$0xf]
        %v1575 = vld [vmem:[%s1230 + $0x7e0] sm:$0xff]
        %v1576 = vld [vmem:[%s1230 + $0x7e8] sm:$0xff]
        %v1577 = vld [vmem:[%s1230 + $0x7f0] sm:$0xff]
        %v1578 = vld [vmem:[%s1230 + $0x7f8] sm:$0xf]
        %v1579 = vld [vmem:[%s1230 + $0x7fc] sm:$0xff]
        %v1580 = vld [vmem:[%s1230 + $0x804] sm:$0xff]
        %v1581 = vld [vmem:[%s1230 + $0x80c] sm:$0xff]
        %v1582 = vld [vmem:[%s1230 + $0x814] sm:$0xf]
        %v1583 = vld [vmem:[%s1230 + $0x818] sm:$0xff]
        %v1584 = vld [vmem:[%s1230 + $0x820] sm:$0xff]
        %v1585 = vld [vmem:[%s1230 + $0x828] sm:$0xff]
        %v1586 = vld [vmem:[%s1230 + $0x830] sm:$0xf]
        %v1587 = vld [vmem:[%s1230 + $0x834] sm:$0xff]
        %v1588 = vld [vmem:[%s1230 + $0x83c] sm:$0xff]
        %v1589 = vld [vmem:[%s1230 + $0x844] sm:$0xff]
        %v1590 = vld [vmem:[%s1230 + $0x84c] sm:$0xf]
        %v1591 = vld [vmem:[%s1230 + $0x850] sm:$0xff]
        %v1592 = vld [vmem:[%s1230 + $0x858] sm:$0xff]
        %v1593 = vld [vmem:[%s1230 + $0x860] sm:$0xff]
        %v1594 = vld [vmem:[%s1230 + $0x868] sm:$0xf]
        %v1595 = vld [vmem:[%s1230 + $0x86c] sm:$0xff]
        %v1596 = vld [vmem:[%s1230 + $0x874] sm:$0xff]
        %v1597 = vld [vmem:[%s1230 + $0x87c] sm:$0xff]
        %v1598 = vld [vmem:[%s1230 + $0x884] sm:$0xf]
        %v1599 = vld [vmem:[%s1230 + $0x888] sm:$0xff]
        %v1600 = vld [vmem:[%s1230 + $0x890] sm:$0xff]
        %v1601 = vld [vmem:[%s1230 + $0x898] sm:$0xff]
        %v1602 = vld [vmem:[%s1230 + $0x8a0] sm:$0xf]
        %v1603 = vld [vmem:[%s1230 + $0x8a4] sm:$0xff]
        %v1604 = vld [vmem:[%s1230 + $0x8ac] sm:$0xff]
        %v1605 = vld [vmem:[%s1230 + $0x8b4] sm:$0xff]
        %v1606 = vld [vmem:[%s1230 + $0x8bc] sm:$0xf]
        %v1607 = vld [vmem:[%s1230 + $0x8c0] sm:$0xff]
        %v1608 = vld [vmem:[%s1230 + $0x8c8] sm:$0xff]
        %v1609 = vld [vmem:[%s1230 + $0x8d0] sm:$0xff]
        %v1610 = vld [vmem:[%s1230 + $0x8d8] sm:$0xf]
        %v1611 = vld [vmem:[%s1230 + $0x8dc] sm:$0xff]
        %v1612 = vld [vmem:[%s1230 + $0x8e4] sm:$0xff]
        %v1613 = vld [vmem:[%s1230 + $0x8ec] sm:$0xff]
        %v1614 = vld [vmem:[%s1230 + $0x8f4] sm:$0xf]
        %v1615 = vld [vmem:[%s1230 + $0x8f8] sm:$0xff]
        %v1616 = vld [vmem:[%s1230 + $0x900] sm:$0xff]
        %v1617 = vld [vmem:[%s1230 + $0x908] sm:$0xff]
        %v1618 = vld [vmem:[%s1230 + $0x910] sm:$0xf]
        %v1619 = vld [vmem:[%s1230 + $0x914] sm:$0xff]
        %v1620 = vld [vmem:[%s1230 + $0x91c] sm:$0xff]
        %v1621 = vld [vmem:[%s1230 + $0x924] sm:$0xff]
        %v1622 = vld [vmem:[%s1230 + $0x92c] sm:$0xf]
        %v1623 = vld [vmem:[%s1230 + $0x930] sm:$0xff]
        %v1624 = vld [vmem:[%s1230 + $0x938] sm:$0xff]
        %v1625 = vld [vmem:[%s1230 + $0x940] sm:$0xff]
        %v1626 = vld [vmem:[%s1230 + $0x948] sm:$0xf]
        %v1627 = vld [vmem:[%s1230 + $0x94c] sm:$0xff]
        %v1628 = vld [vmem:[%s1230 + $0x954] sm:$0xff]
        %v1629 = vld [vmem:[%s1230 + $0x95c] sm:$0xff]
        %v1630 = vld [vmem:[%s1230 + $0x964] sm:$0xf]
        %v1631 = vld [vmem:[%s1230 + $0x968] sm:$0xff]
        %v1632 = vld [vmem:[%s1230 + $0x970] sm:$0xff]
        %v1633 = vld [vmem:[%s1230 + $0x978] sm:$0xff]
        %v1634 = vld [vmem:[%s1230 + $0x980] sm:$0xf]
        %v1635 = vld [vmem:[%s1230 + $0x984] sm:$0xff]
        %v1636 = vld [vmem:[%s1230 + $0x98c] sm:$0xff]
        %v1637 = vld [vmem:[%s1230 + $0x994] sm:$0xff]
        %v1638 = vld [vmem:[%s1230 + $0x99c] sm:$0xf]
        %v1639 = vld [vmem:[%s1230 + $0x9a0] sm:$0xff]
        %v1640 = vld [vmem:[%s1230 + $0x9a8] sm:$0xff]
        %v1641 = vld [vmem:[%s1230 + $0x9b0] sm:$0xff]
        %v1642 = vld [vmem:[%s1230 + $0x9b8] sm:$0xf]
        %v1643 = vld [vmem:[%s1230 + $0x9bc] sm:$0xff]
        %v1644 = vld [vmem:[%s1230 + $0x9c4] sm:$0xff]
        %v1645 = vld [vmem:[%s1230 + $0x9cc] sm:$0xff]
        %v1646 = vld [vmem:[%s1230 + $0x9d4] sm:$0xf]
        %v1647 = vld [vmem:[%s1230 + $0x9d8] sm:$0xff]
        %v1648 = vld [vmem:[%s1230 + $0x9e0] sm:$0xff]
        %v1649 = vld [vmem:[%s1230 + $0x9e8] sm:$0xff]
        %v1650 = vld [vmem:[%s1230 + $0x9f0] sm:$0xf]
        %v1651 = vld [vmem:[%s1230 + $0x9f4] sm:$0xff]
        %v1652 = vld [vmem:[%s1230 + $0x9fc] sm:$0xff]
        %v1653 = vld [vmem:[%s1230 + $0xa04] sm:$0xff]
        %v1654 = vld [vmem:[%s1230 + $0xa0c] sm:$0xf]
        %v1655 = vld [vmem:[%s1230 + $0xa10] sm:$0xff]
        %v1656 = vld [vmem:[%s1230 + $0xa18] sm:$0xff]
        %v1657 = vld [vmem:[%s1230 + $0xa20] sm:$0xff]
        %v1658 = vld [vmem:[%s1230 + $0xa28] sm:$0xf]
        %v1659 = vld [vmem:[%s1230 + $0xa2c] sm:$0xff]
        %v1660 = vld [vmem:[%s1230 + $0xa34] sm:$0xff]
        %v1661 = vld [vmem:[%s1230 + $0xa3c] sm:$0xff]
        %v1662 = vld [vmem:[%s1230 + $0xa44] sm:$0xf]
        %v1663 = vld [vmem:[%s1230 + $0xa48] sm:$0xff]
        %v1664 = vld [vmem:[%s1230 + $0xa50] sm:$0xff]
        %v1665 = vld [vmem:[%s1230 + $0xa58] sm:$0xff]
        %v1666 = vld [vmem:[%s1230 + $0xa60] sm:$0xf]
        %v1667 = vld [vmem:[%s1230 + $0xa64] sm:$0xff]
        %v1668 = vld [vmem:[%s1230 + $0xa6c] sm:$0xff]
        %v1669 = vld [vmem:[%s1230 + $0xa74] sm:$0xff]
        %v1670 = vld [vmem:[%s1230 + $0xa7c] sm:$0xf]
        %v1671 = vld [vmem:[%s1230 + $0xa80] sm:$0xff]
        %v1672 = vld [vmem:[%s1230 + $0xa88] sm:$0xff]
        %v1673 = vld [vmem:[%s1230 + $0xa90] sm:$0xff]
        %v1674 = vld [vmem:[%s1230 + $0xa98] sm:$0xf]
        %v1675 = vld [vmem:[%s1230 + $0xa9c] sm:$0xff]
        %v1676 = vld [vmem:[%s1230 + $0xaa4] sm:$0xff]
        %v1677 = vld [vmem:[%s1230 + $0xaac] sm:$0xff]
        %v1678 = vld [vmem:[%s1230 + $0xab4] sm:$0xf]
        %v1679 = vld [vmem:[%s1230 + $0xab8] sm:$0xff]
        %v1680 = vld [vmem:[%s1230 + $0xac0] sm:$0xff]
        %v1681 = vld [vmem:[%s1230 + $0xac8] sm:$0xff]
        %v1682 = vld [vmem:[%s1230 + $0xad0] sm:$0xf]
        %v1683 = vld [vmem:[%s1230 + $0xad4] sm:$0xff]
        %v1684 = vld [vmem:[%s1230 + $0xadc] sm:$0xff]
        %v1685 = vld [vmem:[%s1230 + $0xae4] sm:$0xff]
        %v1686 = vld [vmem:[%s1230 + $0xaec] sm:$0xf]
        %v1687 = vld [vmem:[%s1230 + $0xaf0] sm:$0xff]
        %v1688 = vld [vmem:[%s1230 + $0xaf8] sm:$0xff]
        %v1689 = vld [vmem:[%s1230 + $0xb00] sm:$0xff]
        %v1690 = vld [vmem:[%s1230 + $0xb08] sm:$0xf]
        %v1691 = vld [vmem:[%s1230 + $0xb0c] sm:$0xff]
        %v1692 = vld [vmem:[%s1230 + $0xb14] sm:$0xff]
        %v1693 = vld [vmem:[%s1230 + $0xb1c] sm:$0xff]
        %v1694 = vld [vmem:[%s1230 + $0xb24] sm:$0xf]
        %v1695 = vld [vmem:[%s1230 + $0xb28] sm:$0xff]
        %v1696 = vld [vmem:[%s1230 + $0xb30] sm:$0xff]
        %v1697 = vld [vmem:[%s1230 + $0xb38] sm:$0xff]
        %v1698 = vld [vmem:[%s1230 + $0xb40] sm:$0xf]
        %v1699 = vld [vmem:[%s1230 + $0xb44] sm:$0xff]
        %v1700 = vld [vmem:[%s1230 + $0xb4c] sm:$0xff]
        %v1701 = vld [vmem:[%s1230 + $0xb54] sm:$0xff]
        %v1702 = vld [vmem:[%s1230 + $0xb5c] sm:$0xf]
        %v1703 = vld [vmem:[%s1230 + $0xb60] sm:$0xff]
        %v1704 = vld [vmem:[%s1230 + $0xb68] sm:$0xff]
        %v1705 = vld [vmem:[%s1230 + $0xb70] sm:$0xff]
        %v1706 = vld [vmem:[%s1230 + $0xb78] sm:$0xf]
        %v1707 = vld [vmem:[%s1230 + $0xb7c] sm:$0xff]
        %v1708 = vld [vmem:[%s1230 + $0xb84] sm:$0xff]
        %v1709 = vld [vmem:[%s1230 + $0xb8c] sm:$0xff]
        %v1710 = vld [vmem:[%s1230 + $0xb94] sm:$0xf]
        %v1711 = vld [vmem:[%s1230 + $0xb98] sm:$0xff]
        %v1712 = vld [vmem:[%s1230 + $0xba0] sm:$0xff]
        %v1713 = vld [vmem:[%s1230 + $0xba8] sm:$0xff]
        %v1714 = vld [vmem:[%s1230 + $0xbb0] sm:$0xf]
        %v1715 = vld [vmem:[%s1230 + $0xbb4] sm:$0xff]
        %v1716 = vld [vmem:[%s1230 + $0xbbc] sm:$0xff]
        %v1717 = vld [vmem:[%s1230 + $0xbc4] sm:$0xff]
        %v1718 = vld [vmem:[%s1230 + $0xbcc] sm:$0xf]
        %v1719 = vld [vmem:[%s1230 + $0xbd0] sm:$0xff]
        %v1720 = vld [vmem:[%s1230 + $0xbd8] sm:$0xff]
        %v1721 = vld [vmem:[%s1230 + $0xbe0] sm:$0xff]
        %v1722 = vld [vmem:[%s1230 + $0xbe8] sm:$0xf]
        %v1723 = vld [vmem:[%s1230 + $0xbec] sm:$0xff]
        %v1724 = vld [vmem:[%s1230 + $0xbf4] sm:$0xff]
        %v1725 = vld [vmem:[%s1230 + $0xbfc] sm:$0xff]
        %v1726 = vld [vmem:[%s1230 + $0xc04] sm:$0xf]
        %v1727 = vld [vmem:[%s1230 + $0xc08] sm:$0xff]
        %v1728 = vld [vmem:[%s1230 + $0xc10] sm:$0xff]
        %v1729 = vld [vmem:[%s1230 + $0xc18] sm:$0xff]
        %v1730 = vld [vmem:[%s1230 + $0xc20] sm:$0xf]
        %v1731 = vld [vmem:[%s1230 + $0xc24] sm:$0xff]
        %v1732 = vld [vmem:[%s1230 + $0xc2c] sm:$0xff]
        %v1733 = vld [vmem:[%s1230 + $0xc34] sm:$0xff]
        %v1734 = vld [vmem:[%s1230 + $0xc3c] sm:$0xf]
        %v1735 = vld [vmem:[%s1230 + $0xc40] sm:$0xff]
        %v1736 = vld [vmem:[%s1230 + $0xc48] sm:$0xff]
        %v1737 = vld [vmem:[%s1230 + $0xc50] sm:$0xff]
        %v1738 = vld [vmem:[%s1230 + $0xc58] sm:$0xf]
        %v1739 = vld [vmem:[%s1230 + $0xc5c] sm:$0xff]
        %v1740 = vld [vmem:[%s1230 + $0xc64] sm:$0xff]
        %v1741 = vld [vmem:[%s1230 + $0xc6c] sm:$0xff]
        %v1742 = vld [vmem:[%s1230 + $0xc74] sm:$0xf]
        %v1743 = vld [vmem:[%s1230 + $0xc78] sm:$0xff]
        %v1744 = vld [vmem:[%s1230 + $0xc80] sm:$0xff]
        %v1745 = vld [vmem:[%s1230 + $0xc88] sm:$0xff]
        %v1746 = vld [vmem:[%s1230 + $0xc90] sm:$0xf]
        %v1747 = vld [vmem:[%s1230 + $0xc94] sm:$0xff]
        %v1748 = vld [vmem:[%s1230 + $0xc9c] sm:$0xff]
        %v1749 = vld [vmem:[%s1230 + $0xca4] sm:$0xff]
        %v1750 = vld [vmem:[%s1230 + $0xcac] sm:$0xf]
        %v1751 = vld [vmem:[%s1230 + $0xcb0] sm:$0xff]
        %v1752 = vld [vmem:[%s1230 + $0xcb8] sm:$0xff]
        %v1753 = vld [vmem:[%s1230 + $0xcc0] sm:$0xff]
        %v1754 = vld [vmem:[%s1230 + $0xcc8] sm:$0xf]
        %v1755 = vld [vmem:[%s1230 + $0xccc] sm:$0xff]
        %v1756 = vld [vmem:[%s1230 + $0xcd4] sm:$0xff]
        %v1757 = vld [vmem:[%s1230 + $0xcdc] sm:$0xff]
        %v1758 = vld [vmem:[%s1230 + $0xce4] sm:$0xf]
        %v1759 = vld [vmem:[%s1230 + $0xce8] sm:$0xff]
        %v1760 = vld [vmem:[%s1230 + $0xcf0] sm:$0xff]
        %v1761 = vld [vmem:[%s1230 + $0xcf8] sm:$0xff]
        %v1762 = vld [vmem:[%s1230 + $0xd00] sm:$0xf]
        %v1763 = vld [vmem:[%s1230 + $0xd04] sm:$0xff]
        %v1764 = vld [vmem:[%s1230 + $0xd0c] sm:$0xff]
        %v1765 = vld [vmem:[%s1230 + $0xd14] sm:$0xff]
        %v1766 = vld [vmem:[%s1230 + $0xd1c] sm:$0xf]
        %v1767 = vld [vmem:[%s1230 + $0xd20] sm:$0xff]
        %v1768 = vld [vmem:[%s1230 + $0xd28] sm:$0xff]
        %v1769 = vld [vmem:[%s1230 + $0xd30] sm:$0xff]
        %v1770 = vld [vmem:[%s1230 + $0xd38] sm:$0xf]
        %v1771 = vld [vmem:[%s1230 + $0xd3c] sm:$0xff]
        %v1772 = vld [vmem:[%s1230 + $0xd44] sm:$0xff]
        %v1773 = vld [vmem:[%s1230 + $0xd4c] sm:$0xff]
        %v1774 = vld [vmem:[%s1230 + $0xd54] sm:$0xf]
        %v1775 = vld [vmem:[%s1230 + $0xd58] sm:$0xff]
        %v1776 = vld [vmem:[%s1230 + $0xd60] sm:$0xff]
        %v1777 = vld [vmem:[%s1230 + $0xd68] sm:$0xff]
        %v1778 = vld [vmem:[%s1230 + $0xd70] sm:$0xf]
        %v1779 = vld [vmem:[%s1230 + $0xd74] sm:$0xff]
        %v1780 = vld [vmem:[%s1230 + $0xd7c] sm:$0xff]
        %v1781 = vld [vmem:[%s1230 + $0xd84] sm:$0xff]
        %v1782 = vld [vmem:[%s1230 + $0xd8c] sm:$0xf]
        %v1783 = vld [vmem:[%s1230 + $0xd90] sm:$0xff]
        %v1784 = vld [vmem:[%s1230 + $0xd98] sm:$0xff]
        %v1785 = vld [vmem:[%s1230 + $0xda0] sm:$0xff]
        %v1786 = vld [vmem:[%s1230 + $0xda8] sm:$0xf]
        %v1787 = vld [vmem:[%s1230 + $0xdac] sm:$0xff]
        %v1788 = vld [vmem:[%s1230 + $0xdb4] sm:$0xff]
        %v1789 = vld [vmem:[%s1230 + $0xdbc] sm:$0xff]
        %v1790 = vld [vmem:[%s1230 + $0xdc4] sm:$0xf]
        %v1791 = vld [vmem:[%s1230 + $0xdc8] sm:$0xff]
        %v1792 = vld [vmem:[%s1230 + $0xdd0] sm:$0xff]
        %v1793 = vld [vmem:[%s1230 + $0xdd8] sm:$0xff]
        %v1794 = vld [vmem:[%s1230 + $0xde0] sm:$0xf]
        %v1795 = vld [vmem:[%s1230 + $0xde4] sm:$0xff]
        %v1796 = vld [vmem:[%s1230 + $0xdec] sm:$0xff]
        %v1797 = vld [vmem:[%s1230 + $0xdf4] sm:$0xff]
        %v1798 = vld [vmem:[%s1230 + $0xdfc] sm:$0xf]
        %v1799 = vld [vmem:[%s1273] ss:$4 sm:$0xff]
        %v1801 = vlaneseq
        %v1802 = vshrl.u32 %v1801, 7
        %v1803 = vsub.s32 0, %v1802
        %v1804 = vrot.slane %v1799, %v1803
        %v1805 = vlaneseq
        %v1806 = vshrl.u32 %v1805, 7
        %v1807 = vsub.s32 1, %v1806
        %v1808 = vrot.slane %v1799, %v1807
        %v1809 = vlaneseq
        %v1810 = vshrl.u32 %v1809, 7
        %v1811 = vsub.s32 2, %v1810
        %v1812 = vrot.slane %v1799, %v1811
        %v1813 = vlaneseq
        %v1814 = vshrl.u32 %v1813, 7
        %v1815 = vsub.s32 3, %v1814
        %v1816 = vrot.slane %v1799, %v1815
        %v1817 = vlaneseq
        %v1818 = vshrl.u32 %v1817, 7
        %v1819 = vsub.s32 4, %v1818
        %v1820 = vrot.slane %v1799, %v1819
        %v1821 = vlaneseq
        %v1822 = vshrl.u32 %v1821, 7
        %v1823 = vsub.s32 5, %v1822
        %v1824 = vrot.slane %v1799, %v1823
        %v1825 = vlaneseq
        %v1826 = vshrl.u32 %v1825, 7
        %v1827 = vsub.s32 6, %v1826
        %v1828 = vrot.slane %v1799, %v1827
        %v1837 = vcombine.high %v1286, %v1286
        %v1839 = vunpack.c.l.s4 1966171168
        %v1840 = vunpack.c.0.s8 %v1839
        %v1841 = vlaneseq
        %v1842 = vshrl.u32 %v1841, 7
        %v1843 = vsub.s32 %v1840, %v1842
        %v1844 = vrot.slane %v1286, %v1843
        %v1846 = vunpack.c.l.s4 1966171168
        %v1847 = vunpack.c.0.s8 %v1846
        %v1848 = vlaneseq
        %v1849 = vshrl.u32 %v1848, 7
        %v1850 = vsub.s32 %v1847, %v1849
        %v1851 = vrot.slane %v1837, %v1850
        %v1852 = vcombine.high %v1844, %v1844
        %v1853 = vcombine.high %v1851, %v1851
        %v1855 = vunpack.c.l.s4 1966171168
        %v1856 = vunpack.c.0.s8 %v1855
        %v1857 = vlaneseq
        %v1858 = vshrl.u32 %v1857, 7
        %v1859 = vsub.s32 %v1856, %v1858
        %v1860 = vrot.slane %v1844, %v1859
        %v1862 = vunpack.c.l.s4 1966171168
        %v1863 = vunpack.c.0.s8 %v1862
        %v1864 = vlaneseq
        %v1865 = vshrl.u32 %v1864, 7
        %v1866 = vsub.s32 %v1863, %v1865
        %v1867 = vrot.slane %v1851, %v1866
        %v1869 = vunpack.c.l.s4 1966171168
        %v1870 = vunpack.c.0.s8 %v1869
        %v1871 = vlaneseq
        %v1872 = vshrl.u32 %v1871, 7
        %v1873 = vsub.s32 %v1870, %v1872
        %v1874 = vrot.slane %v1852, %v1873
        %v1876 = vunpack.c.l.s4 1966171168
        %v1877 = vunpack.c.0.s8 %v1876
        %v1878 = vlaneseq
        %v1879 = vshrl.u32 %v1878, 7
        %v1880 = vsub.s32 %v1877, %v1879
        %v1881 = vrot.slane %v1853, %v1880
        %v1882 = vcombine.high %v1860, %v1860
        %v1883 = vcombine.high %v1867, %v1867
        %v1884 = vcombine.high %v1874, %v1874
        %v1885 = vcombine.high %v1881, %v1881
        %v2406 = vunpack.c.l.b16 %v1287
        %v2407 = vunpack.c.h.b16 %v1287
        %v2408 = vunpack.c.l.b16 %v1288
        %v2409 = vunpack.c.h.b16 %v1288
        %v2410 = vunpack.c.l.b16 %v1289
        %v2411 = vunpack.c.h.b16 %v1289
        %v2412 = vunpack.c.l.b16 %v1290
        %v2413 = vunpack.c.l.b16 %v1291
        %v2414 = vunpack.c.h.b16 %v1291
        %v2415 = vunpack.c.l.b16 %v1292
        %v2416 = vunpack.c.h.b16 %v1292
        %v2417 = vunpack.c.l.b16 %v1293
        %v2418 = vunpack.c.h.b16 %v1293
        %v2419 = vunpack.c.l.b16 %v1294
        %v2420 = vunpack.c.l.b16 %v1295
        %v2421 = vunpack.c.h.b16 %v1295
        %v2422 = vunpack.c.l.b16 %v1296
        %v2423 = vunpack.c.h.b16 %v1296
        %v2424 = vunpack.c.l.b16 %v1297
        %v2425 = vunpack.c.h.b16 %v1297
        %v2426 = vunpack.c.l.b16 %v1298
        %v2427 = vunpack.c.l.b16 %v1299
        %v2428 = vunpack.c.h.b16 %v1299
        %v2429 = vunpack.c.l.b16 %v1300
        %v2430 = vunpack.c.h.b16 %v1300
        %v2431 = vunpack.c.l.b16 %v1301
        %v2432 = vunpack.c.h.b16 %v1301
        %v2433 = vunpack.c.l.b16 %v1302
        %v2434 = vunpack.c.l.b16 %v1303
        %v2435 = vunpack.c.h.b16 %v1303
        %v2436 = vunpack.c.l.b16 %v1304
        %v2437 = vunpack.c.h.b16 %v1304
        %v2438 = vunpack.c.l.b16 %v1305
        %v2439 = vunpack.c.h.b16 %v1305
        %v2440 = vunpack.c.l.b16 %v1306
        %v2441 = vunpack.c.l.b16 %v1307
        %v2442 = vunpack.c.h.b16 %v1307
        %v2443 = vunpack.c.l.b16 %v1308
        %v2444 = vunpack.c.h.b16 %v1308
        %v2445 = vunpack.c.l.b16 %v1309
        %v2446 = vunpack.c.h.b16 %v1309
        %v2447 = vunpack.c.l.b16 %v1310
        %v2448 = vunpack.c.l.b16 %v1311
        %v2449 = vunpack.c.h.b16 %v1311
        %v2450 = vunpack.c.l.b16 %v1312
        %v2451 = vunpack.c.h.b16 %v1312
        %v2452 = vunpack.c.l.b16 %v1313
        %v2453 = vunpack.c.h.b16 %v1313
        %v2454 = vunpack.c.l.b16 %v1314
        %v2455 = vunpack.c.l.b16 %v1315
        %v2456 = vunpack.c.h.b16 %v1315
        %v2457 = vunpack.c.l.b16 %v1316
        %v2458 = vunpack.c.h.b16 %v1316
        %v2459 = vunpack.c.l.b16 %v1317
        %v2460 = vunpack.c.h.b16 %v1317
        %v2461 = vunpack.c.l.b16 %v1318
        %v2462 = vunpack.c.l.b16 %v1319
        %v2463 = vunpack.c.h.b16 %v1319
        %v2464 = vunpack.c.l.b16 %v1320
        %v2465 = vunpack.c.h.b16 %v1320
        %v2466 = vunpack.c.l.b16 %v1321
        %v2467 = vunpack.c.h.b16 %v1321
        %v2468 = vunpack.c.l.b16 %v1322
        %v2469 = vunpack.c.l.b16 %v1323
        %v2470 = vunpack.c.h.b16 %v1323
        %v2471 = vunpack.c.l.b16 %v1324
        %v2472 = vunpack.c.h.b16 %v1324
        %v2473 = vunpack.c.l.b16 %v1325
        %v2474 = vunpack.c.h.b16 %v1325
        %v2475 = vunpack.c.l.b16 %v1326
        %v2476 = vunpack.c.l.b16 %v1327
        %v2477 = vunpack.c.h.b16 %v1327
        %v2478 = vunpack.c.l.b16 %v1328
        %v2479 = vunpack.c.h.b16 %v1328
        %v2480 = vunpack.c.l.b16 %v1329
        %v2481 = vunpack.c.h.b16 %v1329
        %v2482 = vunpack.c.l.b16 %v1330
        %v2483 = vunpack.c.l.b16 %v1331
        %v2484 = vunpack.c.h.b16 %v1331
        %v2485 = vunpack.c.l.b16 %v1332
        %v2486 = vunpack.c.h.b16 %v1332
        %v2487 = vunpack.c.l.b16 %v1333
        %v2488 = vunpack.c.h.b16 %v1333
        %v2489 = vunpack.c.l.b16 %v1334
        %v2490 = vunpack.c.l.b16 %v1335
        %v2491 = vunpack.c.h.b16 %v1335
        %v2492 = vunpack.c.l.b16 %v1336
        %v2493 = vunpack.c.h.b16 %v1336
        %v2494 = vunpack.c.l.b16 %v1337
        %v2495 = vunpack.c.h.b16 %v1337
        %v2496 = vunpack.c.l.b16 %v1338
        %v2497 = vunpack.c.l.b16 %v1339
        %v2498 = vunpack.c.h.b16 %v1339
        %v2499 = vunpack.c.l.b16 %v1340
        %v2500 = vunpack.c.h.b16 %v1340
        %v2501 = vunpack.c.l.b16 %v1341
        %v2502 = vunpack.c.h.b16 %v1341
        %v2503 = vunpack.c.l.b16 %v1342
        %v2504 = vunpack.c.l.b16 %v1343
        %v2505 = vunpack.c.h.b16 %v1343
        %v2506 = vunpack.c.l.b16 %v1344
        %v2507 = vunpack.c.h.b16 %v1344
        %v2508 = vunpack.c.l.b16 %v1345
        %v2509 = vunpack.c.h.b16 %v1345
        %v2510 = vunpack.c.l.b16 %v1346
        %v2511 = vunpack.c.l.b16 %v1347
        %v2512 = vunpack.c.h.b16 %v1347
        %v2513 = vunpack.c.l.b16 %v1348
        %v2514 = vunpack.c.h.b16 %v1348
        %v2515 = vunpack.c.l.b16 %v1349
        %v2516 = vunpack.c.h.b16 %v1349
        %v2517 = vunpack.c.l.b16 %v1350
        %v2518 = vunpack.c.l.b16 %v1351
        %v2519 = vunpack.c.h.b16 %v1351
        %v2520 = vunpack.c.l.b16 %v1352
        %v2521 = vunpack.c.h.b16 %v1352
        %v2522 = vunpack.c.l.b16 %v1353
        %v2523 = vunpack.c.h.b16 %v1353
        %v2524 = vunpack.c.l.b16 %v1354
        %v2525 = vunpack.c.l.b16 %v1355
        %v2526 = vunpack.c.h.b16 %v1355
        %v2527 = vunpack.c.l.b16 %v1356
        %v2528 = vunpack.c.h.b16 %v1356
        %v2529 = vunpack.c.l.b16 %v1357
        %v2530 = vunpack.c.h.b16 %v1357
        %v2531 = vunpack.c.l.b16 %v1358
        %v2532 = vunpack.c.l.b16 %v1359
        %v2533 = vunpack.c.h.b16 %v1359
        %v2534 = vunpack.c.l.b16 %v1360
        %v2535 = vunpack.c.h.b16 %v1360
        %v2536 = vunpack.c.l.b16 %v1361
        %v2537 = vunpack.c.h.b16 %v1361
        %v2538 = vunpack.c.l.b16 %v1362
        %v2539 = vunpack.c.l.b16 %v1363
        %v2540 = vunpack.c.h.b16 %v1363
        %v2541 = vunpack.c.l.b16 %v1364
        %v2542 = vunpack.c.h.b16 %v1364
        %v2543 = vunpack.c.l.b16 %v1365
        %v2544 = vunpack.c.h.b16 %v1365
        %v2545 = vunpack.c.l.b16 %v1366
        %v2546 = vunpack.c.l.b16 %v1367
        %v2547 = vunpack.c.h.b16 %v1367
        %v2548 = vunpack.c.l.b16 %v1368
        %v2549 = vunpack.c.h.b16 %v1368
        %v2550 = vunpack.c.l.b16 %v1369
        %v2551 = vunpack.c.h.b16 %v1369
        %v2552 = vunpack.c.l.b16 %v1370
        %v2553 = vunpack.c.l.b16 %v1371
        %v2554 = vunpack.c.h.b16 %v1371
        %v2555 = vunpack.c.l.b16 %v1372
        %v2556 = vunpack.c.h.b16 %v1372
        %v2557 = vunpack.c.l.b16 %v1373
        %v2558 = vunpack.c.h.b16 %v1373
        %v2559 = vunpack.c.l.b16 %v1374
        %v2560 = vunpack.c.l.b16 %v1375
        %v2561 = vunpack.c.h.b16 %v1375
        %v2562 = vunpack.c.l.b16 %v1376
        %v2563 = vunpack.c.h.b16 %v1376
        %v2564 = vunpack.c.l.b16 %v1377
        %v2565 = vunpack.c.h.b16 %v1377
        %v2566 = vunpack.c.l.b16 %v1378
        %v2567 = vunpack.c.l.b16 %v1379
        %v2568 = vunpack.c.h.b16 %v1379
        %v2569 = vunpack.c.l.b16 %v1380
        %v2570 = vunpack.c.h.b16 %v1380
        %v2571 = vunpack.c.l.b16 %v1381
        %v2572 = vunpack.c.h.b16 %v1381
        %v2573 = vunpack.c.l.b16 %v1382
        %v2574 = vunpack.c.l.b16 %v1383
        %v2575 = vunpack.c.h.b16 %v1383
        %v2576 = vunpack.c.l.b16 %v1384
        %v2577 = vunpack.c.h.b16 %v1384
        %v2578 = vunpack.c.l.b16 %v1385
        %v2579 = vunpack.c.h.b16 %v1385
        %v2580 = vunpack.c.l.b16 %v1386
        %v2581 = vunpack.c.l.b16 %v1387
        %v2582 = vunpack.c.h.b16 %v1387
        %v2583 = vunpack.c.l.b16 %v1388
        %v2584 = vunpack.c.h.b16 %v1388
        %v2585 = vunpack.c.l.b16 %v1389
        %v2586 = vunpack.c.h.b16 %v1389
        %v2587 = vunpack.c.l.b16 %v1390
        %v2588 = vunpack.c.l.b16 %v1391
        %v2589 = vunpack.c.h.b16 %v1391
        %v2590 = vunpack.c.l.b16 %v1392
        %v2591 = vunpack.c.h.b16 %v1392
        %v2592 = vunpack.c.l.b16 %v1393
        %v2593 = vunpack.c.h.b16 %v1393
        %v2594 = vunpack.c.l.b16 %v1394
        %v2595 = vunpack.c.l.b16 %v1395
        %v2596 = vunpack.c.h.b16 %v1395
        %v2597 = vunpack.c.l.b16 %v1396
        %v2598 = vunpack.c.h.b16 %v1396
        %v2599 = vunpack.c.l.b16 %v1397
        %v2600 = vunpack.c.h.b16 %v1397
        %v2601 = vunpack.c.l.b16 %v1398
        %v2602 = vunpack.c.l.b16 %v1399
        %v2603 = vunpack.c.h.b16 %v1399
        %v2604 = vunpack.c.l.b16 %v1400
        %v2605 = vunpack.c.h.b16 %v1400
        %v2606 = vunpack.c.l.b16 %v1401
        %v2607 = vunpack.c.h.b16 %v1401
        %v2608 = vunpack.c.l.b16 %v1402
        %v2609 = vunpack.c.l.b16 %v1403
        %v2610 = vunpack.c.h.b16 %v1403
        %v2611 = vunpack.c.l.b16 %v1404
        %v2612 = vunpack.c.h.b16 %v1404
        %v2613 = vunpack.c.l.b16 %v1405
        %v2614 = vunpack.c.h.b16 %v1405
        %v2615 = vunpack.c.l.b16 %v1406
        %v2616 = vunpack.c.l.b16 %v1407
        %v2617 = vunpack.c.h.b16 %v1407
        %v2618 = vunpack.c.l.b16 %v1408
        %v2619 = vunpack.c.h.b16 %v1408
        %v2620 = vunpack.c.l.b16 %v1409
        %v2621 = vunpack.c.h.b16 %v1409
        %v2622 = vunpack.c.l.b16 %v1410
        %v2623 = vunpack.c.l.b16 %v1411
        %v2624 = vunpack.c.h.b16 %v1411
        %v2625 = vunpack.c.l.b16 %v1412
        %v2626 = vunpack.c.h.b16 %v1412
        %v2627 = vunpack.c.l.b16 %v1413
        %v2628 = vunpack.c.h.b16 %v1413
        %v2629 = vunpack.c.l.b16 %v1414
        %v2630 = vunpack.c.l.b16 %v1415
        %v2631 = vunpack.c.h.b16 %v1415
        %v2632 = vunpack.c.l.b16 %v1416
        %v2633 = vunpack.c.h.b16 %v1416
        %v2634 = vunpack.c.l.b16 %v1417
        %v2635 = vunpack.c.h.b16 %v1417
        %v2636 = vunpack.c.l.b16 %v1418
        %v2637 = vunpack.c.l.b16 %v1419
        %v2638 = vunpack.c.h.b16 %v1419
        %v2639 = vunpack.c.l.b16 %v1420
        %v2640 = vunpack.c.h.b16 %v1420
        %v2641 = vunpack.c.l.b16 %v1421
        %v2642 = vunpack.c.h.b16 %v1421
        %v2643 = vunpack.c.l.b16 %v1422
        %v2644 = vunpack.c.l.b16 %v1423
        %v2645 = vunpack.c.h.b16 %v1423
        %v2646 = vunpack.c.l.b16 %v1424
        %v2647 = vunpack.c.h.b16 %v1424
        %v2648 = vunpack.c.l.b16 %v1425
        %v2649 = vunpack.c.h.b16 %v1425
        %v2650 = vunpack.c.l.b16 %v1426
        %v2651 = vunpack.c.l.b16 %v1427
        %v2652 = vunpack.c.h.b16 %v1427
        %v2653 = vunpack.c.l.b16 %v1428
        %v2654 = vunpack.c.h.b16 %v1428
        %v2655 = vunpack.c.l.b16 %v1429
        %v2656 = vunpack.c.h.b16 %v1429
        %v2657 = vunpack.c.l.b16 %v1430
        %v2658 = vunpack.c.l.b16 %v1431
        %v2659 = vunpack.c.h.b16 %v1431
        %v2660 = vunpack.c.l.b16 %v1432
        %v2661 = vunpack.c.h.b16 %v1432
        %v2662 = vunpack.c.l.b16 %v1433
        %v2663 = vunpack.c.h.b16 %v1433
        %v2664 = vunpack.c.l.b16 %v1434
        %v2665 = vunpack.c.l.b16 %v1435
        %v2666 = vunpack.c.h.b16 %v1435
        %v2667 = vunpack.c.l.b16 %v1436
        %v2668 = vunpack.c.h.b16 %v1436
        %v2669 = vunpack.c.l.b16 %v1437
        %v2670 = vunpack.c.h.b16 %v1437
        %v2671 = vunpack.c.l.b16 %v1438
        %v2672 = vunpack.c.l.b16 %v1439
        %v2673 = vunpack.c.h.b16 %v1439
        %v2674 = vunpack.c.l.b16 %v1440
        %v2675 = vunpack.c.h.b16 %v1440
        %v2676 = vunpack.c.l.b16 %v1441
        %v2677 = vunpack.c.h.b16 %v1441
        %v2678 = vunpack.c.l.b16 %v1442
        %v2679 = vunpack.c.l.b16 %v1443
        %v2680 = vunpack.c.h.b16 %v1443
        %v2681 = vunpack.c.l.b16 %v1444
        %v2682 = vunpack.c.h.b16 %v1444
        %v2683 = vunpack.c.l.b16 %v1445
        %v2684 = vunpack.c.h.b16 %v1445
        %v2685 = vunpack.c.l.b16 %v1446
        %v2686 = vunpack.c.l.b16 %v1447
        %v2687 = vunpack.c.h.b16 %v1447
        %v2688 = vunpack.c.l.b16 %v1448
        %v2689 = vunpack.c.h.b16 %v1448
        %v2690 = vunpack.c.l.b16 %v1449
        %v2691 = vunpack.c.h.b16 %v1449
        %v2692 = vunpack.c.l.b16 %v1450
        %v2693 = vunpack.c.l.b16 %v1451
        %v2694 = vunpack.c.h.b16 %v1451
        %v2695 = vunpack.c.l.b16 %v1452
        %v2696 = vunpack.c.h.b16 %v1452
        %v2697 = vunpack.c.l.b16 %v1453
        %v2698 = vunpack.c.h.b16 %v1453
        %v2699 = vunpack.c.l.b16 %v1454
        %v2700 = vunpack.c.l.b16 %v1455
        %v2701 = vunpack.c.h.b16 %v1455
        %v2702 = vunpack.c.l.b16 %v1456
        %v2703 = vunpack.c.h.b16 %v1456
        %v2704 = vunpack.c.l.b16 %v1457
        %v2705 = vunpack.c.h.b16 %v1457
        %v2706 = vunpack.c.l.b16 %v1458
        %v2707 = vunpack.c.l.b16 %v1459
        %v2708 = vunpack.c.h.b16 %v1459
        %v2709 = vunpack.c.l.b16 %v1460
        %v2710 = vunpack.c.h.b16 %v1460
        %v2711 = vunpack.c.l.b16 %v1461
        %v2712 = vunpack.c.h.b16 %v1461
        %v2713 = vunpack.c.l.b16 %v1462
        %v2714 = vunpack.c.l.b16 %v1463
        %v2715 = vunpack.c.h.b16 %v1463
        %v2716 = vunpack.c.l.b16 %v1464
        %v2717 = vunpack.c.h.b16 %v1464
        %v2718 = vunpack.c.l.b16 %v1465
        %v2719 = vunpack.c.h.b16 %v1465
        %v2720 = vunpack.c.l.b16 %v1466
        %v2721 = vunpack.c.l.b16 %v1467
        %v2722 = vunpack.c.h.b16 %v1467
        %v2723 = vunpack.c.l.b16 %v1468
        %v2724 = vunpack.c.h.b16 %v1468
        %v2725 = vunpack.c.l.b16 %v1469
        %v2726 = vunpack.c.h.b16 %v1469
        %v2727 = vunpack.c.l.b16 %v1470
        %v2728 = vunpack.c.l.b16 %v1471
        %v2729 = vunpack.c.h.b16 %v1471
        %v2730 = vunpack.c.l.b16 %v1472
        %v2731 = vunpack.c.h.b16 %v1472
        %v2732 = vunpack.c.l.b16 %v1473
        %v2733 = vunpack.c.h.b16 %v1473
        %v2734 = vunpack.c.l.b16 %v1474
        %v2735 = vunpack.c.l.b16 %v1475
        %v2736 = vunpack.c.h.b16 %v1475
        %v2737 = vunpack.c.l.b16 %v1476
        %v2738 = vunpack.c.h.b16 %v1476
        %v2739 = vunpack.c.l.b16 %v1477
        %v2740 = vunpack.c.h.b16 %v1477
        %v2741 = vunpack.c.l.b16 %v1478
        %v2742 = vunpack.c.l.b16 %v1479
        %v2743 = vunpack.c.h.b16 %v1479
        %v2744 = vunpack.c.l.b16 %v1480
        %v2745 = vunpack.c.h.b16 %v1480
        %v2746 = vunpack.c.l.b16 %v1481
        %v2747 = vunpack.c.h.b16 %v1481
        %v2748 = vunpack.c.l.b16 %v1482
        %v2749 = vunpack.c.l.b16 %v1483
        %v2750 = vunpack.c.h.b16 %v1483
        %v2751 = vunpack.c.l.b16 %v1484
        %v2752 = vunpack.c.h.b16 %v1484
        %v2753 = vunpack.c.l.b16 %v1485
        %v2754 = vunpack.c.h.b16 %v1485
        %v2755 = vunpack.c.l.b16 %v1486
        %v2756 = vunpack.c.l.b16 %v1487
        %v2757 = vunpack.c.h.b16 %v1487
        %v2758 = vunpack.c.l.b16 %v1488
        %v2759 = vunpack.c.h.b16 %v1488
        %v2760 = vunpack.c.l.b16 %v1489
        %v2761 = vunpack.c.h.b16 %v1489
        %v2762 = vunpack.c.l.b16 %v1490
        %v2763 = vunpack.c.l.b16 %v1491
        %v2764 = vunpack.c.h.b16 %v1491
        %v2765 = vunpack.c.l.b16 %v1492
        %v2766 = vunpack.c.h.b16 %v1492
        %v2767 = vunpack.c.l.b16 %v1493
        %v2768 = vunpack.c.h.b16 %v1493
        %v2769 = vunpack.c.l.b16 %v1494
        %v2770 = vunpack.c.l.b16 %v1495
        %v2771 = vunpack.c.h.b16 %v1495
        %v2772 = vunpack.c.l.b16 %v1496
        %v2773 = vunpack.c.h.b16 %v1496
        %v2774 = vunpack.c.l.b16 %v1497
        %v2775 = vunpack.c.h.b16 %v1497
        %v2776 = vunpack.c.l.b16 %v1498
        %v2777 = vunpack.c.l.b16 %v1499
        %v2778 = vunpack.c.h.b16 %v1499
        %v2779 = vunpack.c.l.b16 %v1500
        %v2780 = vunpack.c.h.b16 %v1500
        %v2781 = vunpack.c.l.b16 %v1501
        %v2782 = vunpack.c.h.b16 %v1501
        %v2783 = vunpack.c.l.b16 %v1502
        %v2784 = vunpack.c.l.b16 %v1503
        %v2785 = vunpack.c.h.b16 %v1503
        %v2786 = vunpack.c.l.b16 %v1504
        %v2787 = vunpack.c.h.b16 %v1504
        %v2788 = vunpack.c.l.b16 %v1505
        %v2789 = vunpack.c.h.b16 %v1505
        %v2790 = vunpack.c.l.b16 %v1506
        %v2791 = vunpack.c.l.b16 %v1507
        %v2792 = vunpack.c.h.b16 %v1507
        %v2793 = vunpack.c.l.b16 %v1508
        %v2794 = vunpack.c.h.b16 %v1508
        %v2795 = vunpack.c.l.b16 %v1509
        %v2796 = vunpack.c.h.b16 %v1509
        %v2797 = vunpack.c.l.b16 %v1510
        %v2798 = vunpack.c.l.b16 %v1511
        %v2799 = vunpack.c.h.b16 %v1511
        %v2800 = vunpack.c.l.b16 %v1512
        %v2801 = vunpack.c.h.b16 %v1512
        %v2802 = vunpack.c.l.b16 %v1513
        %v2803 = vunpack.c.h.b16 %v1513
        %v2804 = vunpack.c.l.b16 %v1514
        %v2805 = vunpack.c.l.b16 %v1515
        %v2806 = vunpack.c.h.b16 %v1515
        %v2807 = vunpack.c.l.b16 %v1516
        %v2808 = vunpack.c.h.b16 %v1516
        %v2809 = vunpack.c.l.b16 %v1517
        %v2810 = vunpack.c.h.b16 %v1517
        %v2811 = vunpack.c.l.b16 %v1518
        %v2812 = vunpack.c.l.b16 %v1519
        %v2813 = vunpack.c.h.b16 %v1519
        %v2814 = vunpack.c.l.b16 %v1520
        %v2815 = vunpack.c.h.b16 %v1520
        %v2816 = vunpack.c.l.b16 %v1521
        %v2817 = vunpack.c.h.b16 %v1521
        %v2818 = vunpack.c.l.b16 %v1522
        %v2819 = vunpack.c.l.b16 %v1523
        %v2820 = vunpack.c.h.b16 %v1523
        %v2821 = vunpack.c.l.b16 %v1524
        %v2822 = vunpack.c.h.b16 %v1524
        %v2823 = vunpack.c.l.b16 %v1525
        %v2824 = vunpack.c.h.b16 %v1525
        %v2825 = vunpack.c.l.b16 %v1526
        %v2826 = vunpack.c.l.b16 %v1527
        %v2827 = vunpack.c.h.b16 %v1527
        %v2828 = vunpack.c.l.b16 %v1528
        %v2829 = vunpack.c.h.b16 %v1528
        %v2830 = vunpack.c.l.b16 %v1529
        %v2831 = vunpack.c.h.b16 %v1529
        %v2832 = vunpack.c.l.b16 %v1530
        %v2833 = vunpack.c.l.b16 %v1531
        %v2834 = vunpack.c.h.b16 %v1531
        %v2835 = vunpack.c.l.b16 %v1532
        %v2836 = vunpack.c.h.b16 %v1532
        %v2837 = vunpack.c.l.b16 %v1533
        %v2838 = vunpack.c.h.b16 %v1533
        %v2839 = vunpack.c.l.b16 %v1534
        %v2840 = vunpack.c.l.b16 %v1535
        %v2841 = vunpack.c.h.b16 %v1535
        %v2842 = vunpack.c.l.b16 %v1536
        %v2843 = vunpack.c.h.b16 %v1536
        %v2844 = vunpack.c.l.b16 %v1537
        %v2845 = vunpack.c.h.b16 %v1537
        %v2846 = vunpack.c.l.b16 %v1538
        %v2847 = vunpack.c.l.b16 %v1539
        %v2848 = vunpack.c.h.b16 %v1539
        %v2849 = vunpack.c.l.b16 %v1540
        %v2850 = vunpack.c.h.b16 %v1540
        %v2851 = vunpack.c.l.b16 %v1541
        %v2852 = vunpack.c.h.b16 %v1541
        %v2853 = vunpack.c.l.b16 %v1542
        %v2854 = vunpack.c.l.b16 %v1543
        %v2855 = vunpack.c.h.b16 %v1543
        %v2856 = vunpack.c.l.b16 %v1544
        %v2857 = vunpack.c.h.b16 %v1544
        %v2858 = vunpack.c.l.b16 %v1545
        %v2859 = vunpack.c.h.b16 %v1545
        %v2860 = vunpack.c.l.b16 %v1546
        %v2861 = vunpack.c.l.b16 %v1547
        %v2862 = vunpack.c.h.b16 %v1547
        %v2863 = vunpack.c.l.b16 %v1548
        %v2864 = vunpack.c.h.b16 %v1548
        %v2865 = vunpack.c.l.b16 %v1549
        %v2866 = vunpack.c.h.b16 %v1549
        %v2867 = vunpack.c.l.b16 %v1550
        %v2868 = vunpack.c.l.b16 %v1551
        %v2869 = vunpack.c.h.b16 %v1551
        %v2870 = vunpack.c.l.b16 %v1552
        %v2871 = vunpack.c.h.b16 %v1552
        %v2872 = vunpack.c.l.b16 %v1553
        %v2873 = vunpack.c.h.b16 %v1553
        %v2874 = vunpack.c.l.b16 %v1554
        %v2875 = vunpack.c.l.b16 %v1555
        %v2876 = vunpack.c.h.b16 %v1555
        %v2877 = vunpack.c.l.b16 %v1556
        %v2878 = vunpack.c.h.b16 %v1556
        %v2879 = vunpack.c.l.b16 %v1557
        %v2880 = vunpack.c.h.b16 %v1557
        %v2881 = vunpack.c.l.b16 %v1558
        %v2882 = vunpack.c.l.b16 %v1559
        %v2883 = vunpack.c.h.b16 %v1559
        %v2884 = vunpack.c.l.b16 %v1560
        %v2885 = vunpack.c.h.b16 %v1560
        %v2886 = vunpack.c.l.b16 %v1561
        %v2887 = vunpack.c.h.b16 %v1561
        %v2888 = vunpack.c.l.b16 %v1562
        %v2889 = vunpack.c.l.b16 %v1563
        %v2890 = vunpack.c.h.b16 %v1563
        %v2891 = vunpack.c.l.b16 %v1564
        %v2892 = vunpack.c.h.b16 %v1564
        %v2893 = vunpack.c.l.b16 %v1565
        %v2894 = vunpack.c.h.b16 %v1565
        %v2895 = vunpack.c.l.b16 %v1566
        %v2896 = vunpack.c.l.b16 %v1567
        %v2897 = vunpack.c.h.b16 %v1567
        %v2898 = vunpack.c.l.b16 %v1568
        %v2899 = vunpack.c.h.b16 %v1568
        %v2900 = vunpack.c.l.b16 %v1569
        %v2901 = vunpack.c.h.b16 %v1569
        %v2902 = vunpack.c.l.b16 %v1570
        %v2903 = vunpack.c.l.b16 %v1571
        %v2904 = vunpack.c.h.b16 %v1571
        %v2905 = vunpack.c.l.b16 %v1572
        %v2906 = vunpack.c.h.b16 %v1572
        %v2907 = vunpack.c.l.b16 %v1573
        %v2908 = vunpack.c.h.b16 %v1573
        %v2909 = vunpack.c.l.b16 %v1574
        %v2910 = vunpack.c.l.b16 %v1575
        %v2911 = vunpack.c.h.b16 %v1575
        %v2912 = vunpack.c.l.b16 %v1576
        %v2913 = vunpack.c.h.b16 %v1576
        %v2914 = vunpack.c.l.b16 %v1577
        %v2915 = vunpack.c.h.b16 %v1577
        %v2916 = vunpack.c.l.b16 %v1578
        %v2917 = vunpack.c.l.b16 %v1579
        %v2918 = vunpack.c.h.b16 %v1579
        %v2919 = vunpack.c.l.b16 %v1580
        %v2920 = vunpack.c.h.b16 %v1580
        %v2921 = vunpack.c.l.b16 %v1581
        %v2922 = vunpack.c.h.b16 %v1581
        %v2923 = vunpack.c.l.b16 %v1582
        %v2924 = vunpack.c.l.b16 %v1583
        %v2925 = vunpack.c.h.b16 %v1583
        %v2926 = vunpack.c.l.b16 %v1584
        %v2927 = vunpack.c.h.b16 %v1584
        %v2928 = vunpack.c.l.b16 %v1585
        %v2929 = vunpack.c.h.b16 %v1585
        %v2930 = vunpack.c.l.b16 %v1586
        %v2931 = vunpack.c.l.b16 %v1587
        %v2932 = vunpack.c.h.b16 %v1587
        %v2933 = vunpack.c.l.b16 %v1588
        %v2934 = vunpack.c.h.b16 %v1588
        %v2935 = vunpack.c.l.b16 %v1589
        %v2936 = vunpack.c.h.b16 %v1589
        %v2937 = vunpack.c.l.b16 %v1590
        %v2938 = vunpack.c.l.b16 %v1591
        %v2939 = vunpack.c.h.b16 %v1591
        %v2940 = vunpack.c.l.b16 %v1592
        %v2941 = vunpack.c.h.b16 %v1592
        %v2942 = vunpack.c.l.b16 %v1593
        %v2943 = vunpack.c.h.b16 %v1593
        %v2944 = vunpack.c.l.b16 %v1594
        %v2945 = vunpack.c.l.b16 %v1595
        %v2946 = vunpack.c.h.b16 %v1595
        %v2947 = vunpack.c.l.b16 %v1596
        %v2948 = vunpack.c.h.b16 %v1596
        %v2949 = vunpack.c.l.b16 %v1597
        %v2950 = vunpack.c.h.b16 %v1597
        %v2951 = vunpack.c.l.b16 %v1598
        %v2952 = vunpack.c.l.b16 %v1599
        %v2953 = vunpack.c.h.b16 %v1599
        %v2954 = vunpack.c.l.b16 %v1600
        %v2955 = vunpack.c.h.b16 %v1600
        %v2956 = vunpack.c.l.b16 %v1601
        %v2957 = vunpack.c.h.b16 %v1601
        %v2958 = vunpack.c.l.b16 %v1602
        %v2959 = vunpack.c.l.b16 %v1603
        %v2960 = vunpack.c.h.b16 %v1603
        %v2961 = vunpack.c.l.b16 %v1604
        %v2962 = vunpack.c.h.b16 %v1604
        %v2963 = vunpack.c.l.b16 %v1605
        %v2964 = vunpack.c.h.b16 %v1605
        %v2965 = vunpack.c.l.b16 %v1606
        %v2966 = vunpack.c.l.b16 %v1607
        %v2967 = vunpack.c.h.b16 %v1607
        %v2968 = vunpack.c.l.b16 %v1608
        %v2969 = vunpack.c.h.b16 %v1608
        %v2970 = vunpack.c.l.b16 %v1609
        %v2971 = vunpack.c.h.b16 %v1609
        %v2972 = vunpack.c.l.b16 %v1610
        %v2973 = vunpack.c.l.b16 %v1611
        %v2974 = vunpack.c.h.b16 %v1611
        %v2975 = vunpack.c.l.b16 %v1612
        %v2976 = vunpack.c.h.b16 %v1612
        %v2977 = vunpack.c.l.b16 %v1613
        %v2978 = vunpack.c.h.b16 %v1613
        %v2979 = vunpack.c.l.b16 %v1614
        %v2980 = vunpack.c.l.b16 %v1615
        %v2981 = vunpack.c.h.b16 %v1615
        %v2982 = vunpack.c.l.b16 %v1616
        %v2983 = vunpack.c.h.b16 %v1616
        %v2984 = vunpack.c.l.b16 %v1617
        %v2985 = vunpack.c.h.b16 %v1617
        %v2986 = vunpack.c.l.b16 %v1618
        %v2987 = vunpack.c.l.b16 %v1619
        %v2988 = vunpack.c.h.b16 %v1619
        %v2989 = vunpack.c.l.b16 %v1620
        %v2990 = vunpack.c.h.b16 %v1620
        %v2991 = vunpack.c.l.b16 %v1621
        %v2992 = vunpack.c.h.b16 %v1621
        %v2993 = vunpack.c.l.b16 %v1622
        %v2994 = vunpack.c.l.b16 %v1623
        %v2995 = vunpack.c.h.b16 %v1623
        %v2996 = vunpack.c.l.b16 %v1624
        %v2997 = vunpack.c.h.b16 %v1624
        %v2998 = vunpack.c.l.b16 %v1625
        %v2999 = vunpack.c.h.b16 %v1625
        %v3000 = vunpack.c.l.b16 %v1626
        %v3001 = vunpack.c.l.b16 %v1627
        %v3002 = vunpack.c.h.b16 %v1627
        %v3003 = vunpack.c.l.b16 %v1628
        %v3004 = vunpack.c.h.b16 %v1628
        %v3005 = vunpack.c.l.b16 %v1629
        %v3006 = vunpack.c.h.b16 %v1629
        %v3007 = vunpack.c.l.b16 %v1630
        %v3008 = vunpack.c.l.b16 %v1631
        %v3009 = vunpack.c.h.b16 %v1631
        %v3010 = vunpack.c.l.b16 %v1632
        %v3011 = vunpack.c.h.b16 %v1632
        %v3012 = vunpack.c.l.b16 %v1633
        %v3013 = vunpack.c.h.b16 %v1633
        %v3014 = vunpack.c.l.b16 %v1634
        %v3015 = vunpack.c.l.b16 %v1635
        %v3016 = vunpack.c.h.b16 %v1635
        %v3017 = vunpack.c.l.b16 %v1636
        %v3018 = vunpack.c.h.b16 %v1636
        %v3019 = vunpack.c.l.b16 %v1637
        %v3020 = vunpack.c.h.b16 %v1637
        %v3021 = vunpack.c.l.b16 %v1638
        %v3022 = vunpack.c.l.b16 %v1639
        %v3023 = vunpack.c.h.b16 %v1639
        %v3024 = vunpack.c.l.b16 %v1640
        %v3025 = vunpack.c.h.b16 %v1640
        %v3026 = vunpack.c.l.b16 %v1641
        %v3027 = vunpack.c.h.b16 %v1641
        %v3028 = vunpack.c.l.b16 %v1642
        %v3029 = vunpack.c.l.b16 %v1643
        %v3030 = vunpack.c.h.b16 %v1643
        %v3031 = vunpack.c.l.b16 %v1644
        %v3032 = vunpack.c.h.b16 %v1644
        %v3033 = vunpack.c.l.b16 %v1645
        %v3034 = vunpack.c.h.b16 %v1645
        %v3035 = vunpack.c.l.b16 %v1646
        %v3036 = vunpack.c.l.b16 %v1647
        %v3037 = vunpack.c.h.b16 %v1647
        %v3038 = vunpack.c.l.b16 %v1648
        %v3039 = vunpack.c.h.b16 %v1648
        %v3040 = vunpack.c.l.b16 %v1649
        %v3041 = vunpack.c.h.b16 %v1649
        %v3042 = vunpack.c.l.b16 %v1650
        %v3043 = vunpack.c.l.b16 %v1651
        %v3044 = vunpack.c.h.b16 %v1651
        %v3045 = vunpack.c.l.b16 %v1652
        %v3046 = vunpack.c.h.b16 %v1652
        %v3047 = vunpack.c.l.b16 %v1653
        %v3048 = vunpack.c.h.b16 %v1653
        %v3049 = vunpack.c.l.b16 %v1654
        %v3050 = vunpack.c.l.b16 %v1655
        %v3051 = vunpack.c.h.b16 %v1655
        %v3052 = vunpack.c.l.b16 %v1656
        %v3053 = vunpack.c.h.b16 %v1656
        %v3054 = vunpack.c.l.b16 %v1657
        %v3055 = vunpack.c.h.b16 %v1657
        %v3056 = vunpack.c.l.b16 %v1658
        %v3057 = vunpack.c.l.b16 %v1659
        %v3058 = vunpack.c.h.b16 %v1659
        %v3059 = vunpack.c.l.b16 %v1660
        %v3060 = vunpack.c.h.b16 %v1660
        %v3061 = vunpack.c.l.b16 %v1661
        %v3062 = vunpack.c.h.b16 %v1661
        %v3063 = vunpack.c.l.b16 %v1662
        %v3064 = vunpack.c.l.b16 %v1663
        %v3065 = vunpack.c.h.b16 %v1663
        %v3066 = vunpack.c.l.b16 %v1664
        %v3067 = vunpack.c.h.b16 %v1664
        %v3068 = vunpack.c.l.b16 %v1665
        %v3069 = vunpack.c.h.b16 %v1665
        %v3070 = vunpack.c.l.b16 %v1666
        %v3071 = vunpack.c.l.b16 %v1667
        %v3072 = vunpack.c.h.b16 %v1667
        %v3073 = vunpack.c.l.b16 %v1668
        %v3074 = vunpack.c.h.b16 %v1668
        %v3075 = vunpack.c.l.b16 %v1669
        %v3076 = vunpack.c.h.b16 %v1669
        %v3077 = vunpack.c.l.b16 %v1670
        %v3078 = vunpack.c.l.b16 %v1671
        %v3079 = vunpack.c.h.b16 %v1671
        %v3080 = vunpack.c.l.b16 %v1672
        %v3081 = vunpack.c.h.b16 %v1672
        %v3082 = vunpack.c.l.b16 %v1673
        %v3083 = vunpack.c.h.b16 %v1673
        %v3084 = vunpack.c.l.b16 %v1674
        %v3085 = vunpack.c.l.b16 %v1675
        %v3086 = vunpack.c.h.b16 %v1675
        %v3087 = vunpack.c.l.b16 %v1676
        %v3088 = vunpack.c.h.b16 %v1676
        %v3089 = vunpack.c.l.b16 %v1677
        %v3090 = vunpack.c.h.b16 %v1677
        %v3091 = vunpack.c.l.b16 %v1678
        %v3092 = vunpack.c.l.b16 %v1679
        %v3093 = vunpack.c.h.b16 %v1679
        %v3094 = vunpack.c.l.b16 %v1680
        %v3095 = vunpack.c.h.b16 %v1680
        %v3096 = vunpack.c.l.b16 %v1681
        %v3097 = vunpack.c.h.b16 %v1681
        %v3098 = vunpack.c.l.b16 %v1682
        %v3099 = vunpack.c.l.b16 %v1683
        %v3100 = vunpack.c.h.b16 %v1683
        %v3101 = vunpack.c.l.b16 %v1684
        %v3102 = vunpack.c.h.b16 %v1684
        %v3103 = vunpack.c.l.b16 %v1685
        %v3104 = vunpack.c.h.b16 %v1685
        %v3105 = vunpack.c.l.b16 %v1686
        %v3106 = vunpack.c.l.b16 %v1687
        %v3107 = vunpack.c.h.b16 %v1687
        %v3108 = vunpack.c.l.b16 %v1688
        %v3109 = vunpack.c.h.b16 %v1688
        %v3110 = vunpack.c.l.b16 %v1689
        %v3111 = vunpack.c.h.b16 %v1689
        %v3112 = vunpack.c.l.b16 %v1690
        %v3113 = vunpack.c.l.b16 %v1691
        %v3114 = vunpack.c.h.b16 %v1691
        %v3115 = vunpack.c.l.b16 %v1692
        %v3116 = vunpack.c.h.b16 %v1692
        %v3117 = vunpack.c.l.b16 %v1693
        %v3118 = vunpack.c.h.b16 %v1693
        %v3119 = vunpack.c.l.b16 %v1694
        %v3120 = vunpack.c.l.b16 %v1695
        %v3121 = vunpack.c.h.b16 %v1695
        %v3122 = vunpack.c.l.b16 %v1696
        %v3123 = vunpack.c.h.b16 %v1696
        %v3124 = vunpack.c.l.b16 %v1697
        %v3125 = vunpack.c.h.b16 %v1697
        %v3126 = vunpack.c.l.b16 %v1698
        %v3127 = vunpack.c.l.b16 %v1699
        %v3128 = vunpack.c.h.b16 %v1699
        %v3129 = vunpack.c.l.b16 %v1700
        %v3130 = vunpack.c.h.b16 %v1700
        %v3131 = vunpack.c.l.b16 %v1701
        %v3132 = vunpack.c.h.b16 %v1701
        %v3133 = vunpack.c.l.b16 %v1702
        %v3134 = vunpack.c.l.b16 %v1703
        %v3135 = vunpack.c.h.b16 %v1703
        %v3136 = vunpack.c.l.b16 %v1704
        %v3137 = vunpack.c.h.b16 %v1704
        %v3138 = vunpack.c.l.b16 %v1705
        %v3139 = vunpack.c.h.b16 %v1705
        %v3140 = vunpack.c.l.b16 %v1706
        %v3141 = vunpack.c.l.b16 %v1707
        %v3142 = vunpack.c.h.b16 %v1707
        %v3143 = vunpack.c.l.b16 %v1708
        %v3144 = vunpack.c.h.b16 %v1708
        %v3145 = vunpack.c.l.b16 %v1709
        %v3146 = vunpack.c.h.b16 %v1709
        %v3147 = vunpack.c.l.b16 %v1710
        %v3148 = vunpack.c.l.b16 %v1711
        %v3149 = vunpack.c.h.b16 %v1711
        %v3150 = vunpack.c.l.b16 %v1712
        %v3151 = vunpack.c.h.b16 %v1712
        %v3152 = vunpack.c.l.b16 %v1713
        %v3153 = vunpack.c.h.b16 %v1713
        %v3154 = vunpack.c.l.b16 %v1714
        %v3155 = vunpack.c.l.b16 %v1715
        %v3156 = vunpack.c.h.b16 %v1715
        %v3157 = vunpack.c.l.b16 %v1716
        %v3158 = vunpack.c.h.b16 %v1716
        %v3159 = vunpack.c.l.b16 %v1717
        %v3160 = vunpack.c.h.b16 %v1717
        %v3161 = vunpack.c.l.b16 %v1718
        %v3162 = vunpack.c.l.b16 %v1719
        %v3163 = vunpack.c.h.b16 %v1719
        %v3164 = vunpack.c.l.b16 %v1720
        %v3165 = vunpack.c.h.b16 %v1720
        %v3166 = vunpack.c.l.b16 %v1721
        %v3167 = vunpack.c.h.b16 %v1721
        %v3168 = vunpack.c.l.b16 %v1722
        %v3169 = vunpack.c.l.b16 %v1723
        %v3170 = vunpack.c.h.b16 %v1723
        %v3171 = vunpack.c.l.b16 %v1724
        %v3172 = vunpack.c.h.b16 %v1724
        %v3173 = vunpack.c.l.b16 %v1725
        %v3174 = vunpack.c.h.b16 %v1725
        %v3175 = vunpack.c.l.b16 %v1726
        %v3176 = vunpack.c.l.b16 %v1727
        %v3177 = vunpack.c.h.b16 %v1727
        %v3178 = vunpack.c.l.b16 %v1728
        %v3179 = vunpack.c.h.b16 %v1728
        %v3180 = vunpack.c.l.b16 %v1729
        %v3181 = vunpack.c.h.b16 %v1729
        %v3182 = vunpack.c.l.b16 %v1730
        %v3183 = vunpack.c.l.b16 %v1731
        %v3184 = vunpack.c.h.b16 %v1731
        %v3185 = vunpack.c.l.b16 %v1732
        %v3186 = vunpack.c.h.b16 %v1732
        %v3187 = vunpack.c.l.b16 %v1733
        %v3188 = vunpack.c.h.b16 %v1733
        %v3189 = vunpack.c.l.b16 %v1734
        %v3190 = vunpack.c.l.b16 %v1735
        %v3191 = vunpack.c.h.b16 %v1735
        %v3192 = vunpack.c.l.b16 %v1736
        %v3193 = vunpack.c.h.b16 %v1736
        %v3194 = vunpack.c.l.b16 %v1737
        %v3195 = vunpack.c.h.b16 %v1737
        %v3196 = vunpack.c.l.b16 %v1738
        %v3197 = vunpack.c.l.b16 %v1739
        %v3198 = vunpack.c.h.b16 %v1739
        %v3199 = vunpack.c.l.b16 %v1740
        %v3200 = vunpack.c.h.b16 %v1740
        %v3201 = vunpack.c.l.b16 %v1741
        %v3202 = vunpack.c.h.b16 %v1741
        %v3203 = vunpack.c.l.b16 %v1742
        %v3204 = vunpack.c.l.b16 %v1743
        %v3205 = vunpack.c.h.b16 %v1743
        %v3206 = vunpack.c.l.b16 %v1744
        %v3207 = vunpack.c.h.b16 %v1744
        %v3208 = vunpack.c.l.b16 %v1745
        %v3209 = vunpack.c.h.b16 %v1745
        %v3210 = vunpack.c.l.b16 %v1746
        %v3211 = vunpack.c.l.b16 %v1747
        %v3212 = vunpack.c.h.b16 %v1747
        %v3213 = vunpack.c.l.b16 %v1748
        %v3214 = vunpack.c.h.b16 %v1748
        %v3215 = vunpack.c.l.b16 %v1749
        %v3216 = vunpack.c.h.b16 %v1749
        %v3217 = vunpack.c.l.b16 %v1750
        %v3218 = vunpack.c.l.b16 %v1751
        %v3219 = vunpack.c.h.b16 %v1751
        %v3220 = vunpack.c.l.b16 %v1752
        %v3221 = vunpack.c.h.b16 %v1752
        %v3222 = vunpack.c.l.b16 %v1753
        %v3223 = vunpack.c.h.b16 %v1753
        %v3224 = vunpack.c.l.b16 %v1754
        %v3225 = vunpack.c.l.b16 %v1755
        %v3226 = vunpack.c.h.b16 %v1755
        %v3227 = vunpack.c.l.b16 %v1756
        %v3228 = vunpack.c.h.b16 %v1756
        %v3229 = vunpack.c.l.b16 %v1757
        %v3230 = vunpack.c.h.b16 %v1757
        %v3231 = vunpack.c.l.b16 %v1758
        %v3232 = vunpack.c.l.b16 %v1759
        %v3233 = vunpack.c.h.b16 %v1759
        %v3234 = vunpack.c.l.b16 %v1760
        %v3235 = vunpack.c.h.b16 %v1760
        %v3236 = vunpack.c.l.b16 %v1761
        %v3237 = vunpack.c.h.b16 %v1761
        %v3238 = vunpack.c.l.b16 %v1762
        %v3239 = vunpack.c.l.b16 %v1763
        %v3240 = vunpack.c.h.b16 %v1763
        %v3241 = vunpack.c.l.b16 %v1764
        %v3242 = vunpack.c.h.b16 %v1764
        %v3243 = vunpack.c.l.b16 %v1765
        %v3244 = vunpack.c.h.b16 %v1765
        %v3245 = vunpack.c.l.b16 %v1766
        %v3246 = vunpack.c.l.b16 %v1767
        %v3247 = vunpack.c.h.b16 %v1767
        %v3248 = vunpack.c.l.b16 %v1768
        %v3249 = vunpack.c.h.b16 %v1768
        %v3250 = vunpack.c.l.b16 %v1769
        %v3251 = vunpack.c.h.b16 %v1769
        %v3252 = vunpack.c.l.b16 %v1770
        %v3253 = vunpack.c.l.b16 %v1771
        %v3254 = vunpack.c.h.b16 %v1771
        %v3255 = vunpack.c.l.b16 %v1772
        %v3256 = vunpack.c.h.b16 %v1772
        %v3257 = vunpack.c.l.b16 %v1773
        %v3258 = vunpack.c.h.b16 %v1773
        %v3259 = vunpack.c.l.b16 %v1774
        %v3260 = vunpack.c.l.b16 %v1775
        %v3261 = vunpack.c.h.b16 %v1775
        %v3262 = vunpack.c.l.b16 %v1776
        %v3263 = vunpack.c.h.b16 %v1776
        %v3264 = vunpack.c.l.b16 %v1777
        %v3265 = vunpack.c.h.b16 %v1777
        %v3266 = vunpack.c.l.b16 %v1778
        %v3267 = vunpack.c.l.b16 %v1779
        %v3268 = vunpack.c.h.b16 %v1779
        %v3269 = vunpack.c.l.b16 %v1780
        %v3270 = vunpack.c.h.b16 %v1780
        %v3271 = vunpack.c.l.b16 %v1781
        %v3272 = vunpack.c.h.b16 %v1781
        %v3273 = vunpack.c.l.b16 %v1782
        %v3274 = vunpack.c.l.b16 %v1783
        %v3275 = vunpack.c.h.b16 %v1783
        %v3276 = vunpack.c.l.b16 %v1784
        %v3277 = vunpack.c.h.b16 %v1784
        %v3278 = vunpack.c.l.b16 %v1785
        %v3279 = vunpack.c.h.b16 %v1785
        %v3280 = vunpack.c.l.b16 %v1786
        %v3281 = vunpack.c.l.b16 %v1787
        %v3282 = vunpack.c.h.b16 %v1787
        %v3283 = vunpack.c.l.b16 %v1788
        %v3284 = vunpack.c.h.b16 %v1788
        %v3285 = vunpack.c.l.b16 %v1789
        %v3286 = vunpack.c.h.b16 %v1789
        %v3287 = vunpack.c.l.b16 %v1790
        %v3288 = vunpack.c.l.b16 %v1791
        %v3289 = vunpack.c.h.b16 %v1791
        %v3290 = vunpack.c.l.b16 %v1792
        %v3291 = vunpack.c.h.b16 %v1792
        %v3292 = vunpack.c.l.b16 %v1793
        %v3293 = vunpack.c.h.b16 %v1793
        %v3294 = vunpack.c.l.b16 %v1794
        %v3295 = vunpack.c.l.b16 %v1795
        %v3296 = vunpack.c.h.b16 %v1795
        %v3297 = vunpack.c.l.b16 %v1796
        %v3298 = vunpack.c.h.b16 %v1796
        %v3299 = vunpack.c.l.b16 %v1797
        %v3300 = vunpack.c.h.b16 %v1797
        %v3301 = vunpack.c.l.b16 %v1798
        %v3302 = vpack.c.b16 %v2413, %v2406
        %v3303 = vpack.c.b16 %v2414, %v2407
        %v3304 = vpack.c.b16 %v2415, %v2408
        %v3305 = vpack.c.b16 %v2416, %v2409
        %v3306 = vpack.c.b16 %v2417, %v2410
        %v3307 = vpack.c.b16 %v2418, %v2411
        %v3308 = vpack.c.b16 %v2419, %v2412
        %v3309 = vpack.c.b16 %v2427, %v2420
        %v3310 = vpack.c.b16 %v2428, %v2421
        %v3311 = vpack.c.b16 %v2429, %v2422
        %v3312 = vpack.c.b16 %v2430, %v2423
        %v3313 = vpack.c.b16 %v2431, %v2424
        %v3314 = vpack.c.b16 %v2432, %v2425
        %v3315 = vpack.c.b16 %v2433, %v2426
        %v3316 = vpack.c.b16 %v2441, %v2434
        %v3317 = vpack.c.b16 %v2442, %v2435
        %v3318 = vpack.c.b16 %v2443, %v2436
        %v3319 = vpack.c.b16 %v2444, %v2437
        %v3320 = vpack.c.b16 %v2445, %v2438
        %v3321 = vpack.c.b16 %v2446, %v2439
        %v3322 = vpack.c.b16 %v2447, %v2440
        %v3323 = vpack.c.b16 %v2455, %v2448
        %v3324 = vpack.c.b16 %v2456, %v2449
        %v3325 = vpack.c.b16 %v2457, %v2450
        %v3326 = vpack.c.b16 %v2458, %v2451
        %v3327 = vpack.c.b16 %v2459, %v2452
        %v3328 = vpack.c.b16 %v2460, %v2453
        %v3329 = vpack.c.b16 %v2461, %v2454
        %v3330 = vpack.c.b16 %v2469, %v2462
        %v3331 = vpack.c.b16 %v2470, %v2463
        %v3332 = vpack.c.b16 %v2471, %v2464
        %v3333 = vpack.c.b16 %v2472, %v2465
        %v3334 = vpack.c.b16 %v2473, %v2466
        %v3335 = vpack.c.b16 %v2474, %v2467
        %v3336 = vpack.c.b16 %v2475, %v2468
        %v3337 = vpack.c.b16 %v2483, %v2476
        %v3338 = vpack.c.b16 %v2484, %v2477
        %v3339 = vpack.c.b16 %v2485, %v2478
        %v3340 = vpack.c.b16 %v2486, %v2479
        %v3341 = vpack.c.b16 %v2487, %v2480
        %v3342 = vpack.c.b16 %v2488, %v2481
        %v3343 = vpack.c.b16 %v2489, %v2482
        %v3344 = vpack.c.b16 %v2497, %v2490
        %v3345 = vpack.c.b16 %v2498, %v2491
        %v3346 = vpack.c.b16 %v2499, %v2492
        %v3347 = vpack.c.b16 %v2500, %v2493
        %v3348 = vpack.c.b16 %v2501, %v2494
        %v3349 = vpack.c.b16 %v2502, %v2495
        %v3350 = vpack.c.b16 %v2503, %v2496
        %v3351 = vpack.c.b16 %v2511, %v2504
        %v3352 = vpack.c.b16 %v2512, %v2505
        %v3353 = vpack.c.b16 %v2513, %v2506
        %v3354 = vpack.c.b16 %v2514, %v2507
        %v3355 = vpack.c.b16 %v2515, %v2508
        %v3356 = vpack.c.b16 %v2516, %v2509
        %v3357 = vpack.c.b16 %v2517, %v2510
        %v3358 = vpack.c.b16 %v2525, %v2518
        %v3359 = vpack.c.b16 %v2526, %v2519
        %v3360 = vpack.c.b16 %v2527, %v2520
        %v3361 = vpack.c.b16 %v2528, %v2521
        %v3362 = vpack.c.b16 %v2529, %v2522
        %v3363 = vpack.c.b16 %v2530, %v2523
        %v3364 = vpack.c.b16 %v2531, %v2524
        %v3365 = vpack.c.b16 %v2539, %v2532
        %v3366 = vpack.c.b16 %v2540, %v2533
        %v3367 = vpack.c.b16 %v2541, %v2534
        %v3368 = vpack.c.b16 %v2542, %v2535
        %v3369 = vpack.c.b16 %v2543, %v2536
        %v3370 = vpack.c.b16 %v2544, %v2537
        %v3371 = vpack.c.b16 %v2545, %v2538
        %v3372 = vpack.c.b16 %v2553, %v2546
        %v3373 = vpack.c.b16 %v2554, %v2547
        %v3374 = vpack.c.b16 %v2555, %v2548
        %v3375 = vpack.c.b16 %v2556, %v2549
        %v3376 = vpack.c.b16 %v2557, %v2550
        %v3377 = vpack.c.b16 %v2558, %v2551
        %v3378 = vpack.c.b16 %v2559, %v2552
        %v3379 = vpack.c.b16 %v2567, %v2560
        %v3380 = vpack.c.b16 %v2568, %v2561
        %v3381 = vpack.c.b16 %v2569, %v2562
        %v3382 = vpack.c.b16 %v2570, %v2563
        %v3383 = vpack.c.b16 %v2571, %v2564
        %v3384 = vpack.c.b16 %v2572, %v2565
        %v3385 = vpack.c.b16 %v2573, %v2566
        %v3386 = vpack.c.b16 %v2581, %v2574
        %v3387 = vpack.c.b16 %v2582, %v2575
        %v3388 = vpack.c.b16 %v2583, %v2576
        %v3389 = vpack.c.b16 %v2584, %v2577
        %v3390 = vpack.c.b16 %v2585, %v2578
        %v3391 = vpack.c.b16 %v2586, %v2579
        %v3392 = vpack.c.b16 %v2587, %v2580
        %v3393 = vpack.c.b16 %v2595, %v2588
        %v3394 = vpack.c.b16 %v2596, %v2589
        %v3395 = vpack.c.b16 %v2597, %v2590
        %v3396 = vpack.c.b16 %v2598, %v2591
        %v3397 = vpack.c.b16 %v2599, %v2592
        %v3398 = vpack.c.b16 %v2600, %v2593
        %v3399 = vpack.c.b16 %v2601, %v2594
        %v3400 = vpack.c.b16 %v2609, %v2602
        %v3401 = vpack.c.b16 %v2610, %v2603
        %v3402 = vpack.c.b16 %v2611, %v2604
        %v3403 = vpack.c.b16 %v2612, %v2605
        %v3404 = vpack.c.b16 %v2613, %v2606
        %v3405 = vpack.c.b16 %v2614, %v2607
        %v3406 = vpack.c.b16 %v2615, %v2608
        %v3407 = vpack.c.b16 %v2623, %v2616
        %v3408 = vpack.c.b16 %v2624, %v2617
        %v3409 = vpack.c.b16 %v2625, %v2618
        %v3410 = vpack.c.b16 %v2626, %v2619
        %v3411 = vpack.c.b16 %v2627, %v2620
        %v3412 = vpack.c.b16 %v2628, %v2621
        %v3413 = vpack.c.b16 %v2629, %v2622
        %v3414 = vpack.c.b16 %v2637, %v2630
        %v3415 = vpack.c.b16 %v2638, %v2631
        %v3416 = vpack.c.b16 %v2639, %v2632
        %v3417 = vpack.c.b16 %v2640, %v2633
        %v3418 = vpack.c.b16 %v2641, %v2634
        %v3419 = vpack.c.b16 %v2642, %v2635
        %v3420 = vpack.c.b16 %v2643, %v2636
        %v3421 = vpack.c.b16 %v2651, %v2644
        %v3422 = vpack.c.b16 %v2652, %v2645
        %v3423 = vpack.c.b16 %v2653, %v2646
        %v3424 = vpack.c.b16 %v2654, %v2647
        %v3425 = vpack.c.b16 %v2655, %v2648
        %v3426 = vpack.c.b16 %v2656, %v2649
        %v3427 = vpack.c.b16 %v2657, %v2650
        %v3428 = vpack.c.b16 %v2665, %v2658
        %v3429 = vpack.c.b16 %v2666, %v2659
        %v3430 = vpack.c.b16 %v2667, %v2660
        %v3431 = vpack.c.b16 %v2668, %v2661
        %v3432 = vpack.c.b16 %v2669, %v2662
        %v3433 = vpack.c.b16 %v2670, %v2663
        %v3434 = vpack.c.b16 %v2671, %v2664
        %v3435 = vpack.c.b16 %v2679, %v2672
        %v3436 = vpack.c.b16 %v2680, %v2673
        %v3437 = vpack.c.b16 %v2681, %v2674
        %v3438 = vpack.c.b16 %v2682, %v2675
        %v3439 = vpack.c.b16 %v2683, %v2676
        %v3440 = vpack.c.b16 %v2684, %v2677
        %v3441 = vpack.c.b16 %v2685, %v2678
        %v3442 = vpack.c.b16 %v2693, %v2686
        %v3443 = vpack.c.b16 %v2694, %v2687
        %v3444 = vpack.c.b16 %v2695, %v2688
        %v3445 = vpack.c.b16 %v2696, %v2689
        %v3446 = vpack.c.b16 %v2697, %v2690
        %v3447 = vpack.c.b16 %v2698, %v2691
        %v3448 = vpack.c.b16 %v2699, %v2692
        %v3449 = vpack.c.b16 %v2707, %v2700
        %v3450 = vpack.c.b16 %v2708, %v2701
        %v3451 = vpack.c.b16 %v2709, %v2702
        %v3452 = vpack.c.b16 %v2710, %v2703
        %v3453 = vpack.c.b16 %v2711, %v2704
        %v3454 = vpack.c.b16 %v2712, %v2705
        %v3455 = vpack.c.b16 %v2713, %v2706
        %v3456 = vpack.c.b16 %v2721, %v2714
        %v3457 = vpack.c.b16 %v2722, %v2715
        %v3458 = vpack.c.b16 %v2723, %v2716
        %v3459 = vpack.c.b16 %v2724, %v2717
        %v3460 = vpack.c.b16 %v2725, %v2718
        %v3461 = vpack.c.b16 %v2726, %v2719
        %v3462 = vpack.c.b16 %v2727, %v2720
        %v3463 = vpack.c.b16 %v2735, %v2728
        %v3464 = vpack.c.b16 %v2736, %v2729
        %v3465 = vpack.c.b16 %v2737, %v2730
        %v3466 = vpack.c.b16 %v2738, %v2731
        %v3467 = vpack.c.b16 %v2739, %v2732
        %v3468 = vpack.c.b16 %v2740, %v2733
        %v3469 = vpack.c.b16 %v2741, %v2734
        %v3470 = vpack.c.b16 %v2749, %v2742
        %v3471 = vpack.c.b16 %v2750, %v2743
        %v3472 = vpack.c.b16 %v2751, %v2744
        %v3473 = vpack.c.b16 %v2752, %v2745
        %v3474 = vpack.c.b16 %v2753, %v2746
        %v3475 = vpack.c.b16 %v2754, %v2747
        %v3476 = vpack.c.b16 %v2755, %v2748
        %v3477 = vpack.c.b16 %v2763, %v2756
        %v3478 = vpack.c.b16 %v2764, %v2757
        %v3479 = vpack.c.b16 %v2765, %v2758
        %v3480 = vpack.c.b16 %v2766, %v2759
        %v3481 = vpack.c.b16 %v2767, %v2760
        %v3482 = vpack.c.b16 %v2768, %v2761
        %v3483 = vpack.c.b16 %v2769, %v2762
        %v3484 = vpack.c.b16 %v2777, %v2770
        %v3485 = vpack.c.b16 %v2778, %v2771
        %v3486 = vpack.c.b16 %v2779, %v2772
        %v3487 = vpack.c.b16 %v2780, %v2773
        %v3488 = vpack.c.b16 %v2781, %v2774
        %v3489 = vpack.c.b16 %v2782, %v2775
        %v3490 = vpack.c.b16 %v2783, %v2776
        %v3491 = vpack.c.b16 %v2791, %v2784
        %v3492 = vpack.c.b16 %v2792, %v2785
        %v3493 = vpack.c.b16 %v2793, %v2786
        %v3494 = vpack.c.b16 %v2794, %v2787
        %v3495 = vpack.c.b16 %v2795, %v2788
        %v3496 = vpack.c.b16 %v2796, %v2789
        %v3497 = vpack.c.b16 %v2797, %v2790
        %v3498 = vpack.c.b16 %v2805, %v2798
        %v3499 = vpack.c.b16 %v2806, %v2799
        %v3500 = vpack.c.b16 %v2807, %v2800
        %v3501 = vpack.c.b16 %v2808, %v2801
        %v3502 = vpack.c.b16 %v2809, %v2802
        %v3503 = vpack.c.b16 %v2810, %v2803
        %v3504 = vpack.c.b16 %v2811, %v2804
        %v3505 = vpack.c.b16 %v2819, %v2812
        %v3506 = vpack.c.b16 %v2820, %v2813
        %v3507 = vpack.c.b16 %v2821, %v2814
        %v3508 = vpack.c.b16 %v2822, %v2815
        %v3509 = vpack.c.b16 %v2823, %v2816
        %v3510 = vpack.c.b16 %v2824, %v2817
        %v3511 = vpack.c.b16 %v2825, %v2818
        %v3512 = vpack.c.b16 %v2833, %v2826
        %v3513 = vpack.c.b16 %v2834, %v2827
        %v3514 = vpack.c.b16 %v2835, %v2828
        %v3515 = vpack.c.b16 %v2836, %v2829
        %v3516 = vpack.c.b16 %v2837, %v2830
        %v3517 = vpack.c.b16 %v2838, %v2831
        %v3518 = vpack.c.b16 %v2839, %v2832
        %v3519 = vpack.c.b16 %v2847, %v2840
        %v3520 = vpack.c.b16 %v2848, %v2841
        %v3521 = vpack.c.b16 %v2849, %v2842
        %v3522 = vpack.c.b16 %v2850, %v2843
        %v3523 = vpack.c.b16 %v2851, %v2844
        %v3524 = vpack.c.b16 %v2852, %v2845
        %v3525 = vpack.c.b16 %v2853, %v2846
        %v3526 = vpack.c.b16 %v2861, %v2854
        %v3527 = vpack.c.b16 %v2862, %v2855
        %v3528 = vpack.c.b16 %v2863, %v2856
        %v3529 = vpack.c.b16 %v2864, %v2857
        %v3530 = vpack.c.b16 %v2865, %v2858
        %v3531 = vpack.c.b16 %v2866, %v2859
        %v3532 = vpack.c.b16 %v2867, %v2860
        %v3533 = vpack.c.b16 %v2875, %v2868
        %v3534 = vpack.c.b16 %v2876, %v2869
        %v3535 = vpack.c.b16 %v2877, %v2870
        %v3536 = vpack.c.b16 %v2878, %v2871
        %v3537 = vpack.c.b16 %v2879, %v2872
        %v3538 = vpack.c.b16 %v2880, %v2873
        %v3539 = vpack.c.b16 %v2881, %v2874
        %v3540 = vpack.c.b16 %v2889, %v2882
        %v3541 = vpack.c.b16 %v2890, %v2883
        %v3542 = vpack.c.b16 %v2891, %v2884
        %v3543 = vpack.c.b16 %v2892, %v2885
        %v3544 = vpack.c.b16 %v2893, %v2886
        %v3545 = vpack.c.b16 %v2894, %v2887
        %v3546 = vpack.c.b16 %v2895, %v2888
        %v3547 = vpack.c.b16 %v2903, %v2896
        %v3548 = vpack.c.b16 %v2904, %v2897
        %v3549 = vpack.c.b16 %v2905, %v2898
        %v3550 = vpack.c.b16 %v2906, %v2899
        %v3551 = vpack.c.b16 %v2907, %v2900
        %v3552 = vpack.c.b16 %v2908, %v2901
        %v3553 = vpack.c.b16 %v2909, %v2902
        %v3554 = vpack.c.b16 %v2917, %v2910
        %v3555 = vpack.c.b16 %v2918, %v2911
        %v3556 = vpack.c.b16 %v2919, %v2912
        %v3557 = vpack.c.b16 %v2920, %v2913
        %v3558 = vpack.c.b16 %v2921, %v2914
        %v3559 = vpack.c.b16 %v2922, %v2915
        %v3560 = vpack.c.b16 %v2923, %v2916
        %v3561 = vpack.c.b16 %v2931, %v2924
        %v3562 = vpack.c.b16 %v2932, %v2925
        %v3563 = vpack.c.b16 %v2933, %v2926
        %v3564 = vpack.c.b16 %v2934, %v2927
        %v3565 = vpack.c.b16 %v2935, %v2928
        %v3566 = vpack.c.b16 %v2936, %v2929
        %v3567 = vpack.c.b16 %v2937, %v2930
        %v3568 = vpack.c.b16 %v2945, %v2938
        %v3569 = vpack.c.b16 %v2946, %v2939
        %v3570 = vpack.c.b16 %v2947, %v2940
        %v3571 = vpack.c.b16 %v2948, %v2941
        %v3572 = vpack.c.b16 %v2949, %v2942
        %v3573 = vpack.c.b16 %v2950, %v2943
        %v3574 = vpack.c.b16 %v2951, %v2944
        %v3575 = vpack.c.b16 %v2959, %v2952
        %v3576 = vpack.c.b16 %v2960, %v2953
        %v3577 = vpack.c.b16 %v2961, %v2954
        %v3578 = vpack.c.b16 %v2962, %v2955
        %v3579 = vpack.c.b16 %v2963, %v2956
        %v3580 = vpack.c.b16 %v2964, %v2957
        %v3581 = vpack.c.b16 %v2965, %v2958
        %v3582 = vpack.c.b16 %v2973, %v2966
        %v3583 = vpack.c.b16 %v2974, %v2967
        %v3584 = vpack.c.b16 %v2975, %v2968
        %v3585 = vpack.c.b16 %v2976, %v2969
        %v3586 = vpack.c.b16 %v2977, %v2970
        %v3587 = vpack.c.b16 %v2978, %v2971
        %v3588 = vpack.c.b16 %v2979, %v2972
        %v3589 = vpack.c.b16 %v2987, %v2980
        %v3590 = vpack.c.b16 %v2988, %v2981
        %v3591 = vpack.c.b16 %v2989, %v2982
        %v3592 = vpack.c.b16 %v2990, %v2983
        %v3593 = vpack.c.b16 %v2991, %v2984
        %v3594 = vpack.c.b16 %v2992, %v2985
        %v3595 = vpack.c.b16 %v2993, %v2986
        %v3596 = vpack.c.b16 %v3001, %v2994
        %v3597 = vpack.c.b16 %v3002, %v2995
        %v3598 = vpack.c.b16 %v3003, %v2996
        %v3599 = vpack.c.b16 %v3004, %v2997
        %v3600 = vpack.c.b16 %v3005, %v2998
        %v3601 = vpack.c.b16 %v3006, %v2999
        %v3602 = vpack.c.b16 %v3007, %v3000
        %v3603 = vpack.c.b16 %v3015, %v3008
        %v3604 = vpack.c.b16 %v3016, %v3009
        %v3605 = vpack.c.b16 %v3017, %v3010
        %v3606 = vpack.c.b16 %v3018, %v3011
        %v3607 = vpack.c.b16 %v3019, %v3012
        %v3608 = vpack.c.b16 %v3020, %v3013
        %v3609 = vpack.c.b16 %v3021, %v3014
        %v3610 = vpack.c.b16 %v3029, %v3022
        %v3611 = vpack.c.b16 %v3030, %v3023
        %v3612 = vpack.c.b16 %v3031, %v3024
        %v3613 = vpack.c.b16 %v3032, %v3025
        %v3614 = vpack.c.b16 %v3033, %v3026
        %v3615 = vpack.c.b16 %v3034, %v3027
        %v3616 = vpack.c.b16 %v3035, %v3028
        %v3617 = vpack.c.b16 %v3043, %v3036
        %v3618 = vpack.c.b16 %v3044, %v3037
        %v3619 = vpack.c.b16 %v3045, %v3038
        %v3620 = vpack.c.b16 %v3046, %v3039
        %v3621 = vpack.c.b16 %v3047, %v3040
        %v3622 = vpack.c.b16 %v3048, %v3041
        %v3623 = vpack.c.b16 %v3049, %v3042
        %v3624 = vpack.c.b16 %v3057, %v3050
        %v3625 = vpack.c.b16 %v3058, %v3051
        %v3626 = vpack.c.b16 %v3059, %v3052
        %v3627 = vpack.c.b16 %v3060, %v3053
        %v3628 = vpack.c.b16 %v3061, %v3054
        %v3629 = vpack.c.b16 %v3062, %v3055
        %v3630 = vpack.c.b16 %v3063, %v3056
        %v3631 = vpack.c.b16 %v3071, %v3064
        %v3632 = vpack.c.b16 %v3072, %v3065
        %v3633 = vpack.c.b16 %v3073, %v3066
        %v3634 = vpack.c.b16 %v3074, %v3067
        %v3635 = vpack.c.b16 %v3075, %v3068
        %v3636 = vpack.c.b16 %v3076, %v3069
        %v3637 = vpack.c.b16 %v3077, %v3070
        %v3638 = vpack.c.b16 %v3085, %v3078
        %v3639 = vpack.c.b16 %v3086, %v3079
        %v3640 = vpack.c.b16 %v3087, %v3080
        %v3641 = vpack.c.b16 %v3088, %v3081
        %v3642 = vpack.c.b16 %v3089, %v3082
        %v3643 = vpack.c.b16 %v3090, %v3083
        %v3644 = vpack.c.b16 %v3091, %v3084
        %v3645 = vpack.c.b16 %v3099, %v3092
        %v3646 = vpack.c.b16 %v3100, %v3093
        %v3647 = vpack.c.b16 %v3101, %v3094
        %v3648 = vpack.c.b16 %v3102, %v3095
        %v3649 = vpack.c.b16 %v3103, %v3096
        %v3650 = vpack.c.b16 %v3104, %v3097
        %v3651 = vpack.c.b16 %v3105, %v3098
        %v3652 = vpack.c.b16 %v3113, %v3106
        %v3653 = vpack.c.b16 %v3114, %v3107
        %v3654 = vpack.c.b16 %v3115, %v3108
        %v3655 = vpack.c.b16 %v3116, %v3109
        %v3656 = vpack.c.b16 %v3117, %v3110
        %v3657 = vpack.c.b16 %v3118, %v3111
        %v3658 = vpack.c.b16 %v3119, %v3112
        %v3659 = vpack.c.b16 %v3127, %v3120
        %v3660 = vpack.c.b16 %v3128, %v3121
        %v3661 = vpack.c.b16 %v3129, %v3122
        %v3662 = vpack.c.b16 %v3130, %v3123
        %v3663 = vpack.c.b16 %v3131, %v3124
        %v3664 = vpack.c.b16 %v3132, %v3125
        %v3665 = vpack.c.b16 %v3133, %v3126
        %v3666 = vpack.c.b16 %v3141, %v3134
        %v3667 = vpack.c.b16 %v3142, %v3135
        %v3668 = vpack.c.b16 %v3143, %v3136
        %v3669 = vpack.c.b16 %v3144, %v3137
        %v3670 = vpack.c.b16 %v3145, %v3138
        %v3671 = vpack.c.b16 %v3146, %v3139
        %v3672 = vpack.c.b16 %v3147, %v3140
        %v3673 = vpack.c.b16 %v3155, %v3148
        %v3674 = vpack.c.b16 %v3156, %v3149
        %v3675 = vpack.c.b16 %v3157, %v3150
        %v3676 = vpack.c.b16 %v3158, %v3151
        %v3677 = vpack.c.b16 %v3159, %v3152
        %v3678 = vpack.c.b16 %v3160, %v3153
        %v3679 = vpack.c.b16 %v3161, %v3154
        %v3680 = vpack.c.b16 %v3169, %v3162
        %v3681 = vpack.c.b16 %v3170, %v3163
        %v3682 = vpack.c.b16 %v3171, %v3164
        %v3683 = vpack.c.b16 %v3172, %v3165
        %v3684 = vpack.c.b16 %v3173, %v3166
        %v3685 = vpack.c.b16 %v3174, %v3167
        %v3686 = vpack.c.b16 %v3175, %v3168
        %v3687 = vpack.c.b16 %v3183, %v3176
        %v3688 = vpack.c.b16 %v3184, %v3177
        %v3689 = vpack.c.b16 %v3185, %v3178
        %v3690 = vpack.c.b16 %v3186, %v3179
        %v3691 = vpack.c.b16 %v3187, %v3180
        %v3692 = vpack.c.b16 %v3188, %v3181
        %v3693 = vpack.c.b16 %v3189, %v3182
        %v3694 = vpack.c.b16 %v3197, %v3190
        %v3695 = vpack.c.b16 %v3198, %v3191
        %v3696 = vpack.c.b16 %v3199, %v3192
        %v3697 = vpack.c.b16 %v3200, %v3193
        %v3698 = vpack.c.b16 %v3201, %v3194
        %v3699 = vpack.c.b16 %v3202, %v3195
        %v3700 = vpack.c.b16 %v3203, %v3196
        %v3701 = vpack.c.b16 %v3211, %v3204
        %v3702 = vpack.c.b16 %v3212, %v3205
        %v3703 = vpack.c.b16 %v3213, %v3206
        %v3704 = vpack.c.b16 %v3214, %v3207
        %v3705 = vpack.c.b16 %v3215, %v3208
        %v3706 = vpack.c.b16 %v3216, %v3209
        %v3707 = vpack.c.b16 %v3217, %v3210
        %v3708 = vpack.c.b16 %v3225, %v3218
        %v3709 = vpack.c.b16 %v3226, %v3219
        %v3710 = vpack.c.b16 %v3227, %v3220
        %v3711 = vpack.c.b16 %v3228, %v3221
        %v3712 = vpack.c.b16 %v3229, %v3222
        %v3713 = vpack.c.b16 %v3230, %v3223
        %v3714 = vpack.c.b16 %v3231, %v3224
        %v3715 = vpack.c.b16 %v3239, %v3232
        %v3716 = vpack.c.b16 %v3240, %v3233
        %v3717 = vpack.c.b16 %v3241, %v3234
        %v3718 = vpack.c.b16 %v3242, %v3235
        %v3719 = vpack.c.b16 %v3243, %v3236
        %v3720 = vpack.c.b16 %v3244, %v3237
        %v3721 = vpack.c.b16 %v3245, %v3238
        %v3722 = vpack.c.b16 %v3253, %v3246
        %v3723 = vpack.c.b16 %v3254, %v3247
        %v3724 = vpack.c.b16 %v3255, %v3248
        %v3725 = vpack.c.b16 %v3256, %v3249
        %v3726 = vpack.c.b16 %v3257, %v3250
        %v3727 = vpack.c.b16 %v3258, %v3251
        %v3728 = vpack.c.b16 %v3259, %v3252
        %v3729 = vpack.c.b16 %v3267, %v3260
        %v3730 = vpack.c.b16 %v3268, %v3261
        %v3731 = vpack.c.b16 %v3269, %v3262
        %v3732 = vpack.c.b16 %v3270, %v3263
        %v3733 = vpack.c.b16 %v3271, %v3264
        %v3734 = vpack.c.b16 %v3272, %v3265
        %v3735 = vpack.c.b16 %v3273, %v3266
        %v3736 = vpack.c.b16 %v3281, %v3274
        %v3737 = vpack.c.b16 %v3282, %v3275
        %v3738 = vpack.c.b16 %v3283, %v3276
        %v3739 = vpack.c.b16 %v3284, %v3277
        %v3740 = vpack.c.b16 %v3285, %v3278
        %v3741 = vpack.c.b16 %v3286, %v3279
        %v3742 = vpack.c.b16 %v3287, %v3280
        %v3743 = vpack.c.b16 %v3295, %v3288
        %v3744 = vpack.c.b16 %v3296, %v3289
        %v3745 = vpack.c.b16 %v3297, %v3290
        %v3746 = vpack.c.b16 %v3298, %v3291
        %v3747 = vpack.c.b16 %v3299, %v3292
        %v3748 = vpack.c.b16 %v3300, %v3293
        %v3749 = vpack.c.b16 %v3301, %v3294
        %4198 = vmatprep.subr.bf16.mxu0 %v3303
        %4199 = vmatpush1.bf16.msra.mxu0 %v3302
        %4200 = vmatprep.subr.bf16.mxu0 %v3310
        %4201 = vmatpush1.bf16.msra.mxu0 %v3309
        %4202 = vmatprep.subr.bf16.mxu0 %v3317
        %4203 = vmatpush1.bf16.msra.mxu0 %v3316
        %4204 = vmatprep.subr.bf16.mxu0 %v3324
        %4205 = vmatpush1.bf16.msra.mxu0 %v3323
        %4206 = vmatprep.subr.bf16.mxu0 %v3331
        %4207 = vmatpush1.bf16.msra.mxu0 %v3330
        %4208 = vmatprep.subr.bf16.mxu0 %v3338
        %4209 = vmatpush1.bf16.msra.mxu0 %v3337
        %4210 = vmatprep.subr.bf16.mxu0 %v3345
        %4211 = vmatpush1.bf16.msra.mxu0 %v3344
        %4212 = vmatprep.subr.bf16.mxu0 %v3352
        %4213 = vmatpush1.bf16.msra.mxu0 %v3351
        %4214 = vmatprep.subr.bf16.mxu0 %v3359
        %4215 = vmatpush1.bf16.msra.mxu0 %v3358
        %4216 = vmatprep.subr.bf16.mxu0 %v3366
        %4217 = vmatpush1.bf16.msra.mxu0 %v3365
        %4218 = vmatprep.subr.bf16.mxu0 %v3373
        %4219 = vmatpush1.bf16.msra.mxu0 %v3372
        %4220 = vmatprep.subr.bf16.mxu0 %v3380
        %4221 = vmatpush1.bf16.msra.mxu0 %v3379
        %4222 = vmatprep.subr.bf16.mxu0 %v3387
        %4223 = vmatpush1.bf16.msra.mxu0 %v3386
        %4224 = vmatprep.subr.bf16.mxu0 %v3394
        %4225 = vmatpush1.bf16.msra.mxu0 %v3393
        %4226 = vmatprep.subr.bf16.mxu0 %v3401
        %4227 = vmatpush1.bf16.msra.mxu0 %v3400
        %4228 = vmatprep.subr.bf16.mxu0 %v3408
        %4229 = vmatpush1.bf16.msra.mxu0 %v3407
        %4230 = vmatprep.mubr.bf16.mxu0 %v1874
        %4231 = vmatmul.mubr.bf16.gmra.mrb[0].mxu0 %v1860
        %v4232 = vpop.f32.mrb[0].mxu0
        %v4233 = vadd.f32 %v1804, %v4232
        %v4234 = vpop.f32.mrb[0].mxu0
        %v4235 = vadd.f32 %v1808, %v4234
        %v4236 = vpop.f32.mrb[0].mxu0
        %v4237 = vpop.f32.mrb[0].mxu0
        %4238 = vdwg.mxu0
        %4239 = vmatprep.subr.bf16.mxu0 %v3415
        %4240 = vmatpush1.bf16.msra.mxu0 %v3414
        %4241 = vmatprep.subr.bf16.mxu0 %v3422
        %4242 = vmatpush1.bf16.msra.mxu0 %v3421
        %4243 = vmatprep.subr.bf16.mxu0 %v3429
        %4244 = vmatpush1.bf16.msra.mxu0 %v3428
        %4245 = vmatprep.subr.bf16.mxu0 %v3436
        %4246 = vmatpush1.bf16.msra.mxu0 %v3435
        %4247 = vmatprep.subr.bf16.mxu0 %v3443
        %4248 = vmatpush1.bf16.msra.mxu0 %v3442
        %4249 = vmatprep.subr.bf16.mxu0 %v3450
        %4250 = vmatpush1.bf16.msra.mxu0 %v3449
        %4251 = vmatprep.subr.bf16.mxu0 %v3457
        %4252 = vmatpush1.bf16.msra.mxu0 %v3456
        %4253 = vmatprep.subr.bf16.mxu0 %v3464
        %4254 = vmatpush1.bf16.msra.mxu0 %v3463
        %4255 = vmatprep.subr.bf16.mxu0 %v3471
        %4256 = vmatpush1.bf16.msra.mxu0 %v3470
        %4257 = vmatprep.subr.bf16.mxu0 %v3478
        %4258 = vmatpush1.bf16.msra.mxu0 %v3477
        %4259 = vmatprep.subr.bf16.mxu0 %v3485
        %4260 = vmatpush1.bf16.msra.mxu0 %v3484
        %4261 = vmatprep.subr.bf16.mxu0 %v3492
        %4262 = vmatpush1.bf16.msra.mxu0 %v3491
        %4263 = vmatprep.subr.bf16.mxu0 %v3499
        %4264 = vmatpush1.bf16.msra.mxu0 %v3498
        %4265 = vmatprep.subr.bf16.mxu0 %v3506
        %4266 = vmatpush1.bf16.msra.mxu0 %v3505
        %4267 = vmatprep.subr.bf16.mxu0 %v3513
        %4268 = vmatpush1.bf16.msra.mxu0 %v3512
        %4269 = vmatprep.subr.bf16.mxu0 %v3520
        %4270 = vmatpush1.bf16.msra.mxu0 %v3519
        %4271 = vmatprep.mubr.bf16.mxu0 %v1884
        %4272 = vmatmul.mubr.bf16.gmra.mrb[0].mxu0 %v1882
        %v4273 = vpop.f32.mrb[0].mxu0
        %v4274 = vadd.f32 %v4233, %v4273
        %v4275 = vpop.f32.mrb[0].mxu0
        %v4276 = vadd.f32 %v4235, %v4275
        %v4277 = vpop.f32.mrb[0].mxu0
        %v4278 = vpop.f32.mrb[0].mxu0
        %4279 = vdwg.mxu0
        %4280 = vmatprep.subr.bf16.mxu0 %v3527
        %4281 = vmatpush1.bf16.msra.mxu0 %v3526
        %4282 = vmatprep.subr.bf16.mxu0 %v3534
        %4283 = vmatpush1.bf16.msra.mxu0 %v3533
        %4284 = vmatprep.subr.bf16.mxu0 %v3541
        %4285 = vmatpush1.bf16.msra.mxu0 %v3540
        %4286 = vmatprep.subr.bf16.mxu0 %v3548
        %4287 = vmatpush1.bf16.msra.mxu0 %v3547
        %4288 = vmatprep.subr.bf16.mxu0 %v3555
        %4289 = vmatpush1.bf16.msra.mxu0 %v3554
        %4290 = vmatprep.subr.bf16.mxu0 %v3562
        %4291 = vmatpush1.bf16.msra.mxu0 %v3561
        %4292 = vmatprep.subr.bf16.mxu0 %v3569
        %4293 = vmatpush1.bf16.msra.mxu0 %v3568
        %4294 = vmatprep.subr.bf16.mxu0 %v3576
        %4295 = vmatpush1.bf16.msra.mxu0 %v3575
        %4296 = vmatprep.subr.bf16.mxu0 %v3583
        %4297 = vmatpush1.bf16.msra.mxu0 %v3582
        %4298 = vmatprep.subr.bf16.mxu0 %v3590
        %4299 = vmatpush1.bf16.msra.mxu0 %v3589
        %4300 = vmatprep.subr.bf16.mxu0 %v3597
        %4301 = vmatpush1.bf16.msra.mxu0 %v3596
        %4302 = vmatprep.subr.bf16.mxu0 %v3604
        %4303 = vmatpush1.bf16.msra.mxu0 %v3603
        %4304 = vmatprep.subr.bf16.mxu0 %v3611
        %4305 = vmatpush1.bf16.msra.mxu0 %v3610
        %4306 = vmatprep.subr.bf16.mxu0 %v3618
        %4307 = vmatpush1.bf16.msra.mxu0 %v3617
        %4308 = vmatprep.subr.bf16.mxu0 %v3625
        %4309 = vmatpush1.bf16.msra.mxu0 %v3624
        %4310 = vmatprep.subr.bf16.mxu0 %v3632
        %4311 = vmatpush1.bf16.msra.mxu0 %v3631
        %4312 = vmatprep.mubr.bf16.mxu0 %v1881
        %4313 = vmatmul.mubr.bf16.gmra.mrb[0].mxu0 %v1867
        %v4314 = vpop.f32.mrb[0].mxu0
        %v4315 = vadd.f32 %v4274, %v4314
        %v4316 = vpop.f32.mrb[0].mxu0
        %v4317 = vadd.f32 %v4276, %v4316
        %v4318 = vpop.f32.mrb[0].mxu0
        %v4319 = vpop.f32.mrb[0].mxu0
        %4320 = vdwg.mxu0
        %4321 = vmatprep.subr.bf16.mxu0 %v3639
        %4322 = vmatpush1.bf16.msra.mxu0 %v3638
        %4323 = vmatprep.subr.bf16.mxu0 %v3646
        %4324 = vmatpush1.bf16.msra.mxu0 %v3645
        %4325 = vmatprep.subr.bf16.mxu0 %v3653
        %4326 = vmatpush1.bf16.msra.mxu0 %v3652
        %4327 = vmatprep.subr.bf16.mxu0 %v3660
        %4328 = vmatpush1.bf16.msra.mxu0 %v3659
        %4329 = vmatprep.subr.bf16.mxu0 %v3667
        %4330 = vmatpush1.bf16.msra.mxu0 %v3666
        %4331 = vmatprep.subr.bf16.mxu0 %v3674
        %4332 = vmatpush1.bf16.msra.mxu0 %v3673
        %4333 = vmatprep.subr.bf16.mxu0 %v3681
        %4334 = vmatpush1.bf16.msra.mxu0 %v3680
        %4335 = vmatprep.subr.bf16.mxu0 %v3688
        %4336 = vmatpush1.bf16.msra.mxu0 %v3687
        %4337 = vmatprep.subr.bf16.mxu0 %v3695
        %4338 = vmatpush1.bf16.msra.mxu0 %v3694
        %4339 = vmatprep.subr.bf16.mxu0 %v3702
        %4340 = vmatpush1.bf16.msra.mxu0 %v3701
        %4341 = vmatprep.subr.bf16.mxu0 %v3709
        %4342 = vmatpush1.bf16.msra.mxu0 %v3708
        %4343 = vmatprep.subr.bf16.mxu0 %v3716
        %4344 = vmatpush1.bf16.msra.mxu0 %v3715
        %4345 = vmatprep.subr.bf16.mxu0 %v3723
        %4346 = vmatpush1.bf16.msra.mxu0 %v3722
        %4347 = vmatprep.subr.bf16.mxu0 %v3730
        %4348 = vmatpush1.bf16.msra.mxu0 %v3729
        %4349 = vmatprep.subr.bf16.mxu0 %v3737
        %4350 = vmatpush1.bf16.msra.mxu0 %v3736
        %4351 = vmatprep.subr.bf16.mxu0 %v3744
        %4352 = vmatpush1.bf16.msra.mxu0 %v3743
        %4353 = vmatprep.mubr.bf16.mxu0 %v1885
        %4354 = vmatmul.mubr.bf16.gmra.mrb[0].mxu0 %v1883
        %v4355 = vpop.f32.mrb[0].mxu0
        %v4356 = vadd.f32 %v4315, %v4355
        %v4357 = vpop.f32.mrb[0].mxu0
        %v4358 = vadd.f32 %v4317, %v4357
        %v4359 = vpop.f32.mrb[0].mxu0
        %v4360 = vpop.f32.mrb[0].mxu0
        %4361 = vdwg.mxu0
        %4362 = vmatprep.subr.bf16.mxu0 %v3305
        %4363 = vmatpush1.bf16.msra.mxu0 %v3304
        %4364 = vmatprep.subr.bf16.mxu0 %v3312
        %4365 = vmatpush1.bf16.msra.mxu0 %v3311
        %4366 = vmatprep.subr.bf16.mxu0 %v3319
        %4367 = vmatpush1.bf16.msra.mxu0 %v3318
        %4368 = vmatprep.subr.bf16.mxu0 %v3326
        %4369 = vmatpush1.bf16.msra.mxu0 %v3325
        %4370 = vmatprep.subr.bf16.mxu0 %v3333
        %4371 = vmatpush1.bf16.msra.mxu0 %v3332
        %4372 = vmatprep.subr.bf16.mxu0 %v3340
        %4373 = vmatpush1.bf16.msra.mxu0 %v3339
        %4374 = vmatprep.subr.bf16.mxu0 %v3347
        %4375 = vmatpush1.bf16.msra.mxu0 %v3346
        %4376 = vmatprep.subr.bf16.mxu0 %v3354
        %4377 = vmatpush1.bf16.msra.mxu0 %v3353
        %4378 = vmatprep.subr.bf16.mxu0 %v3361
        %4379 = vmatpush1.bf16.msra.mxu0 %v3360
        %4380 = vmatprep.subr.bf16.mxu0 %v3368
        %4381 = vmatpush1.bf16.msra.mxu0 %v3367
        %4382 = vmatprep.subr.bf16.mxu0 %v3375
        %4383 = vmatpush1.bf16.msra.mxu0 %v3374
        %4384 = vmatprep.subr.bf16.mxu0 %v3382
        %4385 = vmatpush1.bf16.msra.mxu0 %v3381
        %4386 = vmatprep.subr.bf16.mxu0 %v3389
        %4387 = vmatpush1.bf16.msra.mxu0 %v3388
        %4388 = vmatprep.subr.bf16.mxu0 %v3396
        %4389 = vmatpush1.bf16.msra.mxu0 %v3395
        %4390 = vmatprep.subr.bf16.mxu0 %v3403
        %4391 = vmatpush1.bf16.msra.mxu0 %v3402
        %4392 = vmatprep.subr.bf16.mxu0 %v3410
        %4393 = vmatpush1.bf16.msra.mxu0 %v3409
        %4394 = vmatprep.mubr.bf16.mxu0 %v1874
        %4395 = vmatmul.mubr.bf16.gmra.mrb[0].mxu0 %v1860
        %v4396 = vpop.f32.mrb[0].mxu0
        %v4397 = vadd.f32 %v1812, %v4396
        %v4398 = vpop.f32.mrb[0].mxu0
        %v4399 = vadd.f32 %v1816, %v4398
        %v4400 = vpop.f32.mrb[0].mxu0
        %v4401 = vpop.f32.mrb[0].mxu0
        %4402 = vdwg.mxu0
        %4403 = vmatprep.subr.bf16.mxu0 %v3417
        %4404 = vmatpush1.bf16.msra.mxu0 %v3416
        %4405 = vmatprep.subr.bf16.mxu0 %v3424
        %4406 = vmatpush1.bf16.msra.mxu0 %v3423
        %4407 = vmatprep.subr.bf16.mxu0 %v3431
        %4408 = vmatpush1.bf16.msra.mxu0 %v3430
        %4409 = vmatprep.subr.bf16.mxu0 %v3438
        %4410 = vmatpush1.bf16.msra.mxu0 %v3437
        %4411 = vmatprep.subr.bf16.mxu0 %v3445
        %4412 = vmatpush1.bf16.msra.mxu0 %v3444
        %4413 = vmatprep.subr.bf16.mxu0 %v3452
        %4414 = vmatpush1.bf16.msra.mxu0 %v3451
        %4415 = vmatprep.subr.bf16.mxu0 %v3459
        %4416 = vmatpush1.bf16.msra.mxu0 %v3458
        %4417 = vmatprep.subr.bf16.mxu0 %v3466
        %4418 = vmatpush1.bf16.msra.mxu0 %v3465
        %4419 = vmatprep.subr.bf16.mxu0 %v3473
        %4420 = vmatpush1.bf16.msra.mxu0 %v3472
        %4421 = vmatprep.subr.bf16.mxu0 %v3480
        %4422 = vmatpush1.bf16.msra.mxu0 %v3479
        %4423 = vmatprep.subr.bf16.mxu0 %v3487
        %4424 = vmatpush1.bf16.msra.mxu0 %v3486
        %4425 = vmatprep.subr.bf16.mxu0 %v3494
        %4426 = vmatpush1.bf16.msra.mxu0 %v3493
        %4427 = vmatprep.subr.bf16.mxu0 %v3501
        %4428 = vmatpush1.bf16.msra.mxu0 %v3500
        %4429 = vmatprep.subr.bf16.mxu0 %v3508
        %4430 = vmatpush1.bf16.msra.mxu0 %v3507
        %4431 = vmatprep.subr.bf16.mxu0 %v3515
        %4432 = vmatpush1.bf16.msra.mxu0 %v3514
        %4433 = vmatprep.subr.bf16.mxu0 %v3522
        %4434 = vmatpush1.bf16.msra.mxu0 %v3521
        %4435 = vmatprep.mubr.bf16.mxu0 %v1884
        %4436 = vmatmul.mubr.bf16.gmra.mrb[0].mxu0 %v1882
        %v4437 = vpop.f32.mrb[0].mxu0
        %v4438 = vadd.f32 %v4397, %v4437
        %v4439 = vpop.f32.mrb[0].mxu0
        %v4440 = vadd.f32 %v4399, %v4439
        %v4441 = vpop.f32.mrb[0].mxu0
        %v4442 = vpop.f32.mrb[0].mxu0
        %4443 = vdwg.mxu0
        %4444 = vmatprep.subr.bf16.mxu0 %v3529
        %4445 = vmatpush1.bf16.msra.mxu0 %v3528
        %4446 = vmatprep.subr.bf16.mxu0 %v3536
        %4447 = vmatpush1.bf16.msra.mxu0 %v3535
        %4448 = vmatprep.subr.bf16.mxu0 %v3543
        %4449 = vmatpush1.bf16.msra.mxu0 %v3542
        %4450 = vmatprep.subr.bf16.mxu0 %v3550
        %4451 = vmatpush1.bf16.msra.mxu0 %v3549
        %4452 = vmatprep.subr.bf16.mxu0 %v3557
        %4453 = vmatpush1.bf16.msra.mxu0 %v3556
        %4454 = vmatprep.subr.bf16.mxu0 %v3564
        %4455 = vmatpush1.bf16.msra.mxu0 %v3563
        %4456 = vmatprep.subr.bf16.mxu0 %v3571
        %4457 = vmatpush1.bf16.msra.mxu0 %v3570
        %4458 = vmatprep.subr.bf16.mxu0 %v3578
        %4459 = vmatpush1.bf16.msra.mxu0 %v3577
        %4460 = vmatprep.subr.bf16.mxu0 %v3585
        %4461 = vmatpush1.bf16.msra.mxu0 %v3584
        %4462 = vmatprep.subr.bf16.mxu0 %v3592
        %4463 = vmatpush1.bf16.msra.mxu0 %v3591
        %4464 = vmatprep.subr.bf16.mxu0 %v3599
        %4465 = vmatpush1.bf16.msra.mxu0 %v3598
        %4466 = vmatprep.subr.bf16.mxu0 %v3606
        %4467 = vmatpush1.bf16.msra.mxu0 %v3605
        %4468 = vmatprep.subr.bf16.mxu0 %v3613
        %4469 = vmatpush1.bf16.msra.mxu0 %v3612
        %4470 = vmatprep.subr.bf16.mxu0 %v3620
        %4471 = vmatpush1.bf16.msra.mxu0 %v3619
        %4472 = vmatprep.subr.bf16.mxu0 %v3627
        %4473 = vmatpush1.bf16.msra.mxu0 %v3626
        %4474 = vmatprep.subr.bf16.mxu0 %v3634
        %4475 = vmatpush1.bf16.msra.mxu0 %v3633
        %4476 = vmatprep.mubr.bf16.mxu0 %v1881
        %4477 = vmatmul.mubr.bf16.gmra.mrb[0].mxu0 %v1867
        %v4478 = vpop.f32.mrb[0].mxu0
        %v4479 = vadd.f32 %v4438, %v4478
        %v4480 = vpop.f32.mrb[0].mxu0
        %v4481 = vadd.f32 %v4440, %v4480
        %v4482 = vpop.f32.mrb[0].mxu0
        %v4483 = vpop.f32.mrb[0].mxu0
        %4484 = vdwg.mxu0
        %4485 = vmatprep.subr.bf16.mxu0 %v3641
        %4486 = vmatpush1.bf16.msra.mxu0 %v3640
        %4487 = vmatprep.subr.bf16.mxu0 %v3648
        %4488 = vmatpush1.bf16.msra.mxu0 %v3647
        %4489 = vmatprep.subr.bf16.mxu0 %v3655
        %4490 = vmatpush1.bf16.msra.mxu0 %v3654
        %4491 = vmatprep.subr.bf16.mxu0 %v3662
        %4492 = vmatpush1.bf16.msra.mxu0 %v3661
        %4493 = vmatprep.subr.bf16.mxu0 %v3669
        %4494 = vmatpush1.bf16.msra.mxu0 %v3668
        %4495 = vmatprep.subr.bf16.mxu0 %v3676
        %4496 = vmatpush1.bf16.msra.mxu0 %v3675
        %4497 = vmatprep.subr.bf16.mxu0 %v3683
        %4498 = vmatpush1.bf16.msra.mxu0 %v3682
        %4499 = vmatprep.subr.bf16.mxu0 %v3690
        %4500 = vmatpush1.bf16.msra.mxu0 %v3689
        %4501 = vmatprep.subr.bf16.mxu0 %v3697
        %4502 = vmatpush1.bf16.msra.mxu0 %v3696
        %4503 = vmatprep.subr.bf16.mxu0 %v3704
        %4504 = vmatpush1.bf16.msra.mxu0 %v3703
        %4505 = vmatprep.subr.bf16.mxu0 %v3711
        %4506 = vmatpush1.bf16.msra.mxu0 %v3710
        %4507 = vmatprep.subr.bf16.mxu0 %v3718
        %4508 = vmatpush1.bf16.msra.mxu0 %v3717
        %4509 = vmatprep.subr.bf16.mxu0 %v3725
        %4510 = vmatpush1.bf16.msra.mxu0 %v3724
        %4511 = vmatprep.subr.bf16.mxu0 %v3732
        %4512 = vmatpush1.bf16.msra.mxu0 %v3731
        %4513 = vmatprep.subr.bf16.mxu0 %v3739
        %4514 = vmatpush1.bf16.msra.mxu0 %v3738
        %4515 = vmatprep.subr.bf16.mxu0 %v3746
        %4516 = vmatpush1.bf16.msra.mxu0 %v3745
        %4517 = vmatprep.mubr.bf16.mxu0 %v1885
        %4518 = vmatmul.mubr.bf16.gmra.mrb[0].mxu0 %v1883
        %v4519 = vpop.f32.mrb[0].mxu0
        %v4520 = vadd.f32 %v4479, %v4519
        %v4521 = vpop.f32.mrb[0].mxu0
        %v4522 = vadd.f32 %v4481, %v4521
        %v4523 = vpop.f32.mrb[0].mxu0
        %v4524 = vpop.f32.mrb[0].mxu0
        %4525 = vdwg.mxu0
        %4526 = vmatprep.subr.bf16.mxu0 %v3307
        %4527 = vmatpush1.bf16.msra.mxu0 %v3306
        %4528 = vmatprep.subr.bf16.mxu0 %v3314
        %4529 = vmatpush1.bf16.msra.mxu0 %v3313
        %4530 = vmatprep.subr.bf16.mxu0 %v3321
        %4531 = vmatpush1.bf16.msra.mxu0 %v3320
        %4532 = vmatprep.subr.bf16.mxu0 %v3328
        %4533 = vmatpush1.bf16.msra.mxu0 %v3327
        %4534 = vmatprep.subr.bf16.mxu0 %v3335
        %4535 = vmatpush1.bf16.msra.mxu0 %v3334
        %4536 = vmatprep.subr.bf16.mxu0 %v3342
        %4537 = vmatpush1.bf16.msra.mxu0 %v3341
        %4538 = vmatprep.subr.bf16.mxu0 %v3349
        %4539 = vmatpush1.bf16.msra.mxu0 %v3348
        %4540 = vmatprep.subr.bf16.mxu0 %v3356
        %4541 = vmatpush1.bf16.msra.mxu0 %v3355
        %4542 = vmatprep.subr.bf16.mxu0 %v3363
        %4543 = vmatpush1.bf16.msra.mxu0 %v3362
        %4544 = vmatprep.subr.bf16.mxu0 %v3370
        %4545 = vmatpush1.bf16.msra.mxu0 %v3369
        %4546 = vmatprep.subr.bf16.mxu0 %v3377
        %4547 = vmatpush1.bf16.msra.mxu0 %v3376
        %4548 = vmatprep.subr.bf16.mxu0 %v3384
        %4549 = vmatpush1.bf16.msra.mxu0 %v3383
        %4550 = vmatprep.subr.bf16.mxu0 %v3391
        %4551 = vmatpush1.bf16.msra.mxu0 %v3390
        %4552 = vmatprep.subr.bf16.mxu0 %v3398
        %4553 = vmatpush1.bf16.msra.mxu0 %v3397
        %4554 = vmatprep.subr.bf16.mxu0 %v3405
        %4555 = vmatpush1.bf16.msra.mxu0 %v3404
        %4556 = vmatprep.subr.bf16.mxu0 %v3412
        %4557 = vmatpush1.bf16.msra.mxu0 %v3411
        %4558 = vmatprep.mubr.bf16.mxu0 %v1874
        %4559 = vmatmul.mubr.bf16.gmra.mrb[0].mxu0 %v1860
        %v4560 = vpop.f32.mrb[0].mxu0
        %v4561 = vadd.f32 %v1820, %v4560
        %v4562 = vpop.f32.mrb[0].mxu0
        %v4563 = vadd.f32 %v1824, %v4562
        %v4564 = vpop.f32.mrb[0].mxu0
        %v4565 = vpop.f32.mrb[0].mxu0
        %4566 = vdwg.mxu0
        %4567 = vmatprep.subr.bf16.mxu0 %v3419
        %4568 = vmatpush1.bf16.msra.mxu0 %v3418
        %4569 = vmatprep.subr.bf16.mxu0 %v3426
        %4570 = vmatpush1.bf16.msra.mxu0 %v3425
        %4571 = vmatprep.subr.bf16.mxu0 %v3433
        %4572 = vmatpush1.bf16.msra.mxu0 %v3432
        %4573 = vmatprep.subr.bf16.mxu0 %v3440
        %4574 = vmatpush1.bf16.msra.mxu0 %v3439
        %4575 = vmatprep.subr.bf16.mxu0 %v3447
        %4576 = vmatpush1.bf16.msra.mxu0 %v3446
        %4577 = vmatprep.subr.bf16.mxu0 %v3454
        %4578 = vmatpush1.bf16.msra.mxu0 %v3453
        %4579 = vmatprep.subr.bf16.mxu0 %v3461
        %4580 = vmatpush1.bf16.msra.mxu0 %v3460
        %4581 = vmatprep.subr.bf16.mxu0 %v3468
        %4582 = vmatpush1.bf16.msra.mxu0 %v3467
        %4583 = vmatprep.subr.bf16.mxu0 %v3475
        %4584 = vmatpush1.bf16.msra.mxu0 %v3474
        %4585 = vmatprep.subr.bf16.mxu0 %v3482
        %4586 = vmatpush1.bf16.msra.mxu0 %v3481
        %4587 = vmatprep.subr.bf16.mxu0 %v3489
        %4588 = vmatpush1.bf16.msra.mxu0 %v3488
        %4589 = vmatprep.subr.bf16.mxu0 %v3496
        %4590 = vmatpush1.bf16.msra.mxu0 %v3495
        %4591 = vmatprep.subr.bf16.mxu0 %v3503
        %4592 = vmatpush1.bf16.msra.mxu0 %v3502
        %4593 = vmatprep.subr.bf16.mxu0 %v3510
        %4594 = vmatpush1.bf16.msra.mxu0 %v3509
        %4595 = vmatprep.subr.bf16.mxu0 %v3517
        %4596 = vmatpush1.bf16.msra.mxu0 %v3516
        %4597 = vmatprep.subr.bf16.mxu0 %v3524
        %4598 = vmatpush1.bf16.msra.mxu0 %v3523
        %4599 = vmatprep.mubr.bf16.mxu0 %v1884
        %4600 = vmatmul.mubr.bf16.gmra.mrb[0].mxu0 %v1882
        %v4601 = vpop.f32.mrb[0].mxu0
        %v4602 = vadd.f32 %v4561, %v4601
        %v4603 = vpop.f32.mrb[0].mxu0
        %v4604 = vadd.f32 %v4563, %v4603
        %v4605 = vpop.f32.mrb[0].mxu0
        %v4606 = vpop.f32.mrb[0].mxu0
        %4607 = vdwg.mxu0
        %4608 = vmatprep.subr.bf16.mxu0 %v3531
        %4609 = vmatpush1.bf16.msra.mxu0 %v3530
        %4610 = vmatprep.subr.bf16.mxu0 %v3538
        %4611 = vmatpush1.bf16.msra.mxu0 %v3537
        %4612 = vmatprep.subr.bf16.mxu0 %v3545
        %4613 = vmatpush1.bf16.msra.mxu0 %v3544
        %4614 = vmatprep.subr.bf16.mxu0 %v3552
        %4615 = vmatpush1.bf16.msra.mxu0 %v3551
        %4616 = vmatprep.subr.bf16.mxu0 %v3559
        %4617 = vmatpush1.bf16.msra.mxu0 %v3558
        %4618 = vmatprep.subr.bf16.mxu0 %v3566
        %4619 = vmatpush1.bf16.msra.mxu0 %v3565
        %4620 = vmatprep.subr.bf16.mxu0 %v3573
        %4621 = vmatpush1.bf16.msra.mxu0 %v3572
        %4622 = vmatprep.subr.bf16.mxu0 %v3580
        %4623 = vmatpush1.bf16.msra.mxu0 %v3579
        %4624 = vmatprep.subr.bf16.mxu0 %v3587
        %4625 = vmatpush1.bf16.msra.mxu0 %v3586
        %4626 = vmatprep.subr.bf16.mxu0 %v3594
        %4627 = vmatpush1.bf16.msra.mxu0 %v3593
        %4628 = vmatprep.subr.bf16.mxu0 %v3601
        %4629 = vmatpush1.bf16.msra.mxu0 %v3600
        %4630 = vmatprep.subr.bf16.mxu0 %v3608
        %4631 = vmatpush1.bf16.msra.mxu0 %v3607
        %4632 = vmatprep.subr.bf16.mxu0 %v3615
        %4633 = vmatpush1.bf16.msra.mxu0 %v3614
        %4634 = vmatprep.subr.bf16.mxu0 %v3622
        %4635 = vmatpush1.bf16.msra.mxu0 %v3621
        %4636 = vmatprep.subr.bf16.mxu0 %v3629
        %4637 = vmatpush1.bf16.msra.mxu0 %v3628
        %4638 = vmatprep.subr.bf16.mxu0 %v3636
        %4639 = vmatpush1.bf16.msra.mxu0 %v3635
        %4640 = vmatprep.mubr.bf16.mxu0 %v1881
        %4641 = vmatmul.mubr.bf16.gmra.mrb[0].mxu0 %v1867
        %v4642 = vpop.f32.mrb[0].mxu0
        %v4643 = vadd.f32 %v4602, %v4642
        %v4644 = vpop.f32.mrb[0].mxu0
        %v4645 = vadd.f32 %v4604, %v4644
        %v4646 = vpop.f32.mrb[0].mxu0
        %v4647 = vpop.f32.mrb[0].mxu0
        %4648 = vdwg.mxu0
        %4649 = vmatprep.subr.bf16.mxu0 %v3643
        %4650 = vmatpush1.bf16.msra.mxu0 %v3642
        %4651 = vmatprep.subr.bf16.mxu0 %v3650
        %4652 = vmatpush1.bf16.msra.mxu0 %v3649
        %4653 = vmatprep.subr.bf16.mxu0 %v3657
        %4654 = vmatpush1.bf16.msra.mxu0 %v3656
        %4655 = vmatprep.subr.bf16.mxu0 %v3664
        %4656 = vmatpush1.bf16.msra.mxu0 %v3663
        %4657 = vmatprep.subr.bf16.mxu0 %v3671
        %4658 = vmatpush1.bf16.msra.mxu0 %v3670
        %4659 = vmatprep.subr.bf16.mxu0 %v3678
        %4660 = vmatpush1.bf16.msra.mxu0 %v3677
        %4661 = vmatprep.subr.bf16.mxu0 %v3685
        %4662 = vmatpush1.bf16.msra.mxu0 %v3684
        %4663 = vmatprep.subr.bf16.mxu0 %v3692
        %4664 = vmatpush1.bf16.msra.mxu0 %v3691
        %4665 = vmatprep.subr.bf16.mxu0 %v3699
        %4666 = vmatpush1.bf16.msra.mxu0 %v3698
        %4667 = vmatprep.subr.bf16.mxu0 %v3706
        %4668 = vmatpush1.bf16.msra.mxu0 %v3705
        %4669 = vmatprep.subr.bf16.mxu0 %v3713
        %4670 = vmatpush1.bf16.msra.mxu0 %v3712
        %4671 = vmatprep.subr.bf16.mxu0 %v3720
        %4672 = vmatpush1.bf16.msra.mxu0 %v3719
        %4673 = vmatprep.subr.bf16.mxu0 %v3727
        %4674 = vmatpush1.bf16.msra.mxu0 %v3726
        %4675 = vmatprep.subr.bf16.mxu0 %v3734
        %4676 = vmatpush1.bf16.msra.mxu0 %v3733
        %4677 = vmatprep.subr.bf16.mxu0 %v3741
        %4678 = vmatpush1.bf16.msra.mxu0 %v3740
        %4679 = vmatprep.subr.bf16.mxu0 %v3748
        %4680 = vmatpush1.bf16.msra.mxu0 %v3747
        %4681 = vmatprep.mubr.bf16.mxu0 %v1885
        %4682 = vmatmul.mubr.bf16.gmra.mrb[0].mxu0 %v1883
        %v4683 = vpop.f32.mrb[0].mxu0
        %v4684 = vadd.f32 %v4643, %v4683
        %v4685 = vpop.f32.mrb[0].mxu0
        %v4686 = vadd.f32 %v4645, %v4685
        %v4687 = vpop.f32.mrb[0].mxu0
        %v4688 = vpop.f32.mrb[0].mxu0
        %4689 = vdwg.mxu0
        %4690 = vmatprep.subr.bf16.mxu0 0
        %4691 = vmatpush1.bf16.msra.mxu0 %v3308
        %4692 = vmatprep.subr.bf16.mxu0 0
        %4693 = vmatpush1.bf16.msra.mxu0 %v3315
        %4694 = vmatprep.subr.bf16.mxu0 0
        %4695 = vmatpush1.bf16.msra.mxu0 %v3322
        %4696 = vmatprep.subr.bf16.mxu0 0
        %4697 = vmatpush1.bf16.msra.mxu0 %v3329
        %4698 = vmatprep.subr.bf16.mxu0 0
        %4699 = vmatpush1.bf16.msra.mxu0 %v3336
        %4700 = vmatprep.subr.bf16.mxu0 0
        %4701 = vmatpush1.bf16.msra.mxu0 %v3343
        %4702 = vmatprep.subr.bf16.mxu0 0
        %4703 = vmatpush1.bf16.msra.mxu0 %v3350
        %4704 = vmatprep.subr.bf16.mxu0 0
        %4705 = vmatpush1.bf16.msra.mxu0 %v3357
        %4706 = vmatprep.subr.bf16.mxu0 0
        %4707 = vmatpush1.bf16.msra.mxu0 %v3364
        %4708 = vmatprep.subr.bf16.mxu0 0
        %4709 = vmatpush1.bf16.msra.mxu0 %v3371
        %4710 = vmatprep.subr.bf16.mxu0 0
        %4711 = vmatpush1.bf16.msra.mxu0 %v3378
        %4712 = vmatprep.subr.bf16.mxu0 0
        %4713 = vmatpush1.bf16.msra.mxu0 %v3385
        %4714 = vmatprep.subr.bf16.mxu0 0
        %4715 = vmatpush1.bf16.msra.mxu0 %v3392
        %4716 = vmatprep.subr.bf16.mxu0 0
        %4717 = vmatpush1.bf16.msra.mxu0 %v3399
        %4718 = vmatprep.subr.bf16.mxu0 0
        %4719 = vmatpush1.bf16.msra.mxu0 %v3406
        %4720 = vmatprep.subr.bf16.mxu0 0
        %4721 = vmatpush1.bf16.msra.mxu0 %v3413
        %4722 = vmatprep.mubr.bf16.mxu0 %v1874
        %4723 = vmatmul.mubr.bf16.gmra.mrb[0].mxu0 %v1860
        %v4724 = vpop.f32.mrb[0].mxu0
        %v4725 = vadd.f32 %v1828, %v4724
        %v4726 = vpop.f32.mrb[0].mxu0
        %v4727 = vpop.f32.mrb[0].mxu0
        %v4728 = vpop.f32.mrb[0].mxu0
        %4729 = vdwg.mxu0
        %4730 = vmatprep.subr.bf16.mxu0 0
        %4731 = vmatpush1.bf16.msra.mxu0 %v3420
        %4732 = vmatprep.subr.bf16.mxu0 0
        %4733 = vmatpush1.bf16.msra.mxu0 %v3427
        %4734 = vmatprep.subr.bf16.mxu0 0
        %4735 = vmatpush1.bf16.msra.mxu0 %v3434
        %4736 = vmatprep.subr.bf16.mxu0 0
        %4737 = vmatpush1.bf16.msra.mxu0 %v3441
        %4738 = vmatprep.subr.bf16.mxu0 0
        %4739 = vmatpush1.bf16.msra.mxu0 %v3448
        %4740 = vmatprep.subr.bf16.mxu0 0
        %4741 = vmatpush1.bf16.msra.mxu0 %v3455
        %4742 = vmatprep.subr.bf16.mxu0 0
        %4743 = vmatpush1.bf16.msra.mxu0 %v3462
        %4744 = vmatprep.subr.bf16.mxu0 0
        %4745 = vmatpush1.bf16.msra.mxu0 %v3469
        %4746 = vmatprep.subr.bf16.mxu0 0
        %4747 = vmatpush1.bf16.msra.mxu0 %v3476
        %4748 = vmatprep.subr.bf16.mxu0 0
        %4749 = vmatpush1.bf16.msra.mxu0 %v3483
        %4750 = vmatprep.subr.bf16.mxu0 0
        %4751 = vmatpush1.bf16.msra.mxu0 %v3490
        %4752 = vmatprep.subr.bf16.mxu0 0
        %4753 = vmatpush1.bf16.msra.mxu0 %v3497
        %4754 = vmatprep.subr.bf16.mxu0 0
        %4755 = vmatpush1.bf16.msra.mxu0 %v3504
        %4756 = vmatprep.subr.bf16.mxu0 0
        %4757 = vmatpush1.bf16.msra.mxu0 %v3511
        %4758 = vmatprep.subr.bf16.mxu0 0
        %4759 = vmatpush1.bf16.msra.mxu0 %v3518
        %4760 = vmatprep.subr.bf16.mxu0 0
        %4761 = vmatpush1.bf16.msra.mxu0 %v3525
        %4762 = vmatprep.mubr.bf16.mxu0 %v1884
        %4763 = vmatmul.mubr.bf16.gmra.mrb[0].mxu0 %v1882
        %v4764 = vpop.f32.mrb[0].mxu0
        %v4765 = vadd.f32 %v4725, %v4764
        %v4766 = vpop.f32.mrb[0].mxu0
        %v4767 = vpop.f32.mrb[0].mxu0
        %v4768 = vpop.f32.mrb[0].mxu0
        %4769 = vdwg.mxu0
        %4770 = vmatprep.subr.bf16.mxu0 0
        %4771 = vmatpush1.bf16.msra.mxu0 %v3532
        %4772 = vmatprep.subr.bf16.mxu0 0
        %4773 = vmatpush1.bf16.msra.mxu0 %v3539
        %4774 = vmatprep.subr.bf16.mxu0 0
        %4775 = vmatpush1.bf16.msra.mxu0 %v3546
        %4776 = vmatprep.subr.bf16.mxu0 0
        %4777 = vmatpush1.bf16.msra.mxu0 %v3553
        %4778 = vmatprep.subr.bf16.mxu0 0
        %4779 = vmatpush1.bf16.msra.mxu0 %v3560
        %4780 = vmatprep.subr.bf16.mxu0 0
        %4781 = vmatpush1.bf16.msra.mxu0 %v3567
        %4782 = vmatprep.subr.bf16.mxu0 0
        %4783 = vmatpush1.bf16.msra.mxu0 %v3574
        %4784 = vmatprep.subr.bf16.mxu0 0
        %4785 = vmatpush1.bf16.msra.mxu0 %v3581
        %4786 = vmatprep.subr.bf16.mxu0 0
        %4787 = vmatpush1.bf16.msra.mxu0 %v3588
        %4788 = vmatprep.subr.bf16.mxu0 0
        %4789 = vmatpush1.bf16.msra.mxu0 %v3595
        %4790 = vmatprep.subr.bf16.mxu0 0
        %4791 = vmatpush1.bf16.msra.mxu0 %v3602
        %4792 = vmatprep.subr.bf16.mxu0 0
        %4793 = vmatpush1.bf16.msra.mxu0 %v3609
        %4794 = vmatprep.subr.bf16.mxu0 0
        %4795 = vmatpush1.bf16.msra.mxu0 %v3616
        %4796 = vmatprep.subr.bf16.mxu0 0
        %4797 = vmatpush1.bf16.msra.mxu0 %v3623
        %4798 = vmatprep.subr.bf16.mxu0 0
        %4799 = vmatpush1.bf16.msra.mxu0 %v3630
        %4800 = vmatprep.subr.bf16.mxu0 0
        %4801 = vmatpush1.bf16.msra.mxu0 %v3637
        %4802 = vmatprep.mubr.bf16.mxu0 %v1881
        %4803 = vmatmul.mubr.bf16.gmra.mrb[0].mxu0 %v1867
        %v4804 = vpop.f32.mrb[0].mxu0
        %v4805 = vadd.f32 %v4765, %v4804
        %v4806 = vpop.f32.mrb[0].mxu0
        %v4807 = vpop.f32.mrb[0].mxu0
        %v4808 = vpop.f32.mrb[0].mxu0
        %4809 = vdwg.mxu0
        %4810 = vmatprep.subr.bf16.mxu0 0
        %4811 = vmatpush1.bf16.msra.mxu0 %v3644
        %4812 = vmatprep.subr.bf16.mxu0 0
        %4813 = vmatpush1.bf16.msra.mxu0 %v3651
        %4814 = vmatprep.subr.bf16.mxu0 0
        %4815 = vmatpush1.bf16.msra.mxu0 %v3658
        %4816 = vmatprep.subr.bf16.mxu0 0
        %4817 = vmatpush1.bf16.msra.mxu0 %v3665
        %4818 = vmatprep.subr.bf16.mxu0 0
        %4819 = vmatpush1.bf16.msra.mxu0 %v3672
        %4820 = vmatprep.subr.bf16.mxu0 0
        %4821 = vmatpush1.bf16.msra.mxu0 %v3679
        %4822 = vmatprep.subr.bf16.mxu0 0
        %4823 = vmatpush1.bf16.msra.mxu0 %v3686
        %4824 = vmatprep.subr.bf16.mxu0 0
        %4825 = vmatpush1.bf16.msra.mxu0 %v3693
        %4826 = vmatprep.subr.bf16.mxu0 0
        %4827 = vmatpush1.bf16.msra.mxu0 %v3700
        %4828 = vmatprep.subr.bf16.mxu0 0
        %4829 = vmatpush1.bf16.msra.mxu0 %v3707
        %4830 = vmatprep.subr.bf16.mxu0 0
        %4831 = vmatpush1.bf16.msra.mxu0 %v3714
        %4832 = vmatprep.subr.bf16.mxu0 0
        %4833 = vmatpush1.bf16.msra.mxu0 %v3721
        %4834 = vmatprep.subr.bf16.mxu0 0
        %4835 = vmatpush1.bf16.msra.mxu0 %v3728
        %4836 = vmatprep.subr.bf16.mxu0 0
        %4837 = vmatpush1.bf16.msra.mxu0 %v3735
        %4838 = vmatprep.subr.bf16.mxu0 0
        %4839 = vmatpush1.bf16.msra.mxu0 %v3742
        %4840 = vmatprep.subr.bf16.mxu0 0
        %4841 = vmatpush1.bf16.msra.mxu0 %v3749
        %4842 = vmatprep.mubr.bf16.mxu0 %v1885
        %4843 = vmatmul.mubr.bf16.gmra.mrb[0].mxu0 %v1883
        %v4844 = vpop.f32.mrb[0].mxu0
        %v4845 = vadd.f32 %v4805, %v4844
        %v4846 = vpop.f32.mrb[0].mxu0
        %v4847 = vpop.f32.mrb[0].mxu0
        %v4848 = vpop.f32.mrb[0].mxu0
        %4849 = vdwg.mxu0
        %vm4850 = vcmask 1041408
        %v4851 = vsel %vm4850, %v4356, 0.0
        %v4852 = vrot.slane %v4851, 4
        %v4853 = vadd.f32 %v4851, %v4852
        %v4854 = vrot.slane %v4853, 2
        %v4855 = vadd.f32 %v4853, %v4854
        %v4856 = vrot.slane %v4855, 1
        %v4857 = vadd.f32 %v4855, %v4856
        %v4858 = vsel %vm4850, %v4358, 0.0
        %v4859 = vrot.slane %v4858, 4
        %v4860 = vadd.f32 %v4858, %v4859
        %v4861 = vrot.slane %v4860, 2
        %v4862 = vadd.f32 %v4860, %v4861
        %v4863 = vrot.slane %v4862, 1
        %v4864 = vadd.f32 %v4862, %v4863
        %v4865 = vsel %vm4850, %v4520, 0.0
        %v4866 = vrot.slane %v4865, 4
        %v4867 = vadd.f32 %v4865, %v4866
        %v4868 = vrot.slane %v4867, 2
        %v4869 = vadd.f32 %v4867, %v4868
        %v4870 = vrot.slane %v4869, 1
        %v4871 = vadd.f32 %v4869, %v4870
        %v4872 = vsel %vm4850, %v4522, 0.0
        %v4873 = vrot.slane %v4872, 4
        %v4874 = vadd.f32 %v4872, %v4873
        %v4875 = vrot.slane %v4874, 2
        %v4876 = vadd.f32 %v4874, %v4875
        %v4877 = vrot.slane %v4876, 1
        %v4878 = vadd.f32 %v4876, %v4877
        %v4879 = vsel %vm4850, %v4684, 0.0
        %v4880 = vrot.slane %v4879, 4
        %v4881 = vadd.f32 %v4879, %v4880
        %v4882 = vrot.slane %v4881, 2
        %v4883 = vadd.f32 %v4881, %v4882
        %v4884 = vrot.slane %v4883, 1
        %v4885 = vadd.f32 %v4883, %v4884
        %v4886 = vsel %vm4850, %v4686, 0.0
        %v4887 = vrot.slane %v4886, 4
        %v4888 = vadd.f32 %v4886, %v4887
        %v4889 = vrot.slane %v4888, 2
        %v4890 = vadd.f32 %v4888, %v4889
        %v4891 = vrot.slane %v4890, 1
        %v4892 = vadd.f32 %v4890, %v4891
        %v4893 = vsel %vm4850, %v4845, 0.0
        %v4894 = vrot.slane %v4893, 4
        %v4895 = vadd.f32 %v4893, %v4894
        %v4896 = vrot.slane %v4895, 2
        %v4897 = vadd.f32 %v4895, %v4896
        %v4898 = vrot.slane %v4897, 1
        %v4899 = vadd.f32 %v4897, %v4898
        %v4900 = vrcp.pop 2.0
        %v4901 = vmul.f32 %v4857, %v4900
        %v4902 = vmul.f32 %v4864, %v4900
        %v4903 = vmul.f32 %v4871, %v4900
        %v4904 = vmul.f32 %v4878, %v4900
        %v4905 = vmul.f32 %v4885, %v4900
        %v4906 = vmul.f32 %v4892, %v4900
        %v4907 = vmul.f32 %v4899, %v4900
        %v4908 = vsub.f32 %v4356, %v4901
        %v4909 = vsub.f32 %v4358, %v4902
        %v4910 = vsub.f32 %v4520, %v4903
        %v4911 = vsub.f32 %v4522, %v4904
        %v4912 = vsub.f32 %v4684, %v4905
        %v4913 = vsub.f32 %v4686, %v4906
        %v4914 = vsub.f32 %v4845, %v4907
        %v4915 = vmul.f32 %v4908, %v4908
        %v4916 = vmul.f32 %v4909, %v4909
        %v4917 = vmul.f32 %v4910, %v4910
        %v4918 = vmul.f32 %v4911, %v4911
        %v4919 = vmul.f32 %v4912, %v4912
        %v4920 = vmul.f32 %v4913, %v4913
        %v4921 = vmul.f32 %v4914, %v4914
        %v4922 = vsel %vm4850, %v4915, 0.0
        %v4923 = vrot.slane %v4922, 4
        %v4924 = vadd.f32 %v4922, %v4923
        %v4925 = vrot.slane %v4924, 2
        %v4926 = vadd.f32 %v4924, %v4925
        %v4927 = vrot.slane %v4926, 1
        %v4928 = vadd.f32 %v4926, %v4927
        %v4929 = vsel %vm4850, %v4916, 0.0
        %v4930 = vrot.slane %v4929, 4
        %v4931 = vadd.f32 %v4929, %v4930
        %v4932 = vrot.slane %v4931, 2
        %v4933 = vadd.f32 %v4931, %v4932
        %v4934 = vrot.slane %v4933, 1
        %v4935 = vadd.f32 %v4933, %v4934
        %v4936 = vsel %vm4850, %v4917, 0.0
        %v4937 = vrot.slane %v4936, 4
        %v4938 = vadd.f32 %v4936, %v4937
        %v4939 = vrot.slane %v4938, 2
        %v4940 = vadd.f32 %v4938, %v4939
        %v4941 = vrot.slane %v4940, 1
        %v4942 = vadd.f32 %v4940, %v4941
        %v4943 = vsel %vm4850, %v4918, 0.0
        %v4944 = vrot.slane %v4943, 4
        %v4945 = vadd.f32 %v4943, %v4944
        %v4946 = vrot.slane %v4945, 2
        %v4947 = vadd.f32 %v4945, %v4946
        %v4948 = vrot.slane %v4947, 1
        %v4949 = vadd.f32 %v4947, %v4948
        %v4950 = vsel %vm4850, %v4919, 0.0
        %v4951 = vrot.slane %v4950, 4
        %v4952 = vadd.f32 %v4950, %v4951
        %v4953 = vrot.slane %v4952, 2
        %v4954 = vadd.f32 %v4952, %v4953
        %v4955 = vrot.slane %v4954, 1
        %v4956 = vadd.f32 %v4954, %v4955
        %v4957 = vsel %vm4850, %v4920, 0.0
        %v4958 = vrot.slane %v4957, 4
        %v4959 = vadd.f32 %v4957, %v4958
        %v4960 = vrot.slane %v4959, 2
        %v4961 = vadd.f32 %v4959, %v4960
        %v4962 = vrot.slane %v4961, 1
        %v4963 = vadd.f32 %v4961, %v4962
        %v4964 = vsel %vm4850, %v4921, 0.0
        %v4965 = vrot.slane %v4964, 4
        %v4966 = vadd.f32 %v4964, %v4965
        %v4967 = vrot.slane %v4966, 2
        %v4968 = vadd.f32 %v4966, %v4967
        %v4969 = vrot.slane %v4968, 1
        %v4970 = vadd.f32 %v4968, %v4969
        %v4971 = vmul.f32 %v4928, %v4900
        %v4972 = vmul.f32 %v4935, %v4900
        %v4973 = vmul.f32 %v4942, %v4900
        %v4974 = vmul.f32 %v4949, %v4900
        %v4975 = vmul.f32 %v4956, %v4900
        %v4976 = vmul.f32 %v4963, %v4900
        %v4977 = vmul.f32 %v4970, %v4900
        %v4978 = vadd.f32 %v4971, 1e-05
        %v4979 = vadd.f32 %v4972, 1e-05
        %v4980 = vadd.f32 %v4973, 1e-05
        %v4981 = vadd.f32 %v4974, 1e-05
        %v4982 = vadd.f32 %v4975, 1e-05
        %v4983 = vadd.f32 %v4976, 1e-05
        %v4984 = vadd.f32 %v4977, 1e-05
        %v4985 = vrsqrt.pop %v4978
        %v4986 = vrsqrt.pop %v4979
        %v4987 = vrsqrt.pop %v4980
        %v4988 = vrsqrt.pop %v4981
        %v4989 = vrsqrt.pop %v4982
        %v4990 = vrsqrt.pop %v4983
        %v4991 = vrsqrt.pop %v4984
        %v4992 = vmul.f32 %v4908, %v4985
        %v4993 = vmul.f32 %v4909, %v4986
        %v4994 = vmul.f32 %v4910, %v4987
        %v4995 = vmul.f32 %v4911, %v4988
        %v4996 = vmul.f32 %v4912, %v4989
        %v4997 = vmul.f32 %v4913, %v4990
        %v4998 = vmul.f32 %v4914, %v4991
        %s4999 = scalar_lea.vmem %s1273, 1
        %v5000 = vld [vmem:[%s4999] ss:$4 sm:$0xff]
        %v5002 = vlaneseq
        %v5003 = vshrl.u32 %v5002, 7
        %v5004 = vsub.s32 0, %v5003
        %v5005 = vrot.slane %v5000, %v5004
        %v5006 = vlaneseq
        %v5007 = vshrl.u32 %v5006, 7
        %v5008 = vsub.s32 1, %v5007
        %v5009 = vrot.slane %v5000, %v5008
        %v5010 = vlaneseq
        %v5011 = vshrl.u32 %v5010, 7
        %v5012 = vsub.s32 2, %v5011
        %v5013 = vrot.slane %v5000, %v5012
        %v5014 = vlaneseq
        %v5015 = vshrl.u32 %v5014, 7
        %v5016 = vsub.s32 3, %v5015
        %v5017 = vrot.slane %v5000, %v5016
        %v5018 = vlaneseq
        %v5019 = vshrl.u32 %v5018, 7
        %v5020 = vsub.s32 4, %v5019
        %v5021 = vrot.slane %v5000, %v5020
        %v5022 = vlaneseq
        %v5023 = vshrl.u32 %v5022, 7
        %v5024 = vsub.s32 5, %v5023
        %v5025 = vrot.slane %v5000, %v5024
        %v5026 = vlaneseq
        %v5027 = vshrl.u32 %v5026, 7
        %v5028 = vsub.s32 6, %v5027
        %v5029 = vrot.slane %v5000, %v5028
        %v5037 = vmul.f32 %v4992, %v5005
        %v5038 = vmul.f32 %v4993, %v5009
        %v5039 = vmul.f32 %v4994, %v5013
        %v5040 = vmul.f32 %v4995, %v5017
        %v5041 = vmul.f32 %v4996, %v5021
        %v5042 = vmul.f32 %v4997, %v5025
        %v5043 = vmul.f32 %v4998, %v5029
        %s5044 = scalar_lea.vmem %s1273, 2
        %v5045 = vld [vmem:[%s5044] ss:$4 sm:$0xff]
        %v5047 = vlaneseq
        %v5048 = vshrl.u32 %v5047, 7
        %v5049 = vsub.s32 0, %v5048
        %v5050 = vrot.slane %v5045, %v5049
        %v5051 = vlaneseq
        %v5052 = vshrl.u32 %v5051, 7
        %v5053 = vsub.s32 1, %v5052
        %v5054 = vrot.slane %v5045, %v5053
        %v5055 = vlaneseq
        %v5056 = vshrl.u32 %v5055, 7
        %v5057 = vsub.s32 2, %v5056
        %v5058 = vrot.slane %v5045, %v5057
        %v5059 = vlaneseq
        %v5060 = vshrl.u32 %v5059, 7
        %v5061 = vsub.s32 3, %v5060
        %v5062 = vrot.slane %v5045, %v5061
        %v5063 = vlaneseq
        %v5064 = vshrl.u32 %v5063, 7
        %v5065 = vsub.s32 4, %v5064
        %v5066 = vrot.slane %v5045, %v5065
        %v5067 = vlaneseq
        %v5068 = vshrl.u32 %v5067, 7
        %v5069 = vsub.s32 5, %v5068
        %v5070 = vrot.slane %v5045, %v5069
        %v5071 = vlaneseq
        %v5072 = vshrl.u32 %v5071, 7
        %v5073 = vsub.s32 6, %v5072
        %v5074 = vrot.slane %v5045, %v5073
        %v5082 = vadd.f32 %v5037, %v5050
        %v5083 = vadd.f32 %v5038, %v5054
        %v5084 = vadd.f32 %v5039, %v5058
        %v5085 = vadd.f32 %v5040, %v5062
        %v5086 = vadd.f32 %v5041, %v5066
        %v5087 = vadd.f32 %v5042, %v5070
        %v5088 = vadd.f32 %v5043, %v5074
        %v5089 = vmax.f32 %v5082, 0.0
        %v5090 = vmax.f32 %v5083, 0.0
        %v5091 = vmax.f32 %v5084, 0.0
        %v5092 = vmax.f32 %v5085, 0.0
        %v5093 = vmax.f32 %v5086, 0.0
        %v5094 = vmax.f32 %v5087, 0.0
        %v5095 = vmax.f32 %v5088, 0.0
        %v5103 = vcombine.low %v5089, %v5090
        %v5104 = vcombine.low %v5091, %v5092
        %v5106 = vunpack.c.l.s4 1983009808
        %v5107 = vunpack.c.0.s8 %v5106
        %v5108 = vlaneseq
        %v5109 = vshrl.u32 %v5108, 7
        %v5110 = vsub.s32 %v5107, %v5109
        %v5111 = vrot.slane %v5103, %v5110
        %v5113 = vunpack.c.l.s4 1983009808
        %v5114 = vunpack.c.0.s8 %v5113
        %v5115 = vlaneseq
        %v5116 = vshrl.u32 %v5115, 7
        %v5117 = vsub.s32 %v5114, %v5116
        %v5118 = vrot.slane %v5104, %v5117
        %v5119 = vcombine.low %v5111, %v5118
        %v5120 = vcombine.low %v5093, %v5094
        %v5122 = vunpack.c.l.s4 1983009808
        %v5123 = vunpack.c.0.s8 %v5122
        %v5124 = vlaneseq
        %v5125 = vshrl.u32 %v5124, 7
        %v5126 = vsub.s32 %v5123, %v5125
        %v5127 = vrot.slane %v5120, %v5126
        %v5129 = vunpack.c.l.s4 1983009808
        %v5130 = vunpack.c.0.s8 %v5129
        %v5131 = vlaneseq
        %v5132 = vshrl.u32 %v5131, 7
        %v5133 = vsub.s32 %v5130, %v5132
        %v5134 = vrot.slane %v5095, %v5133
        %v5135 = vcombine.low %v5127, %v5134
        %5138 = vst [vmem:[%s1283] sm:$0xff] %v5119
        %5139 = vst [vmem:[%s1283 + $0x8] sm:$0x3f] %v5135
        %s5140 = smul.u32 7, %s19
        %p5141 = scmp.lt.s32.totalorder %s18, 0
        %s5142 = scalar_select %p5141, %s18, 0
        %p5143 = scmp.lt.s32.totalorder %s5140, 48
        %s5144 = scalar_select %p5143, %s5140, 48
        %s5145 = smul.addr %s5142, 49
        %s5146 = sadd.s32 %s5144, %s5145
        %s5147 = smul.addr %s5146, 2
        %s5148 = scalar_lea.vmem %s3, %s5147
        // Predicated region
        $region59: #{generator_forward.5} parent=53 // pred_check
          %p5149 = pneg %p124
        $region60: #{generator_forward.5} parent=53 // pred_check_branch
          %5151 = sbr.rel (%p5149) target = $region62
        $region61: #{generator_forward.5} parent=53 // pred_region
          %s5152 = smul.u32 7, %s19
        $region62: #{generator_forward.5} parent=53 // pred_fallthru
          _
      $region54: #{generator_forward.5} parent=5 // pred_fallthru
        _
      %p5153 = scmp.le.s32.totalorder 2, %s9
      // Predicated region
      $region63: #{generator_forward.5} parent=5 // pred_check
        %p5154 = pneg %p5153
      $region64: #{generator_forward.5} parent=5 // pred_check_branch
        %5156 = sbr.rel (%p5154) target = $region66
      $region65: #{generator_forward.5} parent=5 // pred_region
        %s5157 = ssub.s32 %s9, 2
        // Predicated region
        $region67: #{generator_forward.5} parent=65 // pred_check
          %p5158 = pneg %p130
        $region68: #{generator_forward.5} parent=65 // pred_check_branch
          %5160 = sbr.rel (%p5158) target = $region70
        $region69: #{generator_forward.5} parent=65 // pred_region
          %s5161 = smul.u32 7, %s21
          %p5162 = scmp.lt.s32.totalorder %s20, 0
          %s5163 = scalar_select %p5162, %s20, 0
          %p5164 = scmp.lt.s32.totalorder %s5161, 48
          %s5165 = scalar_select %p5164, %s5161, 48
          %s5166 = smul.addr %s5163, 49
          %s5167 = sadd.s32 %s5165, %s5166
          %s5168 = smul.addr %s5167, 2
          %s5169 = scalar_lea.vmem %s3, %s5168
        $region70: #{generator_forward.5} parent=65 // pred_fallthru
          _
      $region66: #{generator_forward.5} parent=5 // pred_fallthru
        _
    $region6: #{generator_forward.5} parent=1 // loop_footer
      %s13 = sadd.s32 1, %s9
    $region7: #{generator_forward.5} parent=1 // loop_footer_branch
      %8 = sbr.rel target = $region3
    $region8: #{generator_forward.5} parent=1 // loop_exit
      _

// kernel: tile.31
$region0: #{tile.31}
  #allocation0 [shape = 's32[1]{0}', space=sflag, size = 0x4, scoped, tag = 'scoped memory for tile.31']
  %s0 = inlined_call_operand.vmem [shape: f32[64], index: 0, kind: input, shape index: {}]
  %s1 = inlined_call_operand.vmem [shape: f32[4,64], index: 1, kind: output, shape index: {}]
  // Predicated region
  $region2: #{tile.31} parent=0 // pred_check
    _
  $region3: #{tile.31} parent=0 // pred_check_branch
    %3 = sbr.rel (0) target = $region5
  $region4: #{tile.31} parent=0 // pred_region
    _
  $region5: #{tile.31} parent=0 // pred_fallthru
    _
  %v4 = vld [vmem:[%s0] ss:$0 sm:$0xff]
  %5 = vst [vmem:[%s1] sm:$0xf] %v4

// kernel: tile.34
$region0: #{tile.34}
  %s0 = inlined_call_operand.vmem [shape: f32[4,64], index: 0, kind: input, shape index: {}]
  %s1 = inlined_call_operand.vmem [shape: f32[1,256], index: 1, kind: output, shape index: {}]
  $region1: #{tile.34} parent=0
    #allocation0 [shape = 'u8[8192]{0}', space=vmem, size = 0x2000, scoped, tag = 'scoped mem for output reshape']
    #allocation1 [shape = 'u8[4096]{0}', space=vmem, size = 0x1000, scoped, tag = 'scoped mem for input reshape']
    %s3 = sshllo.u32 0, 4
    %v4 = vld [vmem:[%s0] sm:%s3]
    %5 = vst [vmem:[#allocation1] sm:%s3] %v4
    %s6 = smov 3
    %v7 = vld [vmem:[#allocation1] ss:$2 sm:%s6]
    %vm8 = vcmask 523264
    %9 = vst.msk [vmem:[#allocation0] ss:$8 sm:$0x3] %vm8, %v7
    %s10 = scalar_lea.vmem [#allocation1], 1
    %s11 = smov 3
    %v12 = vld [vmem:[%s10] ss:$2 sm:%s11]
    %13 = vrot.lane.b32.xlu0 %v12, 64
    %v14 = vpop.permute.xlu0 %13
    %vm15 = vcmask 1048064
    %16 = vst.msk [vmem:[#allocation0] ss:$8 sm:$0x3] %vm15, %v14
    %s18 = sshllo.u32 0, 1
    %v20 = vld [vmem:[#allocation0] sm:%s18]
    %s21 = sshllo.u32 0, 1
    %22 = vst [vmem:[%s1] sm:%s21] %v20
    %s23 = scalar_lea.vmem [#allocation0], 8
    %v24 = vld [vmem:[%s23] sm:%s18]
    %s25 = sshllo.u32 0, 1
    %s26 = scalar_lea.vmem %s1, 1
    %27 = vst [vmem:[%s26] sm:%s25] %v24

// kernel: generator_forward.6
$region0: #{generator_forward.6}
  #allocation0 [shape = 'u32[]', space=smem, size = 0x4, offset = 0x4, fixed_abs, tag = 'smem constant byte address 0x4 - core index']
  #allocation1 [shape = 'u32[144,128]{1,0:T(1,128)}', space=vmem, size = 0x12000, scoped, tag = 'internal scratch']
  %s0 = inlined_call_operand.vmem [shape: bf16[98,1152], index: 0, kind: input, shape index: {}]
  %s1 = inlined_call_operand.vmem [shape: bf16[1152,256], index: 1, kind: input, shape index: {}]
  %s2 = inlined_call_operand.vmem [shape: f32[3,256], index: 2, kind: input, shape index: {}]
  %s3 = inlined_call_operand.vmem [shape: f32[98,256], index: 3, kind: output, shape index: {}]
  %s4 = sld [smem:[#allocation0]]
  $region22: #{generator_forward.6} parent=0
    _
  %s6 = ssub.s32 1, %s4
  %s7 = scalar_select 0, %s6, %s4
  // Predicated region
  $region2: #{generator_forward.6} parent=0 // pred_check
    _
  $region3: #{generator_forward.6} parent=0 // pred_check_branch
    %9 = sbr.rel (0) target = $region5
  $region4: #{generator_forward.6} parent=0 // pred_region
    _
  $region5: #{generator_forward.6} parent=0 // pred_fallthru
    _
  // Predicated region
  $region6: #{generator_forward.6} parent=0 // pred_check
    _
  $region7: #{generator_forward.6} parent=0 // pred_check_branch
    %11 = sbr.rel (0) target = $region9
  $region8: #{generator_forward.6} parent=0 // pred_region
    _
  $region9: #{generator_forward.6} parent=0 // pred_fallthru
    _
  // Predicated region
  $region10: #{generator_forward.6} parent=0 // pred_check
    _
  $region11: #{generator_forward.6} parent=0 // pred_check_branch
    %13 = sbr.rel (0) target = $region13
  $region12: #{generator_forward.6} parent=0 // pred_region
    _
  $region13: #{generator_forward.6} parent=0 // pred_fallthru
    _
  %v15 = vld [vmem:[%s0] sm:$0xff]
  %v16 = vld [vmem:[%s0 + $0x8] sm:$0xff]
  %v17 = vld [vmem:[%s0 + $0x10] sm:$0xff]
  %v18 = vld [vmem:[%s0 + $0x18] sm:$0xff]
  %v19 = vld [vmem:[%s0 + $0x20] sm:$0xf]
  %v20 = vld [vmem:[%s0 + $0x24] sm:$0xff]
  %v21 = vld [vmem:[%s0 + $0x2c] sm:$0xff]
  %v22 = vld [vmem:[%s0 + $0x34] sm:$0xff]
  %v23 = vld [vmem:[%s0 + $0x3c] sm:$0xff]
  %v24 = vld [vmem:[%s0 + $0x44] sm:$0xf]
  %v25 = vld [vmem:[%s0 + $0x48] sm:$0xff]
  %v26 = vld [vmem:[%s0 + $0x50] sm:$0xff]
  %v27 = vld [vmem:[%s0 + $0x58] sm:$0xff]
  %v28 = vld [vmem:[%s0 + $0x60] sm:$0xff]
  %v29 = vld [vmem:[%s0 + $0x68] sm:$0xf]
  %v30 = vld [vmem:[%s0 + $0x6c] sm:$0xff]
  %v31 = vld [vmem:[%s0 + $0x74] sm:$0xff]
  %v32 = vld [vmem:[%s0 + $0x7c] sm:$0xff]
  %v33 = vld [vmem:[%s0 + $0x84] sm:$0xff]
  %v34 = vld [vmem:[%s0 + $0x8c] sm:$0xf]
  %v35 = vld [vmem:[%s0 + $0x90] sm:$0xff]
  %v36 = vld [vmem:[%s0 + $0x98] sm:$0xff]
  %v37 = vld [vmem:[%s0 + $0xa0] sm:$0xff]
  %v38 = vld [vmem:[%s0 + $0xa8] sm:$0xff]
  %v39 = vld [vmem:[%s0 + $0xb0] sm:$0xf]
  %v40 = vld [vmem:[%s0 + $0xb4] sm:$0xff]
  %v41 = vld [vmem:[%s0 + $0xbc] sm:$0xff]
  %v42 = vld [vmem:[%s0 + $0xc4] sm:$0xff]
  %v43 = vld [vmem:[%s0 + $0xcc] sm:$0xff]
  %v44 = vld [vmem:[%s0 + $0xd4] sm:$0xf]
  %v45 = vld [vmem:[%s0 + $0xd8] sm:$0xff]
  %v46 = vld [vmem:[%s0 + $0xe0] sm:$0xff]
  %v47 = vld [vmem:[%s0 + $0xe8] sm:$0xff]
  %v48 = vld [vmem:[%s0 + $0xf0] sm:$0xff]
  %v49 = vld [vmem:[%s0 + $0xf8] sm:$0xf]
  %v50 = vld [vmem:[%s0 + $0xfc] sm:$0xff]
  %v51 = vld [vmem:[%s0 + $0x104] sm:$0xff]
  %v52 = vld [vmem:[%s0 + $0x10c] sm:$0xff]
  %v53 = vld [vmem:[%s0 + $0x114] sm:$0xff]
  %v54 = vld [vmem:[%s0 + $0x11c] sm:$0xf]
  %v55 = vld [vmem:[%s0 + $0x120] sm:$0xff]
  %v56 = vld [vmem:[%s0 + $0x128] sm:$0xff]
  %v57 = vld [vmem:[%s0 + $0x130] sm:$0xff]
  %v58 = vld [vmem:[%s0 + $0x138] sm:$0xff]
  %v59 = vld [vmem:[%s0 + $0x140] sm:$0xf]
  %v60 = vld [vmem:[%s0 + $0x144] sm:$0xff]
  %v61 = vld [vmem:[%s0 + $0x14c] sm:$0xff]
  %v62 = vld [vmem:[%s0 + $0x154] sm:$0xff]
  %v63 = vld [vmem:[%s0 + $0x15c] sm:$0xff]
  %v64 = vld [vmem:[%s0 + $0x164] sm:$0xf]
  %v65 = vld [vmem:[%s0 + $0x168] sm:$0xff]
  %v66 = vld [vmem:[%s0 + $0x170] sm:$0xff]
  %v67 = vld [vmem:[%s0 + $0x178] sm:$0xff]
  %v68 = vld [vmem:[%s0 + $0x180] sm:$0xff]
  %v69 = vld [vmem:[%s0 + $0x188] sm:$0xf]
  %v70 = vld [vmem:[%s0 + $0x18c] sm:$0xff]
  %v71 = vld [vmem:[%s0 + $0x194] sm:$0xff]
  %v72 = vld [vmem:[%s0 + $0x19c] sm:$0xff]
  %v73 = vld [vmem:[%s0 + $0x1a4] sm:$0xff]
  %v74 = vld [vmem:[%s0 + $0x1ac] sm:$0xf]
  %v75 = vld [vmem:[%s0 + $0x1b0] sm:$0x11]
  %v76 = vld [vmem:[%s0 + $0x1b8] sm:$0x11]
  %v77 = vld [vmem:[%s0 + $0x1c0] sm:$0x11]
  %v78 = vld [vmem:[%s0 + $0x1c8] sm:$0x11]
  %v79 = vld [vmem:[%s0 + $0x1d0] sm:$0x1]
  %v80 = vld [vmem:[%s1] sm:$0xff]
  %v81 = vld [vmem:[%s1 + $0x8] sm:$0xff]
  %v82 = vld [vmem:[%s1 + $0x10] sm:$0xff]
  %v83 = vld [vmem:[%s1 + $0x18] sm:$0xff]
  %v84 = vld [vmem:[%s1 + $0x20] sm:$0xff]
  %v85 = vld [vmem:[%s1 + $0x28] sm:$0xff]
  %v86 = vld [vmem:[%s1 + $0x30] sm:$0xff]
  %v87 = vld [vmem:[%s1 + $0x38] sm:$0xff]
  %v88 = vld [vmem:[%s1 + $0x40] sm:$0xff]
  %v89 = vld [vmem:[%s1 + $0x48] sm:$0xff]
  %v90 = vld [vmem:[%s1 + $0x50] sm:$0xff]
  %v91 = vld [vmem:[%s1 + $0x58] sm:$0xff]
  %v92 = vld [vmem:[%s1 + $0x60] sm:$0xff]
  %v93 = vld [vmem:[%s1 + $0x68] sm:$0xff]
  %v94 = vld [vmem:[%s1 + $0x70] sm:$0xff]
  %v95 = vld [vmem:[%s1 + $0x78] sm:$0xff]
  %v96 = vld [vmem:[%s1 + $0x80] sm:$0xff]
  %v97 = vld [vmem:[%s1 + $0x88] sm:$0xff]
  %v98 = vld [vmem:[%s1 + $0x90] sm:$0xff]
  %v99 = vld [vmem:[%s1 + $0x98] sm:$0xff]
  %v100 = vld [vmem:[%s1 + $0xa0] sm:$0xff]
  %v101 = vld [vmem:[%s1 + $0xa8] sm:$0xff]
  %v102 = vld [vmem:[%s1 + $0xb0] sm:$0xff]
  %v103 = vld [vmem:[%s1 + $0xb8] sm:$0xff]
  %v104 = vld [vmem:[%s1 + $0xc0] sm:$0xff]
  %v105 = vld [vmem:[%s1 + $0xc8] sm:$0xff]
  %v106 = vld [vmem:[%s1 + $0xd0] sm:$0xff]
  %v107 = vld [vmem:[%s1 + $0xd8] sm:$0xff]
  %v108 = vld [vmem:[%s1 + $0xe0] sm:$0xff]
  %v109 = vld [vmem:[%s1 + $0xe8] sm:$0xff]
  %v110 = vld [vmem:[%s1 + $0xf0] sm:$0xff]
  %v111 = vld [vmem:[%s1 + $0xf8] sm:$0xff]
  %v112 = vld [vmem:[%s1 + $0x100] sm:$0xff]
  %v113 = vld [vmem:[%s1 + $0x108] sm:$0xff]
  %v114 = vld [vmem:[%s1 + $0x110] sm:$0xff]
  %v115 = vld [vmem:[%s1 + $0x118] sm:$0xff]
  %v116 = vld [vmem:[%s1 + $0x120] sm:$0xff]
  %v117 = vld [vmem:[%s1 + $0x128] sm:$0xff]
  %v118 = vld [vmem:[%s1 + $0x130] sm:$0xff]
  %v119 = vld [vmem:[%s1 + $0x138] sm:$0xff]
  %v120 = vld [vmem:[%s1 + $0x140] sm:$0xff]
  %v121 = vld [vmem:[%s1 + $0x148] sm:$0xff]
  %v122 = vld [vmem:[%s1 + $0x150] sm:$0xff]
  %v123 = vld [vmem:[%s1 + $0x158] sm:$0xff]
  %v124 = vld [vmem:[%s1 + $0x160] sm:$0xff]
  %v125 = vld [vmem:[%s1 + $0x168] sm:$0xff]
  %v126 = vld [vmem:[%s1 + $0x170] sm:$0xff]
  %v127 = vld [vmem:[%s1 + $0x178] sm:$0xff]
  %v128 = vld [vmem:[%s1 + $0x180] sm:$0xff]
  %v129 = vld [vmem:[%s1 + $0x188] sm:$0xff]
  %v130 = vld [vmem:[%s1 + $0x190] sm:$0xff]
  %v131 = vld [vmem:[%s1 + $0x198] sm:$0xff]
  %v132 = vld [vmem:[%s1 + $0x1a0] sm:$0xff]
  %v133 = vld [vmem:[%s1 + $0x1a8] sm:$0xff]
  %v134 = vld [vmem:[%s1 + $0x1b0] sm:$0xff]
  %v135 = vld [vmem:[%s1 + $0x1b8] sm:$0xff]
  %v136 = vld [vmem:[%s1 + $0x1c0] sm:$0xff]
  %v137 = vld [vmem:[%s1 + $0x1c8] sm:$0xff]
  %v138 = vld [vmem:[%s1 + $0x1d0] sm:$0xff]
  %v139 = vld [vmem:[%s1 + $0x1d8] sm:$0xff]
  %v140 = vld [vmem:[%s1 + $0x1e0] sm:$0xff]
  %v141 = vld [vmem:[%s1 + $0x1e8] sm:$0xff]
  %v142 = vld [vmem:[%s1 + $0x1f0] sm:$0xff]
  %v143 = vld [vmem:[%s1 + $0x1f8] sm:$0xff]
  %v144 = vld [vmem:[%s1 + $0x200] sm:$0xff]
  %v145 = vld [vmem:[%s1 + $0x208] sm:$0xff]
  %v146 = vld [vmem:[%s1 + $0x210] sm:$0xff]
  %v147 = vld [vmem:[%s1 + $0x218] sm:$0xff]
  %v148 = vld [vmem:[%s1 + $0x220] sm:$0xff]
  %v149 = vld [vmem:[%s1 + $0x228] sm:$0xff]
  %v150 = vld [vmem:[%s1 + $0x230] sm:$0xff]
  %v151 = vld [vmem:[%s1 + $0x238] sm:$0xff]
  %v152 = vld [vmem:[%s1 + $0x240] sm:$0xff]
  %v153 = vld [vmem:[%s1 + $0x248] sm:$0xff]
  %v154 = vld [vmem:[%s1 + $0x250] sm:$0xff]
  %v155 = vld [vmem:[%s1 + $0x258] sm:$0xff]
  %v156 = vld [vmem:[%s1 + $0x260] sm:$0xff]
  %v157 = vld [vmem:[%s1 + $0x268] sm:$0xff]
  %v158 = vld [vmem:[%s1 + $0x270] sm:$0xff]
  %v159 = vld [vmem:[%s1 + $0x278] sm:$0xff]
  %v160 = vld [vmem:[%s1 + $0x280] sm:$0xff]
  %v161 = vld [vmem:[%s1 + $0x288] sm:$0xff]
  %v162 = vld [vmem:[%s1 + $0x290] sm:$0xff]
  %v163 = vld [vmem:[%s1 + $0x298] sm:$0xff]
  %v164 = vld [vmem:[%s1 + $0x2a0] sm:$0xff]
  %v165 = vld [vmem:[%s1 + $0x2a8] sm:$0xff]
  %v166 = vld [vmem:[%s1 + $0x2b0] sm:$0xff]
  %v167 = vld [vmem:[%s1 + $0x2b8] sm:$0xff]
  %v168 = vld [vmem:[%s1 + $0x2c0] sm:$0xff]
  %v169 = vld [vmem:[%s1 + $0x2c8] sm:$0xff]
  %v170 = vld [vmem:[%s1 + $0x2d0] sm:$0xff]
  %v171 = vld [vmem:[%s1 + $0x2d8] sm:$0xff]
  %v172 = vld [vmem:[%s1 + $0x2e0] sm:$0xff]
  %v173 = vld [vmem:[%s1 + $0x2e8] sm:$0xff]
  %v174 = vld [vmem:[%s1 + $0x2f0] sm:$0xff]
  %v175 = vld [vmem:[%s1 + $0x2f8] sm:$0xff]
  %v176 = vld [vmem:[%s1 + $0x300] sm:$0xff]
  %v177 = vld [vmem:[%s1 + $0x308] sm:$0xff]
  %v178 = vld [vmem:[%s1 + $0x310] sm:$0xff]
  %v179 = vld [vmem:[%s1 + $0x318] sm:$0xff]
  %v180 = vld [vmem:[%s1 + $0x320] sm:$0xff]
  %v181 = vld [vmem:[%s1 + $0x328] sm:$0xff]
  %v182 = vld [vmem:[%s1 + $0x330] sm:$0xff]
  %v183 = vld [vmem:[%s1 + $0x338] sm:$0xff]
  %v184 = vld [vmem:[%s1 + $0x340] sm:$0xff]
  %v185 = vld [vmem:[%s1 + $0x348] sm:$0xff]
  %v186 = vld [vmem:[%s1 + $0x350] sm:$0xff]
  %v187 = vld [vmem:[%s1 + $0x358] sm:$0xff]
  %v188 = vld [vmem:[%s1 + $0x360] sm:$0xff]
  %v189 = vld [vmem:[%s1 + $0x368] sm:$0xff]
  %v190 = vld [vmem:[%s1 + $0x370] sm:$0xff]
  %v191 = vld [vmem:[%s1 + $0x378] sm:$0xff]
  %v192 = vld [vmem:[%s1 + $0x380] sm:$0xff]
  %v193 = vld [vmem:[%s1 + $0x388] sm:$0xff]
  %v194 = vld [vmem:[%s1 + $0x390] sm:$0xff]
  %v195 = vld [vmem:[%s1 + $0x398] sm:$0xff]
  %v196 = vld [vmem:[%s1 + $0x3a0] sm:$0xff]
  %v197 = vld [vmem:[%s1 + $0x3a8] sm:$0xff]
  %v198 = vld [vmem:[%s1 + $0x3b0] sm:$0xff]
  %v199 = vld [vmem:[%s1 + $0x3b8] sm:$0xff]
  %v200 = vld [vmem:[%s1 + $0x3c0] sm:$0xff]
  %v201 = vld [vmem:[%s1 + $0x3c8] sm:$0xff]
  %v202 = vld [vmem:[%s1 + $0x3d0] sm:$0xff]
  %v203 = vld [vmem:[%s1 + $0x3d8] sm:$0xff]
  %v204 = vld [vmem:[%s1 + $0x3e0] sm:$0xff]
  %v205 = vld [vmem:[%s1 + $0x3e8] sm:$0xff]
  %v206 = vld [vmem:[%s1 + $0x3f0] sm:$0xff]
  %v207 = vld [vmem:[%s1 + $0x3f8] sm:$0xff]
  %v208 = vld [vmem:[%s1 + $0x400] sm:$0xff]
  %v209 = vld [vmem:[%s1 + $0x408] sm:$0xff]
  %v210 = vld [vmem:[%s1 + $0x410] sm:$0xff]
  %v211 = vld [vmem:[%s1 + $0x418] sm:$0xff]
  %v212 = vld [vmem:[%s1 + $0x420] sm:$0xff]
  %v213 = vld [vmem:[%s1 + $0x428] sm:$0xff]
  %v214 = vld [vmem:[%s1 + $0x430] sm:$0xff]
  %v215 = vld [vmem:[%s1 + $0x438] sm:$0xff]
  %v216 = vld [vmem:[%s1 + $0x440] sm:$0xff]
  %v217 = vld [vmem:[%s1 + $0x448] sm:$0xff]
  %v218 = vld [vmem:[%s1 + $0x450] sm:$0xff]
  %v219 = vld [vmem:[%s1 + $0x458] sm:$0xff]
  %v220 = vld [vmem:[%s1 + $0x460] sm:$0xff]
  %v221 = vld [vmem:[%s1 + $0x468] sm:$0xff]
  %v222 = vld [vmem:[%s1 + $0x470] sm:$0xff]
  %v223 = vld [vmem:[%s1 + $0x478] sm:$0xff]
  %v224 = vld [vmem:[%s2] ss:$4 sm:$0x3]
  %v226 = vlaneseq
  %v227 = vshrl.u32 %v226, 7
  %v228 = vsub.s32 0, %v227
  %v229 = vrot.slane %v224, %v228
  %v230 = vlaneseq
  %v231 = vshrl.u32 %v230, 7
  %v232 = vsub.s32 1, %v231
  %v233 = vrot.slane %v224, %v232
  %v301 = vunpack.c.l.b16 %v15
  %v302 = vunpack.c.h.b16 %v15
  %v303 = vunpack.c.l.b16 %v16
  %v304 = vunpack.c.h.b16 %v16
  %v305 = vunpack.c.l.b16 %v17
  %v306 = vunpack.c.h.b16 %v17
  %v307 = vunpack.c.l.b16 %v18
  %v308 = vunpack.c.h.b16 %v18
  %v309 = vunpack.c.l.b16 %v19
  %v310 = vunpack.c.l.b16 %v20
  %v311 = vunpack.c.h.b16 %v20
  %v312 = vunpack.c.l.b16 %v21
  %v313 = vunpack.c.h.b16 %v21
  %v314 = vunpack.c.l.b16 %v22
  %v315 = vunpack.c.h.b16 %v22
  %v316 = vunpack.c.l.b16 %v23
  %v317 = vunpack.c.h.b16 %v23
  %v318 = vunpack.c.l.b16 %v24
  %v319 = vunpack.c.l.b16 %v25
  %v320 = vunpack.c.h.b16 %v25
  %v321 = vunpack.c.l.b16 %v26
  %v322 = vunpack.c.h.b16 %v26
  %v323 = vunpack.c.l.b16 %v27
  %v324 = vunpack.c.h.b16 %v27
  %v325 = vunpack.c.l.b16 %v28
  %v326 = vunpack.c.h.b16 %v28
  %v327 = vunpack.c.l.b16 %v29
  %v328 = vunpack.c.l.b16 %v30
  %v329 = vunpack.c.h.b16 %v30
  %v330 = vunpack.c.l.b16 %v31
  %v331 = vunpack.c.h.b16 %v31
  %v332 = vunpack.c.l.b16 %v32
  %v333 = vunpack.c.h.b16 %v32
  %v334 = vunpack.c.l.b16 %v33
  %v335 = vunpack.c.h.b16 %v33
  %v336 = vunpack.c.l.b16 %v34
  %v337 = vunpack.c.l.b16 %v35
  %v338 = vunpack.c.h.b16 %v35
  %v339 = vunpack.c.l.b16 %v36
  %v340 = vunpack.c.h.b16 %v36
  %v341 = vunpack.c.l.b16 %v37
  %v342 = vunpack.c.h.b16 %v37
  %v343 = vunpack.c.l.b16 %v38
  %v344 = vunpack.c.h.b16 %v38
  %v345 = vunpack.c.l.b16 %v39
  %v346 = vunpack.c.l.b16 %v40
  %v347 = vunpack.c.h.b16 %v40
  %v348 = vunpack.c.l.b16 %v41
  %v349 = vunpack.c.h.b16 %v41
  %v350 = vunpack.c.l.b16 %v42
  %v351 = vunpack.c.h.b16 %v42
  %v352 = vunpack.c.l.b16 %v43
  %v353 = vunpack.c.h.b16 %v43
  %v354 = vunpack.c.l.b16 %v44
  %v355 = vunpack.c.l.b16 %v45
  %v356 = vunpack.c.h.b16 %v45
  %v357 = vunpack.c.l.b16 %v46
  %v358 = vunpack.c.h.b16 %v46
  %v359 = vunpack.c.l.b16 %v47
  %v360 = vunpack.c.h.b16 %v47
  %v361 = vunpack.c.l.b16 %v48
  %v362 = vunpack.c.h.b16 %v48
  %v363 = vunpack.c.l.b16 %v49
  %v364 = vunpack.c.l.b16 %v50
  %v365 = vunpack.c.h.b16 %v50
  %v366 = vunpack.c.l.b16 %v51
  %v367 = vunpack.c.h.b16 %v51
  %v368 = vunpack.c.l.b16 %v52
  %v369 = vunpack.c.h.b16 %v52
  %v370 = vunpack.c.l.b16 %v53
  %v371 = vunpack.c.h.b16 %v53
  %v372 = vunpack.c.l.b16 %v54
  %v373 = vunpack.c.l.b16 %v55
  %v374 = vunpack.c.h.b16 %v55
  %v375 = vunpack.c.l.b16 %v56
  %v376 = vunpack.c.h.b16 %v56
  %v377 = vunpack.c.l.b16 %v57
  %v378 = vunpack.c.h.b16 %v57
  %v379 = vunpack.c.l.b16 %v58
  %v380 = vunpack.c.h.b16 %v58
  %v381 = vunpack.c.l.b16 %v59
  %v382 = vunpack.c.l.b16 %v60
  %v383 = vunpack.c.h.b16 %v60
  %v384 = vunpack.c.l.b16 %v61
  %v385 = vunpack.c.h.b16 %v61
  %v386 = vunpack.c.l.b16 %v62
  %v387 = vunpack.c.h.b16 %v62
  %v388 = vunpack.c.l.b16 %v63
  %v389 = vunpack.c.h.b16 %v63
  %v390 = vunpack.c.l.b16 %v64
  %v391 = vunpack.c.l.b16 %v65
  %v392 = vunpack.c.h.b16 %v65
  %v393 = vunpack.c.l.b16 %v66
  %v394 = vunpack.c.h.b16 %v66
  %v395 = vunpack.c.l.b16 %v67
  %v396 = vunpack.c.h.b16 %v67
  %v397 = vunpack.c.l.b16 %v68
  %v398 = vunpack.c.h.b16 %v68
  %v399 = vunpack.c.l.b16 %v69
  %v400 = vunpack.c.l.b16 %v70
  %v401 = vunpack.c.h.b16 %v70
  %v402 = vunpack.c.l.b16 %v71
  %v403 = vunpack.c.h.b16 %v71
  %v404 = vunpack.c.l.b16 %v72
  %v405 = vunpack.c.h.b16 %v72
  %v406 = vunpack.c.l.b16 %v73
  %v407 = vunpack.c.h.b16 %v73
  %v408 = vunpack.c.l.b16 %v74
  %v409 = vunpack.c.l.b16 %v75
  %v410 = vunpack.c.h.b16 %v75
  %v411 = vunpack.c.l.b16 %v76
  %v412 = vunpack.c.h.b16 %v76
  %v413 = vunpack.c.l.b16 %v77
  %v414 = vunpack.c.h.b16 %v77
  %v415 = vunpack.c.l.b16 %v78
  %v416 = vunpack.c.h.b16 %v78
  %v417 = vunpack.c.l.b16 %v79
  %v418 = vpack.c.b16 %v310, %v301
  %v419 = vpack.c.b16 %v311, %v302
  %v420 = vpack.c.b16 %v312, %v303
  %v421 = vpack.c.b16 %v313, %v304
  %v422 = vpack.c.b16 %v314, %v305
  %v423 = vpack.c.b16 %v315, %v306
  %v424 = vpack.c.b16 %v316, %v307
  %v425 = vpack.c.b16 %v317, %v308
  %v426 = vpack.c.b16 %v318, %v309
  %v427 = vpack.c.b16 %v328, %v319
  %v428 = vpack.c.b16 %v329, %v320
  %v429 = vpack.c.b16 %v330, %v321
  %v430 = vpack.c.b16 %v331, %v322
  %v431 = vpack.c.b16 %v332, %v323
  %v432 = vpack.c.b16 %v333, %v324
  %v433 = vpack.c.b16 %v334, %v325
  %v434 = vpack.c.b16 %v335, %v326
  %v435 = vpack.c.b16 %v336, %v327
  %v436 = vpack.c.b16 %v346, %v337
  %v437 = vpack.c.b16 %v347, %v338
  %v438 = vpack.c.b16 %v348, %v339
  %v439 = vpack.c.b16 %v349, %v340
  %v440 = vpack.c.b16 %v350, %v341
  %v441 = vpack.c.b16 %v351, %v342
  %v442 = vpack.c.b16 %v352, %v343
  %v443 = vpack.c.b16 %v353, %v344
  %v444 = vpack.c.b16 %v354, %v345
  %v445 = vpack.c.b16 %v364, %v355
  %v446 = vpack.c.b16 %v365, %v356
  %v447 = vpack.c.b16 %v366, %v357
  %v448 = vpack.c.b16 %v367, %v358
  %v449 = vpack.c.b16 %v368, %v359
  %v450 = vpack.c.b16 %v369, %v360
  %v451 = vpack.c.b16 %v370, %v361
  %v452 = vpack.c.b16 %v371, %v362
  %v453 = vpack.c.b16 %v372, %v363
  %v454 = vpack.c.b16 %v382, %v373
  %v455 = vpack.c.b16 %v383, %v374
  %v456 = vpack.c.b16 %v384, %v375
  %v457 = vpack.c.b16 %v385, %v376
  %v458 = vpack.c.b16 %v386, %v377
  %v459 = vpack.c.b16 %v387, %v378
  %v460 = vpack.c.b16 %v388, %v379
  %v461 = vpack.c.b16 %v389, %v380
  %v462 = vpack.c.b16 %v390, %v381
  %v463 = vpack.c.b16 %v400, %v391
  %v464 = vpack.c.b16 %v401, %v392
  %v465 = vpack.c.b16 %v402, %v393
  %v466 = vpack.c.b16 %v403, %v394
  %v467 = vpack.c.b16 %v404, %v395
  %v468 = vpack.c.b16 %v405, %v396
  %v469 = vpack.c.b16 %v406, %v397
  %v470 = vpack.c.b16 %v407, %v398
  %v471 = vpack.c.b16 %v408, %v399
  %v472 = vpack.c.b16 %v409, %v409
  %v473 = vpack.c.b16 %v410, %v410
  %v474 = vpack.c.b16 %v411, %v411
  %v475 = vpack.c.b16 %v412, %v412
  %v476 = vpack.c.b16 %v413, %v413
  %v477 = vpack.c.b16 %v414, %v414
  %v478 = vpack.c.b16 %v415, %v415
  %v479 = vpack.c.b16 %v416, %v416
  %v480 = vpack.c.b16 %v417, %v417
  %v688 = vunpack.c.l.b16 %v80
  %v689 = vunpack.c.h.b16 %v80
  %v690 = vunpack.c.l.b16 %v81
  %v691 = vunpack.c.h.b16 %v81
  %v692 = vunpack.c.l.b16 %v82
  %v693 = vunpack.c.h.b16 %v82
  %v694 = vunpack.c.l.b16 %v83
  %v695 = vunpack.c.h.b16 %v83
  %v696 = vunpack.c.l.b16 %v84
  %v697 = vunpack.c.h.b16 %v84
  %v698 = vunpack.c.l.b16 %v85
  %v699 = vunpack.c.h.b16 %v85
  %v700 = vunpack.c.l.b16 %v86
  %v701 = vunpack.c.h.b16 %v86
  %v702 = vunpack.c.l.b16 %v87
  %v703 = vunpack.c.h.b16 %v87
  %v704 = vunpack.c.l.b16 %v88
  %v705 = vunpack.c.h.b16 %v88
  %v706 = vunpack.c.l.b16 %v89
  %v707 = vunpack.c.h.b16 %v89
  %v708 = vunpack.c.l.b16 %v90
  %v709 = vunpack.c.h.b16 %v90
  %v710 = vunpack.c.l.b16 %v91
  %v711 = vunpack.c.h.b16 %v91
  %v712 = vunpack.c.l.b16 %v92
  %v713 = vunpack.c.h.b16 %v92
  %v714 = vunpack.c.l.b16 %v93
  %v715 = vunpack.c.h.b16 %v93
  %v716 = vunpack.c.l.b16 %v94
  %v717 = vunpack.c.h.b16 %v94
  %v718 = vunpack.c.l.b16 %v95
  %v719 = vunpack.c.h.b16 %v95
  %v720 = vunpack.c.l.b16 %v96
  %v721 = vunpack.c.h.b16 %v96
  %v722 = vunpack.c.l.b16 %v97
  %v723 = vunpack.c.h.b16 %v97
  %v724 = vunpack.c.l.b16 %v98
  %v725 = vunpack.c.h.b16 %v98
  %v726 = vunpack.c.l.b16 %v99
  %v727 = vunpack.c.h.b16 %v99
  %v728 = vunpack.c.l.b16 %v100
  %v729 = vunpack.c.h.b16 %v100
  %v730 = vunpack.c.l.b16 %v101
  %v731 = vunpack.c.h.b16 %v101
  %v732 = vunpack.c.l.b16 %v102
  %v733 = vunpack.c.h.b16 %v102
  %v734 = vunpack.c.l.b16 %v103
  %v735 = vunpack.c.h.b16 %v103
  %v736 = vunpack.c.l.b16 %v104
  %v737 = vunpack.c.h.b16 %v104
  %v738 = vunpack.c.l.b16 %v105
  %v739 = vunpack.c.h.b16 %v105
  %v740 = vunpack.c.l.b16 %v106
  %v741 = vunpack.c.h.b16 %v106
  %v742 = vunpack.c.l.b16 %v107
  %v743 = vunpack.c.h.b16 %v107
  %v744 = vunpack.c.l.b16 %v108
  %v745 = vunpack.c.h.b16 %v108
  %v746 = vunpack.c.l.b16 %v109
  %v747 = vunpack.c.h.b16 %v109
  %v748 = vunpack.c.l.b16 %v110
  %v749 = vunpack.c.h.b16 %v110
  %v750 = vunpack.c.l.b16 %v111
  %v751 = vunpack.c.h.b16 %v111
  %v752 = vunpack.c.l.b16 %v112
  %v753 = vunpack.c.h.b16 %v112
  %v754 = vunpack.c.l.b16 %v113
  %v755 = vunpack.c.h.b16 %v113
  %v756 = vunpack.c.l.b16 %v114
  %v757 = vunpack.c.h.b16 %v114
  %v758 = vunpack.c.l.b16 %v115
  %v759 = vunpack.c.h.b16 %v115
  %v760 = vunpack.c.l.b16 %v116
  %v761 = vunpack.c.h.b16 %v116
  %v762 = vunpack.c.l.b16 %v117
  %v763 = vunpack.c.h.b16 %v117
  %v764 = vunpack.c.l.b16 %v118
  %v765 = vunpack.c.h.b16 %v118
  %v766 = vunpack.c.l.b16 %v119
  %v767 = vunpack.c.h.b16 %v119
  %v768 = vunpack.c.l.b16 %v120
  %v769 = vunpack.c.h.b16 %v120
  %v770 = vunpack.c.l.b16 %v121
  %v771 = vunpack.c.h.b16 %v121
  %v772 = vunpack.c.l.b16 %v122
  %v773 = vunpack.c.h.b16 %v122
  %v774 = vunpack.c.l.b16 %v123
  %v775 = vunpack.c.h.b16 %v123
  %v776 = vunpack.c.l.b16 %v124
  %v777 = vunpack.c.h.b16 %v124
  %v778 = vunpack.c.l.b16 %v125
  %v779 = vunpack.c.h.b16 %v125
  %v780 = vunpack.c.l.b16 %v126
  %v781 = vunpack.c.h.b16 %v126
  %v782 = vunpack.c.l.b16 %v127
  %v783 = vunpack.c.h.b16 %v127
  %v784 = vunpack.c.l.b16 %v128
  %v785 = vunpack.c.h.b16 %v128
  %v786 = vunpack.c.l.b16 %v129
  %v787 = vunpack.c.h.b16 %v129
  %v788 = vunpack.c.l.b16 %v130
  %v789 = vunpack.c.h.b16 %v130
  %v790 = vunpack.c.l.b16 %v131
  %v791 = vunpack.c.h.b16 %v131
  %v792 = vunpack.c.l.b16 %v132
  %v793 = vunpack.c.h.b16 %v132
  %v794 = vunpack.c.l.b16 %v133
  %v795 = vunpack.c.h.b16 %v133
  %v796 = vunpack.c.l.b16 %v134
  %v797 = vunpack.c.h.b16 %v134
  %v798 = vunpack.c.l.b16 %v135
  %v799 = vunpack.c.h.b16 %v135
  %v800 = vunpack.c.l.b16 %v136
  %v801 = vunpack.c.h.b16 %v136
  %v802 = vunpack.c.l.b16 %v137
  %v803 = vunpack.c.h.b16 %v137
  %v804 = vunpack.c.l.b16 %v138
  %v805 = vunpack.c.h.b16 %v138
  %v806 = vunpack.c.l.b16 %v139
  %v807 = vunpack.c.h.b16 %v139
  %v808 = vunpack.c.l.b16 %v140
  %v809 = vunpack.c.h.b16 %v140
  %v810 = vunpack.c.l.b16 %v141
  %v811 = vunpack.c.h.b16 %v141
  %v812 = vunpack.c.l.b16 %v142
  %v813 = vunpack.c.h.b16 %v142
  %v814 = vunpack.c.l.b16 %v143
  %v815 = vunpack.c.h.b16 %v143
  %v816 = vunpack.c.l.b16 %v144
  %v817 = vunpack.c.h.b16 %v144
  %v818 = vunpack.c.l.b16 %v145
  %v819 = vunpack.c.h.b16 %v145
  %v820 = vunpack.c.l.b16 %v146
  %v821 = vunpack.c.h.b16 %v146
  %v822 = vunpack.c.l.b16 %v147
  %v823 = vunpack.c.h.b16 %v147
  %v824 = vunpack.c.l.b16 %v148
  %v825 = vunpack.c.h.b16 %v148
  %v826 = vunpack.c.l.b16 %v149
  %v827 = vunpack.c.h.b16 %v149
  %v828 = vunpack.c.l.b16 %v150
  %v829 = vunpack.c.h.b16 %v150
  %v830 = vunpack.c.l.b16 %v151
  %v831 = vunpack.c.h.b16 %v151
  %v832 = vunpack.c.l.b16 %v152
  %v833 = vunpack.c.h.b16 %v152
  %v834 = vunpack.c.l.b16 %v153
  %v835 = vunpack.c.h.b16 %v153
  %v836 = vunpack.c.l.b16 %v154
  %v837 = vunpack.c.h.b16 %v154
  %v838 = vunpack.c.l.b16 %v155
  %v839 = vunpack.c.h.b16 %v155
  %v840 = vunpack.c.l.b16 %v156
  %v841 = vunpack.c.h.b16 %v156
  %v842 = vunpack.c.l.b16 %v157
  %v843 = vunpack.c.h.b16 %v157
  %v844 = vunpack.c.l.b16 %v158
  %v845 = vunpack.c.h.b16 %v158
  %v846 = vunpack.c.l.b16 %v159
  %v847 = vunpack.c.h.b16 %v159
  %v848 = vunpack.c.l.b16 %v160
  %v849 = vunpack.c.h.b16 %v160
  %v850 = vunpack.c.l.b16 %v161
  %v851 = vunpack.c.h.b16 %v161
  %v852 = vunpack.c.l.b16 %v162
  %v853 = vunpack.c.h.b16 %v162
  %v854 = vunpack.c.l.b16 %v163
  %v855 = vunpack.c.h.b16 %v163
  %v856 = vunpack.c.l.b16 %v164
  %v857 = vunpack.c.h.b16 %v164
  %v858 = vunpack.c.l.b16 %v165
  %v859 = vunpack.c.h.b16 %v165
  %v860 = vunpack.c.l.b16 %v166
  %v861 = vunpack.c.h.b16 %v166
  %v862 = vunpack.c.l.b16 %v167
  %v863 = vunpack.c.h.b16 %v167
  %v864 = vunpack.c.l.b16 %v168
  %v865 = vunpack.c.h.b16 %v168
  %v866 = vunpack.c.l.b16 %v169
  %v867 = vunpack.c.h.b16 %v169
  %v868 = vunpack.c.l.b16 %v170
  %v869 = vunpack.c.h.b16 %v170
  %v870 = vunpack.c.l.b16 %v171
  %v871 = vunpack.c.h.b16 %v171
  %v872 = vunpack.c.l.b16 %v172
  %v873 = vunpack.c.h.b16 %v172
  %v874 = vunpack.c.l.b16 %v173
  %v875 = vunpack.c.h.b16 %v173
  %v876 = vunpack.c.l.b16 %v174
  %v877 = vunpack.c.h.b16 %v174
  %v878 = vunpack.c.l.b16 %v175
  %v879 = vunpack.c.h.b16 %v175
  %v880 = vunpack.c.l.b16 %v176
  %v881 = vunpack.c.h.b16 %v176
  %v882 = vunpack.c.l.b16 %v177
  %v883 = vunpack.c.h.b16 %v177
  %v884 = vunpack.c.l.b16 %v178
  %v885 = vunpack.c.h.b16 %v178
  %v886 = vunpack.c.l.b16 %v179
  %v887 = vunpack.c.h.b16 %v179
  %v888 = vunpack.c.l.b16 %v180
  %v889 = vunpack.c.h.b16 %v180
  %v890 = vunpack.c.l.b16 %v181
  %v891 = vunpack.c.h.b16 %v181
  %v892 = vunpack.c.l.b16 %v182
  %v893 = vunpack.c.h.b16 %v182
  %v894 = vunpack.c.l.b16 %v183
  %v895 = vunpack.c.h.b16 %v183
  %v896 = vunpack.c.l.b16 %v184
  %v897 = vunpack.c.h.b16 %v184
  %v898 = vunpack.c.l.b16 %v185
  %v899 = vunpack.c.h.b16 %v185
  %v900 = vunpack.c.l.b16 %v186
  %v901 = vunpack.c.h.b16 %v186
  %v902 = vunpack.c.l.b16 %v187
  %v903 = vunpack.c.h.b16 %v187
  %v904 = vunpack.c.l.b16 %v188
  %v905 = vunpack.c.h.b16 %v188
  %v906 = vunpack.c.l.b16 %v189
  %v907 = vunpack.c.h.b16 %v189
  %v908 = vunpack.c.l.b16 %v190
  %v909 = vunpack.c.h.b16 %v190
  %v910 = vunpack.c.l.b16 %v191
  %v911 = vunpack.c.h.b16 %v191
  %v912 = vunpack.c.l.b16 %v192
  %v913 = vunpack.c.h.b16 %v192
  %v914 = vunpack.c.l.b16 %v193
  %v915 = vunpack.c.h.b16 %v193
  %v916 = vunpack.c.l.b16 %v194
  %v917 = vunpack.c.h.b16 %v194
  %v918 = vunpack.c.l.b16 %v195
  %v919 = vunpack.c.h.b16 %v195
  %v920 = vunpack.c.l.b16 %v196
  %v921 = vunpack.c.h.b16 %v196
  %v922 = vunpack.c.l.b16 %v197
  %v923 = vunpack.c.h.b16 %v197
  %v924 = vunpack.c.l.b16 %v198
  %v925 = vunpack.c.h.b16 %v198
  %v926 = vunpack.c.l.b16 %v199
  %v927 = vunpack.c.h.b16 %v199
  %v928 = vunpack.c.l.b16 %v200
  %v929 = vunpack.c.h.b16 %v200
  %v930 = vunpack.c.l.b16 %v201
  %v931 = vunpack.c.h.b16 %v201
  %v932 = vunpack.c.l.b16 %v202
  %v933 = vunpack.c.h.b16 %v202
  %v934 = vunpack.c.l.b16 %v203
  %v935 = vunpack.c.h.b16 %v203
  %v936 = vunpack.c.l.b16 %v204
  %v937 = vunpack.c.h.b16 %v204
  %v938 = vunpack.c.l.b16 %v205
  %v939 = vunpack.c.h.b16 %v205
  %v940 = vunpack.c.l.b16 %v206
  %v941 = vunpack.c.h.b16 %v206
  %v942 = vunpack.c.l.b16 %v207
  %v943 = vunpack.c.h.b16 %v207
  %v944 = vunpack.c.l.b16 %v208
  %v945 = vunpack.c.h.b16 %v208
  %v946 = vunpack.c.l.b16 %v209
  %v947 = vunpack.c.h.b16 %v209
  %v948 = vunpack.c.l.b16 %v210
  %v949 = vunpack.c.h.b16 %v210
  %v950 = vunpack.c.l.b16 %v211
  %v951 = vunpack.c.h.b16 %v211
  %v952 = vunpack.c.l.b16 %v212
  %v953 = vunpack.c.h.b16 %v212
  %v954 = vunpack.c.l.b16 %v213
  %v955 = vunpack.c.h.b16 %v213
  %v956 = vunpack.c.l.b16 %v214
  %v957 = vunpack.c.h.b16 %v214
  %v958 = vunpack.c.l.b16 %v215
  %v959 = vunpack.c.h.b16 %v215
  %v960 = vunpack.c.l.b16 %v216
  %v961 = vunpack.c.h.b16 %v216
  %v962 = vunpack.c.l.b16 %v217
  %v963 = vunpack.c.h.b16 %v217
  %v964 = vunpack.c.l.b16 %v218
  %v965 = vunpack.c.h.b16 %v218
  %v966 = vunpack.c.l.b16 %v219
  %v967 = vunpack.c.h.b16 %v219
  %v968 = vunpack.c.l.b16 %v220
  %v969 = vunpack.c.h.b16 %v220
  %v970 = vunpack.c.l.b16 %v221
  %v971 = vunpack.c.h.b16 %v221
  %v972 = vunpack.c.l.b16 %v222
  %v973 = vunpack.c.h.b16 %v222
  %v974 = vunpack.c.l.b16 %v223
  %v975 = vunpack.c.h.b16 %v223
  %v976 = vpack.c.b16 %v690, %v688
  %v977 = vpack.c.b16 %v691, %v689
  %v978 = vpack.c.b16 %v694, %v692
  %v979 = vpack.c.b16 %v695, %v693
  %v980 = vpack.c.b16 %v698, %v696
  %v981 = vpack.c.b16 %v699, %v697
  %v982 = vpack.c.b16 %v702, %v700
  %v983 = vpack.c.b16 %v703, %v701
  %v984 = vpack.c.b16 %v706, %v704
  %v985 = vpack.c.b16 %v707, %v705
  %v986 = vpack.c.b16 %v710, %v708
  %v987 = vpack.c.b16 %v711, %v709
  %v988 = vpack.c.b16 %v714, %v712
  %v989 = vpack.c.b16 %v715, %v713
  %v990 = vpack.c.b16 %v718, %v716
  %v991 = vpack.c.b16 %v719, %v717
  %v992 = vpack.c.b16 %v722, %v720
  %v993 = vpack.c.b16 %v723, %v721
  %v994 = vpack.c.b16 %v726, %v724
  %v995 = vpack.c.b16 %v727, %v725
  %v996 = vpack.c.b16 %v730, %v728
  %v997 = vpack.c.b16 %v731, %v729
  %v998 = vpack.c.b16 %v734, %v732
  %v999 = vpack.c.b16 %v735, %v733
  %v1000 = vpack.c.b16 %v738, %v736
  %v1001 = vpack.c.b16 %v739, %v737
  %v1002 = vpack.c.b16 %v742, %v740
  %v1003 = vpack.c.b16 %v743, %v741
  %v1004 = vpack.c.b16 %v746, %v744
  %v1005 = vpack.c.b16 %v747, %v745
  %v1006 = vpack.c.b16 %v750, %v748
  %v1007 = vpack.c.b16 %v751, %v749
  %v1008 = vpack.c.b16 %v754, %v752
  %v1009 = vpack.c.b16 %v755, %v753
  %v1010 = vpack.c.b16 %v758, %v756
  %v1011 = vpack.c.b16 %v759, %v757
  %v1012 = vpack.c.b16 %v762, %v760
  %v1013 = vpack.c.b16 %v763, %v761
  %v1014 = vpack.c.b16 %v766, %v764
  %v1015 = vpack.c.b16 %v767, %v765
  %v1016 = vpack.c.b16 %v770, %v768
  %v1017 = vpack.c.b16 %v771, %v769
  %v1018 = vpack.c.b16 %v774, %v772
  %v1019 = vpack.c.b16 %v775, %v773
  %v1020 = vpack.c.b16 %v778, %v776
  %v1021 = vpack.c.b16 %v779, %v777
  %v1022 = vpack.c.b16 %v782, %v780
  %v1023 = vpack.c.b16 %v783, %v781
  %v1024 = vpack.c.b16 %v786, %v784
  %v1025 = vpack.c.b16 %v787, %v785
  %v1026 = vpack.c.b16 %v790, %v788
  %v1027 = vpack.c.b16 %v791, %v789
  %v1028 = vpack.c.b16 %v794, %v792
  %v1029 = vpack.c.b16 %v795, %v793
  %v1030 = vpack.c.b16 %v798, %v796
  %v1031 = vpack.c.b16 %v799, %v797
  %v1032 = vpack.c.b16 %v802, %v800
  %v1033 = vpack.c.b16 %v803, %v801
  %v1034 = vpack.c.b16 %v806, %v804
  %v1035 = vpack.c.b16 %v807, %v805
  %v1036 = vpack.c.b16 %v810, %v808
  %v1037 = vpack.c.b16 %v811, %v809
  %v1038 = vpack.c.b16 %v814, %v812
  %v1039 = vpack.c.b16 %v815, %v813
  %v1040 = vpack.c.b16 %v818, %v816
  %v1041 = vpack.c.b16 %v819, %v817
  %v1042 = vpack.c.b16 %v822, %v820
  %v1043 = vpack.c.b16 %v823, %v821
  %v1044 = vpack.c.b16 %v826, %v824
  %v1045 = vpack.c.b16 %v827, %v825
  %v1046 = vpack.c.b16 %v830, %v828
  %v1047 = vpack.c.b16 %v831, %v829
  %v1048 = vpack.c.b16 %v834, %v832
  %v1049 = vpack.c.b16 %v835, %v833
  %v1050 = vpack.c.b16 %v838, %v836
  %v1051 = vpack.c.b16 %v839, %v837
  %v1052 = vpack.c.b16 %v842, %v840
  %v1053 = vpack.c.b16 %v843, %v841
  %v1054 = vpack.c.b16 %v846, %v844
  %v1055 = vpack.c.b16 %v847, %v845
  %v1056 = vpack.c.b16 %v850, %v848
  %v1057 = vpack.c.b16 %v851, %v849
  %v1058 = vpack.c.b16 %v854, %v852
  %v1059 = vpack.c.b16 %v855, %v853
  %v1060 = vpack.c.b16 %v858, %v856
  %v1061 = vpack.c.b16 %v859, %v857
  %v1062 = vpack.c.b16 %v862, %v860
  %v1063 = vpack.c.b16 %v863, %v861
  %v1064 = vpack.c.b16 %v866, %v864
  %v1065 = vpack.c.b16 %v867, %v865
  %v1066 = vpack.c.b16 %v870, %v868
  %v1067 = vpack.c.b16 %v871, %v869
  %v1068 = vpack.c.b16 %v874, %v872
  %v1069 = vpack.c.b16 %v875, %v873
  %v1070 = vpack.c.b16 %v878, %v876
  %v1071 = vpack.c.b16 %v879, %v877
  %v1072 = vpack.c.b16 %v882, %v880
  %v1073 = vpack.c.b16 %v883, %v881
  %v1074 = vpack.c.b16 %v886, %v884
  %v1075 = vpack.c.b16 %v887, %v885
  %v1076 = vpack.c.b16 %v890, %v888
  %v1077 = vpack.c.b16 %v891, %v889
  %v1078 = vpack.c.b16 %v894, %v892
  %v1079 = vpack.c.b16 %v895, %v893
  %v1080 = vpack.c.b16 %v898, %v896
  %v1081 = vpack.c.b16 %v899, %v897
  %v1082 = vpack.c.b16 %v902, %v900
  %v1083 = vpack.c.b16 %v903, %v901
  %v1084 = vpack.c.b16 %v906, %v904
  %v1085 = vpack.c.b16 %v907, %v905
  %v1086 = vpack.c.b16 %v910, %v908
  %v1087 = vpack.c.b16 %v911, %v909
  %v1088 = vpack.c.b16 %v914, %v912
  %v1089 = vpack.c.b16 %v915, %v913
  %v1090 = vpack.c.b16 %v918, %v916
  %v1091 = vpack.c.b16 %v919, %v917
  %v1092 = vpack.c.b16 %v922, %v920
  %v1093 = vpack.c.b16 %v923, %v921
  %v1094 = vpack.c.b16 %v926, %v924
  %v1095 = vpack.c.b16 %v927, %v925
  %v1096 = vpack.c.b16 %v930, %v928
  %v1097 = vpack.c.b16 %v931, %v929
  %v1098 = vpack.c.b16 %v934, %v932
  %v1099 = vpack.c.b16 %v935, %v933
  %v1100 = vpack.c.b16 %v938, %v936
  %v1101 = vpack.c.b16 %v939, %v937
  %v1102 = vpack.c.b16 %v942, %v940
  %v1103 = vpack.c.b16 %v943, %v941
  %v1104 = vpack.c.b16 %v946, %v944
  %v1105 = vpack.c.b16 %v947, %v945
  %v1106 = vpack.c.b16 %v950, %v948
  %v1107 = vpack.c.b16 %v951, %v949
  %v1108 = vpack.c.b16 %v954, %v952
  %v1109 = vpack.c.b16 %v955, %v953
  %v1110 = vpack.c.b16 %v958, %v956
  %v1111 = vpack.c.b16 %v959, %v957
  %v1112 = vpack.c.b16 %v962, %v960
  %v1113 = vpack.c.b16 %v963, %v961
  %v1114 = vpack.c.b16 %v966, %v964
  %v1115 = vpack.c.b16 %v967, %v965
  %v1116 = vpack.c.b16 %v970, %v968
  %v1117 = vpack.c.b16 %v971, %v969
  %v1118 = vpack.c.b16 %v974, %v972
  %v1119 = vpack.c.b16 %v975, %v973
  %1264 = vmatprep.subr.bf16.mxu0 %v977
  %1265 = vmatpush1.bf16.msra.mxu0 %v976
  %1266 = vmatprep.subr.bf16.mxu0 %v979
  %1267 = vmatpush1.bf16.msra.mxu0 %v978
  %1268 = vmatprep.subr.bf16.mxu0 %v981
  %1269 = vmatpush1.bf16.msra.mxu0 %v980
  %1270 = vmatprep.subr.bf16.mxu0 %v983
  %1271 = vmatpush1.bf16.msra.mxu0 %v982
  %1272 = vmatprep.subr.bf16.mxu0 %v985
  %1273 = vmatpush1.bf16.msra.mxu0 %v984
  %1274 = vmatprep.subr.bf16.mxu0 %v987
  %1275 = vmatpush1.bf16.msra.mxu0 %v986
  %1276 = vmatprep.subr.bf16.mxu0 %v989
  %1277 = vmatpush1.bf16.msra.mxu0 %v988
  %1278 = vmatprep.subr.bf16.mxu0 %v991
  %1279 = vmatpush1.bf16.msra.mxu0 %v990
  %1280 = vmatprep.subr.bf16.mxu0 %v993
  %1281 = vmatpush1.bf16.msra.mxu0 %v992
  %1282 = vmatprep.subr.bf16.mxu0 %v995
  %1283 = vmatpush1.bf16.msra.mxu0 %v994
  %1284 = vmatprep.subr.bf16.mxu0 %v997
  %1285 = vmatpush1.bf16.msra.mxu0 %v996
  %1286 = vmatprep.subr.bf16.mxu0 %v999
  %1287 = vmatpush1.bf16.msra.mxu0 %v998
  %1288 = vmatprep.subr.bf16.mxu0 %v1001
  %1289 = vmatpush1.bf16.msra.mxu0 %v1000
  %1290 = vmatprep.subr.bf16.mxu0 %v1003
  %1291 = vmatpush1.bf16.msra.mxu0 %v1002
  %1292 = vmatprep.subr.bf16.mxu0 %v1005
  %1293 = vmatpush1.bf16.msra.mxu0 %v1004
  %1294 = vmatprep.subr.bf16.mxu0 %v1007
  %1295 = vmatpush1.bf16.msra.mxu0 %v1006
  %1296 = vmatprep.mubr.bf16.mxu0 %v419
  %1297 = vmatmul.mubr.bf16.gmra.mrb[0].mxu0 %v418
  %v1298 = vpop.f32.mrb[0].mxu0
  %v1299 = vadd.f32 %v229, %v1298
  %v1300 = vpop.f32.mrb[0].mxu0
  %v1301 = vadd.f32 %v233, %v1300
  %v1302 = vpop.f32.mrb[0].mxu0
  %v1303 = vadd.f32 %v229, %v1302
  %v1304 = vpop.f32.mrb[0].mxu0
  %v1305 = vadd.f32 %v233, %v1304
  %1306 = vmatprep.mubr.bf16.mxu0 %v428
  %1307 = vmatmul.mubr.bf16.gmra.mrb[0].mxu0 %v427
  %v1308 = vpop.f32.mrb[0].mxu0
  %v1309 = vadd.f32 %v229, %v1308
  %v1310 = vpop.f32.mrb[0].mxu0
  %v1311 = vadd.f32 %v233, %v1310
  %v1312 = vpop.f32.mrb[0].mxu0
  %v1313 = vadd.f32 %v229, %v1312
  %v1314 = vpop.f32.mrb[0].mxu0
  %v1315 = vadd.f32 %v233, %v1314
  %1316 = vmatprep.mubr.bf16.mxu0 %v437
  %1317 = vmatmul.mubr.bf16.gmra.mrb[0].mxu0 %v436
  %v1318 = vpop.f32.mrb[0].mxu0
  %v1319 = vadd.f32 %v229, %v1318
  %v1320 = vpop.f32.mrb[0].mxu0
  %v1321 = vadd.f32 %v233, %v1320
  %v1322 = vpop.f32.mrb[0].mxu0
  %v1323 = vadd.f32 %v229, %v1322
  %v1324 = vpop.f32.mrb[0].mxu0
  %v1325 = vadd.f32 %v233, %v1324
  %1326 = vmatprep.mubr.bf16.mxu0 %v446
  %1327 = vmatmul.mubr.bf16.gmra.mrb[0].mxu0 %v445
  %v1328 = vpop.f32.mrb[0].mxu0
  %v1329 = vadd.f32 %v229, %v1328
  %v1330 = vpop.f32.mrb[0].mxu0
  %v1331 = vadd.f32 %v233, %v1330
  %v1332 = vpop.f32.mrb[0].mxu0
  %v1333 = vadd.f32 %v229, %v1332
  %v1334 = vpop.f32.mrb[0].mxu0
  %v1335 = vadd.f32 %v233, %v1334
  %1336 = vmatprep.mubr.bf16.mxu0 %v455
  %1337 = vmatmul.mubr.bf16.gmra.mrb[0].mxu0 %v454
  %v1338 = vpop.f32.mrb[0].mxu0
  %v1339 = vadd.f32 %v229, %v1338
  %v1340 = vpop.f32.mrb[0].mxu0
  %v1341 = vadd.f32 %v233, %v1340
  %v1342 = vpop.f32.mrb[0].mxu0
  %v1343 = vadd.f32 %v229, %v1342
  %v1344 = vpop.f32.mrb[0].mxu0
  %v1345 = vadd.f32 %v233, %v1344
  %1346 = vmatprep.mubr.bf16.mxu0 %v464
  %1347 = vmatmul.mubr.bf16.gmra.mrb[0].mxu0 %v463
  %v1348 = vpop.f32.mrb[0].mxu0
  %v1349 = vadd.f32 %v229, %v1348
  %v1350 = vpop.f32.mrb[0].mxu0
  %v1351 = vadd.f32 %v233, %v1350
  %v1352 = vpop.f32.mrb[0].mxu0
  %v1353 = vadd.f32 %v229, %v1352
  %v1354 = vpop.f32.mrb[0].mxu0
  %v1355 = vadd.f32 %v233, %v1354
  %1356 = vmatprep.mubr.bf16.mxu0 %v473
  %1357 = vmatmul.mubr.bf16.gmra.mrb[0].mxu0 %v472
  %v1358 = vpop.f32.mrb[0].mxu0
  %v1359 = vadd.f32 %v229, %v1358
  %v1360 = vpop.f32.mrb[0].mxu0
  %v1361 = vadd.f32 %v233, %v1360
  %v1362 = vpop.f32.mrb[0].mxu0
  %v1363 = vpop.f32.mrb[0].mxu0
  %1364 = vdwg.mxu0
  %1365 = vmatprep.subr.bf16.mxu0 %v1009
  %1366 = vmatpush1.bf16.msra.mxu0 %v1008
  %1367 = vmatprep.subr.bf16.mxu0 %v1011
  %1368 = vmatpush1.bf16.msra.mxu0 %v1010
  %1369 = vmatprep.subr.bf16.mxu0 %v1013
  %1370 = vmatpush1.bf16.msra.mxu0 %v1012
  %1371 = vmatprep.subr.bf16.mxu0 %v1015
  %1372 = vmatpush1.bf16.msra.mxu0 %v1014
  %1373 = vmatprep.subr.bf16.mxu0 %v1017
  %1374 = vmatpush1.bf16.msra.mxu0 %v1016
  %1375 = vmatprep.subr.bf16.mxu0 %v1019
  %1376 = vmatpush1.bf16.msra.mxu0 %v1018
  %1377 = vmatprep.subr.bf16.mxu0 %v1021
  %1378 = vmatpush1.bf16.msra.mxu0 %v1020
  %1379 = vmatprep.subr.bf16.mxu0 %v1023
  %1380 = vmatpush1.bf16.msra.mxu0 %v1022
  %1381 = vmatprep.subr.bf16.mxu0 %v1025
  %1382 = vmatpush1.bf16.msra.mxu0 %v1024
  %1383 = vmatprep.subr.bf16.mxu0 %v1027
  %1384 = vmatpush1.bf16.msra.mxu0 %v1026
  %1385 = vmatprep.subr.bf16.mxu0 %v1029
  %1386 = vmatpush1.bf16.msra.mxu0 %v1028
  %1387 = vmatprep.subr.bf16.mxu0 %v1031
  %1388 = vmatpush1.bf16.msra.mxu0 %v1030
  %1389 = vmatprep.subr.bf16.mxu0 %v1033
  %1390 = vmatpush1.bf16.msra.mxu0 %v1032
  %1391 = vmatprep.subr.bf16.mxu0 %v1035
  %1392 = vmatpush1.bf16.msra.mxu0 %v1034
  %1393 = vmatprep.subr.bf16.mxu0 %v1037
  %1394 = vmatpush1.bf16.msra.mxu0 %v1036
  %1395 = vmatprep.subr.bf16.mxu0 %v1039
  %1396 = vmatpush1.bf16.msra.mxu0 %v1038
  %1397 = vmatprep.mubr.bf16.mxu0 %v421
  %1398 = vmatmul.mubr.bf16.gmra.mrb[0].mxu0 %v420
  %v1399 = vpop.f32.mrb[0].mxu0
  %v1400 = vadd.f32 %v1299, %v1399
  %v1401 = vpop.f32.mrb[0].mxu0
  %v1402 = vadd.f32 %v1301, %v1401
  %v1403 = vpop.f32.mrb[0].mxu0
  %v1404 = vadd.f32 %v1303, %v1403
  %v1405 = vpop.f32.mrb[0].mxu0
  %v1406 = vadd.f32 %v1305, %v1405
  %1407 = vmatprep.mubr.bf16.mxu0 %v430
  %1408 = vmatmul.mubr.bf16.gmra.mrb[0].mxu0 %v429
  %v1409 = vpop.f32.mrb[0].mxu0
  %v1410 = vadd.f32 %v1309, %v1409
  %v1411 = vpop.f32.mrb[0].mxu0
  %v1412 = vadd.f32 %v1311, %v1411
  %v1413 = vpop.f32.mrb[0].mxu0
  %v1414 = vadd.f32 %v1313, %v1413
  %v1415 = vpop.f32.mrb[0].mxu0
  %v1416 = vadd.f32 %v1315, %v1415
  %1417 = vmatprep.mubr.bf16.mxu0 %v439
  %1418 = vmatmul.mubr.bf16.gmra.mrb[0].mxu0 %v438
  %v1419 = vpop.f32.mrb[0].mxu0
  %v1420 = vadd.f32 %v1319, %v1419
  %v1421 = vpop.f32.mrb[0].mxu0
  %v1422 = vadd.f32 %v1321, %v1421
  %v1423 = vpop.f32.mrb[0].mxu0
  %v1424 = vadd.f32 %v1323, %v1423
  %v1425 = vpop.f32.mrb[0].mxu0
  %v1426 = vadd.f32 %v1325, %v1425
  %1427 = vmatprep.mubr.bf16.mxu0 %v448
  %1428 = vmatmul.mubr.bf16.gmra.mrb[0].mxu0 %v447
  %v1429 = vpop.f32.mrb[0].mxu0
  %v1430 = vadd.f32 %v1329, %v1429
  %v1431 = vpop.f32.mrb[0].mxu0
  %v1432 = vadd.f32 %v1331, %v1431
  %v1433 = vpop.f32.mrb[0].mxu0
  %v1434 = vadd.f32 %v1333, %v1433
  %v1435 = vpop.f32.mrb[0].mxu0
  %v1436 = vadd.f32 %v1335, %v1435
  %1437 = vmatprep.mubr.bf16.mxu0 %v457
  %1438 = vmatmul.mubr.bf16.gmra.mrb[0].mxu0 %v456
  %v1439 = vpop.f32.mrb[0].mxu0
  %v1440 = vadd.f32 %v1339, %v1439
  %v1441 = vpop.f32.mrb[0].mxu0
  %v1442 = vadd.f32 %v1341, %v1441
  %v1443 = vpop.f32.mrb[0].mxu0
  %v1444 = vadd.f32 %v1343, %v1443
  %v1445 = vpop.f32.mrb[0].mxu0
  %v1446 = vadd.f32 %v1345, %v1445
  %1447 = vmatprep.mubr.bf16.mxu0 %v466
  %1448 = vmatmul.mubr.bf16.gmra.mrb[0].mxu0 %v465
  %v1449 = vpop.f32.mrb[0].mxu0
  %v1450 = vadd.f32 %v1349, %v1449
  %v1451 = vpop.f32.mrb[0].mxu0
  %v1452 = vadd.f32 %v1351, %v1451
  %v1453 = vpop.f32.mrb[0].mxu0
  %v1454 = vadd.f32 %v1353, %v1453
  %v1455 = vpop.f32.mrb[0].mxu0
  %v1456 = vadd.f32 %v1355, %v1455
  %1457 = vmatprep.mubr.bf16.mxu0 %v475
  %1458 = vmatmul.mubr.bf16.gmra.mrb[0].mxu0 %v474
  %v1459 = vpop.f32.mrb[0].mxu0
  %v1460 = vadd.f32 %v1359, %v1459
  %v1461 = vpop.f32.mrb[0].mxu0
  %v1462 = vadd.f32 %v1361, %v1461
  %v1463 = vpop.f32.mrb[0].mxu0
  %v1464 = vpop.f32.mrb[0].mxu0
  %1465 = vdwg.mxu0
  %1466 = vmatprep.subr.bf16.mxu0 %v1041
  %1467 = vmatpush1.bf16.msra.mxu0 %v1040
  %1468 = vmatprep.subr.bf16.mxu0 %v1043
  %1469 = vmatpush1.bf16.msra.mxu0 %v1042
  %1470 = vmatprep.subr.bf16.mxu0 %v1045
  %1471 = vmatpush1.bf16.msra.mxu0 %v1044
  %1472 = vmatprep.subr.bf16.mxu0 %v1047
  %1473 = vmatpush1.bf16.msra.mxu0 %v1046
  %1474 = vmatprep.subr.bf16.mxu0 %v1049
  %1475 = vmatpush1.bf16.msra.mxu0 %v1048
  %1476 = vmatprep.subr.bf16.mxu0 %v1051
  %1477 = vmatpush1.bf16.msra.mxu0 %v1050
  %1478 = vmatprep.subr.bf16.mxu0 %v1053
  %1479 = vmatpush1.bf16.msra.mxu0 %v1052
  %1480 = vmatprep.subr.bf16.mxu0 %v1055
  %1481 = vmatpush1.bf16.msra.mxu0 %v1054
  %1482 = vmatprep.subr.bf16.mxu0 %v1057
  %1483 = vmatpush1.bf16.msra.mxu0 %v1056
  %1484 = vmatprep.subr.bf16.mxu0 %v1059
  %1485 = vmatpush1.bf16.msra.mxu0 %v1058
  %1486 = vmatprep.subr.bf16.mxu0 %v1061
  %1487 = vmatpush1.bf16.msra.mxu0 %v1060
  %1488 = vmatprep.subr.bf16.mxu0 %v1063
  %1489 = vmatpush1.bf16.msra.mxu0 %v1062
  %1490 = vmatprep.subr.bf16.mxu0 %v1065
  %1491 = vmatpush1.bf16.msra.mxu0 %v1064
  %1492 = vmatprep.subr.bf16.mxu0 %v1067
  %1493 = vmatpush1.bf16.msra.mxu0 %v1066
  %1494 = vmatprep.subr.bf16.mxu0 %v1069
  %1495 = vmatpush1.bf16.msra.mxu0 %v1068
  %1496 = vmatprep.subr.bf16.mxu0 %v1071
  %1497 = vmatpush1.bf16.msra.mxu0 %v1070
  %1498 = vmatprep.mubr.bf16.mxu0 %v423
  %1499 = vmatmul.mubr.bf16.gmra.mrb[0].mxu0 %v422
  %v1500 = vpop.f32.mrb[0].mxu0
  %v1501 = vadd.f32 %v1400, %v1500
  %v1502 = vpop.f32.mrb[0].mxu0
  %v1503 = vadd.f32 %v1402, %v1502
  %v1504 = vpop.f32.mrb[0].mxu0
  %v1505 = vadd.f32 %v1404, %v1504
  %v1506 = vpop.f32.mrb[0].mxu0
  %v1507 = vadd.f32 %v1406, %v1506
  %1508 = vmatprep.mubr.bf16.mxu0 %v432
  %1509 = vmatmul.mubr.bf16.gmra.mrb[0].mxu0 %v431
  %v1510 = vpop.f32.mrb[0].mxu0
  %v1511 = vadd.f32 %v1410, %v1510
  %v1512 = vpop.f32.mrb[0].mxu0
  %v1513 = vadd.f32 %v1412, %v1512
  %v1514 = vpop.f32.mrb[0].mxu0
  %v1515 = vadd.f32 %v1414, %v1514
  %v1516 = vpop.f32.mrb[0].mxu0
  %v1517 = vadd.f32 %v1416, %v1516
  %1518 = vmatprep.mubr.bf16.mxu0 %v441
  %1519 = vmatmul.mubr.bf16.gmra.mrb[0].mxu0 %v440
  %v1520 = vpop.f32.mrb[0].mxu0
  %v1521 = vadd.f32 %v1420, %v1520
  %v1522 = vpop.f32.mrb[0].mxu0
  %v1523 = vadd.f32 %v1422, %v1522
  %v1524 = vpop.f32.mrb[0].mxu0
  %v1525 = vadd.f32 %v1424, %v1524
  %v1526 = vpop.f32.mrb[0].mxu0
  %v1527 = vadd.f32 %v1426, %v1526
  %1528 = vmatprep.mubr.bf16.mxu0 %v450
  %1529 = vmatmul.mubr.bf16.gmra.mrb[0].mxu0 %v449
  %v1530 = vpop.f32.mrb[0].mxu0
  %v1531 = vadd.f32 %v1430, %v1530
  %v1532 = vpop.f32.mrb[0].mxu0
  %v1533 = vadd.f32 %v1432, %v1532
  %v1534 = vpop.f32.mrb[0].mxu0
  %v1535 = vadd.f32 %v1434, %v1534
  %v1536 = vpop.f32.mrb[0].mxu0
  %v1537 = vadd.f32 %v1436, %v1536
  %1538 = vmatprep.mubr.bf16.mxu0 %v459
  %1539 = vmatmul.mubr.bf16.gmra.mrb[0].mxu0 %v458
  %v1540 = vpop.f32.mrb[0].mxu0
  %v1541 = vadd.f32 %v1440, %v1540
  %v1542 = vpop.f32.mrb[0].mxu0
  %v1543 = vadd.f32 %v1442, %v1542
  %v1544 = vpop.f32.mrb[0].mxu0
  %v1545 = vadd.f32 %v1444, %v1544
  %v1546 = vpop.f32.mrb[0].mxu0
  %v1547 = vadd.f32 %v1446, %v1546
  %1548 = vmatprep.mubr.bf16.mxu0 %v468
  %1549 = vmatmul.mubr.bf16.gmra.mrb[0].mxu0 %v467
  %v1550 = vpop.f32.mrb[0].mxu0
  %v1551 = vadd.f32 %v1450, %v1550
  %v1552 = vpop.f32.mrb[0].mxu0
  %v1553 = vadd.f32 %v1452, %v1552
  %v1554 = vpop.f32.mrb[0].mxu0
  %v1555 = vadd.f32 %v1454, %v1554
  %v1556 = vpop.f32.mrb[0].mxu0
  %v1557 = vadd.f32 %v1456, %v1556
  %1558 = vmatprep.mubr.bf16.mxu0 %v477
  %1559 = vmatmul.mubr.bf16.gmra.mrb[0].mxu0 %v476
  %v1560 = vpop.f32.mrb[0].mxu0
  %v1561 = vadd.f32 %v1460, %v1560
  %v1562 = vpop.f32.mrb[0].mxu0
  %v1563 = vadd.f32 %v1462, %v1562
  %v1564 = vpop.f32.mrb[0].mxu0
  %v1565 = vpop.f32.mrb[0].mxu0
  %1566 = vdwg.mxu0
  %1567 = vmatprep.subr.bf16.mxu0 %v1073
  %1568 = vmatpush1.bf16.msra.mxu0 %v1072
  %1569 = vmatprep.subr.bf16.mxu0 %v1075
  %1570 = vmatpush1.bf16.msra.mxu0 %v1074
  %1571 = vmatprep.subr.bf16.mxu0 %v1077
  %1572 = vmatpush1.bf16.msra.mxu0 %v1076
  %1573 = vmatprep.subr.bf16.mxu0 %v1079
  %1574 = vmatpush1.bf16.msra.mxu0 %v1078
  %1575 = vmatprep.subr.bf16.mxu0 %v1081
  %1576 = vmatpush1.bf16.msra.mxu0 %v1080
  %1577 = vmatprep.subr.bf16.mxu0 %v1083
  %1578 = vmatpush1.bf16.msra.mxu0 %v1082
  %1579 = vmatprep.subr.bf16.mxu0 %v1085
  %1580 = vmatpush1.bf16.msra.mxu0 %v1084
  %1581 = vmatprep.subr.bf16.mxu0 %v1087
  %1582 = vmatpush1.bf16.msra.mxu0 %v1086
  %1583 = vmatprep.subr.bf16.mxu0 %v1089
  %1584 = vmatpush1.bf16.msra.mxu0 %v1088
  %1585 = vmatprep.subr.bf16.mxu0 %v1091
  %1586 = vmatpush1.bf16.msra.mxu0 %v1090
  %1587 = vmatprep.subr.bf16.mxu0 %v1093
  %1588 = vmatpush1.bf16.msra.mxu0 %v1092
  %1589 = vmatprep.subr.bf16.mxu0 %v1095
  %1590 = vmatpush1.bf16.msra.mxu0 %v1094
  %1591 = vmatprep.subr.bf16.mxu0 %v1097
  %1592 = vmatpush1.bf16.msra.mxu0 %v1096
  %1593 = vmatprep.subr.bf16.mxu0 %v1099
  %1594 = vmatpush1.bf16.msra.mxu0 %v1098
  %1595 = vmatprep.subr.bf16.mxu0 %v1101
  %1596 = vmatpush1.bf16.msra.mxu0 %v1100
  %1597 = vmatprep.subr.bf16.mxu0 %v1103
  %1598 = vmatpush1.bf16.msra.mxu0 %v1102
  %1599 = vmatprep.mubr.bf16.mxu0 %v425
  %1600 = vmatmul.mubr.bf16.gmra.mrb[0].mxu0 %v424
  %v1601 = vpop.f32.mrb[0].mxu0
  %v1602 = vadd.f32 %v1501, %v1601
  %v1603 = vpop.f32.mrb[0].mxu0
  %v1604 = vadd.f32 %v1503, %v1603
  %v1605 = vpop.f32.mrb[0].mxu0
  %v1606 = vadd.f32 %v1505, %v1605
  %v1607 = vpop.f32.mrb[0].mxu0
  %v1608 = vadd.f32 %v1507, %v1607
  %1609 = vmatprep.mubr.bf16.mxu0 %v434
  %1610 = vmatmul.mubr.bf16.gmra.mrb[0].mxu0 %v433
  %v1611 = vpop.f32.mrb[0].mxu0
  %v1612 = vadd.f32 %v1511, %v1611
  %v1613 = vpop.f32.mrb[0].mxu0
  %v1614 = vadd.f32 %v1513, %v1613
  %v1615 = vpop.f32.mrb[0].mxu0
  %v1616 = vadd.f32 %v1515, %v1615
  %v1617 = vpop.f32.mrb[0].mxu0
  %v1618 = vadd.f32 %v1517, %v1617
  %1619 = vmatprep.mubr.bf16.mxu0 %v443
  %1620 = vmatmul.mubr.bf16.gmra.mrb[0].mxu0 %v442
  %v1621 = vpop.f32.mrb[0].mxu0
  %v1622 = vadd.f32 %v1521, %v1621
  %v1623 = vpop.f32.mrb[0].mxu0
  %v1624 = vadd.f32 %v1523, %v1623
  %v1625 = vpop.f32.mrb[0].mxu0
  %v1626 = vadd.f32 %v1525, %v1625
  %v1627 = vpop.f32.mrb[0].mxu0
  %v1628 = vadd.f32 %v1527, %v1627
  %1629 = vmatprep.mubr.bf16.mxu0 %v452
  %1630 = vmatmul.mubr.bf16.gmra.mrb[0].mxu0 %v451
  %v1631 = vpop.f32.mrb[0].mxu0
  %v1632 = vadd.f32 %v1531, %v1631
  %v1633 = vpop.f32.mrb[0].mxu0
  %v1634 = vadd.f32 %v1533, %v1633
  %v1635 = vpop.f32.mrb[0].mxu0
  %v1636 = vadd.f32 %v1535, %v1635
  %v1637 = vpop.f32.mrb[0].mxu0
  %v1638 = vadd.f32 %v1537, %v1637
  %1639 = vmatprep.mubr.bf16.mxu0 %v461
  %1640 = vmatmul.mubr.bf16.gmra.mrb[0].mxu0 %v460
  %v1641 = vpop.f32.mrb[0].mxu0
  %v1642 = vadd.f32 %v1541, %v1641
  %v1643 = vpop.f32.mrb[0].mxu0
  %v1644 = vadd.f32 %v1543, %v1643
  %v1645 = vpop.f32.mrb[0].mxu0
  %v1646 = vadd.f32 %v1545, %v1645
  %v1647 = vpop.f32.mrb[0].mxu0
  %v1648 = vadd.f32 %v1547, %v1647
  %1649 = vmatprep.mubr.bf16.mxu0 %v470
  %1650 = vmatmul.mubr.bf16.gmra.mrb[0].mxu0 %v469
  %v1651 = vpop.f32.mrb[0].mxu0
  %v1652 = vadd.f32 %v1551, %v1651
  %v1653 = vpop.f32.mrb[0].mxu0
  %v1654 = vadd.f32 %v1553, %v1653
  %v1655 = vpop.f32.mrb[0].mxu0
  %v1656 = vadd.f32 %v1555, %v1655
  %v1657 = vpop.f32.mrb[0].mxu0
  %v1658 = vadd.f32 %v1557, %v1657
  %1659 = vmatprep.mubr.bf16.mxu0 %v479
  %1660 = vmatmul.mubr.bf16.gmra.mrb[0].mxu0 %v478
  %v1661 = vpop.f32.mrb[0].mxu0
  %v1662 = vadd.f32 %v1561, %v1661
  %v1663 = vpop.f32.mrb[0].mxu0
  %v1664 = vadd.f32 %v1563, %v1663
  %v1665 = vpop.f32.mrb[0].mxu0
  %v1666 = vpop.f32.mrb[0].mxu0
  %1667 = vdwg.mxu0
  %1668 = vmatprep.subr.bf16.mxu0 %v1105
  %1669 = vmatpush1.bf16.msra.mxu0 %v1104
  %1670 = vmatprep.subr.bf16.mxu0 %v1107
  %1671 = vmatpush1.bf16.msra.mxu0 %v1106
  %1672 = vmatprep.subr.bf16.mxu0 %v1109
  %1673 = vmatpush1.bf16.msra.mxu0 %v1108
  %1674 = vmatprep.subr.bf16.mxu0 %v1111
  %1675 = vmatpush1.bf16.msra.mxu0 %v1110
  %1676 = vmatprep.subr.bf16.mxu0 %v1113
  %1677 = vmatpush1.bf16.msra.mxu0 %v1112
  %1678 = vmatprep.subr.bf16.mxu0 %v1115
  %1679 = vmatpush1.bf16.msra.mxu0 %v1114
  %1680 = vmatprep.subr.bf16.mxu0 %v1117
  %1681 = vmatpush1.bf16.msra.mxu0 %v1116
  %1682 = vmatprep.subr.bf16.mxu0 %v1119
  %1683 = vmatpush1.bf16.msra.mxu0 %v1118
  %1684 = vmatprep.subr.bf16.mxu0 0
  %1685 = vmatpush1.bf16.msra.mxu0 0
  %1686 = vmatprep.subr.bf16.mxu0 0
  %1687 = vmatpush1.bf16.msra.mxu0 0
  %1688 = vmatprep.subr.bf16.mxu0 0
  %1689 = vmatpush1.bf16.msra.mxu0 0
  %1690 = vmatprep.subr.bf16.mxu0 0
  %1691 = vmatpush1.bf16.msra.mxu0 0
  %1692 = vmatprep.subr.bf16.mxu0 0
  %1693 = vmatpush1.bf16.msra.mxu0 0
  %1694 = vmatprep.subr.bf16.mxu0 0
  %1695 = vmatpush1.bf16.msra.mxu0 0
  %1696 = vmatprep.subr.bf16.mxu0 0
  %1697 = vmatpush1.bf16.msra.mxu0 0
  %1698 = vmatprep.subr.bf16.mxu0 0
  %1699 = vmatpush1.bf16.msra.mxu0 0
  %1700 = vmatprep.mubr.bf16.mxu0 0
  %1701 = vmatmul.mubr.bf16.gmra.mrb[0].mxu0 %v426
  %v1702 = vpop.f32.mrb[0].mxu0
  %v1703 = vadd.f32 %v1602, %v1702
  %v1704 = vpop.f32.mrb[0].mxu0
  %v1705 = vadd.f32 %v1604, %v1704
  %v1706 = vpop.f32.mrb[0].mxu0
  %v1707 = vadd.f32 %v1606, %v1706
  %v1708 = vpop.f32.mrb[0].mxu0
  %v1709 = vadd.f32 %v1608, %v1708
  %1710 = vmatprep.mubr.bf16.mxu0 0
  %1711 = vmatmul.mubr.bf16.gmra.mrb[0].mxu0 %v435
  %v1712 = vpop.f32.mrb[0].mxu0
  %v1713 = vadd.f32 %v1612, %v1712
  %v1714 = vpop.f32.mrb[0].mxu0
  %v1715 = vadd.f32 %v1614, %v1714
  %v1716 = vpop.f32.mrb[0].mxu0
  %v1717 = vadd.f32 %v1616, %v1716
  %v1718 = vpop.f32.mrb[0].mxu0
  %v1719 = vadd.f32 %v1618, %v1718
  %1720 = vmatprep.mubr.bf16.mxu0 0
  %1721 = vmatmul.mubr.bf16.gmra.mrb[0].mxu0 %v444
  %v1722 = vpop.f32.mrb[0].mxu0
  %v1723 = vadd.f32 %v1622, %v1722
  %v1724 = vpop.f32.mrb[0].mxu0
  %v1725 = vadd.f32 %v1624, %v1724
  %v1726 = vpop.f32.mrb[0].mxu0
  %v1727 = vadd.f32 %v1626, %v1726
  %v1728 = vpop.f32.mrb[0].mxu0
  %v1729 = vadd.f32 %v1628, %v1728
  %1730 = vmatprep.mubr.bf16.mxu0 0
  %1731 = vmatmul.mubr.bf16.gmra.mrb[0].mxu0 %v453
  %v1732 = vpop.f32.mrb[0].mxu0
  %v1733 = vadd.f32 %v1632, %v1732
  %v1734 = vpop.f32.mrb[0].mxu0
  %v1735 = vadd.f32 %v1634, %v1734
  %v1736 = vpop.f32.mrb[0].mxu0
  %v1737 = vadd.f32 %v1636, %v1736
  %v1738 = vpop.f32.mrb[0].mxu0
  %v1739 = vadd.f32 %v1638, %v1738
  %1740 = vmatprep.mubr.bf16.mxu0 0
  %1741 = vmatmul.mubr.bf16.gmra.mrb[0].mxu0 %v462
  %v1742 = vpop.f32.mrb[0].mxu0
  %v1743 = vadd.f32 %v1642, %v1742
  %v1744 = vpop.f32.mrb[0].mxu0
  %v1745 = vadd.f32 %v1644, %v1744
  %v1746 = vpop.f32.mrb[0].mxu0
  %v1747 = vadd.f32 %v1646, %v1746
  %v1748 = vpop.f32.mrb[0].mxu0
  %v1749 = vadd.f32 %v1648, %v1748
  %1750 = vmatprep.mubr.bf16.mxu0 0
  %1751 = vmatmul.mubr.bf16.gmra.mrb[0].mxu0 %v471
  %v1752 = vpop.f32.mrb[0].mxu0
  %v1753 = vadd.f32 %v1652, %v1752
  %v1754 = vpop.f32.mrb[0].mxu0
  %v1755 = vadd.f32 %v1654, %v1754
  %v1756 = vpop.f32.mrb[0].mxu0
  %v1757 = vadd.f32 %v1656, %v1756
  %v1758 = vpop.f32.mrb[0].mxu0
  %v1759 = vadd.f32 %v1658, %v1758
  %1760 = vmatprep.mubr.bf16.mxu0 0
  %1761 = vmatmul.mubr.bf16.gmra.mrb[0].mxu0 %v480
  %v1762 = vpop.f32.mrb[0].mxu0
  %v1763 = vadd.f32 %v1662, %v1762
  %v1764 = vpop.f32.mrb[0].mxu0
  %v1765 = vadd.f32 %v1664, %v1764
  %v1766 = vpop.f32.mrb[0].mxu0
  %v1767 = vpop.f32.mrb[0].mxu0
  %1768 = vdwg.mxu0
  %v1769 = vadd.f32 %v1703, %v1707
  %v1770 = vadd.f32 %v1769, %v1713
  %v1771 = vadd.f32 %v1770, %v1717
  %v1772 = vadd.f32 %v1771, %v1723
  %v1773 = vadd.f32 %v1772, %v1727
  %v1774 = vadd.f32 %v1773, %v1733
  %v1775 = vadd.f32 %v1774, %v1737
  %v1776 = vadd.f32 %v1775, %v1743
  %v1777 = vadd.f32 %v1776, %v1747
  %v1778 = vadd.f32 %v1777, %v1753
  %v1779 = vadd.f32 %v1778, %v1757
  %vm1780 = vcmask 1041408
  %v1781 = vsel %vm1780, %v1763, 0.0
  %v1782 = vadd.f32 %v1779, %v1781
  %v1783 = vrot.slane %v1782, 4
  %v1784 = vadd.f32 %v1782, %v1783
  %v1785 = vrot.slane %v1784, 2
  %v1786 = vadd.f32 %v1784, %v1785
  %v1787 = vrot.slane %v1786, 1
  %v1788 = vadd.f32 %v1786, %v1787
  %v1789 = vadd.f32 %v1705, %v1709
  %v1790 = vadd.f32 %v1789, %v1715
  %v1791 = vadd.f32 %v1790, %v1719
  %v1792 = vadd.f32 %v1791, %v1725
  %v1793 = vadd.f32 %v1792, %v1729
  %v1794 = vadd.f32 %v1793, %v1735
  %v1795 = vadd.f32 %v1794, %v1739
  %v1796 = vadd.f32 %v1795, %v1745
  %v1797 = vadd.f32 %v1796, %v1749
  %v1798 = vadd.f32 %v1797, %v1755
  %v1799 = vadd.f32 %v1798, %v1759
  %v1800 = vsel %vm1780, %v1765, 0.0
  %v1801 = vadd.f32 %v1799, %v1800
  %v1802 = vrot.slane %v1801, 4
  %v1803 = vadd.f32 %v1801, %v1802
  %v1804 = vrot.slane %v1803, 2
  %v1805 = vadd.f32 %v1803, %v1804
  %v1806 = vrot.slane %v1805, 1
  %v1807 = vadd.f32 %v1805, %v1806
  %v1808 = vrcp.pop 98.0
  %v1809 = vmul.f32 %v1788, %v1808
  %v1810 = vmul.f32 %v1807, %v1808
  %1812 = vrot.lane.b32.xlu0 %v1809, 64
  %v1813 = vpop.permute.xlu0 %1812
  %v1815 = vadd.f32 %v1809, %v1813
  %v1816 = vadd.f32 %v1815, %v1810
  %1818 = vrot.lane.b32.xlu0 %v1810, 64
  %v1819 = vpop.permute.xlu0 %1818
  %v1821 = vadd.f32 %v1816, %v1819
  %v1822 = vmul.f32 %v1821, 0.25
  %1824 = vrot.lane.b32.xlu0 %v1822, 64
  %v1825 = vpop.permute.xlu0 %1824
  %vm1827 = vcmask 523264
  %v1828 = vsel %vm1827, %v1822, %v1825
  %v1829 = vlaneseq
  %v1830 = vshrl.u32 %v1829, 7
  %v1831 = vsub.s32 0, %v1830
  %v1832 = vrot.slane %v1828, %v1831
  %v1833 = vsub.f32 %v1703, %v1832
  %v1834 = vsub.f32 %v1705, %v1832
  %v1835 = vsub.f32 %v1707, %v1832
  %v1836 = vsub.f32 %v1709, %v1832
  %v1837 = vsub.f32 %v1713, %v1832
  %v1838 = vsub.f32 %v1715, %v1832
  %v1839 = vsub.f32 %v1717, %v1832
  %v1840 = vsub.f32 %v1719, %v1832
  %v1841 = vsub.f32 %v1723, %v1832
  %v1842 = vsub.f32 %v1725, %v1832
  %v1843 = vsub.f32 %v1727, %v1832
  %v1844 = vsub.f32 %v1729, %v1832
  %v1845 = vsub.f32 %v1733, %v1832
  %v1846 = vsub.f32 %v1735, %v1832
  %v1847 = vsub.f32 %v1737, %v1832
  %v1848 = vsub.f32 %v1739, %v1832
  %v1849 = vsub.f32 %v1743, %v1832
  %v1850 = vsub.f32 %v1745, %v1832
  %v1851 = vsub.f32 %v1747, %v1832
  %v1852 = vsub.f32 %v1749, %v1832
  %v1853 = vsub.f32 %v1753, %v1832
  %v1854 = vsub.f32 %v1755, %v1832
  %v1855 = vsub.f32 %v1757, %v1832
  %v1856 = vsub.f32 %v1759, %v1832
  %v1857 = vsub.f32 %v1763, %v1832
  %v1858 = vsub.f32 %v1765, %v1832
  %v1859 = vmul.f32 %v1833, %v1833
  %v1860 = vmul.f32 %v1834, %v1834
  %v1861 = vmul.f32 %v1835, %v1835
  %v1862 = vmul.f32 %v1836, %v1836
  %v1863 = vmul.f32 %v1837, %v1837
  %v1864 = vmul.f32 %v1838, %v1838
  %v1865 = vmul.f32 %v1839, %v1839
  %v1866 = vmul.f32 %v1840, %v1840
  %v1867 = vmul.f32 %v1841, %v1841
  %v1868 = vmul.f32 %v1842, %v1842
  %v1869 = vmul.f32 %v1843, %v1843
  %v1870 = vmul.f32 %v1844, %v1844
  %v1871 = vmul.f32 %v1845, %v1845
  %v1872 = vmul.f32 %v1846, %v1846
  %v1873 = vmul.f32 %v1847, %v1847
  %v1874 = vmul.f32 %v1848, %v1848
  %v1875 = vmul.f32 %v1849, %v1849
  %v1876 = vmul.f32 %v1850, %v1850
  %v1877 = vmul.f32 %v1851, %v1851
  %v1878 = vmul.f32 %v1852, %v1852
  %v1879 = vmul.f32 %v1853, %v1853
  %v1880 = vmul.f32 %v1854, %v1854
  %v1881 = vmul.f32 %v1855, %v1855
  %v1882 = vmul.f32 %v1856, %v1856
  %v1883 = vmul.f32 %v1857, %v1857
  %v1884 = vmul.f32 %v1858, %v1858
  %v1885 = vadd.f32 %v1859, %v1861
  %v1886 = vadd.f32 %v1885, %v1863
  %v1887 = vadd.f32 %v1886, %v1865
  %v1888 = vadd.f32 %v1887, %v1867
  %v1889 = vadd.f32 %v1888, %v1869
  %v1890 = vadd.f32 %v1889, %v1871
  %v1891 = vadd.f32 %v1890, %v1873
  %v1892 = vadd.f32 %v1891, %v1875
  %v1893 = vadd.f32 %v1892, %v1877
  %v1894 = vadd.f32 %v1893, %v1879
  %v1895 = vadd.f32 %v1894, %v1881
  %v1896 = vsel %vm1780, %v1883, 0.0
  %v1897 = vadd.f32 %v1895, %v1896
  %v1898 = vrot.slane %v1897, 4
  %v1899 = vadd.f32 %v1897, %v1898
  %v1900 = vrot.slane %v1899, 2
  %v1901 = vadd.f32 %v1899, %v1900
  %v1902 = vrot.slane %v1901, 1
  %v1903 = vadd.f32 %v1901, %v1902
  %v1904 = vadd.f32 %v1860, %v1862
  %v1905 = vadd.f32 %v1904, %v1864
  %v1906 = vadd.f32 %v1905, %v1866
  %v1907 = vadd.f32 %v1906, %v1868
  %v1908 = vadd.f32 %v1907, %v1870
  %v1909 = vadd.f32 %v1908, %v1872
  %v1910 = vadd.f32 %v1909, %v1874
  %v1911 = vadd.f32 %v1910, %v1876
  %v1912 = vadd.f32 %v1911, %v1878
  %v1913 = vadd.f32 %v1912, %v1880
  %v1914 = vadd.f32 %v1913, %v1882
  %v1915 = vsel %vm1780, %v1884, 0.0
  %v1916 = vadd.f32 %v1914, %v1915
  %v1917 = vrot.slane %v1916, 4
  %v1918 = vadd.f32 %v1916, %v1917
  %v1919 = vrot.slane %v1918, 2
  %v1920 = vadd.f32 %v1918, %v1919
  %v1921 = vrot.slane %v1920, 1
  %v1922 = vadd.f32 %v1920, %v1921
  %v1923 = vmul.f32 %v1903, %v1808
  %v1924 = vmul.f32 %v1922, %v1808
  %1926 = vrot.lane.b32.xlu0 %v1923, 64
  %v1927 = vpop.permute.xlu0 %1926
  %v1929 = vadd.f32 %v1923, %v1927
  %v1930 = vadd.f32 %v1929, %v1924
  %1932 = vrot.lane.b32.xlu0 %v1924, 64
  %v1933 = vpop.permute.xlu0 %1932
  %v1935 = vadd.f32 %v1930, %v1933
  %v1936 = vmul.f32 %v1935, 0.25
  %1938 = vrot.lane.b32.xlu0 %v1936, 64
  %v1939 = vpop.permute.xlu0 %1938
  %v1941 = vsel %vm1827, %v1936, %v1939
  %v1942 = vadd.f32 %v1941, 1e-05
  %v1943 = vrsqrt.pop %v1942
  %v1944 = vlaneseq
  %v1945 = vshrl.u32 %v1944, 7
  %v1946 = vsub.s32 0, %v1945
  %v1947 = vrot.slane %v1943, %v1946
  %v1948 = vmul.f32 %v1833, %v1947
  %v1949 = vmul.f32 %v1834, %v1947
  %v1950 = vmul.f32 %v1835, %v1947
  %v1951 = vmul.f32 %v1836, %v1947
  %v1952 = vmul.f32 %v1837, %v1947
  %v1953 = vmul.f32 %v1838, %v1947
  %v1954 = vmul.f32 %v1839, %v1947
  %v1955 = vmul.f32 %v1840, %v1947
  %v1956 = vmul.f32 %v1841, %v1947
  %v1957 = vmul.f32 %v1842, %v1947
  %v1958 = vmul.f32 %v1843, %v1947
  %v1959 = vmul.f32 %v1844, %v1947
  %v1960 = vmul.f32 %v1845, %v1947
  %v1961 = vmul.f32 %v1846, %v1947
  %v1962 = vmul.f32 %v1847, %v1947
  %v1963 = vmul.f32 %v1848, %v1947
  %v1964 = vmul.f32 %v1849, %v1947
  %v1965 = vmul.f32 %v1850, %v1947
  %v1966 = vmul.f32 %v1851, %v1947
  %v1967 = vmul.f32 %v1852, %v1947
  %v1968 = vmul.f32 %v1853, %v1947
  %v1969 = vmul.f32 %v1854, %v1947
  %v1970 = vmul.f32 %v1855, %v1947
  %v1971 = vmul.f32 %v1856, %v1947
  %v1972 = vmul.f32 %v1857, %v1947
  %v1973 = vmul.f32 %v1858, %v1947
  %s1974 = scalar_lea.vmem %s2, 1
  %v1975 = vld [vmem:[%s1974] ss:$4 sm:$0x3]
  %v1977 = vlaneseq
  %v1978 = vshrl.u32 %v1977, 7
  %v1979 = vsub.s32 0, %v1978
  %v1980 = vrot.slane %v1975, %v1979
  %v1981 = vlaneseq
  %v1982 = vshrl.u32 %v1981, 7
  %v1983 = vsub.s32 1, %v1982
  %v1984 = vrot.slane %v1975, %v1983
  %v1987 = vmul.f32 %v1948, %v1980
  %v1988 = vmul.f32 %v1949, %v1984
  %v1989 = vmul.f32 %v1950, %v1980
  %v1990 = vmul.f32 %v1951, %v1984
  %v1991 = vmul.f32 %v1952, %v1980
  %v1992 = vmul.f32 %v1953, %v1984
  %v1993 = vmul.f32 %v1954, %v1980
  %v1994 = vmul.f32 %v1955, %v1984
  %v1995 = vmul.f32 %v1956, %v1980
  %v1996 = vmul.f32 %v1957, %v1984
  %v1997 = vmul.f32 %v1958, %v1980
  %v1998 = vmul.f32 %v1959, %v1984
  %v1999 = vmul.f32 %v1960, %v1980
  %v2000 = vmul.f32 %v1961, %v1984
  %v2001 = vmul.f32 %v1962, %v1980
  %v2002 = vmul.f32 %v1963, %v1984
  %v2003 = vmul.f32 %v1964, %v1980
  %v2004 = vmul.f32 %v1965, %v1984
  %v2005 = vmul.f32 %v1966, %v1980
  %v2006 = vmul.f32 %v1967, %v1984
  %v2007 = vmul.f32 %v1968, %v1980
  %v2008 = vmul.f32 %v1969, %v1984
  %v2009 = vmul.f32 %v1970, %v1980
  %v2010 = vmul.f32 %v1971, %v1984
  %v2011 = vmul.f32 %v1972, %v1980
  %v2012 = vmul.f32 %v1973, %v1984
  %s2013 = scalar_lea.vmem %s2, 2
  %v2014 = vld [vmem:[%s2013] ss:$4 sm:$0x3]
  %v2016 = vlaneseq
  %v2017 = vshrl.u32 %v2016, 7
  %v2018 = vsub.s32 0, %v2017
  %v2019 = vrot.slane %v2014, %v2018
  %v2020 = vlaneseq
  %v2021 = vshrl.u32 %v2020, 7
  %v2022 = vsub.s32 1, %v2021
  %v2023 = vrot.slane %v2014, %v2022
  %v2026 = vadd.f32 %v1987, %v2019
  %v2027 = vadd.f32 %v1988, %v2023
  %v2028 = vadd.f32 %v1989, %v2019
  %v2029 = vadd.f32 %v1990, %v2023
  %v2030 = vadd.f32 %v1991, %v2019
  %v2031 = vadd.f32 %v1992, %v2023
  %v2032 = vadd.f32 %v1993, %v2019
  %v2033 = vadd.f32 %v1994, %v2023
  %v2034 = vadd.f32 %v1995, %v2019
  %v2035 = vadd.f32 %v1996, %v2023
  %v2036 = vadd.f32 %v1997, %v2019
  %v2037 = vadd.f32 %v1998, %v2023
  %v2038 = vadd.f32 %v1999, %v2019
  %v2039 = vadd.f32 %v2000, %v2023
  %v2040 = vadd.f32 %v2001, %v2019
  %v2041 = vadd.f32 %v2002, %v2023
  %v2042 = vadd.f32 %v2003, %v2019
  %v2043 = vadd.f32 %v2004, %v2023
  %v2044 = vadd.f32 %v2005, %v2019
  %v2045 = vadd.f32 %v2006, %v2023
  %v2046 = vadd.f32 %v2007, %v2019
  %v2047 = vadd.f32 %v2008, %v2023
  %v2048 = vadd.f32 %v2009, %v2019
  %v2049 = vadd.f32 %v2010, %v2023
  %v2050 = vadd.f32 %v2011, %v2019
  %v2051 = vadd.f32 %v2012, %v2023
  %v2052 = vmax.f32 %v2026, 0.0
  %v2053 = vmax.f32 %v2027, 0.0
  %v2054 = vmax.f32 %v2028, 0.0
  %v2055 = vmax.f32 %v2029, 0.0
  %v2056 = vmax.f32 %v2030, 0.0
  %v2057 = vmax.f32 %v2031, 0.0
  %v2058 = vmax.f32 %v2032, 0.0
  %v2059 = vmax.f32 %v2033, 0.0
  %v2060 = vmax.f32 %v2034, 0.0
  %v2061 = vmax.f32 %v2035, 0.0
  %v2062 = vmax.f32 %v2036, 0.0
  %v2063 = vmax.f32 %v2037, 0.0
  %v2064 = vmax.f32 %v2038, 0.0
  %v2065 = vmax.f32 %v2039, 0.0
  %v2066 = vmax.f32 %v2040, 0.0
  %v2067 = vmax.f32 %v2041, 0.0
  %v2068 = vmax.f32 %v2042, 0.0
  %v2069 = vmax.f32 %v2043, 0.0
  %v2070 = vmax.f32 %v2044, 0.0
  %v2071 = vmax.f32 %v2045, 0.0
  %v2072 = vmax.f32 %v2046, 0.0
  %v2073 = vmax.f32 %v2047, 0.0
  %v2074 = vmax.f32 %v2048, 0.0
  %v2075 = vmax.f32 %v2049, 0.0
  %v2076 = vmax.f32 %v2050, 0.0
  %v2077 = vmax.f32 %v2051, 0.0
  %2078 = vst [vmem:[%s3] sm:$0xff] %v2052
  %2079 = vst [vmem:[%s3 + $0x8] sm:$0xff] %v2053
  %2080 = vst [vmem:[%s3 + $0x10] sm:$0xff] %v2054
  %2081 = vst [vmem:[%s3 + $0x18] sm:$0xff] %v2055
  %2082 = vst [vmem:[%s3 + $0x20] sm:$0xff] %v2056
  %2083 = vst [vmem:[%s3 + $0x28] sm:$0xff] %v2057
  %2084 = vst [vmem:[%s3 + $0x30] sm:$0xff] %v2058
  %2085 = vst [vmem:[%s3 + $0x38] sm:$0xff] %v2059
  %2086 = vst [vmem:[%s3 + $0x40] sm:$0xff] %v2060
  %2087 = vst [vmem:[%s3 + $0x48] sm:$0xff] %v2061
  %2088 = vst [vmem:[%s3 + $0x50] sm:$0xff] %v2062
  %2089 = vst [vmem:[%s3 + $0x58] sm:$0xff] %v2063
  %2090 = vst [vmem:[%s3 + $0x60] sm:$0xff] %v2064
  %2091 = vst [vmem:[%s3 + $0x68] sm:$0xff] %v2065
  %2092 = vst [vmem:[%s3 + $0x70] sm:$0xff] %v2066
  %2093 = vst [vmem:[%s3 + $0x78] sm:$0xff] %v2067
  %2094 = vst [vmem:[%s3 + $0x80] sm:$0xff] %v2068
  %2095 = vst [vmem:[%s3 + $0x88] sm:$0xff] %v2069
  %2096 = vst [vmem:[%s3 + $0x90] sm:$0xff] %v2070
  %2097 = vst [vmem:[%s3 + $0x98] sm:$0xff] %v2071
  %2098 = vst [vmem:[%s3 + $0xa0] sm:$0xff] %v2072
  %2099 = vst [vmem:[%s3 + $0xa8] sm:$0xff] %v2073
  %2100 = vst [vmem:[%s3 + $0xb0] sm:$0xff] %v2074
  %2101 = vst [vmem:[%s3 + $0xb8] sm:$0xff] %v2075
  %2102 = vst [vmem:[%s3 + $0xc0] sm:$0x3] %v2076
  %2103 = vst [vmem:[%s3 + $0xc8] sm:$0x3] %v2077
  // Predicated region
  $region14: #{generator_forward.6} parent=0 // pred_check
    _
  $region15: #{generator_forward.6} parent=0 // pred_check_branch
    %2105 = sbr.rel (0) target = $region17
  $region16: #{generator_forward.6} parent=0 // pred_region
    _
  $region17: #{generator_forward.6} parent=0 // pred_fallthru
    _
  // Predicated region
  $region18: #{generator_forward.6} parent=0 // pred_check
    _
  $region19: #{generator_forward.6} parent=0 // pred_check_branch
    %2107 = sbr.rel (0) target = $region21
  $region20: #{generator_forward.6} parent=0 // pred_region
    _
  $region21: #{generator_forward.6} parent=0 // pred_fallthru
    _

// kernel: generator_forward.7
$region0: #{generator_forward.7}
  #allocation0 [shape = 'u32[]', space=smem, size = 0x4, offset = 0x4, fixed_abs, tag = 'smem constant byte address 0x4 - core index']
  #allocation1 [shape = 'u32[144,128]{1,0:T(1,128)}', space=vmem, size = 0x12000, scoped, tag = 'internal scratch']
  %s0 = inlined_call_operand.vmem [shape: bf16[392,576], index: 0, kind: input, shape index: {}]
  %s1 = inlined_call_operand.vmem [shape: bf16[576,128], index: 1, kind: input, shape index: {}]
  %s2 = inlined_call_operand.vmem [shape: f32[3,128], index: 2, kind: input, shape index: {}]
  %s3 = inlined_call_operand.vmem [shape: f32[392,128], index: 3, kind: output, shape index: {}]
  %s4 = sld [smem:[#allocation0]]
  $region45: #{generator_forward.7} parent=0
    _
  %s6 = ssub.s32 1, %s4
  %s7 = scalar_select 0, %s6, %s4
  loop: start=0, step=1, limit=9
  $region2: #{generator_forward.7} parent=0 // loop_pre_header
    _
  $region3: #{generator_forward.7} parent=0 // loop_header
    %s9 = sphi 0, %s13
    %p10 = scmp.ge.s32.totalorder %s9, 9
    %s16 = sphi 0, %s28
    %s17 = sphi 0, %s24
    %s18 = sphi 0, %s16
    %s19 = sphi 0, %s17
    %s20 = sphi 0, %s18
    %s21 = sphi 0, %s19
    %s31 = sphi 0, %s33
    %s34 = sphi 0, %s31
    %s35 = sphi 0, %s34
    %s51 = sphi 0, %s35
    %s57 = sphi 0, %s59
    %s60 = sphi 0, %s57
    %s61 = sphi 0, %s60
    %s77 = sphi 0, %s61
    %s83 = sphi 0, %s85
    %s86 = sphi 0, %s83
    %s87 = sphi 0, %s86
    %s103 = sphi 0, %s87
    %s111 = sphi 0, %s113
    %s114 = sphi 0, %s111
    %s115 = sphi 0, %s114
    %s131 = sphi 0, %s115
  $region4: #{generator_forward.7} parent=0 // loop_header_branch
    %12 = sbr.rel (%p10) target = $region8
  $region5: #{generator_forward.7} parent=0 // loop_body
    %s14 = ssub.s32 %s9, 1
    %s15 = ssub.s32 %s9, 2
    %s22 = sadd.s32 1, %s17
    %p23 = scmp.ge.s32.totalorder %s22, 1
    %s24 = scalar_select %p23, 0, %s22
    %s25 = sadd.s32 1, %s16
    %s26 = scalar_select %p23, %s25, %s16
    %p27 = scmp.ge.s32.totalorder %s26, 7
    %s28 = scalar_select %p27, 0, %s26
    %s29 = ssub.s32 %s16, %s28
    %p30 = scmp.eq.s32.totalorder %s29, 0
    %s32 = sadd.s32 %s31, 1
    %s33 = scalar_select %p30, %s31, %s32
    %p36 = pneg %p30
    %p37 = scmp.eq.s32.totalorder %s9, 6
    %p38 = por %p36, %p37
    %p39 = scmp.ne.s32.totalorder %s31, %s34
    %p40 = scmp.eq.s32.totalorder %s9, 0
    %p41 = por %p39, %p40
    %p42 = scmp.ne.s32.totalorder %s31, %s34
    %p43 = scmp.eq.s32.totalorder %s14, 6
    %p44 = por %p42, %p43
    %p45 = scmp.ne.s32.totalorder %s34, %s35
    %p46 = scmp.eq.s32.totalorder %s14, 0
    %p47 = por %p45, %p46
    %p48 = scmp.ne.s32.totalorder %s34, %s35
    %p49 = scmp.eq.s32.totalorder %s15, 6
    %p50 = por %p48, %p49
    %p52 = scmp.ne.s32.totalorder %s35, %s51
    %p53 = scmp.eq.s32.totalorder %s15, 0
    %p54 = por %p52, %p53
    %s55 = ssub.s32 %s17, %s24
    %p56 = scmp.eq.s32.totalorder %s55, 0
    %s58 = sadd.s32 %s57, 1
    %s59 = scalar_select %p56, %s57, %s58
    %p62 = pneg %p56
    %p63 = scmp.eq.s32.totalorder %s9, 6
    %p64 = por %p62, %p63
    %p65 = scmp.ne.s32.totalorder %s57, %s60
    %p66 = scmp.eq.s32.totalorder %s9, 0
    %p67 = por %p65, %p66
    %p68 = scmp.ne.s32.totalorder %s57, %s60
    %p69 = scmp.eq.s32.totalorder %s14, 6
    %p70 = por %p68, %p69
    %p71 = scmp.ne.s32.totalorder %s60, %s61
    %p72 = scmp.eq.s32.totalorder %s14, 0
    %p73 = por %p71, %p72
    %p74 = scmp.ne.s32.totalorder %s60, %s61
    %p75 = scmp.eq.s32.totalorder %s15, 6
    %p76 = por %p74, %p75
    %p78 = scmp.ne.s32.totalorder %s61, %s77
    %p79 = scmp.eq.s32.totalorder %s15, 0
    %p80 = por %p78, %p79
    %s81 = ssub.s32 %s17, %s24
    %p82 = scmp.eq.s32.totalorder %s81, 0
    %s84 = sadd.s32 %s83, 1
    %s85 = scalar_select %p82, %s83, %s84
    %p88 = pneg %p82
    %p89 = scmp.eq.s32.totalorder %s9, 6
    %p90 = por %p88, %p89
    %p91 = scmp.ne.s32.totalorder %s83, %s86
    %p92 = scmp.eq.s32.totalorder %s9, 0
    %p93 = por %p91, %p92
    %p94 = scmp.ne.s32.totalorder %s83, %s86
    %p95 = scmp.eq.s32.totalorder %s14, 6
    %p96 = por %p94, %p95
    %p97 = scmp.ne.s32.totalorder %s86, %s87
    %p98 = scmp.eq.s32.totalorder %s14, 0
    %p99 = por %p97, %p98
    %p100 = scmp.ne.s32.totalorder %s86, %s87
    %p101 = scmp.eq.s32.totalorder %s15, 6
    %p102 = por %p100, %p101
    %p104 = scmp.ne.s32.totalorder %s87, %s103
    %p105 = scmp.eq.s32.totalorder %s15, 0
    %p106 = por %p104, %p105
    %s107 = ssub.s32 %s16, %s28
    %s108 = ssub.s32 %s17, %s24
    %s109 = sor.u32 %s107, %s108
    %p110 = scmp.eq.s32.totalorder %s109, 0
    %s112 = sadd.s32 %s111, 1
    %s113 = scalar_select %p110, %s111, %s112
    %p116 = pneg %p110
    %p117 = scmp.eq.s32.totalorder %s9, 6
    %p118 = por %p116, %p117
    %p119 = scmp.ne.s32.totalorder %s111, %s114
    %p120 = scmp.eq.s32.totalorder %s9, 0
    %p121 = por %p119, %p120
    %p122 = scmp.ne.s32.totalorder %s111, %s114
    %p123 = scmp.eq.s32.totalorder %s14, 6
    %p124 = por %p122, %p123
    %p125 = scmp.ne.s32.totalorder %s114, %s115
    %p126 = scmp.eq.s32.totalorder %s14, 0
    %p127 = por %p125, %p126
    %p128 = scmp.ne.s32.totalorder %s114, %s115
    %p129 = scmp.eq.s32.totalorder %s15, 6
    %p130 = por %p128, %p129
    %p132 = scmp.ne.s32.totalorder %s115, %s131
    %p133 = scmp.eq.s32.totalorder %s15, 0
    %p134 = por %p132, %p133
    %p135 = scmp.le.s32.totalorder 1, %s9
    %p136 = scmp.lt.s32.totalorder %s9, 8
    %p137 = pnand %p135, %p136
    %p138 = pneg %p137
    // Predicated region
    $region9: #{generator_forward.7} parent=5 // pred_check
      _
    $region10: #{generator_forward.7} parent=5 // pred_check_branch
      %140 = sbr.rel (%p137) target = $region12
    $region11: #{generator_forward.7} parent=5 // pred_region
      %s141 = ssub.s32 %s9, 1
      // Predicated region
      $region13: #{generator_forward.7} parent=11 // pred_check
        %p142 = pneg %p73
      $region14: #{generator_forward.7} parent=11 // pred_check_branch
        %144 = sbr.rel (%p142) target = $region16
      $region15: #{generator_forward.7} parent=11 // pred_region
        %p145 = scmp.lt.s32.totalorder %s19, 0
        %s146 = scalar_select %p145, %s19, 0
        %s147 = smul.addr %s146, 4
        %s148 = scalar_lea.vmem %s1, %s147
      $region16: #{generator_forward.7} parent=11 // pred_fallthru
        _
      // Predicated region
      $region17: #{generator_forward.7} parent=11 // pred_check
        %p149 = pneg %p99
      $region18: #{generator_forward.7} parent=11 // pred_check_branch
        %151 = sbr.rel (%p149) target = $region20
      $region19: #{generator_forward.7} parent=11 // pred_region
        %p152 = scmp.lt.s32.totalorder %s19, 0
        %s153 = scalar_select %p152, %s19, 0
        %s154 = smul.addr %s153, 4
        %s155 = scalar_lea.vmem %s2, %s154
      $region20: #{generator_forward.7} parent=11 // pred_fallthru
        _
    $region12: #{generator_forward.7} parent=5 // pred_fallthru
      _
    %p156 = scmp.lt.s32.totalorder %s9, 7
    // Predicated region
    $region21: #{generator_forward.7} parent=5 // pred_check
      %p157 = pneg %p156
    $region22: #{generator_forward.7} parent=5 // pred_check_branch
      %159 = sbr.rel (%p157) target = $region24
    $region23: #{generator_forward.7} parent=5 // pred_region
      // Predicated region
      $region25: #{generator_forward.7} parent=23 // pred_check
        %p160 = pneg %p41
      $region26: #{generator_forward.7} parent=23 // pred_check_branch
        %162 = sbr.rel (%p160) target = $region28
      $region27: #{generator_forward.7} parent=23 // pred_region
        %s163 = smul.u32 7, %s16
        %p164 = scmp.lt.s32.totalorder %s163, 48
        %s165 = scalar_select %p164, %s163, 48
        %s166 = smul.addr %s165, 5
        %s167 = smul.addr %s166, 4
        %s168 = scalar_lea.vmem %s0, %s167
        %s169 = smul.u32 7, %s16
      $region28: #{generator_forward.7} parent=23 // pred_fallthru
        _
    $region24: #{generator_forward.7} parent=5 // pred_fallthru
      _
    %p170 = scmp.le.s32.totalorder 1, %s9
    %p171 = scmp.lt.s32.totalorder %s9, 8
    %p172 = pnand %p170, %p171
    %p173 = pneg %p172
    // Predicated region
    $region29: #{generator_forward.7} parent=5 // pred_check
      _
    $region30: #{generator_forward.7} parent=5 // pred_check_branch
      %175 = sbr.rel (%p172) target = $region32
    $region31: #{generator_forward.7} parent=5 // pred_region
      %s176 = ssub.s32 %s9, 1
      %s177 = smul.u32 7, %s18
      %p178 = scmp.lt.s32.totalorder %s177, 48
      %s179 = scalar_select %p178, %s177, 48
      %s180 = smul.addr %s179, 5
      %s181 = smul.addr %s180, 4
      %s182 = scalar_lea.vmem %s0, %s181
      %p183 = pneg %p47
      %p184 = pneg %p44
      %p185 = scmp.lt.s32.totalorder %s19, 0
      %s186 = scalar_select %p185, %s19, 0
      %s187 = smul.addr %s186, 4
      %s188 = scalar_lea.vmem %s1, %s187
      %p189 = pneg %p73
      %p190 = pneg %p70
      %p191 = scmp.lt.s32.totalorder %s19, 0
      %s192 = scalar_select %p191, %s19, 0
      %s193 = smul.addr %s192, 4
      %s194 = scalar_lea.vmem %s2, %s193
      %p195 = pneg %p99
      %p196 = pneg %p96
      %p197 = pneg %p127
      %p198 = pneg %p124
      %s199 = smul.u32 7, %s18
      %p200 = scmp.lt.s32.totalorder %s199, 48
      %s201 = scalar_select %p200, %s199, 48
      %p202 = scmp.lt.s32.totalorder %s19, 0
      %s203 = scalar_select %p202, %s19, 0
      %s204 = sadd.s32 %s203, %s201
      %s205 = smul.addr %s204, 8
      %s206 = scalar_lea.vmem %s3, %s205
      %s207 = smul.u32 7, %s18
      %p208 = scmp.lt.s32.totalorder %s207, 48
      %s209 = scalar_select %p208, %s207, 48
      %s210 = smul.addr %s209, 5
      %s211 = smul.addr %s210, 4
      %s212 = scalar_lea.vmem %s0, %s211
      %s213 = smul.u32 7, %s18
      %p214 = scmp.lt.s32.totalorder %s19, 0
      %s215 = scalar_select %p214, %s19, 0
      %s216 = smul.addr %s215, 4
      %s217 = scalar_lea.vmem %s1, %s216
      %p218 = scmp.lt.s32.totalorder %s19, 0
      %s219 = scalar_select %p218, %s19, 0
      %s220 = smul.addr %s219, 4
      %s221 = scalar_lea.vmem %s2, %s220
      %s222 = smul.u32 7, %s18
      %p223 = scmp.lt.s32.totalorder %s222, 48
      %s224 = scalar_select %p223, %s222, 48
      %p225 = scmp.lt.s32.totalorder %s19, 0
      %s226 = scalar_select %p225, %s19, 0
      %s227 = sadd.s32 %s226, %s224
      %s228 = smul.addr %s227, 8
      %s229 = scalar_lea.vmem %s3, %s228
      %s230 = smul.u32 7, %s18
      %v232 = vld [vmem:[%s212] sm:$0xff]
      %v233 = vld [vmem:[%s212 + $0x8] sm:$0xff]
      %v234 = vld [vmem:[%s212 + $0x10] sm:$0xf]
      %v235 = vld [vmem:[%s212 + $0x14] sm:$0xff]
      %v236 = vld [vmem:[%s212 + $0x1c] sm:$0xff]
      %v237 = vld [vmem:[%s212 + $0x24] sm:$0xf]
      %v238 = vld [vmem:[%s212 + $0x28] sm:$0xff]
      %v239 = vld [vmem:[%s212 + $0x30] sm:$0xff]
      %v240 = vld [vmem:[%s212 + $0x38] sm:$0xf]
      %v241 = vld [vmem:[%s212 + $0x3c] sm:$0xff]
      %v242 = vld [vmem:[%s212 + $0x44] sm:$0xff]
      %v243 = vld [vmem:[%s212 + $0x4c] sm:$0xf]
      %v244 = vld [vmem:[%s212 + $0x50] sm:$0xff]
      %v245 = vld [vmem:[%s212 + $0x58] sm:$0xff]
      %v246 = vld [vmem:[%s212 + $0x60] sm:$0xf]
      %v247 = vld [vmem:[%s212 + $0x64] sm:$0xff]
      %v248 = vld [vmem:[%s212 + $0x6c] sm:$0xff]
      %v249 = vld [vmem:[%s212 + $0x74] sm:$0xf]
      %v250 = vld [vmem:[%s212 + $0x78] sm:$0xff]
      %v251 = vld [vmem:[%s212 + $0x80] sm:$0xff]
      %v252 = vld [vmem:[%s212 + $0x88] sm:$0xf]
      %v253 = vld [vmem:[%s217] sm:$0xf]
      %v254 = vld [vmem:[%s217 + $0x4] sm:$0xf]
      %v255 = vld [vmem:[%s217 + $0x8] sm:$0xf]
      %v256 = vld [vmem:[%s217 + $0xc] sm:$0xf]
      %v257 = vld [vmem:[%s217 + $0x10] sm:$0xf]
      %v258 = vld [vmem:[%s217 + $0x14] sm:$0xf]
      %v259 = vld [vmem:[%s217 + $0x18] sm:$0xf]
      %v260 = vld [vmem:[%s217 + $0x1c] sm:$0xf]
      %v261 = vld [vmem:[%s217 + $0x20] sm:$0xf]
      %v262 = vld [vmem:[%s217 + $0x24] sm:$0xf]
      %v263 = vld [vmem:[%s217 + $0x28] sm:$0xf]
      %v264 = vld [vmem:[%s217 + $0x2c] sm:$0xf]
      %v265 = vld [vmem:[%s217 + $0x30] sm:$0xf]
      %v266 = vld [vmem:[%s217 + $0x34] sm:$0xf]
      %v267 = vld [vmem:[%s217 + $0x38] sm:$0xf]
      %v268 = vld [vmem:[%s217 + $0x3c] sm:$0xf]
      %v269 = vld [vmem:[%s217 + $0x40] sm:$0xf]
      %v270 = vld [vmem:[%s217 + $0x44] sm:$0xf]
      %v271 = vld [vmem:[%s217 + $0x48] sm:$0xf]
      %v272 = vld [vmem:[%s217 + $0x4c] sm:$0xf]
      %v273 = vld [vmem:[%s217 + $0x50] sm:$0xf]
      %v274 = vld [vmem:[%s217 + $0x54] sm:$0xf]
      %v275 = vld [vmem:[%s217 + $0x58] sm:$0xf]
      %v276 = vld [vmem:[%s217 + $0x5c] sm:$0xf]
      %v277 = vld [vmem:[%s217 + $0x60] sm:$0xf]
      %v278 = vld [vmem:[%s217 + $0x64] sm:$0xf]
      %v279 = vld [vmem:[%s217 + $0x68] sm:$0xf]
      %v280 = vld [vmem:[%s217 + $0x6c] sm:$0xf]
      %v281 = vld [vmem:[%s217 + $0x70] sm:$0xf]
      %v282 = vld [vmem:[%s217 + $0x74] sm:$0xf]
      %v283 = vld [vmem:[%s217 + $0x78] sm:$0xf]
      %v284 = vld [vmem:[%s217 + $0x7c] sm:$0xf]
      %v285 = vld [vmem:[%s217 + $0x80] sm:$0xf]
      %v286 = vld [vmem:[%s217 + $0x84] sm:$0xf]
      %v287 = vld [vmem:[%s217 + $0x88] sm:$0xf]
      %v288 = vld [vmem:[%s217 + $0x8c] sm:$0xf]
      %v289 = vld [vmem:[%s217 + $0x90] sm:$0xf]
      %v290 = vld [vmem:[%s217 + $0x94] sm:$0xf]
      %v291 = vld [vmem:[%s217 + $0x98] sm:$0xf]
      %v292 = vld [vmem:[%s217 + $0x9c] sm:$0xf]
      %v293 = vld [vmem:[%s217 + $0xa0] sm:$0xf]
      %v294 = vld [vmem:[%s217 + $0xa4] sm:$0xf]
      %v295 = vld [vmem:[%s217 + $0xa8] sm:$0xf]
      %v296 = vld [vmem:[%s217 + $0xac] sm:$0xf]
      %v297 = vld [vmem:[%s217 + $0xb0] sm:$0xf]
      %v298 = vld [vmem:[%s217 + $0xb4] sm:$0xf]
      %v299 = vld [vmem:[%s217 + $0xb8] sm:$0xf]
      %v300 = vld [vmem:[%s217 + $0xbc] sm:$0xf]
      %v301 = vld [vmem:[%s217 + $0xc0] sm:$0xf]
      %v302 = vld [vmem:[%s217 + $0xc4] sm:$0xf]
      %v303 = vld [vmem:[%s217 + $0xc8] sm:$0xf]
      %v304 = vld [vmem:[%s217 + $0xcc] sm:$0xf]
      %v305 = vld [vmem:[%s217 + $0xd0] sm:$0xf]
      %v306 = vld [vmem:[%s217 + $0xd4] sm:$0xf]
      %v307 = vld [vmem:[%s217 + $0xd8] sm:$0xf]
      %v308 = vld [vmem:[%s217 + $0xdc] sm:$0xf]
      %v309 = vld [vmem:[%s217 + $0xe0] sm:$0xf]
      %v310 = vld [vmem:[%s217 + $0xe4] sm:$0xf]
      %v311 = vld [vmem:[%s217 + $0xe8] sm:$0xf]
      %v312 = vld [vmem:[%s217 + $0xec] sm:$0xf]
      %v313 = vld [vmem:[%s217 + $0xf0] sm:$0xf]
      %v314 = vld [vmem:[%s217 + $0xf4] sm:$0xf]
      %v315 = vld [vmem:[%s217 + $0xf8] sm:$0xf]
      %v316 = vld [vmem:[%s217 + $0xfc] sm:$0xf]
      %v317 = vld [vmem:[%s217 + $0x100] sm:$0xf]
      %v318 = vld [vmem:[%s217 + $0x104] sm:$0xf]
      %v319 = vld [vmem:[%s217 + $0x108] sm:$0xf]
      %v320 = vld [vmem:[%s217 + $0x10c] sm:$0xf]
      %v321 = vld [vmem:[%s217 + $0x110] sm:$0xf]
      %v322 = vld [vmem:[%s217 + $0x114] sm:$0xf]
      %v323 = vld [vmem:[%s217 + $0x118] sm:$0xf]
      %v324 = vld [vmem:[%s217 + $0x11c] sm:$0xf]
      %v325 = vld [vmem:[%s221] sm:$0x1]
      %v326 = vlaneseq
      %v327 = vshrl.u32 %v326, 7
      %v328 = vsub.s32 0, %v327
      %v329 = vrot.slane %v325, %v328
      %v351 = vunpack.c.l.b16 %v232
      %v352 = vunpack.c.h.b16 %v232
      %v353 = vunpack.c.l.b16 %v233
      %v354 = vunpack.c.h.b16 %v233
      %v355 = vunpack.c.l.b16 %v234
      %v356 = vunpack.c.l.b16 %v235
      %v357 = vunpack.c.h.b16 %v235
      %v358 = vunpack.c.l.b16 %v236
      %v359 = vunpack.c.h.b16 %v236
      %v360 = vunpack.c.l.b16 %v237
      %v361 = vunpack.c.l.b16 %v238
      %v362 = vunpack.c.h.b16 %v238
      %v363 = vunpack.c.l.b16 %v239
      %v364 = vunpack.c.h.b16 %v239
      %v365 = vunpack.c.l.b16 %v240
      %v366 = vunpack.c.l.b16 %v241
      %v367 = vunpack.c.h.b16 %v241
      %v368 = vunpack.c.l.b16 %v242
      %v369 = vunpack.c.h.b16 %v242
      %v370 = vunpack.c.l.b16 %v243
      %v371 = vunpack.c.l.b16 %v244
      %v372 = vunpack.c.h.b16 %v244
      %v373 = vunpack.c.l.b16 %v245
      %v374 = vunpack.c.h.b16 %v245
      %v375 = vunpack.c.l.b16 %v246
      %v376 = vunpack.c.l.b16 %v247
      %v377 = vunpack.c.h.b16 %v247
      %v378 = vunpack.c.l.b16 %v248
      %v379 = vunpack.c.h.b16 %v248
      %v380 = vunpack.c.l.b16 %v249
      %v381 = vunpack.c.l.b16 %v250
      %v382 = vunpack.c.h.b16 %v250
      %v383 = vunpack.c.l.b16 %v251
      %v384 = vunpack.c.h.b16 %v251
      %v385 = vunpack.c.l.b16 %v252
      %v386 = vpack.c.b16 %v356, %v351
      %v387 = vpack.c.b16 %v357, %v352
      %v388 = vpack.c.b16 %v358, %v353
      %v389 = vpack.c.b16 %v359, %v354
      %v390 = vpack.c.b16 %v360, %v355
      %v391 = vpack.c.b16 %v366, %v361
      %v392 = vpack.c.b16 %v367, %v362
      %v393 = vpack.c.b16 %v368, %v363
      %v394 = vpack.c.b16 %v369, %v364
      %v395 = vpack.c.b16 %v370, %v365
      %v396 = vpack.c.b16 %v376, %v371
      %v397 = vpack.c.b16 %v377, %v372
      %v398 = vpack.c.b16 %v378, %v373
      %v399 = vpack.c.b16 %v379, %v374
      %v400 = vpack.c.b16 %v380, %v375
      %v401 = vpack.c.b16 %v381, %v381
      %v402 = vpack.c.b16 %v382, %v382
      %v403 = vpack.c.b16 %v383, %v383
      %v404 = vpack.c.b16 %v384, %v384
      %v405 = vpack.c.b16 %v385, %v385
      %v494 = vunpack.c.l.b16 %v253
      %v495 = vunpack.c.l.b16 %v254
      %v496 = vunpack.c.l.b16 %v255
      %v497 = vunpack.c.l.b16 %v256
      %v498 = vunpack.c.l.b16 %v257
      %v499 = vunpack.c.l.b16 %v258
      %v500 = vunpack.c.l.b16 %v259
      %v501 = vunpack.c.l.b16 %v260
      %v502 = vunpack.c.l.b16 %v261
      %v503 = vunpack.c.l.b16 %v262
      %v504 = vunpack.c.l.b16 %v263
      %v505 = vunpack.c.l.b16 %v264
      %v506 = vunpack.c.l.b16 %v265
      %v507 = vunpack.c.l.b16 %v266
      %v508 = vunpack.c.l.b16 %v267
      %v509 = vunpack.c.l.b16 %v268
      %v510 = vunpack.c.l.b16 %v269
      %v511 = vunpack.c.l.b16 %v270
      %v512 = vunpack.c.l.b16 %v271
      %v513 = vunpack.c.l.b16 %v272
      %v514 = vunpack.c.l.b16 %v273
      %v515 = vunpack.c.l.b16 %v274
      %v516 = vunpack.c.l.b16 %v275
      %v517 = vunpack.c.l.b16 %v276
      %v518 = vunpack.c.l.b16 %v277
      %v519 = vunpack.c.l.b16 %v278
      %v520 = vunpack.c.l.b16 %v279
      %v521 = vunpack.c.l.b16 %v280
      %v522 = vunpack.c.l.b16 %v281
      %v523 = vunpack.c.l.b16 %v282
      %v524 = vunpack.c.l.b16 %v283
      %v525 = vunpack.c.l.b16 %v284
      %v526 = vunpack.c.l.b16 %v285
      %v527 = vunpack.c.l.b16 %v286
      %v528 = vunpack.c.l.b16 %v287
      %v529 = vunpack.c.l.b16 %v288
      %v530 = vunpack.c.l.b16 %v289
      %v531 = vunpack.c.l.b16 %v290
      %v532 = vunpack.c.l.b16 %v291
      %v533 = vunpack.c.l.b16 %v292
      %v534 = vunpack.c.l.b16 %v293
      %v535 = vunpack.c.l.b16 %v294
      %v536 = vunpack.c.l.b16 %v295
      %v537 = vunpack.c.l.b16 %v296
      %v538 = vunpack.c.l.b16 %v297
      %v539 = vunpack.c.l.b16 %v298
      %v540 = vunpack.c.l.b16 %v299
      %v541 = vunpack.c.l.b16 %v300
      %v542 = vunpack.c.l.b16 %v301
      %v543 = vunpack.c.l.b16 %v302
      %v544 = vunpack.c.l.b16 %v303
      %v545 = vunpack.c.l.b16 %v304
      %v546 = vunpack.c.l.b16 %v305
      %v547 = vunpack.c.l.b16 %v306
      %v548 = vunpack.c.l.b16 %v307
      %v549 = vunpack.c.l.b16 %v308
      %v550 = vunpack.c.l.b16 %v309
      %v551 = vunpack.c.l.b16 %v310
      %v552 = vunpack.c.l.b16 %v311
      %v553 = vunpack.c.l.b16 %v312
      %v554 = vunpack.c.l.b16 %v313
      %v555 = vunpack.c.l.b16 %v314
      %v556 = vunpack.c.l.b16 %v315
      %v557 = vunpack.c.l.b16 %v316
      %v558 = vunpack.c.l.b16 %v317
      %v559 = vunpack.c.l.b16 %v318
      %v560 = vunpack.c.l.b16 %v319
      %v561 = vunpack.c.l.b16 %v320
      %v562 = vunpack.c.l.b16 %v321
      %v563 = vunpack.c.l.b16 %v322
      %v564 = vunpack.c.l.b16 %v323
      %v565 = vunpack.c.l.b16 %v324
      %v566 = vpack.c.b16 %v495, %v494
      %v567 = vpack.c.b16 %v497, %v496
      %v568 = vpack.c.b16 %v499, %v498
      %v569 = vpack.c.b16 %v501, %v500
      %v570 = vpack.c.b16 %v503, %v502
      %v571 = vpack.c.b16 %v505, %v504
      %v572 = vpack.c.b16 %v507, %v506
      %v573 = vpack.c.b16 %v509, %v508
      %v574 = vpack.c.b16 %v511, %v510
      %v575 = vpack.c.b16 %v513, %v512
      %v576 = vpack.c.b16 %v515, %v514
      %v577 = vpack.c.b16 %v517, %v516
      %v578 = vpack.c.b16 %v519, %v518
      %v579 = vpack.c.b16 %v521, %v520
      %v580 = vpack.c.b16 %v523, %v522
      %v581 = vpack.c.b16 %v525, %v524
      %v582 = vpack.c.b16 %v527, %v526
      %v583 = vpack.c.b16 %v529, %v528
      %v584 = vpack.c.b16 %v531, %v530
      %v585 = vpack.c.b16 %v533, %v532
      %v586 = vpack.c.b16 %v535, %v534
      %v587 = vpack.c.b16 %v537, %v536
      %v588 = vpack.c.b16 %v539, %v538
      %v589 = vpack.c.b16 %v541, %v540
      %v590 = vpack.c.b16 %v543, %v542
      %v591 = vpack.c.b16 %v545, %v544
      %v592 = vpack.c.b16 %v547, %v546
      %v593 = vpack.c.b16 %v549, %v548
      %v594 = vpack.c.b16 %v551, %v550
      %v595 = vpack.c.b16 %v553, %v552
      %v596 = vpack.c.b16 %v555, %v554
      %v597 = vpack.c.b16 %v557, %v556
      %v598 = vpack.c.b16 %v559, %v558
      %v599 = vpack.c.b16 %v561, %v560
      %v600 = vpack.c.b16 %v563, %v562
      %v601 = vpack.c.b16 %v565, %v564
      %vm638 = vcmask 523264
      %v640 = vsel %vm638, %v390, 0
      %v643 = vsel %vm638, %v395, 0
      %v646 = vsel %vm638, %v400, 0
      %v649 = vsel %vm638, %v405, 0
      %651 = vmatprep.subr.bf16.mxu0 0
      %652 = vmatpush1.bf16.msra.mxu0 %v566
      %653 = vmatprep.subr.bf16.mxu0 0
      %654 = vmatpush1.bf16.msra.mxu0 %v567
      %655 = vmatprep.subr.bf16.mxu0 0
      %656 = vmatpush1.bf16.msra.mxu0 %v568
      %657 = vmatprep.subr.bf16.mxu0 0
      %658 = vmatpush1.bf16.msra.mxu0 %v569
      %659 = vmatprep.subr.bf16.mxu0 0
      %660 = vmatpush1.bf16.msra.mxu0 %v570
      %661 = vmatprep.subr.bf16.mxu0 0
      %662 = vmatpush1.bf16.msra.mxu0 %v571
      %663 = vmatprep.subr.bf16.mxu0 0
      %664 = vmatpush1.bf16.msra.mxu0 %v572
      %665 = vmatprep.subr.bf16.mxu0 0
      %666 = vmatpush1.bf16.msra.mxu0 %v573
      %667 = vmatprep.subr.bf16.mxu0 0
      %668 = vmatpush1.bf16.msra.mxu0 %v574
      %669 = vmatprep.subr.bf16.mxu0 0
      %670 = vmatpush1.bf16.msra.mxu0 %v575
      %671 = vmatprep.subr.bf16.mxu0 0
      %672 = vmatpush1.bf16.msra.mxu0 %v576
      %673 = vmatprep.subr.bf16.mxu0 0
      %674 = vmatpush1.bf16.msra.mxu0 %v577
      %675 = vmatprep.subr.bf16.mxu0 0
      %676 = vmatpush1.bf16.msra.mxu0 %v578
      %677 = vmatprep.subr.bf16.mxu0 0
      %678 = vmatpush1.bf16.msra.mxu0 %v579
      %679 = vmatprep.subr.bf16.mxu0 0
      %680 = vmatpush1.bf16.msra.mxu0 %v580
      %681 = vmatprep.subr.bf16.mxu0 0
      %682 = vmatpush1.bf16.msra.mxu0 %v581
      %683 = vmatprep.mubr.bf16.mxu0 %v387
      %684 = vmatmul.mubr.bf16.gmra.mrb[0].mxu0 %v386
      %v685 = vpop.f32.mrb[0].mxu0
      %v686 = vadd.f32 %v329, %v685
      %v687 = vpop.f32.mrb[0].mxu0
      %v688 = vpop.f32.mrb[0].mxu0
      %v689 = vadd.f32 %v329, %v688
      %v690 = vpop.f32.mrb[0].mxu0
      %691 = vmatprep.mubr.bf16.mxu0 %v392
      %692 = vmatmul.mubr.bf16.gmra.mrb[0].mxu0 %v391
      %v693 = vpop.f32.mrb[0].mxu0
      %v694 = vadd.f32 %v329, %v693
      %v695 = vpop.f32.mrb[0].mxu0
      %v696 = vpop.f32.mrb[0].mxu0
      %v697 = vadd.f32 %v329, %v696
      %v698 = vpop.f32.mrb[0].mxu0
      %699 = vmatprep.mubr.bf16.mxu0 %v397
      %700 = vmatmul.mubr.bf16.gmra.mrb[0].mxu0 %v396
      %v701 = vpop.f32.mrb[0].mxu0
      %v702 = vadd.f32 %v329, %v701
      %v703 = vpop.f32.mrb[0].mxu0
      %v704 = vpop.f32.mrb[0].mxu0
      %v705 = vadd.f32 %v329, %v704
      %v706 = vpop.f32.mrb[0].mxu0
      %707 = vmatprep.mubr.bf16.mxu0 %v402
      %708 = vmatmul.mubr.bf16.gmra.mrb[0].mxu0 %v401
      %v709 = vpop.f32.mrb[0].mxu0
      %v710 = vadd.f32 %v329, %v709
      %v711 = vpop.f32.mrb[0].mxu0
      %v712 = vpop.f32.mrb[0].mxu0
      %v713 = vpop.f32.mrb[0].mxu0
      %714 = vdwg.mxu0
      %715 = vmatprep.subr.bf16.mxu0 0
      %716 = vmatpush1.bf16.msra.mxu0 %v582
      %717 = vmatprep.subr.bf16.mxu0 0
      %718 = vmatpush1.bf16.msra.mxu0 %v583
      %719 = vmatprep.subr.bf16.mxu0 0
      %720 = vmatpush1.bf16.msra.mxu0 %v584
      %721 = vmatprep.subr.bf16.mxu0 0
      %722 = vmatpush1.bf16.msra.mxu0 %v585
      %723 = vmatprep.subr.bf16.mxu0 0
      %724 = vmatpush1.bf16.msra.mxu0 %v586
      %725 = vmatprep.subr.bf16.mxu0 0
      %726 = vmatpush1.bf16.msra.mxu0 %v587
      %727 = vmatprep.subr.bf16.mxu0 0
      %728 = vmatpush1.bf16.msra.mxu0 %v588
      %729 = vmatprep.subr.bf16.mxu0 0
      %730 = vmatpush1.bf16.msra.mxu0 %v589
      %731 = vmatprep.subr.bf16.mxu0 0
      %732 = vmatpush1.bf16.msra.mxu0 %v590
      %733 = vmatprep.subr.bf16.mxu0 0
      %734 = vmatpush1.bf16.msra.mxu0 %v591
      %735 = vmatprep.subr.bf16.mxu0 0
      %736 = vmatpush1.bf16.msra.mxu0 %v592
      %737 = vmatprep.subr.bf16.mxu0 0
      %738 = vmatpush1.bf16.msra.mxu0 %v593
      %739 = vmatprep.subr.bf16.mxu0 0
      %740 = vmatpush1.bf16.msra.mxu0 %v594
      %741 = vmatprep.subr.bf16.mxu0 0
      %742 = vmatpush1.bf16.msra.mxu0 %v595
      %743 = vmatprep.subr.bf16.mxu0 0
      %744 = vmatpush1.bf16.msra.mxu0 %v596
      %745 = vmatprep.subr.bf16.mxu0 0
      %746 = vmatpush1.bf16.msra.mxu0 %v597
      %747 = vmatprep.mubr.bf16.mxu0 %v389
      %748 = vmatmul.mubr.bf16.gmra.mrb[0].mxu0 %v388
      %v749 = vpop.f32.mrb[0].mxu0
      %v750 = vadd.f32 %v686, %v749
      %v751 = vpop.f32.mrb[0].mxu0
      %v752 = vpop.f32.mrb[0].mxu0
      %v753 = vadd.f32 %v689, %v752
      %v754 = vpop.f32.mrb[0].mxu0
      %755 = vmatprep.mubr.bf16.mxu0 %v394
      %756 = vmatmul.mubr.bf16.gmra.mrb[0].mxu0 %v393
      %v757 = vpop.f32.mrb[0].mxu0
      %v758 = vadd.f32 %v694, %v757
      %v759 = vpop.f32.mrb[0].mxu0
      %v760 = vpop.f32.mrb[0].mxu0
      %v761 = vadd.f32 %v697, %v760
      %v762 = vpop.f32.mrb[0].mxu0
      %763 = vmatprep.mubr.bf16.mxu0 %v399
      %764 = vmatmul.mubr.bf16.gmra.mrb[0].mxu0 %v398
      %v765 = vpop.f32.mrb[0].mxu0
      %v766 = vadd.f32 %v702, %v765
      %v767 = vpop.f32.mrb[0].mxu0
      %v768 = vpop.f32.mrb[0].mxu0
      %v769 = vadd.f32 %v705, %v768
      %v770 = vpop.f32.mrb[0].mxu0
      %771 = vmatprep.mubr.bf16.mxu0 %v404
      %772 = vmatmul.mubr.bf16.gmra.mrb[0].mxu0 %v403
      %v773 = vpop.f32.mrb[0].mxu0
      %v774 = vadd.f32 %v710, %v773
      %v775 = vpop.f32.mrb[0].mxu0
      %v776 = vpop.f32.mrb[0].mxu0
      %v777 = vpop.f32.mrb[0].mxu0
      %778 = vdwg.mxu0
      %779 = vmatprep.subr.bf16.mxu0 0
      %780 = vmatpush1.bf16.msra.mxu0 %v598
      %781 = vmatprep.subr.bf16.mxu0 0
      %782 = vmatpush1.bf16.msra.mxu0 %v599
      %783 = vmatprep.subr.bf16.mxu0 0
      %784 = vmatpush1.bf16.msra.mxu0 %v600
      %785 = vmatprep.subr.bf16.mxu0 0
      %786 = vmatpush1.bf16.msra.mxu0 %v601
      %787 = vmatprep.subr.bf16.mxu0 0
      %788 = vmatpush1.bf16.msra.mxu0 0
      %789 = vmatprep.subr.bf16.mxu0 0
      %790 = vmatpush1.bf16.msra.mxu0 0
      %791 = vmatprep.subr.bf16.mxu0 0
      %792 = vmatpush1.bf16.msra.mxu0 0
      %793 = vmatprep.subr.bf16.mxu0 0
      %794 = vmatpush1.bf16.msra.mxu0 0
      %795 = vmatprep.subr.bf16.mxu0 0
      %796 = vmatpush1.bf16.msra.mxu0 0
      %797 = vmatprep.subr.bf16.mxu0 0
      %798 = vmatpush1.bf16.msra.mxu0 0
      %799 = vmatprep.subr.bf16.mxu0 0
      %800 = vmatpush1.bf16.msra.mxu0 0
      %801 = vmatprep.subr.bf16.mxu0 0
      %802 = vmatpush1.bf16.msra.mxu0 0
      %803 = vmatprep.subr.bf16.mxu0 0
      %804 = vmatpush1.bf16.msra.mxu0 0
      %805 = vmatprep.subr.bf16.mxu0 0
      %806 = vmatpush1.bf16.msra.mxu0 0
      %807 = vmatprep.subr.bf16.mxu0 0
      %808 = vmatpush1.bf16.msra.mxu0 0
      %809 = vmatprep.subr.bf16.mxu0 0
      %810 = vmatpush1.bf16.msra.mxu0 0
      %811 = vmatprep.mubr.bf16.mxu0 0
      %812 = vmatmul.mubr.bf16.gmra.mrb[0].mxu0 %v640
      %v813 = vpop.f32.mrb[0].mxu0
      %v814 = vadd.f32 %v750, %v813
      %v815 = vpop.f32.mrb[0].mxu0
      %v816 = vpop.f32.mrb[0].mxu0
      %v817 = vadd.f32 %v753, %v816
      %v818 = vpop.f32.mrb[0].mxu0
      %819 = vmatprep.mubr.bf16.mxu0 0
      %820 = vmatmul.mubr.bf16.gmra.mrb[0].mxu0 %v643
      %v821 = vpop.f32.mrb[0].mxu0
      %v822 = vadd.f32 %v758, %v821
      %v823 = vpop.f32.mrb[0].mxu0
      %v824 = vpop.f32.mrb[0].mxu0
      %v825 = vadd.f32 %v761, %v824
      %v826 = vpop.f32.mrb[0].mxu0
      %827 = vmatprep.mubr.bf16.mxu0 0
      %828 = vmatmul.mubr.bf16.gmra.mrb[0].mxu0 %v646
      %v829 = vpop.f32.mrb[0].mxu0
      %v830 = vadd.f32 %v766, %v829
      %v831 = vpop.f32.mrb[0].mxu0
      %v832 = vpop.f32.mrb[0].mxu0
      %v833 = vadd.f32 %v769, %v832
      %v834 = vpop.f32.mrb[0].mxu0
      %835 = vmatprep.mubr.bf16.mxu0 0
      %836 = vmatmul.mubr.bf16.gmra.mrb[0].mxu0 %v649
      %v837 = vpop.f32.mrb[0].mxu0
      %v838 = vadd.f32 %v774, %v837
      %v839 = vpop.f32.mrb[0].mxu0
      %v840 = vpop.f32.mrb[0].mxu0
      %v841 = vpop.f32.mrb[0].mxu0
      %842 = vdwg.mxu0
      %v843 = vxor.u32 %v814, 2147483648
      %v844 = vxor.u32 %v817, 2147483648
      %v845 = vxor.u32 %v822, 2147483648
      %v846 = vxor.u32 %v825, 2147483648
      %v847 = vxor.u32 %v830, 2147483648
      %v848 = vxor.u32 %v833, 2147483648
      %v849 = vxor.u32 %v838, 2147483648
      %v850 = vmul.f32 %v843, 1.442695
      %v851 = vpow.pop %v850
      %v852 = vmul.f32 %v844, 1.442695
      %v853 = vpow.pop %v852
      %v854 = vmul.f32 %v845, 1.442695
      %v855 = vpow.pop %v854
      %v856 = vmul.f32 %v846, 1.442695
      %v857 = vpow.pop %v856
      %v858 = vmul.f32 %v847, 1.442695
      %v859 = vpow.pop %v858
      %v860 = vmul.f32 %v848, 1.442695
      %v861 = vpow.pop %v860
      %v862 = vmul.f32 %v849, 1.442695
      %v863 = vpow.pop %v862
      %v864 = vadd.f32 %v851, 1.0
      %v865 = vadd.f32 %v853, 1.0
      %v866 = vadd.f32 %v855, 1.0
      %v867 = vadd.f32 %v857, 1.0
      %v868 = vadd.f32 %v859, 1.0
      %v869 = vadd.f32 %v861, 1.0
      %v870 = vadd.f32 %v863, 1.0
      %v871 = vrcp.pop %v864
      %v872 = vmul.f32 1.0, %v871
      %v873 = vrcp.pop %v865
      %v874 = vmul.f32 1.0, %v873
      %v875 = vrcp.pop %v866
      %v876 = vmul.f32 1.0, %v875
      %v877 = vrcp.pop %v867
      %v878 = vmul.f32 1.0, %v877
      %v879 = vrcp.pop %v868
      %v880 = vmul.f32 1.0, %v879
      %v881 = vrcp.pop %v869
      %v882 = vmul.f32 1.0, %v881
      %v883 = vrcp.pop %v870
      %v884 = vmul.f32 1.0, %v883
      %885 = vst [vmem:[%s229] sm:$0xff] %v872
      %886 = vst [vmem:[%s229 + $0x8] sm:$0xff] %v874
      %887 = vst [vmem:[%s229 + $0x10] sm:$0xff] %v876
      %888 = vst [vmem:[%s229 + $0x18] sm:$0xff] %v878
      %889 = vst [vmem:[%s229 + $0x20] sm:$0xff] %v880
      %890 = vst [vmem:[%s229 + $0x28] sm:$0xff] %v882
      %891 = vst [vmem:[%s229 + $0x30] sm:$0xff] %v884
      %s892 = smul.u32 7, %s18
      %p893 = scmp.lt.s32.totalorder %s892, 48
      %s894 = scalar_select %p893, %s892, 48
      %p895 = scmp.lt.s32.totalorder %s19, 0
      %s896 = scalar_select %p895, %s19, 0
      %s897 = sadd.s32 %s896, %s894
      %s898 = smul.addr %s897, 8
      %s899 = scalar_lea.vmem %s3, %s898
      // Predicated region
      $region33: #{generator_forward.7} parent=31 // pred_check
        %p900 = pneg %p124
      $region34: #{generator_forward.7} parent=31 // pred_check_branch
        %902 = sbr.rel (%p900) target = $region36
      $region35: #{generator_forward.7} parent=31 // pred_region
        %s903 = smul.u32 7, %s18
      $region36: #{generator_forward.7} parent=31 // pred_fallthru
        _
    $region32: #{generator_forward.7} parent=5 // pred_fallthru
      _
    %p904 = scmp.le.s32.totalorder 2, %s9
    // Predicated region
    $region37: #{generator_forward.7} parent=5 // pred_check
      %p905 = pneg %p904
    $region38: #{generator_forward.7} parent=5 // pred_check_branch
      %907 = sbr.rel (%p905) target = $region40
    $region39: #{generator_forward.7} parent=5 // pred_region
      %s908 = ssub.s32 %s9, 2
      // Predicated region
      $region41: #{generator_forward.7} parent=39 // pred_check
        %p909 = pneg %p130
      $region42: #{generator_forward.7} parent=39 // pred_check_branch
        %911 = sbr.rel (%p909) target = $region44
      $region43: #{generator_forward.7} parent=39 // pred_region
        %s912 = smul.u32 7, %s20
        %p913 = scmp.lt.s32.totalorder %s912, 48
        %s914 = scalar_select %p913, %s912, 48
        %p915 = scmp.lt.s32.totalorder %s21, 0
        %s916 = scalar_select %p915, %s21, 0
        %s917 = sadd.s32 %s916, %s914
        %s918 = smul.addr %s917, 8
        %s919 = scalar_lea.vmem %s3, %s918
      $region44: #{generator_forward.7} parent=39 // pred_fallthru
        _
    $region40: #{generator_forward.7} parent=5 // pred_fallthru
      _
  $region6: #{generator_forward.7} parent=0 // loop_footer
    %s13 = sadd.s32 1, %s9
  $region7: #{generator_forward.7} parent=0 // loop_footer_branch
    %8 = sbr.rel target = $region3
  $region8: #{generator_forward.7} parent=0 // loop_exit
    _

</llo_original>
